<compile_context>
chip_gen: v7x
topology: tpu7x:2x2x1
jax: 0.10.0
libtpu: 0.0.40
codegen_flags: <defaults>
</compile_context>

<pallas_src>
import functools
import math

import jax
import jax.numpy as jnp
from jax.experimental import pallas as pl
from jax.experimental.pallas import tpu as pltpu

D_MODEL = 32
N_HEAD = 4
HEAD_DIM = D_MODEL // N_HEAD
DIM_FF = 64
NUM_LAYERS = 2
LN_EPS = 1e-5


# --------------------------- fused Pallas kernel -----------------------------

def _layer_norm(x, g, b):
    mu = jnp.mean(x, axis=-1, keepdims=True)
    var = jnp.mean(jnp.square(x - mu), axis=-1, keepdims=True)
    return (x - mu) * jax.lax.rsqrt(var + LN_EPS) * g + b


def _fused_decoder_kernel(
        tgt_ref, mem_ref, pos_ref, qp_ref, qtp_ref,
        sa_w_ref, sa_b_ref, sa_wo_ref, sa_bo_ref,
        ca_w_ref, ca_b_ref, ca_wo_ref, ca_bo_ref,
        ff_w1_ref, ff_b1_ref, ff_w2_ref, ff_b2_ref,
        ng_ref, nb_ref,
        hs_ref, w_ref, *, batch, lq, lk):
    f32 = jnp.float32
    D, H, Dh = D_MODEL, N_HEAD, HEAD_DIM
    scale = 1.0 / math.sqrt(Dh)

    # ---- load everything into registers (all tiny, stays VMEM-resident) ----
    tgt = tgt_ref[...].astype(f32)       # (B*Lq, D), batch-major rows
    mem = mem_ref[...].astype(f32)       # (B*Lk, D)
    pos = pos_ref[...].astype(f32)
    qp = qp_ref[...].astype(f32)
    qtp = qtp_ref[...].astype(f32)

    sa_w, sa_b = sa_w_ref[...].astype(f32), sa_b_ref[...].astype(f32)
    sa_wo, sa_bo = sa_wo_ref[...].astype(f32), sa_bo_ref[...].astype(f32)
    ca_w, ca_b = ca_w_ref[...].astype(f32), ca_b_ref[...].astype(f32)
    ca_wo, ca_bo = ca_wo_ref[...].astype(f32), ca_bo_ref[...].astype(f32)
    w1, b1 = ff_w1_ref[...].astype(f32), ff_b1_ref[...].astype(f32)
    w2, b2 = ff_w2_ref[...].astype(f32), ff_b2_ref[...].astype(f32)
    ng, nb = ng_ref[...].astype(f32), nb_ref[...].astype(f32)   # (4, D) each

    def attention(q_in, k_in, v_in, w_in, b_in, wo, bo, n_q, n_k, need_weights):
        # fused Q|K projection when query and key are the same tensor
        if q_in is k_in:
            qk = jnp.dot(q_in, w_in[:, 0:2 * D],
                         preferred_element_type=f32) + b_in[:, 0:2 * D]
            q_all = qk[:, 0:D]
            k_all = qk[:, D:2 * D]
        else:
            q_all = jnp.dot(q_in, w_in[:, 0:D],
                            preferred_element_type=f32) + b_in[:, 0:D]
            k_all = jnp.dot(k_in, w_in[:, D:2 * D],
                            preferred_element_type=f32) + b_in[:, D:2 * D]
        v_all = jnp.dot(v_in, w_in[:, 2 * D:3 * D],
                        preferred_element_type=f32) + b_in[:, 2 * D:3 * D]

        outs, wts = [], []
        for b in range(batch):              # static, tiny
            qb = q_all[b * n_q:(b + 1) * n_q]
            kb = k_all[b * n_k:(b + 1) * n_k]
            vb = v_all[b * n_k:(b + 1) * n_k]
            head_o = []
            p_acc = None
            for h in range(H):              # static, tiny
                lo, hi = h * Dh, (h + 1) * Dh
                s = jax.lax.dot_general(
                    qb[:, lo:hi], kb[:, lo:hi],
                    dimension_numbers=(((1,), (1,)), ((), ())),
                    preferred_element_type=f32) * scale       # (n_q, n_k)
                s = s - jnp.max(s, axis=-1, keepdims=True)
                p = jnp.exp(s)
                p = p * pl.reciprocal(jnp.sum(p, axis=-1, keepdims=True),
                                      approx=True)
                head_o.append(jnp.dot(p, vb[:, lo:hi],
                                      preferred_element_type=f32))
                if need_weights:
                    p_acc = p if p_acc is None else p_acc + p
            outs.append(jnp.concatenate(head_o, axis=-1))      # (n_q, D)
            if need_weights:
                wts.append(p_acc * (1.0 / H))                  # (n_q, n_k)
        o = jnp.concatenate(outs, axis=0)                      # (B*n_q, D)
        o = jnp.dot(o, wo, preferred_element_type=f32) + bo
        return o, wts

    q_pos_sum = qp + qtp        # layer-invariant, computed once
    mem_k = mem + pos           # layer-invariant, computed once

    x = tgt
    for layer in range(NUM_LAYERS):   # deepcopy clones -> identical params
        # ---- self-attention (queries/keys carry query_pos + query_time_pos) -
        q_sa = x + q_pos_sum
        sa_out, _ = attention(q_sa, q_sa, x, sa_w, sa_b, sa_wo, sa_bo,
                              lq, lq, need_weights=False)
        x = _layer_norm(x + sa_out, ng[0:1], nb[0:1])
        # ---- cross-attention over memory (keys carry pos) -------------------
        ca_out, wts = attention(x + qp, mem_k, mem, ca_w, ca_b, ca_wo, ca_bo,
                                lq, lk, need_weights=True)
        x = _layer_norm(x + ca_out, ng[1:2], nb[1:2])
        # ---- feed-forward ----------------------------------------------------
        hmid = jnp.maximum(jnp.dot(x, w1, preferred_element_type=f32) + b1, 0.0)
        y = jnp.dot(hmid, w2, preferred_element_type=f32) + b2
        x = _layer_norm(x + y, ng[2:3], nb[2:3])
        # ---- intermediate norm (identical to the final norm for last layer) --
        hs_ref[layer] = _layer_norm(x, ng[3:4], nb[3:4]).astype(hs_ref.dtype)
        for b in range(batch):
            w_ref[layer * batch + b] = wts[b].astype(w_ref.dtype)


def _full_spec(shape):
    zero = (0,) * len(shape)
    return pl.BlockSpec(shape, lambda i, _z=zero: _z)


# --------------------------- driver / wrapper ---------------------------------

def time_decoder_forward(params, tgt, memory, pos=None, query_pos=None,
                         query_time_pos=None, return_intermediate=True,
                         return_weights=True):
    Lq, B, D = tgt.shape
    Lk = memory.shape[0]
    dt = tgt.dtype
    if pos is None:
        pos = jnp.zeros_like(memory)
    if query_pos is None:
        query_pos = jnp.zeros_like(tgt)
    if query_time_pos is None:
        query_time_pos = jnp.zeros_like(tgt)

    def to_bm(x, L):   # (L, B, D) -> (B*L, D), batch-major rows
        return jnp.transpose(x, (1, 0, 2)).reshape(B * L, D)

    lp = params['layer']
    sa, ca = lp['self_attn'], lp['cross_attn']
    sa_w = jnp.concatenate([sa['wq'], sa['wk'], sa['wv']], axis=1)   # (D, 3D)
    sa_b = jnp.concatenate([sa['bq'], sa['bk'], sa['bv']]).reshape(1, 3 * D)
    ca_w = jnp.concatenate([ca['wq'], ca['wk'], ca['wv']], axis=1)
    ca_b = jnp.concatenate([ca['bq'], ca['bk'], ca['bv']]).reshape(1, 3 * D)
    ng = jnp.stack([lp['norm1_g'], lp['norm2_g'], lp['norm3_g'], params['norm_g']])
    nb = jnp.stack([lp['norm1_b'], lp['norm2_b'], lp['norm3_b'], params['norm_b']])

    args = (to_bm(tgt, Lq), to_bm(memory, Lk), to_bm(pos, Lk),
            to_bm(query_pos, Lq), to_bm(query_time_pos, Lq),
            sa_w, sa_b, sa['wo'], sa['bo'].reshape(1, D),
            ca_w, ca_b, ca['wo'], ca['bo'].reshape(1, D),
            lp['lin1_w'], lp['lin1_b'].reshape(1, DIM_FF),
            lp['lin2_w'], lp['lin2_b'].reshape(1, D),
            ng, nb)

    kern = functools.partial(_fused_decoder_kernel, batch=B, lq=Lq, lk=Lk)
    hs_flat, w_flat = pl.pallas_call(
        kern,
        out_shape=(jax.ShapeDtypeStruct((NUM_LAYERS, B * Lq, D), dt),
                   jax.ShapeDtypeStruct((NUM_LAYERS * B, Lq, Lk), dt)),
        grid=(1,),
        in_specs=[_full_spec(a.shape) for a in args],
        out_specs=(_full_spec((NUM_LAYERS, B * Lq, D)),
                   _full_spec((NUM_LAYERS * B, Lq, Lk))),
        compiler_params=pltpu.CompilerParams(dimension_semantics=("arbitrary",)),
    )(*args)

    hs = hs_flat.reshape(NUM_LAYERS, B, Lq, D)          # stack(...).transpose(1,2)
    w = w_flat.reshape(NUM_LAYERS, B, Lq, Lk)           # stacked cross-attn weights

    if return_intermediate:
        if return_weights:
            return hs, w
        return hs
    output = jnp.transpose(hs[-1], (1, 0, 2))           # (Lq, B, D), final norm applied
    if return_weights:
        return output, w[-1]
    return output


# ------------------------------- init ----------------------------------------

def _dense(key, din, dout):
    k1, k2 = jax.random.split(key)
    lim = 1.0 / math.sqrt(din)
    w = jax.random.uniform(k1, (din, dout), jnp.float32, -lim, lim)
    b = jax.random.uniform(k2, (dout,), jnp.float32, -lim, lim)
    return w, b


def _mha_params(key):
    ks = jax.random.split(key, 4)
    wq, bq = _dense(ks[0], D_MODEL, D_MODEL)
    wk, bk = _dense(ks[1], D_MODEL, D_MODEL)
    wv, bv = _dense(ks[2], D_MODEL, D_MODEL)
    wo, bo = _dense(ks[3], D_MODEL, D_MODEL)
    return dict(wq=wq, bq=bq, wk=wk, bk=bk, wv=wv, bv=bv, wo=wo, bo=bo)


def init_params(key):
    ks = jax.random.split(key, 4)
    lin1_w, lin1_b = _dense(ks[2], D_MODEL, DIM_FF)
    lin2_w, lin2_b = _dense(ks[3], DIM_FF, D_MODEL)
    layer = dict(
        self_attn=_mha_params(ks[0]),
        cross_attn=_mha_params(ks[1]),
        lin1_w=lin1_w, lin1_b=lin1_b, lin2_w=lin2_w, lin2_b=lin2_b,
        norm1_g=jnp.ones((D_MODEL,), jnp.float32), norm1_b=jnp.zeros((D_MODEL,), jnp.float32),
        norm2_g=jnp.ones((D_MODEL,), jnp.float32), norm2_b=jnp.zeros((D_MODEL,), jnp.float32),
        norm3_g=jnp.ones((D_MODEL,), jnp.float32), norm3_b=jnp.zeros((D_MODEL,), jnp.float32),
    )
    return dict(layer=layer,
                norm_g=jnp.ones((D_MODEL,), jnp.float32),
                norm_b=jnp.zeros((D_MODEL,), jnp.float32))


# ------------------------------- main -----------------------------------------

if __name__ == "__main__":
    B, LQ, LK = 2, 8, 16   # batch, num_queries, memory length
    key = jax.random.PRNGKey(0)
    kp, kt, km, kpos, kqp, kqtp = jax.random.split(key, 6)

    params = init_params(kp)
    tgt = jax.random.normal(kt, (LQ, B, D_MODEL), jnp.float32)
    memory = jax.random.normal(km, (LK, B, D_MODEL), jnp.float32)
    pos = jax.random.normal(kpos, (LK, B, D_MODEL), jnp.float32)
    query_pos = jax.random.normal(kqp, (LQ, B, D_MODEL), jnp.float32)
    query_time_pos = jax.random.normal(kqtp, (LQ, B, D_MODEL), jnp.float32)

    fwd = jax.jit(functools.partial(time_decoder_forward,
                                    return_intermediate=True,
                                    return_weights=True))
    hs, attn_weights = fwd(params, tgt, memory, pos, query_pos, query_time_pos)

    jax.block_until_ready(hs)
    jax.block_until_ready(attn_weights)
    assert hs.shape == (NUM_LAYERS, B, LQ, D_MODEL), hs.shape
    assert attn_weights.shape == (NUM_LAYERS, B, LQ, LK), attn_weights.shape
    print("KERNEL_OK")
</pallas_src>

<mosaic_0001>
module attributes {stable_mosaic.version = 11 : i64} {
  func.func @_fused_decoder_kernel(%arg0: i32, %arg1: memref<16x32xf32, #tpu.memory_space<vmem>>, %arg2: memref<32x32xf32, #tpu.memory_space<vmem>>, %arg3: memref<32x32xf32, #tpu.memory_space<vmem>>, %arg4: memref<16x32xf32, #tpu.memory_space<vmem>>, %arg5: memref<16x32xf32, #tpu.memory_space<vmem>>, %arg6: memref<32x96xf32, #tpu.memory_space<vmem>>, %arg7: memref<1x96xf32, #tpu.memory_space<vmem>>, %arg8: memref<32x32xf32, #tpu.memory_space<vmem>>, %arg9: memref<1x32xf32, #tpu.memory_space<vmem>>, %arg10: memref<32x96xf32, #tpu.memory_space<vmem>>, %arg11: memref<1x96xf32, #tpu.memory_space<vmem>>, %arg12: memref<32x32xf32, #tpu.memory_space<vmem>>, %arg13: memref<1x32xf32, #tpu.memory_space<vmem>>, %arg14: memref<32x64xf32, #tpu.memory_space<vmem>>, %arg15: memref<1x64xf32, #tpu.memory_space<vmem>>, %arg16: memref<64x32xf32, #tpu.memory_space<vmem>>, %arg17: memref<1x32xf32, #tpu.memory_space<vmem>>, %arg18: memref<4x32xf32, #tpu.memory_space<vmem>>, %arg19: memref<4x32xf32, #tpu.memory_space<vmem>>, %arg20: memref<2x16x32xf32, #tpu.memory_space<vmem>>, %arg21: memref<4x8x16xf32, #tpu.memory_space<vmem>>) attributes {dimension_semantics = [#tpu.dimension_semantics<arbitrary>], iteration_bounds = array<i64: 1>, scalar_prefetch = 0 : i64, scratch_operands = 0 : i64, tpu.core_type = #tpu.core_type<tc>, window_params = [{pipeline_mode = #tpu.pipeline_mode<synchronous>, transform_indices = @transform_0, window_bounds = array<i64: 16, 32>}, {pipeline_mode = #tpu.pipeline_mode<synchronous>, transform_indices = @transform_1, window_bounds = array<i64: 32, 32>}, {pipeline_mode = #tpu.pipeline_mode<synchronous>, transform_indices = @transform_2, window_bounds = array<i64: 32, 32>}, {pipeline_mode = #tpu.pipeline_mode<synchronous>, transform_indices = @transform_3, window_bounds = array<i64: 16, 32>}, {pipeline_mode = #tpu.pipeline_mode<synchronous>, transform_indices = @transform_4, window_bounds = array<i64: 16, 32>}, {pipeline_mode = #tpu.pipeline_mode<synchronous>, transform_indices = @transform_5, window_bounds = array<i64: 32, 96>}, {pipeline_mode = #tpu.pipeline_mode<synchronous>, transform_indices = @transform_6, window_bounds = array<i64: 1, 96>}, {pipeline_mode = #tpu.pipeline_mode<synchronous>, transform_indices = @transform_7, window_bounds = array<i64: 32, 32>}, {pipeline_mode = #tpu.pipeline_mode<synchronous>, transform_indices = @transform_8, window_bounds = array<i64: 1, 32>}, {pipeline_mode = #tpu.pipeline_mode<synchronous>, transform_indices = @transform_9, window_bounds = array<i64: 32, 96>}, {pipeline_mode = #tpu.pipeline_mode<synchronous>, transform_indices = @transform_10, window_bounds = array<i64: 1, 96>}, {pipeline_mode = #tpu.pipeline_mode<synchronous>, transform_indices = @transform_11, window_bounds = array<i64: 32, 32>}, {pipeline_mode = #tpu.pipeline_mode<synchronous>, transform_indices = @transform_12, window_bounds = array<i64: 1, 32>}, {pipeline_mode = #tpu.pipeline_mode<synchronous>, transform_indices = @transform_13, window_bounds = array<i64: 32, 64>}, {pipeline_mode = #tpu.pipeline_mode<synchronous>, transform_indices = @transform_14, window_bounds = array<i64: 1, 64>}, {pipeline_mode = #tpu.pipeline_mode<synchronous>, transform_indices = @transform_15, window_bounds = array<i64: 64, 32>}, {pipeline_mode = #tpu.pipeline_mode<synchronous>, transform_indices = @transform_16, window_bounds = array<i64: 1, 32>}, {pipeline_mode = #tpu.pipeline_mode<synchronous>, transform_indices = @transform_17, window_bounds = array<i64: 4, 32>}, {pipeline_mode = #tpu.pipeline_mode<synchronous>, transform_indices = @transform_18, window_bounds = array<i64: 4, 32>}, {pipeline_mode = #tpu.pipeline_mode<synchronous>, transform_indices = @transform_19, window_bounds = array<i64: 2, 16, 32>}, {pipeline_mode = #tpu.pipeline_mode<synchronous>, transform_indices = @transform_20, window_bounds = array<i64: 4, 8, 16>}]} {
    %c0 = arith.constant 0 : index
    %c0_0 = arith.constant 0 : index
    %0 = vector.load %arg1[%c0, %c0_0] : memref<16x32xf32, #tpu.memory_space<vmem>>, vector<16x32xf32>
    %c0_1 = arith.constant 0 : index
    %c0_2 = arith.constant 0 : index
    %1 = vector.load %arg2[%c0_1, %c0_2] : memref<32x32xf32, #tpu.memory_space<vmem>>, vector<32x32xf32>
    %c0_3 = arith.constant 0 : index
    %c0_4 = arith.constant 0 : index
    %2 = vector.load %arg3[%c0_3, %c0_4] : memref<32x32xf32, #tpu.memory_space<vmem>>, vector<32x32xf32>
    %c0_5 = arith.constant 0 : index
    %c0_6 = arith.constant 0 : index
    %3 = vector.load %arg4[%c0_5, %c0_6] : memref<16x32xf32, #tpu.memory_space<vmem>>, vector<16x32xf32>
    %c0_7 = arith.constant 0 : index
    %c0_8 = arith.constant 0 : index
    %4 = vector.load %arg5[%c0_7, %c0_8] : memref<16x32xf32, #tpu.memory_space<vmem>>, vector<16x32xf32>
    %c0_9 = arith.constant 0 : index
    %c0_10 = arith.constant 0 : index
    %5 = vector.load %arg6[%c0_9, %c0_10] : memref<32x96xf32, #tpu.memory_space<vmem>>, vector<32x96xf32>
    %c0_11 = arith.constant 0 : index
    %c0_12 = arith.constant 0 : index
    %6 = vector.load %arg7[%c0_11, %c0_12] : memref<1x96xf32, #tpu.memory_space<vmem>>, vector<1x96xf32>
    %c0_13 = arith.constant 0 : index
    %c0_14 = arith.constant 0 : index
    %7 = vector.load %arg8[%c0_13, %c0_14] : memref<32x32xf32, #tpu.memory_space<vmem>>, vector<32x32xf32>
    %c0_15 = arith.constant 0 : index
    %c0_16 = arith.constant 0 : index
    %8 = vector.load %arg9[%c0_15, %c0_16] : memref<1x32xf32, #tpu.memory_space<vmem>>, vector<1x32xf32>
    %c0_17 = arith.constant 0 : index
    %c0_18 = arith.constant 0 : index
    %9 = vector.load %arg10[%c0_17, %c0_18] : memref<32x96xf32, #tpu.memory_space<vmem>>, vector<32x96xf32>
    %c0_19 = arith.constant 0 : index
    %c0_20 = arith.constant 0 : index
    %10 = vector.load %arg11[%c0_19, %c0_20] : memref<1x96xf32, #tpu.memory_space<vmem>>, vector<1x96xf32>
    %c0_21 = arith.constant 0 : index
    %c0_22 = arith.constant 0 : index
    %11 = vector.load %arg12[%c0_21, %c0_22] : memref<32x32xf32, #tpu.memory_space<vmem>>, vector<32x32xf32>
    %c0_23 = arith.constant 0 : index
    %c0_24 = arith.constant 0 : index
    %12 = vector.load %arg13[%c0_23, %c0_24] : memref<1x32xf32, #tpu.memory_space<vmem>>, vector<1x32xf32>
    %c0_25 = arith.constant 0 : index
    %c0_26 = arith.constant 0 : index
    %13 = vector.load %arg14[%c0_25, %c0_26] : memref<32x64xf32, #tpu.memory_space<vmem>>, vector<32x64xf32>
    %c0_27 = arith.constant 0 : index
    %c0_28 = arith.constant 0 : index
    %14 = vector.load %arg15[%c0_27, %c0_28] : memref<1x64xf32, #tpu.memory_space<vmem>>, vector<1x64xf32>
    %c0_29 = arith.constant 0 : index
    %c0_30 = arith.constant 0 : index
    %15 = vector.load %arg16[%c0_29, %c0_30] : memref<64x32xf32, #tpu.memory_space<vmem>>, vector<64x32xf32>
    %c0_31 = arith.constant 0 : index
    %c0_32 = arith.constant 0 : index
    %16 = vector.load %arg17[%c0_31, %c0_32] : memref<1x32xf32, #tpu.memory_space<vmem>>, vector<1x32xf32>
    %c0_33 = arith.constant 0 : index
    %c0_34 = arith.constant 0 : index
    %17 = vector.load %arg18[%c0_33, %c0_34] : memref<4x32xf32, #tpu.memory_space<vmem>>, vector<4x32xf32>
    %c0_35 = arith.constant 0 : index
    %c0_36 = arith.constant 0 : index
    %18 = vector.load %arg19[%c0_35, %c0_36] : memref<4x32xf32, #tpu.memory_space<vmem>>, vector<4x32xf32>
    %19 = arith.addf %3, %4 : vector<16x32xf32>
    %20 = arith.addf %1, %2 : vector<32x32xf32>
    %21 = arith.addf %0, %19 : vector<16x32xf32>
    %22 = vector.extract_strided_slice %5 {offsets = [0, 0], sizes = [32, 64], strides = [1, 1]} : vector<32x96xf32> to vector<32x64xf32>
    %cst = arith.constant dense<0.000000e+00> : vector<16x64xf32>
    %23 = tpu.matmul %21, %22, %cst {dimension_numbers = #tpu.dot_dimension_numbers<[1], [0], [0], [1], [0, 0, 1, 1], [], []>} : vector<16x32xf32>, vector<32x64xf32>, vector<16x64xf32> -> vector<16x64xf32>
    %24 = vector.extract_strided_slice %6 {offsets = [0, 0], sizes = [1, 64], strides = [1, 1]} : vector<1x96xf32> to vector<1x64xf32>
    %25 = vector.broadcast %24 : vector<1x64xf32> to vector<16x64xf32>
    %26 = arith.addf %23, %25 : vector<16x64xf32>
    %27 = vector.extract_strided_slice %26 {offsets = [0, 0], sizes = [16, 32], strides = [1, 1]} : vector<16x64xf32> to vector<16x32xf32>
    %28 = vector.extract_strided_slice %26 {offsets = [0, 32], sizes = [16, 32], strides = [1, 1]} : vector<16x64xf32> to vector<16x32xf32>
    %29 = vector.extract_strided_slice %5 {offsets = [0, 64], sizes = [32, 32], strides = [1, 1]} : vector<32x96xf32> to vector<32x32xf32>
    %cst_37 = arith.constant dense<0.000000e+00> : vector<16x32xf32>
    %30 = tpu.matmul %0, %29, %cst_37 {dimension_numbers = #tpu.dot_dimension_numbers<[1], [0], [0], [1], [0, 0, 1, 1], [], []>} : vector<16x32xf32>, vector<32x32xf32>, vector<16x32xf32> -> vector<16x32xf32>
    %31 = vector.extract_strided_slice %6 {offsets = [0, 64], sizes = [1, 32], strides = [1, 1]} : vector<1x96xf32> to vector<1x32xf32>
    %32 = vector.broadcast %31 : vector<1x32xf32> to vector<16x32xf32>
    %33 = arith.addf %30, %32 : vector<16x32xf32>
    %34 = vector.extract_strided_slice %27 {offsets = [0, 0], sizes = [8, 32], strides = [1, 1]} : vector<16x32xf32> to vector<8x32xf32>
    %35 = vector.extract_strided_slice %28 {offsets = [0, 0], sizes = [8, 32], strides = [1, 1]} : vector<16x32xf32> to vector<8x32xf32>
    %36 = vector.extract_strided_slice %33 {offsets = [0, 0], sizes = [8, 32], strides = [1, 1]} : vector<16x32xf32> to vector<8x32xf32>
    %37 = vector.extract_strided_slice %34 {offsets = [0, 0], sizes = [8, 8], strides = [1, 1]} : vector<8x32xf32> to vector<8x8xf32>
    %38 = vector.extract_strided_slice %35 {offsets = [0, 0], sizes = [8, 8], strides = [1, 1]} : vector<8x32xf32> to vector<8x8xf32>
    %cst_38 = arith.constant dense<0.000000e+00> : vector<8x8xf32>
    %39 = tpu.matmul %37, %38, %cst_38 {dimension_numbers = #tpu.dot_dimension_numbers<[1], [1], [0], [0], [0, 0, 1, 0], [], []>} : vector<8x8xf32>, vector<8x8xf32>, vector<8x8xf32> -> vector<8x8xf32>
    %cst_39 = arith.constant 0.353553385 : f32
    %40 = vector.broadcast %cst_39 : f32 to vector<8x8xf32>
    %41 = arith.mulf %39, %40 : vector<8x8xf32>
    %cst_40 = arith.constant dense<0xFF800000> : vector<8xf32>
    %42 = vector.multi_reduction <maximumf>, %41, %cst_40 [1] : vector<8x8xf32> to vector<8xf32>
    %43 = vector.shape_cast %42 : vector<8xf32> to vector<8x1xf32>
    %44 = vector.broadcast %43 : vector<8x1xf32> to vector<8x8xf32>
    %45 = arith.subf %41, %44 : vector<8x8xf32>
    %46 = math.exp %45 : vector<8x8xf32>
    %cst_41 = arith.constant dense<0.000000e+00> : vector<8xf32>
    %47 = vector.multi_reduction <add>, %46, %cst_41 [1] : vector<8x8xf32> to vector<8xf32>
    %48 = vector.shape_cast %47 : vector<8xf32> to vector<8x1xf32>
    %49 = tpu.reciprocal %48 {approx = true} : vector<8x1xf32> -> vector<8x1xf32>
    %50 = vector.broadcast %49 : vector<8x1xf32> to vector<8x8xf32>
    %51 = arith.mulf %46, %50 : vector<8x8xf32>
    %52 = vector.extract_strided_slice %36 {offsets = [0, 0], sizes = [8, 8], strides = [1, 1]} : vector<8x32xf32> to vector<8x8xf32>
    %cst_42 = arith.constant dense<0.000000e+00> : vector<8x8xf32>
    %53 = tpu.matmul %51, %52, %cst_42 {dimension_numbers = #tpu.dot_dimension_numbers<[1], [0], [0], [1], [0, 0, 1, 1], [], []>} : vector<8x8xf32>, vector<8x8xf32>, vector<8x8xf32> -> vector<8x8xf32>
    %54 = vector.extract_strided_slice %34 {offsets = [0, 8], sizes = [8, 8], strides = [1, 1]} : vector<8x32xf32> to vector<8x8xf32>
    %55 = vector.extract_strided_slice %35 {offsets = [0, 8], sizes = [8, 8], strides = [1, 1]} : vector<8x32xf32> to vector<8x8xf32>
    %cst_43 = arith.constant dense<0.000000e+00> : vector<8x8xf32>
    %56 = tpu.matmul %54, %55, %cst_43 {dimension_numbers = #tpu.dot_dimension_numbers<[1], [1], [0], [0], [0, 0, 1, 0], [], []>} : vector<8x8xf32>, vector<8x8xf32>, vector<8x8xf32> -> vector<8x8xf32>
    %cst_44 = arith.constant 0.353553385 : f32
    %57 = vector.broadcast %cst_44 : f32 to vector<8x8xf32>
    %58 = arith.mulf %56, %57 : vector<8x8xf32>
    %cst_45 = arith.constant dense<0xFF800000> : vector<8xf32>
    %59 = vector.multi_reduction <maximumf>, %58, %cst_45 [1] : vector<8x8xf32> to vector<8xf32>
    %60 = vector.shape_cast %59 : vector<8xf32> to vector<8x1xf32>
    %61 = vector.broadcast %60 : vector<8x1xf32> to vector<8x8xf32>
    %62 = arith.subf %58, %61 : vector<8x8xf32>
    %63 = math.exp %62 : vector<8x8xf32>
    %cst_46 = arith.constant dense<0.000000e+00> : vector<8xf32>
    %64 = vector.multi_reduction <add>, %63, %cst_46 [1] : vector<8x8xf32> to vector<8xf32>
    %65 = vector.shape_cast %64 : vector<8xf32> to vector<8x1xf32>
    %66 = tpu.reciprocal %65 {approx = true} : vector<8x1xf32> -> vector<8x1xf32>
    %67 = vector.broadcast %66 : vector<8x1xf32> to vector<8x8xf32>
    %68 = arith.mulf %63, %67 : vector<8x8xf32>
    %69 = vector.extract_strided_slice %36 {offsets = [0, 8], sizes = [8, 8], strides = [1, 1]} : vector<8x32xf32> to vector<8x8xf32>
    %cst_47 = arith.constant dense<0.000000e+00> : vector<8x8xf32>
    %70 = tpu.matmul %68, %69, %cst_47 {dimension_numbers = #tpu.dot_dimension_numbers<[1], [0], [0], [1], [0, 0, 1, 1], [], []>} : vector<8x8xf32>, vector<8x8xf32>, vector<8x8xf32> -> vector<8x8xf32>
    %71 = vector.extract_strided_slice %34 {offsets = [0, 16], sizes = [8, 8], strides = [1, 1]} : vector<8x32xf32> to vector<8x8xf32>
    %72 = vector.extract_strided_slice %35 {offsets = [0, 16], sizes = [8, 8], strides = [1, 1]} : vector<8x32xf32> to vector<8x8xf32>
    %cst_48 = arith.constant dense<0.000000e+00> : vector<8x8xf32>
    %73 = tpu.matmul %71, %72, %cst_48 {dimension_numbers = #tpu.dot_dimension_numbers<[1], [1], [0], [0], [0, 0, 1, 0], [], []>} : vector<8x8xf32>, vector<8x8xf32>, vector<8x8xf32> -> vector<8x8xf32>
    %cst_49 = arith.constant 0.353553385 : f32
    %74 = vector.broadcast %cst_49 : f32 to vector<8x8xf32>
    %75 = arith.mulf %73, %74 : vector<8x8xf32>
    %cst_50 = arith.constant dense<0xFF800000> : vector<8xf32>
    %76 = vector.multi_reduction <maximumf>, %75, %cst_50 [1] : vector<8x8xf32> to vector<8xf32>
    %77 = vector.shape_cast %76 : vector<8xf32> to vector<8x1xf32>
    %78 = vector.broadcast %77 : vector<8x1xf32> to vector<8x8xf32>
    %79 = arith.subf %75, %78 : vector<8x8xf32>
    %80 = math.exp %79 : vector<8x8xf32>
    %cst_51 = arith.constant dense<0.000000e+00> : vector<8xf32>
    %81 = vector.multi_reduction <add>, %80, %cst_51 [1] : vector<8x8xf32> to vector<8xf32>
    %82 = vector.shape_cast %81 : vector<8xf32> to vector<8x1xf32>
    %83 = tpu.reciprocal %82 {approx = true} : vector<8x1xf32> -> vector<8x1xf32>
    %84 = vector.broadcast %83 : vector<8x1xf32> to vector<8x8xf32>
    %85 = arith.mulf %80, %84 : vector<8x8xf32>
    %86 = vector.extract_strided_slice %36 {offsets = [0, 16], sizes = [8, 8], strides = [1, 1]} : vector<8x32xf32> to vector<8x8xf32>
    %cst_52 = arith.constant dense<0.000000e+00> : vector<8x8xf32>
    %87 = tpu.matmul %85, %86, %cst_52 {dimension_numbers = #tpu.dot_dimension_numbers<[1], [0], [0], [1], [0, 0, 1, 1], [], []>} : vector<8x8xf32>, vector<8x8xf32>, vector<8x8xf32> -> vector<8x8xf32>
    %88 = vector.extract_strided_slice %34 {offsets = [0, 24], sizes = [8, 8], strides = [1, 1]} : vector<8x32xf32> to vector<8x8xf32>
    %89 = vector.extract_strided_slice %35 {offsets = [0, 24], sizes = [8, 8], strides = [1, 1]} : vector<8x32xf32> to vector<8x8xf32>
    %cst_53 = arith.constant dense<0.000000e+00> : vector<8x8xf32>
    %90 = tpu.matmul %88, %89, %cst_53 {dimension_numbers = #tpu.dot_dimension_numbers<[1], [1], [0], [0], [0, 0, 1, 0], [], []>} : vector<8x8xf32>, vector<8x8xf32>, vector<8x8xf32> -> vector<8x8xf32>
    %cst_54 = arith.constant 0.353553385 : f32
    %91 = vector.broadcast %cst_54 : f32 to vector<8x8xf32>
    %92 = arith.mulf %90, %91 : vector<8x8xf32>
    %cst_55 = arith.constant dense<0xFF800000> : vector<8xf32>
    %93 = vector.multi_reduction <maximumf>, %92, %cst_55 [1] : vector<8x8xf32> to vector<8xf32>
    %94 = vector.shape_cast %93 : vector<8xf32> to vector<8x1xf32>
    %95 = vector.broadcast %94 : vector<8x1xf32> to vector<8x8xf32>
    %96 = arith.subf %92, %95 : vector<8x8xf32>
    %97 = math.exp %96 : vector<8x8xf32>
    %cst_56 = arith.constant dense<0.000000e+00> : vector<8xf32>
    %98 = vector.multi_reduction <add>, %97, %cst_56 [1] : vector<8x8xf32> to vector<8xf32>
    %99 = vector.shape_cast %98 : vector<8xf32> to vector<8x1xf32>
    %100 = tpu.reciprocal %99 {approx = true} : vector<8x1xf32> -> vector<8x1xf32>
    %101 = vector.broadcast %100 : vector<8x1xf32> to vector<8x8xf32>
    %102 = arith.mulf %97, %101 : vector<8x8xf32>
    %103 = vector.extract_strided_slice %36 {offsets = [0, 24], sizes = [8, 8], strides = [1, 1]} : vector<8x32xf32> to vector<8x8xf32>
    %cst_57 = arith.constant dense<0.000000e+00> : vector<8x8xf32>
    %104 = tpu.matmul %102, %103, %cst_57 {dimension_numbers = #tpu.dot_dimension_numbers<[1], [0], [0], [1], [0, 0, 1, 1], [], []>} : vector<8x8xf32>, vector<8x8xf32>, vector<8x8xf32> -> vector<8x8xf32>
    %105 = tpu.concatenate %53, %70, %87, %104 in 1 : vector<8x8xf32>, vector<8x8xf32>, vector<8x8xf32>, vector<8x8xf32> -> vector<8x32xf32>
    %106 = vector.extract_strided_slice %27 {offsets = [8, 0], sizes = [8, 32], strides = [1, 1]} : vector<16x32xf32> to vector<8x32xf32>
    %107 = vector.extract_strided_slice %28 {offsets = [8, 0], sizes = [8, 32], strides = [1, 1]} : vector<16x32xf32> to vector<8x32xf32>
    %108 = vector.extract_strided_slice %33 {offsets = [8, 0], sizes = [8, 32], strides = [1, 1]} : vector<16x32xf32> to vector<8x32xf32>
    %109 = vector.extract_strided_slice %106 {offsets = [0, 0], sizes = [8, 8], strides = [1, 1]} : vector<8x32xf32> to vector<8x8xf32>
    %110 = vector.extract_strided_slice %107 {offsets = [0, 0], sizes = [8, 8], strides = [1, 1]} : vector<8x32xf32> to vector<8x8xf32>
    %cst_58 = arith.constant dense<0.000000e+00> : vector<8x8xf32>
    %111 = tpu.matmul %109, %110, %cst_58 {dimension_numbers = #tpu.dot_dimension_numbers<[1], [1], [0], [0], [0, 0, 1, 0], [], []>} : vector<8x8xf32>, vector<8x8xf32>, vector<8x8xf32> -> vector<8x8xf32>
    %cst_59 = arith.constant 0.353553385 : f32
    %112 = vector.broadcast %cst_59 : f32 to vector<8x8xf32>
    %113 = arith.mulf %111, %112 : vector<8x8xf32>
    %cst_60 = arith.constant dense<0xFF800000> : vector<8xf32>
    %114 = vector.multi_reduction <maximumf>, %113, %cst_60 [1] : vector<8x8xf32> to vector<8xf32>
    %115 = vector.shape_cast %114 : vector<8xf32> to vector<8x1xf32>
    %116 = vector.broadcast %115 : vector<8x1xf32> to vector<8x8xf32>
    %117 = arith.subf %113, %116 : vector<8x8xf32>
    %118 = math.exp %117 : vector<8x8xf32>
    %cst_61 = arith.constant dense<0.000000e+00> : vector<8xf32>
    %119 = vector.multi_reduction <add>, %118, %cst_61 [1] : vector<8x8xf32> to vector<8xf32>
    %120 = vector.shape_cast %119 : vector<8xf32> to vector<8x1xf32>
    %121 = tpu.reciprocal %120 {approx = true} : vector<8x1xf32> -> vector<8x1xf32>
    %122 = vector.broadcast %121 : vector<8x1xf32> to vector<8x8xf32>
    %123 = arith.mulf %118, %122 : vector<8x8xf32>
    %124 = vector.extract_strided_slice %108 {offsets = [0, 0], sizes = [8, 8], strides = [1, 1]} : vector<8x32xf32> to vector<8x8xf32>
    %cst_62 = arith.constant dense<0.000000e+00> : vector<8x8xf32>
    %125 = tpu.matmul %123, %124, %cst_62 {dimension_numbers = #tpu.dot_dimension_numbers<[1], [0], [0], [1], [0, 0, 1, 1], [], []>} : vector<8x8xf32>, vector<8x8xf32>, vector<8x8xf32> -> vector<8x8xf32>
    %126 = vector.extract_strided_slice %106 {offsets = [0, 8], sizes = [8, 8], strides = [1, 1]} : vector<8x32xf32> to vector<8x8xf32>
    %127 = vector.extract_strided_slice %107 {offsets = [0, 8], sizes = [8, 8], strides = [1, 1]} : vector<8x32xf32> to vector<8x8xf32>
    %cst_63 = arith.constant dense<0.000000e+00> : vector<8x8xf32>
    %128 = tpu.matmul %126, %127, %cst_63 {dimension_numbers = #tpu.dot_dimension_numbers<[1], [1], [0], [0], [0, 0, 1, 0], [], []>} : vector<8x8xf32>, vector<8x8xf32>, vector<8x8xf32> -> vector<8x8xf32>
    %cst_64 = arith.constant 0.353553385 : f32
    %129 = vector.broadcast %cst_64 : f32 to vector<8x8xf32>
    %130 = arith.mulf %128, %129 : vector<8x8xf32>
    %cst_65 = arith.constant dense<0xFF800000> : vector<8xf32>
    %131 = vector.multi_reduction <maximumf>, %130, %cst_65 [1] : vector<8x8xf32> to vector<8xf32>
    %132 = vector.shape_cast %131 : vector<8xf32> to vector<8x1xf32>
    %133 = vector.broadcast %132 : vector<8x1xf32> to vector<8x8xf32>
    %134 = arith.subf %130, %133 : vector<8x8xf32>
    %135 = math.exp %134 : vector<8x8xf32>
    %cst_66 = arith.constant dense<0.000000e+00> : vector<8xf32>
    %136 = vector.multi_reduction <add>, %135, %cst_66 [1] : vector<8x8xf32> to vector<8xf32>
    %137 = vector.shape_cast %136 : vector<8xf32> to vector<8x1xf32>
    %138 = tpu.reciprocal %137 {approx = true} : vector<8x1xf32> -> vector<8x1xf32>
    %139 = vector.broadcast %138 : vector<8x1xf32> to vector<8x8xf32>
    %140 = arith.mulf %135, %139 : vector<8x8xf32>
    %141 = vector.extract_strided_slice %108 {offsets = [0, 8], sizes = [8, 8], strides = [1, 1]} : vector<8x32xf32> to vector<8x8xf32>
    %cst_67 = arith.constant dense<0.000000e+00> : vector<8x8xf32>
    %142 = tpu.matmul %140, %141, %cst_67 {dimension_numbers = #tpu.dot_dimension_numbers<[1], [0], [0], [1], [0, 0, 1, 1], [], []>} : vector<8x8xf32>, vector<8x8xf32>, vector<8x8xf32> -> vector<8x8xf32>
    %143 = vector.extract_strided_slice %106 {offsets = [0, 16], sizes = [8, 8], strides = [1, 1]} : vector<8x32xf32> to vector<8x8xf32>
    %144 = vector.extract_strided_slice %107 {offsets = [0, 16], sizes = [8, 8], strides = [1, 1]} : vector<8x32xf32> to vector<8x8xf32>
    %cst_68 = arith.constant dense<0.000000e+00> : vector<8x8xf32>
    %145 = tpu.matmul %143, %144, %cst_68 {dimension_numbers = #tpu.dot_dimension_numbers<[1], [1], [0], [0], [0, 0, 1, 0], [], []>} : vector<8x8xf32>, vector<8x8xf32>, vector<8x8xf32> -> vector<8x8xf32>
    %cst_69 = arith.constant 0.353553385 : f32
    %146 = vector.broadcast %cst_69 : f32 to vector<8x8xf32>
    %147 = arith.mulf %145, %146 : vector<8x8xf32>
    %cst_70 = arith.constant dense<0xFF800000> : vector<8xf32>
    %148 = vector.multi_reduction <maximumf>, %147, %cst_70 [1] : vector<8x8xf32> to vector<8xf32>
    %149 = vector.shape_cast %148 : vector<8xf32> to vector<8x1xf32>
    %150 = vector.broadcast %149 : vector<8x1xf32> to vector<8x8xf32>
    %151 = arith.subf %147, %150 : vector<8x8xf32>
    %152 = math.exp %151 : vector<8x8xf32>
    %cst_71 = arith.constant dense<0.000000e+00> : vector<8xf32>
    %153 = vector.multi_reduction <add>, %152, %cst_71 [1] : vector<8x8xf32> to vector<8xf32>
    %154 = vector.shape_cast %153 : vector<8xf32> to vector<8x1xf32>
    %155 = tpu.reciprocal %154 {approx = true} : vector<8x1xf32> -> vector<8x1xf32>
    %156 = vector.broadcast %155 : vector<8x1xf32> to vector<8x8xf32>
    %157 = arith.mulf %152, %156 : vector<8x8xf32>
    %158 = vector.extract_strided_slice %108 {offsets = [0, 16], sizes = [8, 8], strides = [1, 1]} : vector<8x32xf32> to vector<8x8xf32>
    %cst_72 = arith.constant dense<0.000000e+00> : vector<8x8xf32>
    %159 = tpu.matmul %157, %158, %cst_72 {dimension_numbers = #tpu.dot_dimension_numbers<[1], [0], [0], [1], [0, 0, 1, 1], [], []>} : vector<8x8xf32>, vector<8x8xf32>, vector<8x8xf32> -> vector<8x8xf32>
    %160 = vector.extract_strided_slice %106 {offsets = [0, 24], sizes = [8, 8], strides = [1, 1]} : vector<8x32xf32> to vector<8x8xf32>
    %161 = vector.extract_strided_slice %107 {offsets = [0, 24], sizes = [8, 8], strides = [1, 1]} : vector<8x32xf32> to vector<8x8xf32>
    %cst_73 = arith.constant dense<0.000000e+00> : vector<8x8xf32>
    %162 = tpu.matmul %160, %161, %cst_73 {dimension_numbers = #tpu.dot_dimension_numbers<[1], [1], [0], [0], [0, 0, 1, 0], [], []>} : vector<8x8xf32>, vector<8x8xf32>, vector<8x8xf32> -> vector<8x8xf32>
    %cst_74 = arith.constant 0.353553385 : f32
    %163 = vector.broadcast %cst_74 : f32 to vector<8x8xf32>
    %164 = arith.mulf %162, %163 : vector<8x8xf32>
    %cst_75 = arith.constant dense<0xFF800000> : vector<8xf32>
    %165 = vector.multi_reduction <maximumf>, %164, %cst_75 [1] : vector<8x8xf32> to vector<8xf32>
    %166 = vector.shape_cast %165 : vector<8xf32> to vector<8x1xf32>
    %167 = vector.broadcast %166 : vector<8x1xf32> to vector<8x8xf32>
    %168 = arith.subf %164, %167 : vector<8x8xf32>
    %169 = math.exp %168 : vector<8x8xf32>
    %cst_76 = arith.constant dense<0.000000e+00> : vector<8xf32>
    %170 = vector.multi_reduction <add>, %169, %cst_76 [1] : vector<8x8xf32> to vector<8xf32>
    %171 = vector.shape_cast %170 : vector<8xf32> to vector<8x1xf32>
    %172 = tpu.reciprocal %171 {approx = true} : vector<8x1xf32> -> vector<8x1xf32>
    %173 = vector.broadcast %172 : vector<8x1xf32> to vector<8x8xf32>
    %174 = arith.mulf %169, %173 : vector<8x8xf32>
    %175 = vector.extract_strided_slice %108 {offsets = [0, 24], sizes = [8, 8], strides = [1, 1]} : vector<8x32xf32> to vector<8x8xf32>
    %cst_77 = arith.constant dense<0.000000e+00> : vector<8x8xf32>
    %176 = tpu.matmul %174, %175, %cst_77 {dimension_numbers = #tpu.dot_dimension_numbers<[1], [0], [0], [1], [0, 0, 1, 1], [], []>} : vector<8x8xf32>, vector<8x8xf32>, vector<8x8xf32> -> vector<8x8xf32>
    %177 = tpu.concatenate %125, %142, %159, %176 in 1 : vector<8x8xf32>, vector<8x8xf32>, vector<8x8xf32>, vector<8x8xf32> -> vector<8x32xf32>
    %178 = tpu.concatenate %105, %177 in 0 : vector<8x32xf32>, vector<8x32xf32> -> vector<16x32xf32>
    %cst_78 = arith.constant dense<0.000000e+00> : vector<16x32xf32>
    %179 = tpu.matmul %178, %7, %cst_78 {dimension_numbers = #tpu.dot_dimension_numbers<[1], [0], [0], [1], [0, 0, 1, 1], [], []>} : vector<16x32xf32>, vector<32x32xf32>, vector<16x32xf32> -> vector<16x32xf32>
    %180 = vector.broadcast %8 : vector<1x32xf32> to vector<16x32xf32>
    %181 = arith.addf %179, %180 : vector<16x32xf32>
    %182 = arith.addf %0, %181 : vector<16x32xf32>
    %183 = vector.extract_strided_slice %17 {offsets = [0, 0], sizes = [1, 32], strides = [1, 1]} : vector<4x32xf32> to vector<1x32xf32>
    %184 = vector.extract_strided_slice %18 {offsets = [0, 0], sizes = [1, 32], strides = [1, 1]} : vector<4x32xf32> to vector<1x32xf32>
    %cst_79 = arith.constant dense<0.000000e+00> : vector<16xf32>
    %185 = vector.multi_reduction <add>, %182, %cst_79 [1] : vector<16x32xf32> to vector<16xf32>
    %186 = vector.shape_cast %185 : vector<16xf32> to vector<16x1xf32>
    %cst_80 = arith.constant 3.200000e+01 : f32
    %187 = vector.broadcast %cst_80 : f32 to vector<16x1xf32>
    %188 = arith.divf %186, %187 : vector<16x1xf32>
    %189 = vector.broadcast %188 : vector<16x1xf32> to vector<16x32xf32>
    %190 = arith.subf %182, %189 : vector<16x32xf32>
    %191 = arith.mulf %190, %190 : vector<16x32xf32>
    %cst_81 = arith.constant dense<0.000000e+00> : vector<16xf32>
    %192 = vector.multi_reduction <add>, %191, %cst_81 [1] : vector<16x32xf32> to vector<16xf32>
    %193 = vector.shape_cast %192 : vector<16xf32> to vector<16x1xf32>
    %cst_82 = arith.constant 3.200000e+01 : f32
    %194 = vector.broadcast %cst_82 : f32 to vector<16x1xf32>
    %195 = arith.divf %193, %194 : vector<16x1xf32>
    %196 = vector.broadcast %188 : vector<16x1xf32> to vector<16x32xf32>
    %197 = arith.subf %182, %196 : vector<16x32xf32>
    %cst_83 = arith.constant 9.99999974E-6 : f32
    %198 = vector.broadcast %cst_83 : f32 to vector<16x1xf32>
    %199 = arith.addf %195, %198 : vector<16x1xf32>
    %200 = math.rsqrt %199 : vector<16x1xf32>
    %201 = vector.broadcast %200 : vector<16x1xf32> to vector<16x32xf32>
    %202 = arith.mulf %197, %201 : vector<16x32xf32>
    %203 = vector.broadcast %183 : vector<1x32xf32> to vector<16x32xf32>
    %204 = arith.mulf %202, %203 : vector<16x32xf32>
    %205 = vector.broadcast %184 : vector<1x32xf32> to vector<16x32xf32>
    %206 = arith.addf %204, %205 : vector<16x32xf32>
    %207 = arith.addf %206, %3 : vector<16x32xf32>
    %208 = vector.extract_strided_slice %9 {offsets = [0, 0], sizes = [32, 32], strides = [1, 1]} : vector<32x96xf32> to vector<32x32xf32>
    %cst_84 = arith.constant dense<0.000000e+00> : vector<16x32xf32>
    %209 = tpu.matmul %207, %208, %cst_84 {dimension_numbers = #tpu.dot_dimension_numbers<[1], [0], [0], [1], [0, 0, 1, 1], [], []>} : vector<16x32xf32>, vector<32x32xf32>, vector<16x32xf32> -> vector<16x32xf32>
    %210 = vector.extract_strided_slice %10 {offsets = [0, 0], sizes = [1, 32], strides = [1, 1]} : vector<1x96xf32> to vector<1x32xf32>
    %211 = vector.broadcast %210 : vector<1x32xf32> to vector<16x32xf32>
    %212 = arith.addf %209, %211 : vector<16x32xf32>
    %213 = vector.extract_strided_slice %9 {offsets = [0, 32], sizes = [32, 32], strides = [1, 1]} : vector<32x96xf32> to vector<32x32xf32>
    %cst_85 = arith.constant dense<0.000000e+00> : vector<32x32xf32>
    %214 = tpu.matmul %20, %213, %cst_85 {dimension_numbers = #tpu.dot_dimension_numbers<[1], [0], [0], [1], [0, 0, 1, 1], [], []>} : vector<32x32xf32>, vector<32x32xf32>, vector<32x32xf32> -> vector<32x32xf32>
    %215 = vector.extract_strided_slice %10 {offsets = [0, 32], sizes = [1, 32], strides = [1, 1]} : vector<1x96xf32> to vector<1x32xf32>
    %216 = vector.broadcast %215 : vector<1x32xf32> to vector<32x32xf32>
    %217 = arith.addf %214, %216 : vector<32x32xf32>
    %218 = vector.extract_strided_slice %9 {offsets = [0, 64], sizes = [32, 32], strides = [1, 1]} : vector<32x96xf32> to vector<32x32xf32>
    %cst_86 = arith.constant dense<0.000000e+00> : vector<32x32xf32>
    %219 = tpu.matmul %1, %218, %cst_86 {dimension_numbers = #tpu.dot_dimension_numbers<[1], [0], [0], [1], [0, 0, 1, 1], [], []>} : vector<32x32xf32>, vector<32x32xf32>, vector<32x32xf32> -> vector<32x32xf32>
    %220 = vector.extract_strided_slice %10 {offsets = [0, 64], sizes = [1, 32], strides = [1, 1]} : vector<1x96xf32> to vector<1x32xf32>
    %221 = vector.broadcast %220 : vector<1x32xf32> to vector<32x32xf32>
    %222 = arith.addf %219, %221 : vector<32x32xf32>
    %223 = vector.extract_strided_slice %212 {offsets = [0, 0], sizes = [8, 32], strides = [1, 1]} : vector<16x32xf32> to vector<8x32xf32>
    %224 = vector.extract_strided_slice %217 {offsets = [0, 0], sizes = [16, 32], strides = [1, 1]} : vector<32x32xf32> to vector<16x32xf32>
    %225 = vector.extract_strided_slice %222 {offsets = [0, 0], sizes = [16, 32], strides = [1, 1]} : vector<32x32xf32> to vector<16x32xf32>
    %226 = vector.extract_strided_slice %223 {offsets = [0, 0], sizes = [8, 8], strides = [1, 1]} : vector<8x32xf32> to vector<8x8xf32>
    %227 = vector.extract_strided_slice %224 {offsets = [0, 0], sizes = [16, 8], strides = [1, 1]} : vector<16x32xf32> to vector<16x8xf32>
    %cst_87 = arith.constant dense<0.000000e+00> : vector<8x16xf32>
    %228 = tpu.matmul %226, %227, %cst_87 {dimension_numbers = #tpu.dot_dimension_numbers<[1], [1], [0], [0], [0, 0, 1, 0], [], []>} : vector<8x8xf32>, vector<16x8xf32>, vector<8x16xf32> -> vector<8x16xf32>
    %cst_88 = arith.constant 0.353553385 : f32
    %229 = vector.broadcast %cst_88 : f32 to vector<8x16xf32>
    %230 = arith.mulf %228, %229 : vector<8x16xf32>
    %cst_89 = arith.constant dense<0xFF800000> : vector<8xf32>
    %231 = vector.multi_reduction <maximumf>, %230, %cst_89 [1] : vector<8x16xf32> to vector<8xf32>
    %232 = vector.shape_cast %231 : vector<8xf32> to vector<8x1xf32>
    %233 = vector.broadcast %232 : vector<8x1xf32> to vector<8x16xf32>
    %234 = arith.subf %230, %233 : vector<8x16xf32>
    %235 = math.exp %234 : vector<8x16xf32>
    %cst_90 = arith.constant dense<0.000000e+00> : vector<8xf32>
    %236 = vector.multi_reduction <add>, %235, %cst_90 [1] : vector<8x16xf32> to vector<8xf32>
    %237 = vector.shape_cast %236 : vector<8xf32> to vector<8x1xf32>
    %238 = tpu.reciprocal %237 {approx = true} : vector<8x1xf32> -> vector<8x1xf32>
    %239 = vector.broadcast %238 : vector<8x1xf32> to vector<8x16xf32>
    %240 = arith.mulf %235, %239 : vector<8x16xf32>
    %241 = vector.extract_strided_slice %225 {offsets = [0, 0], sizes = [16, 8], strides = [1, 1]} : vector<16x32xf32> to vector<16x8xf32>
    %cst_91 = arith.constant dense<0.000000e+00> : vector<8x8xf32>
    %242 = tpu.matmul %240, %241, %cst_91 {dimension_numbers = #tpu.dot_dimension_numbers<[1], [0], [0], [1], [0, 0, 1, 1], [], []>} : vector<8x16xf32>, vector<16x8xf32>, vector<8x8xf32> -> vector<8x8xf32>
    %243 = vector.extract_strided_slice %223 {offsets = [0, 8], sizes = [8, 8], strides = [1, 1]} : vector<8x32xf32> to vector<8x8xf32>
    %244 = vector.extract_strided_slice %224 {offsets = [0, 8], sizes = [16, 8], strides = [1, 1]} : vector<16x32xf32> to vector<16x8xf32>
    %cst_92 = arith.constant dense<0.000000e+00> : vector<8x16xf32>
    %245 = tpu.matmul %243, %244, %cst_92 {dimension_numbers = #tpu.dot_dimension_numbers<[1], [1], [0], [0], [0, 0, 1, 0], [], []>} : vector<8x8xf32>, vector<16x8xf32>, vector<8x16xf32> -> vector<8x16xf32>
    %cst_93 = arith.constant 0.353553385 : f32
    %246 = vector.broadcast %cst_93 : f32 to vector<8x16xf32>
    %247 = arith.mulf %245, %246 : vector<8x16xf32>
    %cst_94 = arith.constant dense<0xFF800000> : vector<8xf32>
    %248 = vector.multi_reduction <maximumf>, %247, %cst_94 [1] : vector<8x16xf32> to vector<8xf32>
    %249 = vector.shape_cast %248 : vector<8xf32> to vector<8x1xf32>
    %250 = vector.broadcast %249 : vector<8x1xf32> to vector<8x16xf32>
    %251 = arith.subf %247, %250 : vector<8x16xf32>
    %252 = math.exp %251 : vector<8x16xf32>
    %cst_95 = arith.constant dense<0.000000e+00> : vector<8xf32>
    %253 = vector.multi_reduction <add>, %252, %cst_95 [1] : vector<8x16xf32> to vector<8xf32>
    %254 = vector.shape_cast %253 : vector<8xf32> to vector<8x1xf32>
    %255 = tpu.reciprocal %254 {approx = true} : vector<8x1xf32> -> vector<8x1xf32>
    %256 = vector.broadcast %255 : vector<8x1xf32> to vector<8x16xf32>
    %257 = arith.mulf %252, %256 : vector<8x16xf32>
    %258 = vector.extract_strided_slice %225 {offsets = [0, 8], sizes = [16, 8], strides = [1, 1]} : vector<16x32xf32> to vector<16x8xf32>
    %cst_96 = arith.constant dense<0.000000e+00> : vector<8x8xf32>
    %259 = tpu.matmul %257, %258, %cst_96 {dimension_numbers = #tpu.dot_dimension_numbers<[1], [0], [0], [1], [0, 0, 1, 1], [], []>} : vector<8x16xf32>, vector<16x8xf32>, vector<8x8xf32> -> vector<8x8xf32>
    %260 = arith.addf %240, %257 : vector<8x16xf32>
    %261 = vector.extract_strided_slice %223 {offsets = [0, 16], sizes = [8, 8], strides = [1, 1]} : vector<8x32xf32> to vector<8x8xf32>
    %262 = vector.extract_strided_slice %224 {offsets = [0, 16], sizes = [16, 8], strides = [1, 1]} : vector<16x32xf32> to vector<16x8xf32>
    %cst_97 = arith.constant dense<0.000000e+00> : vector<8x16xf32>
    %263 = tpu.matmul %261, %262, %cst_97 {dimension_numbers = #tpu.dot_dimension_numbers<[1], [1], [0], [0], [0, 0, 1, 0], [], []>} : vector<8x8xf32>, vector<16x8xf32>, vector<8x16xf32> -> vector<8x16xf32>
    %cst_98 = arith.constant 0.353553385 : f32
    %264 = vector.broadcast %cst_98 : f32 to vector<8x16xf32>
    %265 = arith.mulf %263, %264 : vector<8x16xf32>
    %cst_99 = arith.constant dense<0xFF800000> : vector<8xf32>
    %266 = vector.multi_reduction <maximumf>, %265, %cst_99 [1] : vector<8x16xf32> to vector<8xf32>
    %267 = vector.shape_cast %266 : vector<8xf32> to vector<8x1xf32>
    %268 = vector.broadcast %267 : vector<8x1xf32> to vector<8x16xf32>
    %269 = arith.subf %265, %268 : vector<8x16xf32>
    %270 = math.exp %269 : vector<8x16xf32>
    %cst_100 = arith.constant dense<0.000000e+00> : vector<8xf32>
    %271 = vector.multi_reduction <add>, %270, %cst_100 [1] : vector<8x16xf32> to vector<8xf32>
    %272 = vector.shape_cast %271 : vector<8xf32> to vector<8x1xf32>
    %273 = tpu.reciprocal %272 {approx = true} : vector<8x1xf32> -> vector<8x1xf32>
    %274 = vector.broadcast %273 : vector<8x1xf32> to vector<8x16xf32>
    %275 = arith.mulf %270, %274 : vector<8x16xf32>
    %276 = vector.extract_strided_slice %225 {offsets = [0, 16], sizes = [16, 8], strides = [1, 1]} : vector<16x32xf32> to vector<16x8xf32>
    %cst_101 = arith.constant dense<0.000000e+00> : vector<8x8xf32>
    %277 = tpu.matmul %275, %276, %cst_101 {dimension_numbers = #tpu.dot_dimension_numbers<[1], [0], [0], [1], [0, 0, 1, 1], [], []>} : vector<8x16xf32>, vector<16x8xf32>, vector<8x8xf32> -> vector<8x8xf32>
    %278 = arith.addf %260, %275 : vector<8x16xf32>
    %279 = vector.extract_strided_slice %223 {offsets = [0, 24], sizes = [8, 8], strides = [1, 1]} : vector<8x32xf32> to vector<8x8xf32>
    %280 = vector.extract_strided_slice %224 {offsets = [0, 24], sizes = [16, 8], strides = [1, 1]} : vector<16x32xf32> to vector<16x8xf32>
    %cst_102 = arith.constant dense<0.000000e+00> : vector<8x16xf32>
    %281 = tpu.matmul %279, %280, %cst_102 {dimension_numbers = #tpu.dot_dimension_numbers<[1], [1], [0], [0], [0, 0, 1, 0], [], []>} : vector<8x8xf32>, vector<16x8xf32>, vector<8x16xf32> -> vector<8x16xf32>
    %cst_103 = arith.constant 0.353553385 : f32
    %282 = vector.broadcast %cst_103 : f32 to vector<8x16xf32>
    %283 = arith.mulf %281, %282 : vector<8x16xf32>
    %cst_104 = arith.constant dense<0xFF800000> : vector<8xf32>
    %284 = vector.multi_reduction <maximumf>, %283, %cst_104 [1] : vector<8x16xf32> to vector<8xf32>
    %285 = vector.shape_cast %284 : vector<8xf32> to vector<8x1xf32>
    %286 = vector.broadcast %285 : vector<8x1xf32> to vector<8x16xf32>
    %287 = arith.subf %283, %286 : vector<8x16xf32>
    %288 = math.exp %287 : vector<8x16xf32>
    %cst_105 = arith.constant dense<0.000000e+00> : vector<8xf32>
    %289 = vector.multi_reduction <add>, %288, %cst_105 [1] : vector<8x16xf32> to vector<8xf32>
    %290 = vector.shape_cast %289 : vector<8xf32> to vector<8x1xf32>
    %291 = tpu.reciprocal %290 {approx = true} : vector<8x1xf32> -> vector<8x1xf32>
    %292 = vector.broadcast %291 : vector<8x1xf32> to vector<8x16xf32>
    %293 = arith.mulf %288, %292 : vector<8x16xf32>
    %294 = vector.extract_strided_slice %225 {offsets = [0, 24], sizes = [16, 8], strides = [1, 1]} : vector<16x32xf32> to vector<16x8xf32>
    %cst_106 = arith.constant dense<0.000000e+00> : vector<8x8xf32>
    %295 = tpu.matmul %293, %294, %cst_106 {dimension_numbers = #tpu.dot_dimension_numbers<[1], [0], [0], [1], [0, 0, 1, 1], [], []>} : vector<8x16xf32>, vector<16x8xf32>, vector<8x8xf32> -> vector<8x8xf32>
    %296 = arith.addf %278, %293 : vector<8x16xf32>
    %297 = tpu.concatenate %242, %259, %277, %295 in 1 : vector<8x8xf32>, vector<8x8xf32>, vector<8x8xf32>, vector<8x8xf32> -> vector<8x32xf32>
    %cst_107 = arith.constant 2.500000e-01 : f32
    %298 = vector.broadcast %cst_107 : f32 to vector<8x16xf32>
    %299 = arith.mulf %296, %298 : vector<8x16xf32>
    %300 = vector.extract_strided_slice %212 {offsets = [8, 0], sizes = [8, 32], strides = [1, 1]} : vector<16x32xf32> to vector<8x32xf32>
    %301 = vector.extract_strided_slice %217 {offsets = [16, 0], sizes = [16, 32], strides = [1, 1]} : vector<32x32xf32> to vector<16x32xf32>
    %302 = vector.extract_strided_slice %222 {offsets = [16, 0], sizes = [16, 32], strides = [1, 1]} : vector<32x32xf32> to vector<16x32xf32>
    %303 = vector.extract_strided_slice %300 {offsets = [0, 0], sizes = [8, 8], strides = [1, 1]} : vector<8x32xf32> to vector<8x8xf32>
    %304 = vector.extract_strided_slice %301 {offsets = [0, 0], sizes = [16, 8], strides = [1, 1]} : vector<16x32xf32> to vector<16x8xf32>
    %cst_108 = arith.constant dense<0.000000e+00> : vector<8x16xf32>
    %305 = tpu.matmul %303, %304, %cst_108 {dimension_numbers = #tpu.dot_dimension_numbers<[1], [1], [0], [0], [0, 0, 1, 0], [], []>} : vector<8x8xf32>, vector<16x8xf32>, vector<8x16xf32> -> vector<8x16xf32>
    %cst_109 = arith.constant 0.353553385 : f32
    %306 = vector.broadcast %cst_109 : f32 to vector<8x16xf32>
    %307 = arith.mulf %305, %306 : vector<8x16xf32>
    %cst_110 = arith.constant dense<0xFF800000> : vector<8xf32>
    %308 = vector.multi_reduction <maximumf>, %307, %cst_110 [1] : vector<8x16xf32> to vector<8xf32>
    %309 = vector.shape_cast %308 : vector<8xf32> to vector<8x1xf32>
    %310 = vector.broadcast %309 : vector<8x1xf32> to vector<8x16xf32>
    %311 = arith.subf %307, %310 : vector<8x16xf32>
    %312 = math.exp %311 : vector<8x16xf32>
    %cst_111 = arith.constant dense<0.000000e+00> : vector<8xf32>
    %313 = vector.multi_reduction <add>, %312, %cst_111 [1] : vector<8x16xf32> to vector<8xf32>
    %314 = vector.shape_cast %313 : vector<8xf32> to vector<8x1xf32>
    %315 = tpu.reciprocal %314 {approx = true} : vector<8x1xf32> -> vector<8x1xf32>
    %316 = vector.broadcast %315 : vector<8x1xf32> to vector<8x16xf32>
    %317 = arith.mulf %312, %316 : vector<8x16xf32>
    %318 = vector.extract_strided_slice %302 {offsets = [0, 0], sizes = [16, 8], strides = [1, 1]} : vector<16x32xf32> to vector<16x8xf32>
    %cst_112 = arith.constant dense<0.000000e+00> : vector<8x8xf32>
    %319 = tpu.matmul %317, %318, %cst_112 {dimension_numbers = #tpu.dot_dimension_numbers<[1], [0], [0], [1], [0, 0, 1, 1], [], []>} : vector<8x16xf32>, vector<16x8xf32>, vector<8x8xf32> -> vector<8x8xf32>
    %320 = vector.extract_strided_slice %300 {offsets = [0, 8], sizes = [8, 8], strides = [1, 1]} : vector<8x32xf32> to vector<8x8xf32>
    %321 = vector.extract_strided_slice %301 {offsets = [0, 8], sizes = [16, 8], strides = [1, 1]} : vector<16x32xf32> to vector<16x8xf32>
    %cst_113 = arith.constant dense<0.000000e+00> : vector<8x16xf32>
    %322 = tpu.matmul %320, %321, %cst_113 {dimension_numbers = #tpu.dot_dimension_numbers<[1], [1], [0], [0], [0, 0, 1, 0], [], []>} : vector<8x8xf32>, vector<16x8xf32>, vector<8x16xf32> -> vector<8x16xf32>
    %cst_114 = arith.constant 0.353553385 : f32
    %323 = vector.broadcast %cst_114 : f32 to vector<8x16xf32>
    %324 = arith.mulf %322, %323 : vector<8x16xf32>
    %cst_115 = arith.constant dense<0xFF800000> : vector<8xf32>
    %325 = vector.multi_reduction <maximumf>, %324, %cst_115 [1] : vector<8x16xf32> to vector<8xf32>
    %326 = vector.shape_cast %325 : vector<8xf32> to vector<8x1xf32>
    %327 = vector.broadcast %326 : vector<8x1xf32> to vector<8x16xf32>
    %328 = arith.subf %324, %327 : vector<8x16xf32>
    %329 = math.exp %328 : vector<8x16xf32>
    %cst_116 = arith.constant dense<0.000000e+00> : vector<8xf32>
    %330 = vector.multi_reduction <add>, %329, %cst_116 [1] : vector<8x16xf32> to vector<8xf32>
    %331 = vector.shape_cast %330 : vector<8xf32> to vector<8x1xf32>
    %332 = tpu.reciprocal %331 {approx = true} : vector<8x1xf32> -> vector<8x1xf32>
    %333 = vector.broadcast %332 : vector<8x1xf32> to vector<8x16xf32>
    %334 = arith.mulf %329, %333 : vector<8x16xf32>
    %335 = vector.extract_strided_slice %302 {offsets = [0, 8], sizes = [16, 8], strides = [1, 1]} : vector<16x32xf32> to vector<16x8xf32>
    %cst_117 = arith.constant dense<0.000000e+00> : vector<8x8xf32>
    %336 = tpu.matmul %334, %335, %cst_117 {dimension_numbers = #tpu.dot_dimension_numbers<[1], [0], [0], [1], [0, 0, 1, 1], [], []>} : vector<8x16xf32>, vector<16x8xf32>, vector<8x8xf32> -> vector<8x8xf32>
    %337 = arith.addf %317, %334 : vector<8x16xf32>
    %338 = vector.extract_strided_slice %300 {offsets = [0, 16], sizes = [8, 8], strides = [1, 1]} : vector<8x32xf32> to vector<8x8xf32>
    %339 = vector.extract_strided_slice %301 {offsets = [0, 16], sizes = [16, 8], strides = [1, 1]} : vector<16x32xf32> to vector<16x8xf32>
    %cst_118 = arith.constant dense<0.000000e+00> : vector<8x16xf32>
    %340 = tpu.matmul %338, %339, %cst_118 {dimension_numbers = #tpu.dot_dimension_numbers<[1], [1], [0], [0], [0, 0, 1, 0], [], []>} : vector<8x8xf32>, vector<16x8xf32>, vector<8x16xf32> -> vector<8x16xf32>
    %cst_119 = arith.constant 0.353553385 : f32
    %341 = vector.broadcast %cst_119 : f32 to vector<8x16xf32>
    %342 = arith.mulf %340, %341 : vector<8x16xf32>
    %cst_120 = arith.constant dense<0xFF800000> : vector<8xf32>
    %343 = vector.multi_reduction <maximumf>, %342, %cst_120 [1] : vector<8x16xf32> to vector<8xf32>
    %344 = vector.shape_cast %343 : vector<8xf32> to vector<8x1xf32>
    %345 = vector.broadcast %344 : vector<8x1xf32> to vector<8x16xf32>
    %346 = arith.subf %342, %345 : vector<8x16xf32>
    %347 = math.exp %346 : vector<8x16xf32>
    %cst_121 = arith.constant dense<0.000000e+00> : vector<8xf32>
    %348 = vector.multi_reduction <add>, %347, %cst_121 [1] : vector<8x16xf32> to vector<8xf32>
    %349 = vector.shape_cast %348 : vector<8xf32> to vector<8x1xf32>
    %350 = tpu.reciprocal %349 {approx = true} : vector<8x1xf32> -> vector<8x1xf32>
    %351 = vector.broadcast %350 : vector<8x1xf32> to vector<8x16xf32>
    %352 = arith.mulf %347, %351 : vector<8x16xf32>
    %353 = vector.extract_strided_slice %302 {offsets = [0, 16], sizes = [16, 8], strides = [1, 1]} : vector<16x32xf32> to vector<16x8xf32>
    %cst_122 = arith.constant dense<0.000000e+00> : vector<8x8xf32>
    %354 = tpu.matmul %352, %353, %cst_122 {dimension_numbers = #tpu.dot_dimension_numbers<[1], [0], [0], [1], [0, 0, 1, 1], [], []>} : vector<8x16xf32>, vector<16x8xf32>, vector<8x8xf32> -> vector<8x8xf32>
    %355 = arith.addf %337, %352 : vector<8x16xf32>
    %356 = vector.extract_strided_slice %300 {offsets = [0, 24], sizes = [8, 8], strides = [1, 1]} : vector<8x32xf32> to vector<8x8xf32>
    %357 = vector.extract_strided_slice %301 {offsets = [0, 24], sizes = [16, 8], strides = [1, 1]} : vector<16x32xf32> to vector<16x8xf32>
    %cst_123 = arith.constant dense<0.000000e+00> : vector<8x16xf32>
    %358 = tpu.matmul %356, %357, %cst_123 {dimension_numbers = #tpu.dot_dimension_numbers<[1], [1], [0], [0], [0, 0, 1, 0], [], []>} : vector<8x8xf32>, vector<16x8xf32>, vector<8x16xf32> -> vector<8x16xf32>
    %cst_124 = arith.constant 0.353553385 : f32
    %359 = vector.broadcast %cst_124 : f32 to vector<8x16xf32>
    %360 = arith.mulf %358, %359 : vector<8x16xf32>
    %cst_125 = arith.constant dense<0xFF800000> : vector<8xf32>
    %361 = vector.multi_reduction <maximumf>, %360, %cst_125 [1] : vector<8x16xf32> to vector<8xf32>
    %362 = vector.shape_cast %361 : vector<8xf32> to vector<8x1xf32>
    %363 = vector.broadcast %362 : vector<8x1xf32> to vector<8x16xf32>
    %364 = arith.subf %360, %363 : vector<8x16xf32>
    %365 = math.exp %364 : vector<8x16xf32>
    %cst_126 = arith.constant dense<0.000000e+00> : vector<8xf32>
    %366 = vector.multi_reduction <add>, %365, %cst_126 [1] : vector<8x16xf32> to vector<8xf32>
    %367 = vector.shape_cast %366 : vector<8xf32> to vector<8x1xf32>
    %368 = tpu.reciprocal %367 {approx = true} : vector<8x1xf32> -> vector<8x1xf32>
    %369 = vector.broadcast %368 : vector<8x1xf32> to vector<8x16xf32>
    %370 = arith.mulf %365, %369 : vector<8x16xf32>
    %371 = vector.extract_strided_slice %302 {offsets = [0, 24], sizes = [16, 8], strides = [1, 1]} : vector<16x32xf32> to vector<16x8xf32>
    %cst_127 = arith.constant dense<0.000000e+00> : vector<8x8xf32>
    %372 = tpu.matmul %370, %371, %cst_127 {dimension_numbers = #tpu.dot_dimension_numbers<[1], [0], [0], [1], [0, 0, 1, 1], [], []>} : vector<8x16xf32>, vector<16x8xf32>, vector<8x8xf32> -> vector<8x8xf32>
    %373 = arith.addf %355, %370 : vector<8x16xf32>
    %374 = tpu.concatenate %319, %336, %354, %372 in 1 : vector<8x8xf32>, vector<8x8xf32>, vector<8x8xf32>, vector<8x8xf32> -> vector<8x32xf32>
    %cst_128 = arith.constant 2.500000e-01 : f32
    %375 = vector.broadcast %cst_128 : f32 to vector<8x16xf32>
    %376 = arith.mulf %373, %375 : vector<8x16xf32>
    %377 = tpu.concatenate %297, %374 in 0 : vector<8x32xf32>, vector<8x32xf32> -> vector<16x32xf32>
    %cst_129 = arith.constant dense<0.000000e+00> : vector<16x32xf32>
    %378 = tpu.matmul %377, %11, %cst_129 {dimension_numbers = #tpu.dot_dimension_numbers<[1], [0], [0], [1], [0, 0, 1, 1], [], []>} : vector<16x32xf32>, vector<32x32xf32>, vector<16x32xf32> -> vector<16x32xf32>
    %379 = vector.broadcast %12 : vector<1x32xf32> to vector<16x32xf32>
    %380 = arith.addf %378, %379 : vector<16x32xf32>
    %381 = arith.addf %206, %380 : vector<16x32xf32>
    %382 = vector.extract_strided_slice %17 {offsets = [1, 0], sizes = [1, 32], strides = [1, 1]} : vector<4x32xf32> to vector<1x32xf32>
    %383 = vector.extract_strided_slice %18 {offsets = [1, 0], sizes = [1, 32], strides = [1, 1]} : vector<4x32xf32> to vector<1x32xf32>
    %cst_130 = arith.constant dense<0.000000e+00> : vector<16xf32>
    %384 = vector.multi_reduction <add>, %381, %cst_130 [1] : vector<16x32xf32> to vector<16xf32>
    %385 = vector.shape_cast %384 : vector<16xf32> to vector<16x1xf32>
    %cst_131 = arith.constant 3.200000e+01 : f32
    %386 = vector.broadcast %cst_131 : f32 to vector<16x1xf32>
    %387 = arith.divf %385, %386 : vector<16x1xf32>
    %388 = vector.broadcast %387 : vector<16x1xf32> to vector<16x32xf32>
    %389 = arith.subf %381, %388 : vector<16x32xf32>
    %390 = arith.mulf %389, %389 : vector<16x32xf32>
    %cst_132 = arith.constant dense<0.000000e+00> : vector<16xf32>
    %391 = vector.multi_reduction <add>, %390, %cst_132 [1] : vector<16x32xf32> to vector<16xf32>
    %392 = vector.shape_cast %391 : vector<16xf32> to vector<16x1xf32>
    %cst_133 = arith.constant 3.200000e+01 : f32
    %393 = vector.broadcast %cst_133 : f32 to vector<16x1xf32>
    %394 = arith.divf %392, %393 : vector<16x1xf32>
    %395 = vector.broadcast %387 : vector<16x1xf32> to vector<16x32xf32>
    %396 = arith.subf %381, %395 : vector<16x32xf32>
    %cst_134 = arith.constant 9.99999974E-6 : f32
    %397 = vector.broadcast %cst_134 : f32 to vector<16x1xf32>
    %398 = arith.addf %394, %397 : vector<16x1xf32>
    %399 = math.rsqrt %398 : vector<16x1xf32>
    %400 = vector.broadcast %399 : vector<16x1xf32> to vector<16x32xf32>
    %401 = arith.mulf %396, %400 : vector<16x32xf32>
    %402 = vector.broadcast %382 : vector<1x32xf32> to vector<16x32xf32>
    %403 = arith.mulf %401, %402 : vector<16x32xf32>
    %404 = vector.broadcast %383 : vector<1x32xf32> to vector<16x32xf32>
    %405 = arith.addf %403, %404 : vector<16x32xf32>
    %cst_135 = arith.constant dense<0.000000e+00> : vector<16x64xf32>
    %406 = tpu.matmul %405, %13, %cst_135 {dimension_numbers = #tpu.dot_dimension_numbers<[1], [0], [0], [1], [0, 0, 1, 1], [], []>} : vector<16x32xf32>, vector<32x64xf32>, vector<16x64xf32> -> vector<16x64xf32>
    %407 = vector.broadcast %14 : vector<1x64xf32> to vector<16x64xf32>
    %408 = arith.addf %406, %407 : vector<16x64xf32>
    %cst_136 = arith.constant 0.000000e+00 : f32
    %409 = vector.broadcast %cst_136 : f32 to vector<16x64xf32>
    %410 = arith.maximumf %408, %409 : vector<16x64xf32>
    %cst_137 = arith.constant dense<0.000000e+00> : vector<16x32xf32>
    %411 = tpu.matmul %410, %15, %cst_137 {dimension_numbers = #tpu.dot_dimension_numbers<[1], [0], [0], [1], [0, 0, 1, 1], [], []>} : vector<16x64xf32>, vector<64x32xf32>, vector<16x32xf32> -> vector<16x32xf32>
    %412 = vector.broadcast %16 : vector<1x32xf32> to vector<16x32xf32>
    %413 = arith.addf %411, %412 : vector<16x32xf32>
    %414 = arith.addf %405, %413 : vector<16x32xf32>
    %415 = vector.extract_strided_slice %17 {offsets = [2, 0], sizes = [1, 32], strides = [1, 1]} : vector<4x32xf32> to vector<1x32xf32>
    %416 = vector.extract_strided_slice %18 {offsets = [2, 0], sizes = [1, 32], strides = [1, 1]} : vector<4x32xf32> to vector<1x32xf32>
    %cst_138 = arith.constant dense<0.000000e+00> : vector<16xf32>
    %417 = vector.multi_reduction <add>, %414, %cst_138 [1] : vector<16x32xf32> to vector<16xf32>
    %418 = vector.shape_cast %417 : vector<16xf32> to vector<16x1xf32>
    %cst_139 = arith.constant 3.200000e+01 : f32
    %419 = vector.broadcast %cst_139 : f32 to vector<16x1xf32>
    %420 = arith.divf %418, %419 : vector<16x1xf32>
    %421 = vector.broadcast %420 : vector<16x1xf32> to vector<16x32xf32>
    %422 = arith.subf %414, %421 : vector<16x32xf32>
    %423 = arith.mulf %422, %422 : vector<16x32xf32>
    %cst_140 = arith.constant dense<0.000000e+00> : vector<16xf32>
    %424 = vector.multi_reduction <add>, %423, %cst_140 [1] : vector<16x32xf32> to vector<16xf32>
    %425 = vector.shape_cast %424 : vector<16xf32> to vector<16x1xf32>
    %cst_141 = arith.constant 3.200000e+01 : f32
    %426 = vector.broadcast %cst_141 : f32 to vector<16x1xf32>
    %427 = arith.divf %425, %426 : vector<16x1xf32>
    %428 = vector.broadcast %420 : vector<16x1xf32> to vector<16x32xf32>
    %429 = arith.subf %414, %428 : vector<16x32xf32>
    %cst_142 = arith.constant 9.99999974E-6 : f32
    %430 = vector.broadcast %cst_142 : f32 to vector<16x1xf32>
    %431 = arith.addf %427, %430 : vector<16x1xf32>
    %432 = math.rsqrt %431 : vector<16x1xf32>
    %433 = vector.broadcast %432 : vector<16x1xf32> to vector<16x32xf32>
    %434 = arith.mulf %429, %433 : vector<16x32xf32>
    %435 = vector.broadcast %415 : vector<1x32xf32> to vector<16x32xf32>
    %436 = arith.mulf %434, %435 : vector<16x32xf32>
    %437 = vector.broadcast %416 : vector<1x32xf32> to vector<16x32xf32>
    %438 = arith.addf %436, %437 : vector<16x32xf32>
    %439 = vector.extract_strided_slice %17 {offsets = [3, 0], sizes = [1, 32], strides = [1, 1]} : vector<4x32xf32> to vector<1x32xf32>
    %440 = vector.extract_strided_slice %18 {offsets = [3, 0], sizes = [1, 32], strides = [1, 1]} : vector<4x32xf32> to vector<1x32xf32>
    %cst_143 = arith.constant dense<0.000000e+00> : vector<16xf32>
    %441 = vector.multi_reduction <add>, %438, %cst_143 [1] : vector<16x32xf32> to vector<16xf32>
    %442 = vector.shape_cast %441 : vector<16xf32> to vector<16x1xf32>
    %cst_144 = arith.constant 3.200000e+01 : f32
    %443 = vector.broadcast %cst_144 : f32 to vector<16x1xf32>
    %444 = arith.divf %442, %443 : vector<16x1xf32>
    %445 = vector.broadcast %444 : vector<16x1xf32> to vector<16x32xf32>
    %446 = arith.subf %438, %445 : vector<16x32xf32>
    %447 = arith.mulf %446, %446 : vector<16x32xf32>
    %cst_145 = arith.constant dense<0.000000e+00> : vector<16xf32>
    %448 = vector.multi_reduction <add>, %447, %cst_145 [1] : vector<16x32xf32> to vector<16xf32>
    %449 = vector.shape_cast %448 : vector<16xf32> to vector<16x1xf32>
    %cst_146 = arith.constant 3.200000e+01 : f32
    %450 = vector.broadcast %cst_146 : f32 to vector<16x1xf32>
    %451 = arith.divf %449, %450 : vector<16x1xf32>
    %452 = vector.broadcast %444 : vector<16x1xf32> to vector<16x32xf32>
    %453 = arith.subf %438, %452 : vector<16x32xf32>
    %cst_147 = arith.constant 9.99999974E-6 : f32
    %454 = vector.broadcast %cst_147 : f32 to vector<16x1xf32>
    %455 = arith.addf %451, %454 : vector<16x1xf32>
    %456 = math.rsqrt %455 : vector<16x1xf32>
    %457 = vector.broadcast %456 : vector<16x1xf32> to vector<16x32xf32>
    %458 = arith.mulf %453, %457 : vector<16x32xf32>
    %459 = vector.broadcast %439 : vector<1x32xf32> to vector<16x32xf32>
    %460 = arith.mulf %458, %459 : vector<16x32xf32>
    %461 = vector.broadcast %440 : vector<1x32xf32> to vector<16x32xf32>
    %462 = arith.addf %460, %461 : vector<16x32xf32>
    %c0_148 = arith.constant 0 : index
    %c0_149 = arith.constant 0 : index
    %c0_150 = arith.constant 0 : index
    %463 = vector.load %arg20[%c0_148, %c0_149, %c0_150] : memref<2x16x32xf32, #tpu.memory_space<vmem>>, vector<1x16x32xf32>
    %464 = vector.shape_cast %463 : vector<1x16x32xf32> to vector<16x32xf32>
    %465 = vector.shape_cast %462 : vector<16x32xf32> to vector<1x16x32xf32>
    tpu.vector_store %arg20[%c0_148, %c0_149, %c0_150], %465 {strides = array<i32>} : memref<2x16x32xf32, #tpu.memory_space<vmem>>, vector<1x16x32xf32>,
    %c0_151 = arith.constant 0 : index
    %c0_152 = arith.constant 0 : index
    %c0_153 = arith.constant 0 : index
    %466 = vector.load %arg21[%c0_151, %c0_152, %c0_153] : memref<4x8x16xf32, #tpu.memory_space<vmem>>, vector<1x8x16xf32>
    %467 = vector.shape_cast %466 : vector<1x8x16xf32> to vector<8x16xf32>
    %468 = vector.shape_cast %299 : vector<8x16xf32> to vector<1x8x16xf32>
    tpu.vector_store %arg21[%c0_151, %c0_152, %c0_153], %468 {strides = array<i32>} : memref<4x8x16xf32, #tpu.memory_space<vmem>>, vector<1x8x16xf32>,
    %c1 = arith.constant 1 : index
    %c0_154 = arith.constant 0 : index
    %c0_155 = arith.constant 0 : index
    %469 = vector.load %arg21[%c1, %c0_154, %c0_155] : memref<4x8x16xf32, #tpu.memory_space<vmem>>, vector<1x8x16xf32>
    %470 = vector.shape_cast %469 : vector<1x8x16xf32> to vector<8x16xf32>
    %471 = vector.shape_cast %376 : vector<8x16xf32> to vector<1x8x16xf32>
    tpu.vector_store %arg21[%c1, %c0_154, %c0_155], %471 {strides = array<i32>} : memref<4x8x16xf32, #tpu.memory_space<vmem>>, vector<1x8x16xf32>,
    %472 = arith.addf %438, %19 : vector<16x32xf32>
    %473 = vector.extract_strided_slice %5 {offsets = [0, 0], sizes = [32, 64], strides = [1, 1]} : vector<32x96xf32> to vector<32x64xf32>
    %cst_156 = arith.constant dense<0.000000e+00> : vector<16x64xf32>
    %474 = tpu.matmul %472, %473, %cst_156 {dimension_numbers = #tpu.dot_dimension_numbers<[1], [0], [0], [1], [0, 0, 1, 1], [], []>} : vector<16x32xf32>, vector<32x64xf32>, vector<16x64xf32> -> vector<16x64xf32>
    %475 = vector.extract_strided_slice %6 {offsets = [0, 0], sizes = [1, 64], strides = [1, 1]} : vector<1x96xf32> to vector<1x64xf32>
    %476 = vector.broadcast %475 : vector<1x64xf32> to vector<16x64xf32>
    %477 = arith.addf %474, %476 : vector<16x64xf32>
    %478 = vector.extract_strided_slice %477 {offsets = [0, 0], sizes = [16, 32], strides = [1, 1]} : vector<16x64xf32> to vector<16x32xf32>
    %479 = vector.extract_strided_slice %477 {offsets = [0, 32], sizes = [16, 32], strides = [1, 1]} : vector<16x64xf32> to vector<16x32xf32>
    %480 = vector.extract_strided_slice %5 {offsets = [0, 64], sizes = [32, 32], strides = [1, 1]} : vector<32x96xf32> to vector<32x32xf32>
    %cst_157 = arith.constant dense<0.000000e+00> : vector<16x32xf32>
    %481 = tpu.matmul %438, %480, %cst_157 {dimension_numbers = #tpu.dot_dimension_numbers<[1], [0], [0], [1], [0, 0, 1, 1], [], []>} : vector<16x32xf32>, vector<32x32xf32>, vector<16x32xf32> -> vector<16x32xf32>
    %482 = vector.extract_strided_slice %6 {offsets = [0, 64], sizes = [1, 32], strides = [1, 1]} : vector<1x96xf32> to vector<1x32xf32>
    %483 = vector.broadcast %482 : vector<1x32xf32> to vector<16x32xf32>
    %484 = arith.addf %481, %483 : vector<16x32xf32>
    %485 = vector.extract_strided_slice %478 {offsets = [0, 0], sizes = [8, 32], strides = [1, 1]} : vector<16x32xf32> to vector<8x32xf32>
    %486 = vector.extract_strided_slice %479 {offsets = [0, 0], sizes = [8, 32], strides = [1, 1]} : vector<16x32xf32> to vector<8x32xf32>
    %487 = vector.extract_strided_slice %484 {offsets = [0, 0], sizes = [8, 32], strides = [1, 1]} : vector<16x32xf32> to vector<8x32xf32>
    %488 = vector.extract_strided_slice %485 {offsets = [0, 0], sizes = [8, 8], strides = [1, 1]} : vector<8x32xf32> to vector<8x8xf32>
    %489 = vector.extract_strided_slice %486 {offsets = [0, 0], sizes = [8, 8], strides = [1, 1]} : vector<8x32xf32> to vector<8x8xf32>
    %cst_158 = arith.constant dense<0.000000e+00> : vector<8x8xf32>
    %490 = tpu.matmul %488, %489, %cst_158 {dimension_numbers = #tpu.dot_dimension_numbers<[1], [1], [0], [0], [0, 0, 1, 0], [], []>} : vector<8x8xf32>, vector<8x8xf32>, vector<8x8xf32> -> vector<8x8xf32>
    %cst_159 = arith.constant 0.353553385 : f32
    %491 = vector.broadcast %cst_159 : f32 to vector<8x8xf32>
    %492 = arith.mulf %490, %491 : vector<8x8xf32>
    %cst_160 = arith.constant dense<0xFF800000> : vector<8xf32>
    %493 = vector.multi_reduction <maximumf>, %492, %cst_160 [1] : vector<8x8xf32> to vector<8xf32>
    %494 = vector.shape_cast %493 : vector<8xf32> to vector<8x1xf32>
    %495 = vector.broadcast %494 : vector<8x1xf32> to vector<8x8xf32>
    %496 = arith.subf %492, %495 : vector<8x8xf32>
    %497 = math.exp %496 : vector<8x8xf32>
    %cst_161 = arith.constant dense<0.000000e+00> : vector<8xf32>
    %498 = vector.multi_reduction <add>, %497, %cst_161 [1] : vector<8x8xf32> to vector<8xf32>
    %499 = vector.shape_cast %498 : vector<8xf32> to vector<8x1xf32>
    %500 = tpu.reciprocal %499 {approx = true} : vector<8x1xf32> -> vector<8x1xf32>
    %501 = vector.broadcast %500 : vector<8x1xf32> to vector<8x8xf32>
    %502 = arith.mulf %497, %501 : vector<8x8xf32>
    %503 = vector.extract_strided_slice %487 {offsets = [0, 0], sizes = [8, 8], strides = [1, 1]} : vector<8x32xf32> to vector<8x8xf32>
    %cst_162 = arith.constant dense<0.000000e+00> : vector<8x8xf32>
    %504 = tpu.matmul %502, %503, %cst_162 {dimension_numbers = #tpu.dot_dimension_numbers<[1], [0], [0], [1], [0, 0, 1, 1], [], []>} : vector<8x8xf32>, vector<8x8xf32>, vector<8x8xf32> -> vector<8x8xf32>
    %505 = vector.extract_strided_slice %485 {offsets = [0, 8], sizes = [8, 8], strides = [1, 1]} : vector<8x32xf32> to vector<8x8xf32>
    %506 = vector.extract_strided_slice %486 {offsets = [0, 8], sizes = [8, 8], strides = [1, 1]} : vector<8x32xf32> to vector<8x8xf32>
    %cst_163 = arith.constant dense<0.000000e+00> : vector<8x8xf32>
    %507 = tpu.matmul %505, %506, %cst_163 {dimension_numbers = #tpu.dot_dimension_numbers<[1], [1], [0], [0], [0, 0, 1, 0], [], []>} : vector<8x8xf32>, vector<8x8xf32>, vector<8x8xf32> -> vector<8x8xf32>
    %cst_164 = arith.constant 0.353553385 : f32
    %508 = vector.broadcast %cst_164 : f32 to vector<8x8xf32>
    %509 = arith.mulf %507, %508 : vector<8x8xf32>
    %cst_165 = arith.constant dense<0xFF800000> : vector<8xf32>
    %510 = vector.multi_reduction <maximumf>, %509, %cst_165 [1] : vector<8x8xf32> to vector<8xf32>
    %511 = vector.shape_cast %510 : vector<8xf32> to vector<8x1xf32>
    %512 = vector.broadcast %511 : vector<8x1xf32> to vector<8x8xf32>
    %513 = arith.subf %509, %512 : vector<8x8xf32>
    %514 = math.exp %513 : vector<8x8xf32>
    %cst_166 = arith.constant dense<0.000000e+00> : vector<8xf32>
    %515 = vector.multi_reduction <add>, %514, %cst_166 [1] : vector<8x8xf32> to vector<8xf32>
    %516 = vector.shape_cast %515 : vector<8xf32> to vector<8x1xf32>
    %517 = tpu.reciprocal %516 {approx = true} : vector<8x1xf32> -> vector<8x1xf32>
    %518 = vector.broadcast %517 : vector<8x1xf32> to vector<8x8xf32>
    %519 = arith.mulf %514, %518 : vector<8x8xf32>
    %520 = vector.extract_strided_slice %487 {offsets = [0, 8], sizes = [8, 8], strides = [1, 1]} : vector<8x32xf32> to vector<8x8xf32>
    %cst_167 = arith.constant dense<0.000000e+00> : vector<8x8xf32>
    %521 = tpu.matmul %519, %520, %cst_167 {dimension_numbers = #tpu.dot_dimension_numbers<[1], [0], [0], [1], [0, 0, 1, 1], [], []>} : vector<8x8xf32>, vector<8x8xf32>, vector<8x8xf32> -> vector<8x8xf32>
    %522 = vector.extract_strided_slice %485 {offsets = [0, 16], sizes = [8, 8], strides = [1, 1]} : vector<8x32xf32> to vector<8x8xf32>
    %523 = vector.extract_strided_slice %486 {offsets = [0, 16], sizes = [8, 8], strides = [1, 1]} : vector<8x32xf32> to vector<8x8xf32>
    %cst_168 = arith.constant dense<0.000000e+00> : vector<8x8xf32>
    %524 = tpu.matmul %522, %523, %cst_168 {dimension_numbers = #tpu.dot_dimension_numbers<[1], [1], [0], [0], [0, 0, 1, 0], [], []>} : vector<8x8xf32>, vector<8x8xf32>, vector<8x8xf32> -> vector<8x8xf32>
    %cst_169 = arith.constant 0.353553385 : f32
    %525 = vector.broadcast %cst_169 : f32 to vector<8x8xf32>
    %526 = arith.mulf %524, %525 : vector<8x8xf32>
    %cst_170 = arith.constant dense<0xFF800000> : vector<8xf32>
    %527 = vector.multi_reduction <maximumf>, %526, %cst_170 [1] : vector<8x8xf32> to vector<8xf32>
    %528 = vector.shape_cast %527 : vector<8xf32> to vector<8x1xf32>
    %529 = vector.broadcast %528 : vector<8x1xf32> to vector<8x8xf32>
    %530 = arith.subf %526, %529 : vector<8x8xf32>
    %531 = math.exp %530 : vector<8x8xf32>
    %cst_171 = arith.constant dense<0.000000e+00> : vector<8xf32>
    %532 = vector.multi_reduction <add>, %531, %cst_171 [1] : vector<8x8xf32> to vector<8xf32>
    %533 = vector.shape_cast %532 : vector<8xf32> to vector<8x1xf32>
    %534 = tpu.reciprocal %533 {approx = true} : vector<8x1xf32> -> vector<8x1xf32>
    %535 = vector.broadcast %534 : vector<8x1xf32> to vector<8x8xf32>
    %536 = arith.mulf %531, %535 : vector<8x8xf32>
    %537 = vector.extract_strided_slice %487 {offsets = [0, 16], sizes = [8, 8], strides = [1, 1]} : vector<8x32xf32> to vector<8x8xf32>
    %cst_172 = arith.constant dense<0.000000e+00> : vector<8x8xf32>
    %538 = tpu.matmul %536, %537, %cst_172 {dimension_numbers = #tpu.dot_dimension_numbers<[1], [0], [0], [1], [0, 0, 1, 1], [], []>} : vector<8x8xf32>, vector<8x8xf32>, vector<8x8xf32> -> vector<8x8xf32>
    %539 = vector.extract_strided_slice %485 {offsets = [0, 24], sizes = [8, 8], strides = [1, 1]} : vector<8x32xf32> to vector<8x8xf32>
    %540 = vector.extract_strided_slice %486 {offsets = [0, 24], sizes = [8, 8], strides = [1, 1]} : vector<8x32xf32> to vector<8x8xf32>
    %cst_173 = arith.constant dense<0.000000e+00> : vector<8x8xf32>
    %541 = tpu.matmul %539, %540, %cst_173 {dimension_numbers = #tpu.dot_dimension_numbers<[1], [1], [0], [0], [0, 0, 1, 0], [], []>} : vector<8x8xf32>, vector<8x8xf32>, vector<8x8xf32> -> vector<8x8xf32>
    %cst_174 = arith.constant 0.353553385 : f32
    %542 = vector.broadcast %cst_174 : f32 to vector<8x8xf32>
    %543 = arith.mulf %541, %542 : vector<8x8xf32>
    %cst_175 = arith.constant dense<0xFF800000> : vector<8xf32>
    %544 = vector.multi_reduction <maximumf>, %543, %cst_175 [1] : vector<8x8xf32> to vector<8xf32>
    %545 = vector.shape_cast %544 : vector<8xf32> to vector<8x1xf32>
    %546 = vector.broadcast %545 : vector<8x1xf32> to vector<8x8xf32>
    %547 = arith.subf %543, %546 : vector<8x8xf32>
    %548 = math.exp %547 : vector<8x8xf32>
    %cst_176 = arith.constant dense<0.000000e+00> : vector<8xf32>
    %549 = vector.multi_reduction <add>, %548, %cst_176 [1] : vector<8x8xf32> to vector<8xf32>
    %550 = vector.shape_cast %549 : vector<8xf32> to vector<8x1xf32>
    %551 = tpu.reciprocal %550 {approx = true} : vector<8x1xf32> -> vector<8x1xf32>
    %552 = vector.broadcast %551 : vector<8x1xf32> to vector<8x8xf32>
    %553 = arith.mulf %548, %552 : vector<8x8xf32>
    %554 = vector.extract_strided_slice %487 {offsets = [0, 24], sizes = [8, 8], strides = [1, 1]} : vector<8x32xf32> to vector<8x8xf32>
    %cst_177 = arith.constant dense<0.000000e+00> : vector<8x8xf32>
    %555 = tpu.matmul %553, %554, %cst_177 {dimension_numbers = #tpu.dot_dimension_numbers<[1], [0], [0], [1], [0, 0, 1, 1], [], []>} : vector<8x8xf32>, vector<8x8xf32>, vector<8x8xf32> -> vector<8x8xf32>
    %556 = tpu.concatenate %504, %521, %538, %555 in 1 : vector<8x8xf32>, vector<8x8xf32>, vector<8x8xf32>, vector<8x8xf32> -> vector<8x32xf32>
    %557 = vector.extract_strided_slice %478 {offsets = [8, 0], sizes = [8, 32], strides = [1, 1]} : vector<16x32xf32> to vector<8x32xf32>
    %558 = vector.extract_strided_slice %479 {offsets = [8, 0], sizes = [8, 32], strides = [1, 1]} : vector<16x32xf32> to vector<8x32xf32>
    %559 = vector.extract_strided_slice %484 {offsets = [8, 0], sizes = [8, 32], strides = [1, 1]} : vector<16x32xf32> to vector<8x32xf32>
    %560 = vector.extract_strided_slice %557 {offsets = [0, 0], sizes = [8, 8], strides = [1, 1]} : vector<8x32xf32> to vector<8x8xf32>
    %561 = vector.extract_strided_slice %558 {offsets = [0, 0], sizes = [8, 8], strides = [1, 1]} : vector<8x32xf32> to vector<8x8xf32>
    %cst_178 = arith.constant dense<0.000000e+00> : vector<8x8xf32>
    %562 = tpu.matmul %560, %561, %cst_178 {dimension_numbers = #tpu.dot_dimension_numbers<[1], [1], [0], [0], [0, 0, 1, 0], [], []>} : vector<8x8xf32>, vector<8x8xf32>, vector<8x8xf32> -> vector<8x8xf32>
    %cst_179 = arith.constant 0.353553385 : f32
    %563 = vector.broadcast %cst_179 : f32 to vector<8x8xf32>
    %564 = arith.mulf %562, %563 : vector<8x8xf32>
    %cst_180 = arith.constant dense<0xFF800000> : vector<8xf32>
    %565 = vector.multi_reduction <maximumf>, %564, %cst_180 [1] : vector<8x8xf32> to vector<8xf32>
    %566 = vector.shape_cast %565 : vector<8xf32> to vector<8x1xf32>
    %567 = vector.broadcast %566 : vector<8x1xf32> to vector<8x8xf32>
    %568 = arith.subf %564, %567 : vector<8x8xf32>
    %569 = math.exp %568 : vector<8x8xf32>
    %cst_181 = arith.constant dense<0.000000e+00> : vector<8xf32>
    %570 = vector.multi_reduction <add>, %569, %cst_181 [1] : vector<8x8xf32> to vector<8xf32>
    %571 = vector.shape_cast %570 : vector<8xf32> to vector<8x1xf32>
    %572 = tpu.reciprocal %571 {approx = true} : vector<8x1xf32> -> vector<8x1xf32>
    %573 = vector.broadcast %572 : vector<8x1xf32> to vector<8x8xf32>
    %574 = arith.mulf %569, %573 : vector<8x8xf32>
    %575 = vector.extract_strided_slice %559 {offsets = [0, 0], sizes = [8, 8], strides = [1, 1]} : vector<8x32xf32> to vector<8x8xf32>
    %cst_182 = arith.constant dense<0.000000e+00> : vector<8x8xf32>
    %576 = tpu.matmul %574, %575, %cst_182 {dimension_numbers = #tpu.dot_dimension_numbers<[1], [0], [0], [1], [0, 0, 1, 1], [], []>} : vector<8x8xf32>, vector<8x8xf32>, vector<8x8xf32> -> vector<8x8xf32>
    %577 = vector.extract_strided_slice %557 {offsets = [0, 8], sizes = [8, 8], strides = [1, 1]} : vector<8x32xf32> to vector<8x8xf32>
    %578 = vector.extract_strided_slice %558 {offsets = [0, 8], sizes = [8, 8], strides = [1, 1]} : vector<8x32xf32> to vector<8x8xf32>
    %cst_183 = arith.constant dense<0.000000e+00> : vector<8x8xf32>
    %579 = tpu.matmul %577, %578, %cst_183 {dimension_numbers = #tpu.dot_dimension_numbers<[1], [1], [0], [0], [0, 0, 1, 0], [], []>} : vector<8x8xf32>, vector<8x8xf32>, vector<8x8xf32> -> vector<8x8xf32>
    %cst_184 = arith.constant 0.353553385 : f32
    %580 = vector.broadcast %cst_184 : f32 to vector<8x8xf32>
    %581 = arith.mulf %579, %580 : vector<8x8xf32>
    %cst_185 = arith.constant dense<0xFF800000> : vector<8xf32>
    %582 = vector.multi_reduction <maximumf>, %581, %cst_185 [1] : vector<8x8xf32> to vector<8xf32>
    %583 = vector.shape_cast %582 : vector<8xf32> to vector<8x1xf32>
    %584 = vector.broadcast %583 : vector<8x1xf32> to vector<8x8xf32>
    %585 = arith.subf %581, %584 : vector<8x8xf32>
    %586 = math.exp %585 : vector<8x8xf32>
    %cst_186 = arith.constant dense<0.000000e+00> : vector<8xf32>
    %587 = vector.multi_reduction <add>, %586, %cst_186 [1] : vector<8x8xf32> to vector<8xf32>
    %588 = vector.shape_cast %587 : vector<8xf32> to vector<8x1xf32>
    %589 = tpu.reciprocal %588 {approx = true} : vector<8x1xf32> -> vector<8x1xf32>
    %590 = vector.broadcast %589 : vector<8x1xf32> to vector<8x8xf32>
    %591 = arith.mulf %586, %590 : vector<8x8xf32>
    %592 = vector.extract_strided_slice %559 {offsets = [0, 8], sizes = [8, 8], strides = [1, 1]} : vector<8x32xf32> to vector<8x8xf32>
    %cst_187 = arith.constant dense<0.000000e+00> : vector<8x8xf32>
    %593 = tpu.matmul %591, %592, %cst_187 {dimension_numbers = #tpu.dot_dimension_numbers<[1], [0], [0], [1], [0, 0, 1, 1], [], []>} : vector<8x8xf32>, vector<8x8xf32>, vector<8x8xf32> -> vector<8x8xf32>
    %594 = vector.extract_strided_slice %557 {offsets = [0, 16], sizes = [8, 8], strides = [1, 1]} : vector<8x32xf32> to vector<8x8xf32>
    %595 = vector.extract_strided_slice %558 {offsets = [0, 16], sizes = [8, 8], strides = [1, 1]} : vector<8x32xf32> to vector<8x8xf32>
    %cst_188 = arith.constant dense<0.000000e+00> : vector<8x8xf32>
    %596 = tpu.matmul %594, %595, %cst_188 {dimension_numbers = #tpu.dot_dimension_numbers<[1], [1], [0], [0], [0, 0, 1, 0], [], []>} : vector<8x8xf32>, vector<8x8xf32>, vector<8x8xf32> -> vector<8x8xf32>
    %cst_189 = arith.constant 0.353553385 : f32
    %597 = vector.broadcast %cst_189 : f32 to vector<8x8xf32>
    %598 = arith.mulf %596, %597 : vector<8x8xf32>
    %cst_190 = arith.constant dense<0xFF800000> : vector<8xf32>
    %599 = vector.multi_reduction <maximumf>, %598, %cst_190 [1] : vector<8x8xf32> to vector<8xf32>
    %600 = vector.shape_cast %599 : vector<8xf32> to vector<8x1xf32>
    %601 = vector.broadcast %600 : vector<8x1xf32> to vector<8x8xf32>
    %602 = arith.subf %598, %601 : vector<8x8xf32>
    %603 = math.exp %602 : vector<8x8xf32>
    %cst_191 = arith.constant dense<0.000000e+00> : vector<8xf32>
    %604 = vector.multi_reduction <add>, %603, %cst_191 [1] : vector<8x8xf32> to vector<8xf32>
    %605 = vector.shape_cast %604 : vector<8xf32> to vector<8x1xf32>
    %606 = tpu.reciprocal %605 {approx = true} : vector<8x1xf32> -> vector<8x1xf32>
    %607 = vector.broadcast %606 : vector<8x1xf32> to vector<8x8xf32>
    %608 = arith.mulf %603, %607 : vector<8x8xf32>
    %609 = vector.extract_strided_slice %559 {offsets = [0, 16], sizes = [8, 8], strides = [1, 1]} : vector<8x32xf32> to vector<8x8xf32>
    %cst_192 = arith.constant dense<0.000000e+00> : vector<8x8xf32>
    %610 = tpu.matmul %608, %609, %cst_192 {dimension_numbers = #tpu.dot_dimension_numbers<[1], [0], [0], [1], [0, 0, 1, 1], [], []>} : vector<8x8xf32>, vector<8x8xf32>, vector<8x8xf32> -> vector<8x8xf32>
    %611 = vector.extract_strided_slice %557 {offsets = [0, 24], sizes = [8, 8], strides = [1, 1]} : vector<8x32xf32> to vector<8x8xf32>
    %612 = vector.extract_strided_slice %558 {offsets = [0, 24], sizes = [8, 8], strides = [1, 1]} : vector<8x32xf32> to vector<8x8xf32>
    %cst_193 = arith.constant dense<0.000000e+00> : vector<8x8xf32>
    %613 = tpu.matmul %611, %612, %cst_193 {dimension_numbers = #tpu.dot_dimension_numbers<[1], [1], [0], [0], [0, 0, 1, 0], [], []>} : vector<8x8xf32>, vector<8x8xf32>, vector<8x8xf32> -> vector<8x8xf32>
    %cst_194 = arith.constant 0.353553385 : f32
    %614 = vector.broadcast %cst_194 : f32 to vector<8x8xf32>
    %615 = arith.mulf %613, %614 : vector<8x8xf32>
    %cst_195 = arith.constant dense<0xFF800000> : vector<8xf32>
    %616 = vector.multi_reduction <maximumf>, %615, %cst_195 [1] : vector<8x8xf32> to vector<8xf32>
    %617 = vector.shape_cast %616 : vector<8xf32> to vector<8x1xf32>
    %618 = vector.broadcast %617 : vector<8x1xf32> to vector<8x8xf32>
    %619 = arith.subf %615, %618 : vector<8x8xf32>
    %620 = math.exp %619 : vector<8x8xf32>
    %cst_196 = arith.constant dense<0.000000e+00> : vector<8xf32>
    %621 = vector.multi_reduction <add>, %620, %cst_196 [1] : vector<8x8xf32> to vector<8xf32>
    %622 = vector.shape_cast %621 : vector<8xf32> to vector<8x1xf32>
    %623 = tpu.reciprocal %622 {approx = true} : vector<8x1xf32> -> vector<8x1xf32>
    %624 = vector.broadcast %623 : vector<8x1xf32> to vector<8x8xf32>
    %625 = arith.mulf %620, %624 : vector<8x8xf32>
    %626 = vector.extract_strided_slice %559 {offsets = [0, 24], sizes = [8, 8], strides = [1, 1]} : vector<8x32xf32> to vector<8x8xf32>
    %cst_197 = arith.constant dense<0.000000e+00> : vector<8x8xf32>
    %627 = tpu.matmul %625, %626, %cst_197 {dimension_numbers = #tpu.dot_dimension_numbers<[1], [0], [0], [1], [0, 0, 1, 1], [], []>} : vector<8x8xf32>, vector<8x8xf32>, vector<8x8xf32> -> vector<8x8xf32>
    %628 = tpu.concatenate %576, %593, %610, %627 in 1 : vector<8x8xf32>, vector<8x8xf32>, vector<8x8xf32>, vector<8x8xf32> -> vector<8x32xf32>
    %629 = tpu.concatenate %556, %628 in 0 : vector<8x32xf32>, vector<8x32xf32> -> vector<16x32xf32>
    %cst_198 = arith.constant dense<0.000000e+00> : vector<16x32xf32>
    %630 = tpu.matmul %629, %7, %cst_198 {dimension_numbers = #tpu.dot_dimension_numbers<[1], [0], [0], [1], [0, 0, 1, 1], [], []>} : vector<16x32xf32>, vector<32x32xf32>, vector<16x32xf32> -> vector<16x32xf32>
    %631 = vector.broadcast %8 : vector<1x32xf32> to vector<16x32xf32>
    %632 = arith.addf %630, %631 : vector<16x32xf32>
    %633 = arith.addf %438, %632 : vector<16x32xf32>
    %634 = vector.extract_strided_slice %17 {offsets = [0, 0], sizes = [1, 32], strides = [1, 1]} : vector<4x32xf32> to vector<1x32xf32>
    %635 = vector.extract_strided_slice %18 {offsets = [0, 0], sizes = [1, 32], strides = [1, 1]} : vector<4x32xf32> to vector<1x32xf32>
    %cst_199 = arith.constant dense<0.000000e+00> : vector<16xf32>
    %636 = vector.multi_reduction <add>, %633, %cst_199 [1] : vector<16x32xf32> to vector<16xf32>
    %637 = vector.shape_cast %636 : vector<16xf32> to vector<16x1xf32>
    %cst_200 = arith.constant 3.200000e+01 : f32
    %638 = vector.broadcast %cst_200 : f32 to vector<16x1xf32>
    %639 = arith.divf %637, %638 : vector<16x1xf32>
    %640 = vector.broadcast %639 : vector<16x1xf32> to vector<16x32xf32>
    %641 = arith.subf %633, %640 : vector<16x32xf32>
    %642 = arith.mulf %641, %641 : vector<16x32xf32>
    %cst_201 = arith.constant dense<0.000000e+00> : vector<16xf32>
    %643 = vector.multi_reduction <add>, %642, %cst_201 [1] : vector<16x32xf32> to vector<16xf32>
    %644 = vector.shape_cast %643 : vector<16xf32> to vector<16x1xf32>
    %cst_202 = arith.constant 3.200000e+01 : f32
    %645 = vector.broadcast %cst_202 : f32 to vector<16x1xf32>
    %646 = arith.divf %644, %645 : vector<16x1xf32>
    %647 = vector.broadcast %639 : vector<16x1xf32> to vector<16x32xf32>
    %648 = arith.subf %633, %647 : vector<16x32xf32>
    %cst_203 = arith.constant 9.99999974E-6 : f32
    %649 = vector.broadcast %cst_203 : f32 to vector<16x1xf32>
    %650 = arith.addf %646, %649 : vector<16x1xf32>
    %651 = math.rsqrt %650 : vector<16x1xf32>
    %652 = vector.broadcast %651 : vector<16x1xf32> to vector<16x32xf32>
    %653 = arith.mulf %648, %652 : vector<16x32xf32>
    %654 = vector.broadcast %634 : vector<1x32xf32> to vector<16x32xf32>
    %655 = arith.mulf %653, %654 : vector<16x32xf32>
    %656 = vector.broadcast %635 : vector<1x32xf32> to vector<16x32xf32>
    %657 = arith.addf %655, %656 : vector<16x32xf32>
    %658 = arith.addf %657, %3 : vector<16x32xf32>
    %659 = vector.extract_strided_slice %9 {offsets = [0, 0], sizes = [32, 32], strides = [1, 1]} : vector<32x96xf32> to vector<32x32xf32>
    %cst_204 = arith.constant dense<0.000000e+00> : vector<16x32xf32>
    %660 = tpu.matmul %658, %659, %cst_204 {dimension_numbers = #tpu.dot_dimension_numbers<[1], [0], [0], [1], [0, 0, 1, 1], [], []>} : vector<16x32xf32>, vector<32x32xf32>, vector<16x32xf32> -> vector<16x32xf32>
    %661 = vector.extract_strided_slice %10 {offsets = [0, 0], sizes = [1, 32], strides = [1, 1]} : vector<1x96xf32> to vector<1x32xf32>
    %662 = vector.broadcast %661 : vector<1x32xf32> to vector<16x32xf32>
    %663 = arith.addf %660, %662 : vector<16x32xf32>
    %664 = vector.extract_strided_slice %9 {offsets = [0, 32], sizes = [32, 32], strides = [1, 1]} : vector<32x96xf32> to vector<32x32xf32>
    %cst_205 = arith.constant dense<0.000000e+00> : vector<32x32xf32>
    %665 = tpu.matmul %20, %664, %cst_205 {dimension_numbers = #tpu.dot_dimension_numbers<[1], [0], [0], [1], [0, 0, 1, 1], [], []>} : vector<32x32xf32>, vector<32x32xf32>, vector<32x32xf32> -> vector<32x32xf32>
    %666 = vector.extract_strided_slice %10 {offsets = [0, 32], sizes = [1, 32], strides = [1, 1]} : vector<1x96xf32> to vector<1x32xf32>
    %667 = vector.broadcast %666 : vector<1x32xf32> to vector<32x32xf32>
    %668 = arith.addf %665, %667 : vector<32x32xf32>
    %669 = vector.extract_strided_slice %9 {offsets = [0, 64], sizes = [32, 32], strides = [1, 1]} : vector<32x96xf32> to vector<32x32xf32>
    %cst_206 = arith.constant dense<0.000000e+00> : vector<32x32xf32>
    %670 = tpu.matmul %1, %669, %cst_206 {dimension_numbers = #tpu.dot_dimension_numbers<[1], [0], [0], [1], [0, 0, 1, 1], [], []>} : vector<32x32xf32>, vector<32x32xf32>, vector<32x32xf32> -> vector<32x32xf32>
    %671 = vector.extract_strided_slice %10 {offsets = [0, 64], sizes = [1, 32], strides = [1, 1]} : vector<1x96xf32> to vector<1x32xf32>
    %672 = vector.broadcast %671 : vector<1x32xf32> to vector<32x32xf32>
    %673 = arith.addf %670, %672 : vector<32x32xf32>
    %674 = vector.extract_strided_slice %663 {offsets = [0, 0], sizes = [8, 32], strides = [1, 1]} : vector<16x32xf32> to vector<8x32xf32>
    %675 = vector.extract_strided_slice %668 {offsets = [0, 0], sizes = [16, 32], strides = [1, 1]} : vector<32x32xf32> to vector<16x32xf32>
    %676 = vector.extract_strided_slice %673 {offsets = [0, 0], sizes = [16, 32], strides = [1, 1]} : vector<32x32xf32> to vector<16x32xf32>
    %677 = vector.extract_strided_slice %674 {offsets = [0, 0], sizes = [8, 8], strides = [1, 1]} : vector<8x32xf32> to vector<8x8xf32>
    %678 = vector.extract_strided_slice %675 {offsets = [0, 0], sizes = [16, 8], strides = [1, 1]} : vector<16x32xf32> to vector<16x8xf32>
    %cst_207 = arith.constant dense<0.000000e+00> : vector<8x16xf32>
    %679 = tpu.matmul %677, %678, %cst_207 {dimension_numbers = #tpu.dot_dimension_numbers<[1], [1], [0], [0], [0, 0, 1, 0], [], []>} : vector<8x8xf32>, vector<16x8xf32>, vector<8x16xf32> -> vector<8x16xf32>
    %cst_208 = arith.constant 0.353553385 : f32
    %680 = vector.broadcast %cst_208 : f32 to vector<8x16xf32>
    %681 = arith.mulf %679, %680 : vector<8x16xf32>
    %cst_209 = arith.constant dense<0xFF800000> : vector<8xf32>
    %682 = vector.multi_reduction <maximumf>, %681, %cst_209 [1] : vector<8x16xf32> to vector<8xf32>
    %683 = vector.shape_cast %682 : vector<8xf32> to vector<8x1xf32>
    %684 = vector.broadcast %683 : vector<8x1xf32> to vector<8x16xf32>
    %685 = arith.subf %681, %684 : vector<8x16xf32>
    %686 = math.exp %685 : vector<8x16xf32>
    %cst_210 = arith.constant dense<0.000000e+00> : vector<8xf32>
    %687 = vector.multi_reduction <add>, %686, %cst_210 [1] : vector<8x16xf32> to vector<8xf32>
    %688 = vector.shape_cast %687 : vector<8xf32> to vector<8x1xf32>
    %689 = tpu.reciprocal %688 {approx = true} : vector<8x1xf32> -> vector<8x1xf32>
    %690 = vector.broadcast %689 : vector<8x1xf32> to vector<8x16xf32>
    %691 = arith.mulf %686, %690 : vector<8x16xf32>
    %692 = vector.extract_strided_slice %676 {offsets = [0, 0], sizes = [16, 8], strides = [1, 1]} : vector<16x32xf32> to vector<16x8xf32>
    %cst_211 = arith.constant dense<0.000000e+00> : vector<8x8xf32>
    %693 = tpu.matmul %691, %692, %cst_211 {dimension_numbers = #tpu.dot_dimension_numbers<[1], [0], [0], [1], [0, 0, 1, 1], [], []>} : vector<8x16xf32>, vector<16x8xf32>, vector<8x8xf32> -> vector<8x8xf32>
    %694 = vector.extract_strided_slice %674 {offsets = [0, 8], sizes = [8, 8], strides = [1, 1]} : vector<8x32xf32> to vector<8x8xf32>
    %695 = vector.extract_strided_slice %675 {offsets = [0, 8], sizes = [16, 8], strides = [1, 1]} : vector<16x32xf32> to vector<16x8xf32>
    %cst_212 = arith.constant dense<0.000000e+00> : vector<8x16xf32>
    %696 = tpu.matmul %694, %695, %cst_212 {dimension_numbers = #tpu.dot_dimension_numbers<[1], [1], [0], [0], [0, 0, 1, 0], [], []>} : vector<8x8xf32>, vector<16x8xf32>, vector<8x16xf32> -> vector<8x16xf32>
    %cst_213 = arith.constant 0.353553385 : f32
    %697 = vector.broadcast %cst_213 : f32 to vector<8x16xf32>
    %698 = arith.mulf %696, %697 : vector<8x16xf32>
    %cst_214 = arith.constant dense<0xFF800000> : vector<8xf32>
    %699 = vector.multi_reduction <maximumf>, %698, %cst_214 [1] : vector<8x16xf32> to vector<8xf32>
    %700 = vector.shape_cast %699 : vector<8xf32> to vector<8x1xf32>
    %701 = vector.broadcast %700 : vector<8x1xf32> to vector<8x16xf32>
    %702 = arith.subf %698, %701 : vector<8x16xf32>
    %703 = math.exp %702 : vector<8x16xf32>
    %cst_215 = arith.constant dense<0.000000e+00> : vector<8xf32>
    %704 = vector.multi_reduction <add>, %703, %cst_215 [1] : vector<8x16xf32> to vector<8xf32>
    %705 = vector.shape_cast %704 : vector<8xf32> to vector<8x1xf32>
    %706 = tpu.reciprocal %705 {approx = true} : vector<8x1xf32> -> vector<8x1xf32>
    %707 = vector.broadcast %706 : vector<8x1xf32> to vector<8x16xf32>
    %708 = arith.mulf %703, %707 : vector<8x16xf32>
    %709 = vector.extract_strided_slice %676 {offsets = [0, 8], sizes = [16, 8], strides = [1, 1]} : vector<16x32xf32> to vector<16x8xf32>
    %cst_216 = arith.constant dense<0.000000e+00> : vector<8x8xf32>
    %710 = tpu.matmul %708, %709, %cst_216 {dimension_numbers = #tpu.dot_dimension_numbers<[1], [0], [0], [1], [0, 0, 1, 1], [], []>} : vector<8x16xf32>, vector<16x8xf32>, vector<8x8xf32> -> vector<8x8xf32>
    %711 = arith.addf %691, %708 : vector<8x16xf32>
    %712 = vector.extract_strided_slice %674 {offsets = [0, 16], sizes = [8, 8], strides = [1, 1]} : vector<8x32xf32> to vector<8x8xf32>
    %713 = vector.extract_strided_slice %675 {offsets = [0, 16], sizes = [16, 8], strides = [1, 1]} : vector<16x32xf32> to vector<16x8xf32>
    %cst_217 = arith.constant dense<0.000000e+00> : vector<8x16xf32>
    %714 = tpu.matmul %712, %713, %cst_217 {dimension_numbers = #tpu.dot_dimension_numbers<[1], [1], [0], [0], [0, 0, 1, 0], [], []>} : vector<8x8xf32>, vector<16x8xf32>, vector<8x16xf32> -> vector<8x16xf32>
    %cst_218 = arith.constant 0.353553385 : f32
    %715 = vector.broadcast %cst_218 : f32 to vector<8x16xf32>
    %716 = arith.mulf %714, %715 : vector<8x16xf32>
    %cst_219 = arith.constant dense<0xFF800000> : vector<8xf32>
    %717 = vector.multi_reduction <maximumf>, %716, %cst_219 [1] : vector<8x16xf32> to vector<8xf32>
    %718 = vector.shape_cast %717 : vector<8xf32> to vector<8x1xf32>
    %719 = vector.broadcast %718 : vector<8x1xf32> to vector<8x16xf32>
    %720 = arith.subf %716, %719 : vector<8x16xf32>
    %721 = math.exp %720 : vector<8x16xf32>
    %cst_220 = arith.constant dense<0.000000e+00> : vector<8xf32>
    %722 = vector.multi_reduction <add>, %721, %cst_220 [1] : vector<8x16xf32> to vector<8xf32>
    %723 = vector.shape_cast %722 : vector<8xf32> to vector<8x1xf32>
    %724 = tpu.reciprocal %723 {approx = true} : vector<8x1xf32> -> vector<8x1xf32>
    %725 = vector.broadcast %724 : vector<8x1xf32> to vector<8x16xf32>
    %726 = arith.mulf %721, %725 : vector<8x16xf32>
    %727 = vector.extract_strided_slice %676 {offsets = [0, 16], sizes = [16, 8], strides = [1, 1]} : vector<16x32xf32> to vector<16x8xf32>
    %cst_221 = arith.constant dense<0.000000e+00> : vector<8x8xf32>
    %728 = tpu.matmul %726, %727, %cst_221 {dimension_numbers = #tpu.dot_dimension_numbers<[1], [0], [0], [1], [0, 0, 1, 1], [], []>} : vector<8x16xf32>, vector<16x8xf32>, vector<8x8xf32> -> vector<8x8xf32>
    %729 = arith.addf %711, %726 : vector<8x16xf32>
    %730 = vector.extract_strided_slice %674 {offsets = [0, 24], sizes = [8, 8], strides = [1, 1]} : vector<8x32xf32> to vector<8x8xf32>
    %731 = vector.extract_strided_slice %675 {offsets = [0, 24], sizes = [16, 8], strides = [1, 1]} : vector<16x32xf32> to vector<16x8xf32>
    %cst_222 = arith.constant dense<0.000000e+00> : vector<8x16xf32>
    %732 = tpu.matmul %730, %731, %cst_222 {dimension_numbers = #tpu.dot_dimension_numbers<[1], [1], [0], [0], [0, 0, 1, 0], [], []>} : vector<8x8xf32>, vector<16x8xf32>, vector<8x16xf32> -> vector<8x16xf32>
    %cst_223 = arith.constant 0.353553385 : f32
    %733 = vector.broadcast %cst_223 : f32 to vector<8x16xf32>
    %734 = arith.mulf %732, %733 : vector<8x16xf32>
    %cst_224 = arith.constant dense<0xFF800000> : vector<8xf32>
    %735 = vector.multi_reduction <maximumf>, %734, %cst_224 [1] : vector<8x16xf32> to vector<8xf32>
    %736 = vector.shape_cast %735 : vector<8xf32> to vector<8x1xf32>
    %737 = vector.broadcast %736 : vector<8x1xf32> to vector<8x16xf32>
    %738 = arith.subf %734, %737 : vector<8x16xf32>
    %739 = math.exp %738 : vector<8x16xf32>
    %cst_225 = arith.constant dense<0.000000e+00> : vector<8xf32>
    %740 = vector.multi_reduction <add>, %739, %cst_225 [1] : vector<8x16xf32> to vector<8xf32>
    %741 = vector.shape_cast %740 : vector<8xf32> to vector<8x1xf32>
    %742 = tpu.reciprocal %741 {approx = true} : vector<8x1xf32> -> vector<8x1xf32>
    %743 = vector.broadcast %742 : vector<8x1xf32> to vector<8x16xf32>
    %744 = arith.mulf %739, %743 : vector<8x16xf32>
    %745 = vector.extract_strided_slice %676 {offsets = [0, 24], sizes = [16, 8], strides = [1, 1]} : vector<16x32xf32> to vector<16x8xf32>
    %cst_226 = arith.constant dense<0.000000e+00> : vector<8x8xf32>
    %746 = tpu.matmul %744, %745, %cst_226 {dimension_numbers = #tpu.dot_dimension_numbers<[1], [0], [0], [1], [0, 0, 1, 1], [], []>} : vector<8x16xf32>, vector<16x8xf32>, vector<8x8xf32> -> vector<8x8xf32>
    %747 = arith.addf %729, %744 : vector<8x16xf32>
    %748 = tpu.concatenate %693, %710, %728, %746 in 1 : vector<8x8xf32>, vector<8x8xf32>, vector<8x8xf32>, vector<8x8xf32> -> vector<8x32xf32>
    %cst_227 = arith.constant 2.500000e-01 : f32
    %749 = vector.broadcast %cst_227 : f32 to vector<8x16xf32>
    %750 = arith.mulf %747, %749 : vector<8x16xf32>
    %751 = vector.extract_strided_slice %663 {offsets = [8, 0], sizes = [8, 32], strides = [1, 1]} : vector<16x32xf32> to vector<8x32xf32>
    %752 = vector.extract_strided_slice %668 {offsets = [16, 0], sizes = [16, 32], strides = [1, 1]} : vector<32x32xf32> to vector<16x32xf32>
    %753 = vector.extract_strided_slice %673 {offsets = [16, 0], sizes = [16, 32], strides = [1, 1]} : vector<32x32xf32> to vector<16x32xf32>
    %754 = vector.extract_strided_slice %751 {offsets = [0, 0], sizes = [8, 8], strides = [1, 1]} : vector<8x32xf32> to vector<8x8xf32>
    %755 = vector.extract_strided_slice %752 {offsets = [0, 0], sizes = [16, 8], strides = [1, 1]} : vector<16x32xf32> to vector<16x8xf32>
    %cst_228 = arith.constant dense<0.000000e+00> : vector<8x16xf32>
    %756 = tpu.matmul %754, %755, %cst_228 {dimension_numbers = #tpu.dot_dimension_numbers<[1], [1], [0], [0], [0, 0, 1, 0], [], []>} : vector<8x8xf32>, vector<16x8xf32>, vector<8x16xf32> -> vector<8x16xf32>
    %cst_229 = arith.constant 0.353553385 : f32
    %757 = vector.broadcast %cst_229 : f32 to vector<8x16xf32>
    %758 = arith.mulf %756, %757 : vector<8x16xf32>
    %cst_230 = arith.constant dense<0xFF800000> : vector<8xf32>
    %759 = vector.multi_reduction <maximumf>, %758, %cst_230 [1] : vector<8x16xf32> to vector<8xf32>
    %760 = vector.shape_cast %759 : vector<8xf32> to vector<8x1xf32>
    %761 = vector.broadcast %760 : vector<8x1xf32> to vector<8x16xf32>
    %762 = arith.subf %758, %761 : vector<8x16xf32>
    %763 = math.exp %762 : vector<8x16xf32>
    %cst_231 = arith.constant dense<0.000000e+00> : vector<8xf32>
    %764 = vector.multi_reduction <add>, %763, %cst_231 [1] : vector<8x16xf32> to vector<8xf32>
    %765 = vector.shape_cast %764 : vector<8xf32> to vector<8x1xf32>
    %766 = tpu.reciprocal %765 {approx = true} : vector<8x1xf32> -> vector<8x1xf32>
    %767 = vector.broadcast %766 : vector<8x1xf32> to vector<8x16xf32>
    %768 = arith.mulf %763, %767 : vector<8x16xf32>
    %769 = vector.extract_strided_slice %753 {offsets = [0, 0], sizes = [16, 8], strides = [1, 1]} : vector<16x32xf32> to vector<16x8xf32>
    %cst_232 = arith.constant dense<0.000000e+00> : vector<8x8xf32>
    %770 = tpu.matmul %768, %769, %cst_232 {dimension_numbers = #tpu.dot_dimension_numbers<[1], [0], [0], [1], [0, 0, 1, 1], [], []>} : vector<8x16xf32>, vector<16x8xf32>, vector<8x8xf32> -> vector<8x8xf32>
    %771 = vector.extract_strided_slice %751 {offsets = [0, 8], sizes = [8, 8], strides = [1, 1]} : vector<8x32xf32> to vector<8x8xf32>
    %772 = vector.extract_strided_slice %752 {offsets = [0, 8], sizes = [16, 8], strides = [1, 1]} : vector<16x32xf32> to vector<16x8xf32>
    %cst_233 = arith.constant dense<0.000000e+00> : vector<8x16xf32>
    %773 = tpu.matmul %771, %772, %cst_233 {dimension_numbers = #tpu.dot_dimension_numbers<[1], [1], [0], [0], [0, 0, 1, 0], [], []>} : vector<8x8xf32>, vector<16x8xf32>, vector<8x16xf32> -> vector<8x16xf32>
    %cst_234 = arith.constant 0.353553385 : f32
    %774 = vector.broadcast %cst_234 : f32 to vector<8x16xf32>
    %775 = arith.mulf %773, %774 : vector<8x16xf32>
    %cst_235 = arith.constant dense<0xFF800000> : vector<8xf32>
    %776 = vector.multi_reduction <maximumf>, %775, %cst_235 [1] : vector<8x16xf32> to vector<8xf32>
    %777 = vector.shape_cast %776 : vector<8xf32> to vector<8x1xf32>
    %778 = vector.broadcast %777 : vector<8x1xf32> to vector<8x16xf32>
    %779 = arith.subf %775, %778 : vector<8x16xf32>
    %780 = math.exp %779 : vector<8x16xf32>
    %cst_236 = arith.constant dense<0.000000e+00> : vector<8xf32>
    %781 = vector.multi_reduction <add>, %780, %cst_236 [1] : vector<8x16xf32> to vector<8xf32>
    %782 = vector.shape_cast %781 : vector<8xf32> to vector<8x1xf32>
    %783 = tpu.reciprocal %782 {approx = true} : vector<8x1xf32> -> vector<8x1xf32>
    %784 = vector.broadcast %783 : vector<8x1xf32> to vector<8x16xf32>
    %785 = arith.mulf %780, %784 : vector<8x16xf32>
    %786 = vector.extract_strided_slice %753 {offsets = [0, 8], sizes = [16, 8], strides = [1, 1]} : vector<16x32xf32> to vector<16x8xf32>
    %cst_237 = arith.constant dense<0.000000e+00> : vector<8x8xf32>
    %787 = tpu.matmul %785, %786, %cst_237 {dimension_numbers = #tpu.dot_dimension_numbers<[1], [0], [0], [1], [0, 0, 1, 1], [], []>} : vector<8x16xf32>, vector<16x8xf32>, vector<8x8xf32> -> vector<8x8xf32>
    %788 = arith.addf %768, %785 : vector<8x16xf32>
    %789 = vector.extract_strided_slice %751 {offsets = [0, 16], sizes = [8, 8], strides = [1, 1]} : vector<8x32xf32> to vector<8x8xf32>
    %790 = vector.extract_strided_slice %752 {offsets = [0, 16], sizes = [16, 8], strides = [1, 1]} : vector<16x32xf32> to vector<16x8xf32>
    %cst_238 = arith.constant dense<0.000000e+00> : vector<8x16xf32>
    %791 = tpu.matmul %789, %790, %cst_238 {dimension_numbers = #tpu.dot_dimension_numbers<[1], [1], [0], [0], [0, 0, 1, 0], [], []>} : vector<8x8xf32>, vector<16x8xf32>, vector<8x16xf32> -> vector<8x16xf32>
    %cst_239 = arith.constant 0.353553385 : f32
    %792 = vector.broadcast %cst_239 : f32 to vector<8x16xf32>
    %793 = arith.mulf %791, %792 : vector<8x16xf32>
    %cst_240 = arith.constant dense<0xFF800000> : vector<8xf32>
    %794 = vector.multi_reduction <maximumf>, %793, %cst_240 [1] : vector<8x16xf32> to vector<8xf32>
    %795 = vector.shape_cast %794 : vector<8xf32> to vector<8x1xf32>
    %796 = vector.broadcast %795 : vector<8x1xf32> to vector<8x16xf32>
    %797 = arith.subf %793, %796 : vector<8x16xf32>
    %798 = math.exp %797 : vector<8x16xf32>
    %cst_241 = arith.constant dense<0.000000e+00> : vector<8xf32>
    %799 = vector.multi_reduction <add>, %798, %cst_241 [1] : vector<8x16xf32> to vector<8xf32>
    %800 = vector.shape_cast %799 : vector<8xf32> to vector<8x1xf32>
    %801 = tpu.reciprocal %800 {approx = true} : vector<8x1xf32> -> vector<8x1xf32>
    %802 = vector.broadcast %801 : vector<8x1xf32> to vector<8x16xf32>
    %803 = arith.mulf %798, %802 : vector<8x16xf32>
    %804 = vector.extract_strided_slice %753 {offsets = [0, 16], sizes = [16, 8], strides = [1, 1]} : vector<16x32xf32> to vector<16x8xf32>
    %cst_242 = arith.constant dense<0.000000e+00> : vector<8x8xf32>
    %805 = tpu.matmul %803, %804, %cst_242 {dimension_numbers = #tpu.dot_dimension_numbers<[1], [0], [0], [1], [0, 0, 1, 1], [], []>} : vector<8x16xf32>, vector<16x8xf32>, vector<8x8xf32> -> vector<8x8xf32>
    %806 = arith.addf %788, %803 : vector<8x16xf32>
    %807 = vector.extract_strided_slice %751 {offsets = [0, 24], sizes = [8, 8], strides = [1, 1]} : vector<8x32xf32> to vector<8x8xf32>
    %808 = vector.extract_strided_slice %752 {offsets = [0, 24], sizes = [16, 8], strides = [1, 1]} : vector<16x32xf32> to vector<16x8xf32>
    %cst_243 = arith.constant dense<0.000000e+00> : vector<8x16xf32>
    %809 = tpu.matmul %807, %808, %cst_243 {dimension_numbers = #tpu.dot_dimension_numbers<[1], [1], [0], [0], [0, 0, 1, 0], [], []>} : vector<8x8xf32>, vector<16x8xf32>, vector<8x16xf32> -> vector<8x16xf32>
    %cst_244 = arith.constant 0.353553385 : f32
    %810 = vector.broadcast %cst_244 : f32 to vector<8x16xf32>
    %811 = arith.mulf %809, %810 : vector<8x16xf32>
    %cst_245 = arith.constant dense<0xFF800000> : vector<8xf32>
    %812 = vector.multi_reduction <maximumf>, %811, %cst_245 [1] : vector<8x16xf32> to vector<8xf32>
    %813 = vector.shape_cast %812 : vector<8xf32> to vector<8x1xf32>
    %814 = vector.broadcast %813 : vector<8x1xf32> to vector<8x16xf32>
    %815 = arith.subf %811, %814 : vector<8x16xf32>
    %816 = math.exp %815 : vector<8x16xf32>
    %cst_246 = arith.constant dense<0.000000e+00> : vector<8xf32>
    %817 = vector.multi_reduction <add>, %816, %cst_246 [1] : vector<8x16xf32> to vector<8xf32>
    %818 = vector.shape_cast %817 : vector<8xf32> to vector<8x1xf32>
    %819 = tpu.reciprocal %818 {approx = true} : vector<8x1xf32> -> vector<8x1xf32>
    %820 = vector.broadcast %819 : vector<8x1xf32> to vector<8x16xf32>
    %821 = arith.mulf %816, %820 : vector<8x16xf32>
    %822 = vector.extract_strided_slice %753 {offsets = [0, 24], sizes = [16, 8], strides = [1, 1]} : vector<16x32xf32> to vector<16x8xf32>
    %cst_247 = arith.constant dense<0.000000e+00> : vector<8x8xf32>
    %823 = tpu.matmul %821, %822, %cst_247 {dimension_numbers = #tpu.dot_dimension_numbers<[1], [0], [0], [1], [0, 0, 1, 1], [], []>} : vector<8x16xf32>, vector<16x8xf32>, vector<8x8xf32> -> vector<8x8xf32>
    %824 = arith.addf %806, %821 : vector<8x16xf32>
    %825 = tpu.concatenate %770, %787, %805, %823 in 1 : vector<8x8xf32>, vector<8x8xf32>, vector<8x8xf32>, vector<8x8xf32> -> vector<8x32xf32>
    %cst_248 = arith.constant 2.500000e-01 : f32
    %826 = vector.broadcast %cst_248 : f32 to vector<8x16xf32>
    %827 = arith.mulf %824, %826 : vector<8x16xf32>
    %828 = tpu.concatenate %748, %825 in 0 : vector<8x32xf32>, vector<8x32xf32> -> vector<16x32xf32>
    %cst_249 = arith.constant dense<0.000000e+00> : vector<16x32xf32>
    %829 = tpu.matmul %828, %11, %cst_249 {dimension_numbers = #tpu.dot_dimension_numbers<[1], [0], [0], [1], [0, 0, 1, 1], [], []>} : vector<16x32xf32>, vector<32x32xf32>, vector<16x32xf32> -> vector<16x32xf32>
    %830 = vector.broadcast %12 : vector<1x32xf32> to vector<16x32xf32>
    %831 = arith.addf %829, %830 : vector<16x32xf32>
    %832 = arith.addf %657, %831 : vector<16x32xf32>
    %833 = vector.extract_strided_slice %17 {offsets = [1, 0], sizes = [1, 32], strides = [1, 1]} : vector<4x32xf32> to vector<1x32xf32>
    %834 = vector.extract_strided_slice %18 {offsets = [1, 0], sizes = [1, 32], strides = [1, 1]} : vector<4x32xf32> to vector<1x32xf32>
    %cst_250 = arith.constant dense<0.000000e+00> : vector<16xf32>
    %835 = vector.multi_reduction <add>, %832, %cst_250 [1] : vector<16x32xf32> to vector<16xf32>
    %836 = vector.shape_cast %835 : vector<16xf32> to vector<16x1xf32>
    %cst_251 = arith.constant 3.200000e+01 : f32
    %837 = vector.broadcast %cst_251 : f32 to vector<16x1xf32>
    %838 = arith.divf %836, %837 : vector<16x1xf32>
    %839 = vector.broadcast %838 : vector<16x1xf32> to vector<16x32xf32>
    %840 = arith.subf %832, %839 : vector<16x32xf32>
    %841 = arith.mulf %840, %840 : vector<16x32xf32>
    %cst_252 = arith.constant dense<0.000000e+00> : vector<16xf32>
    %842 = vector.multi_reduction <add>, %841, %cst_252 [1] : vector<16x32xf32> to vector<16xf32>
    %843 = vector.shape_cast %842 : vector<16xf32> to vector<16x1xf32>
    %cst_253 = arith.constant 3.200000e+01 : f32
    %844 = vector.broadcast %cst_253 : f32 to vector<16x1xf32>
    %845 = arith.divf %843, %844 : vector<16x1xf32>
    %846 = vector.broadcast %838 : vector<16x1xf32> to vector<16x32xf32>
    %847 = arith.subf %832, %846 : vector<16x32xf32>
    %cst_254 = arith.constant 9.99999974E-6 : f32
    %848 = vector.broadcast %cst_254 : f32 to vector<16x1xf32>
    %849 = arith.addf %845, %848 : vector<16x1xf32>
    %850 = math.rsqrt %849 : vector<16x1xf32>
    %851 = vector.broadcast %850 : vector<16x1xf32> to vector<16x32xf32>
    %852 = arith.mulf %847, %851 : vector<16x32xf32>
    %853 = vector.broadcast %833 : vector<1x32xf32> to vector<16x32xf32>
    %854 = arith.mulf %852, %853 : vector<16x32xf32>
    %855 = vector.broadcast %834 : vector<1x32xf32> to vector<16x32xf32>
    %856 = arith.addf %854, %855 : vector<16x32xf32>
    %cst_255 = arith.constant dense<0.000000e+00> : vector<16x64xf32>
    %857 = tpu.matmul %856, %13, %cst_255 {dimension_numbers = #tpu.dot_dimension_numbers<[1], [0], [0], [1], [0, 0, 1, 1], [], []>} : vector<16x32xf32>, vector<32x64xf32>, vector<16x64xf32> -> vector<16x64xf32>
    %858 = vector.broadcast %14 : vector<1x64xf32> to vector<16x64xf32>
    %859 = arith.addf %857, %858 : vector<16x64xf32>
    %cst_256 = arith.constant 0.000000e+00 : f32
    %860 = vector.broadcast %cst_256 : f32 to vector<16x64xf32>
    %861 = arith.maximumf %859, %860 : vector<16x64xf32>
    %cst_257 = arith.constant dense<0.000000e+00> : vector<16x32xf32>
    %862 = tpu.matmul %861, %15, %cst_257 {dimension_numbers = #tpu.dot_dimension_numbers<[1], [0], [0], [1], [0, 0, 1, 1], [], []>} : vector<16x64xf32>, vector<64x32xf32>, vector<16x32xf32> -> vector<16x32xf32>
    %863 = vector.broadcast %16 : vector<1x32xf32> to vector<16x32xf32>
    %864 = arith.addf %862, %863 : vector<16x32xf32>
    %865 = arith.addf %856, %864 : vector<16x32xf32>
    %866 = vector.extract_strided_slice %17 {offsets = [2, 0], sizes = [1, 32], strides = [1, 1]} : vector<4x32xf32> to vector<1x32xf32>
    %867 = vector.extract_strided_slice %18 {offsets = [2, 0], sizes = [1, 32], strides = [1, 1]} : vector<4x32xf32> to vector<1x32xf32>
    %cst_258 = arith.constant dense<0.000000e+00> : vector<16xf32>
    %868 = vector.multi_reduction <add>, %865, %cst_258 [1] : vector<16x32xf32> to vector<16xf32>
    %869 = vector.shape_cast %868 : vector<16xf32> to vector<16x1xf32>
    %cst_259 = arith.constant 3.200000e+01 : f32
    %870 = vector.broadcast %cst_259 : f32 to vector<16x1xf32>
    %871 = arith.divf %869, %870 : vector<16x1xf32>
    %872 = vector.broadcast %871 : vector<16x1xf32> to vector<16x32xf32>
    %873 = arith.subf %865, %872 : vector<16x32xf32>
    %874 = arith.mulf %873, %873 : vector<16x32xf32>
    %cst_260 = arith.constant dense<0.000000e+00> : vector<16xf32>
    %875 = vector.multi_reduction <add>, %874, %cst_260 [1] : vector<16x32xf32> to vector<16xf32>
    %876 = vector.shape_cast %875 : vector<16xf32> to vector<16x1xf32>
    %cst_261 = arith.constant 3.200000e+01 : f32
    %877 = vector.broadcast %cst_261 : f32 to vector<16x1xf32>
    %878 = arith.divf %876, %877 : vector<16x1xf32>
    %879 = vector.broadcast %871 : vector<16x1xf32> to vector<16x32xf32>
    %880 = arith.subf %865, %879 : vector<16x32xf32>
    %cst_262 = arith.constant 9.99999974E-6 : f32
    %881 = vector.broadcast %cst_262 : f32 to vector<16x1xf32>
    %882 = arith.addf %878, %881 : vector<16x1xf32>
    %883 = math.rsqrt %882 : vector<16x1xf32>
    %884 = vector.broadcast %883 : vector<16x1xf32> to vector<16x32xf32>
    %885 = arith.mulf %880, %884 : vector<16x32xf32>
    %886 = vector.broadcast %866 : vector<1x32xf32> to vector<16x32xf32>
    %887 = arith.mulf %885, %886 : vector<16x32xf32>
    %888 = vector.broadcast %867 : vector<1x32xf32> to vector<16x32xf32>
    %889 = arith.addf %887, %888 : vector<16x32xf32>
    %890 = vector.extract_strided_slice %17 {offsets = [3, 0], sizes = [1, 32], strides = [1, 1]} : vector<4x32xf32> to vector<1x32xf32>
    %891 = vector.extract_strided_slice %18 {offsets = [3, 0], sizes = [1, 32], strides = [1, 1]} : vector<4x32xf32> to vector<1x32xf32>
    %cst_263 = arith.constant dense<0.000000e+00> : vector<16xf32>
    %892 = vector.multi_reduction <add>, %889, %cst_263 [1] : vector<16x32xf32> to vector<16xf32>
    %893 = vector.shape_cast %892 : vector<16xf32> to vector<16x1xf32>
    %cst_264 = arith.constant 3.200000e+01 : f32
    %894 = vector.broadcast %cst_264 : f32 to vector<16x1xf32>
    %895 = arith.divf %893, %894 : vector<16x1xf32>
    %896 = vector.broadcast %895 : vector<16x1xf32> to vector<16x32xf32>
    %897 = arith.subf %889, %896 : vector<16x32xf32>
    %898 = arith.mulf %897, %897 : vector<16x32xf32>
    %cst_265 = arith.constant dense<0.000000e+00> : vector<16xf32>
    %899 = vector.multi_reduction <add>, %898, %cst_265 [1] : vector<16x32xf32> to vector<16xf32>
    %900 = vector.shape_cast %899 : vector<16xf32> to vector<16x1xf32>
    %cst_266 = arith.constant 3.200000e+01 : f32
    %901 = vector.broadcast %cst_266 : f32 to vector<16x1xf32>
    %902 = arith.divf %900, %901 : vector<16x1xf32>
    %903 = vector.broadcast %895 : vector<16x1xf32> to vector<16x32xf32>
    %904 = arith.subf %889, %903 : vector<16x32xf32>
    %cst_267 = arith.constant 9.99999974E-6 : f32
    %905 = vector.broadcast %cst_267 : f32 to vector<16x1xf32>
    %906 = arith.addf %902, %905 : vector<16x1xf32>
    %907 = math.rsqrt %906 : vector<16x1xf32>
    %908 = vector.broadcast %907 : vector<16x1xf32> to vector<16x32xf32>
    %909 = arith.mulf %904, %908 : vector<16x32xf32>
    %910 = vector.broadcast %890 : vector<1x32xf32> to vector<16x32xf32>
    %911 = arith.mulf %909, %910 : vector<16x32xf32>
    %912 = vector.broadcast %891 : vector<1x32xf32> to vector<16x32xf32>
    %913 = arith.addf %911, %912 : vector<16x32xf32>
    %c1_268 = arith.constant 1 : index
    %c0_269 = arith.constant 0 : index
    %c0_270 = arith.constant 0 : index
    %914 = vector.load %arg20[%c1_268, %c0_269, %c0_270] : memref<2x16x32xf32, #tpu.memory_space<vmem>>, vector<1x16x32xf32>
    %915 = vector.shape_cast %914 : vector<1x16x32xf32> to vector<16x32xf32>
    %916 = vector.shape_cast %913 : vector<16x32xf32> to vector<1x16x32xf32>
    tpu.vector_store %arg20[%c1_268, %c0_269, %c0_270], %916 {strides = array<i32>} : memref<2x16x32xf32, #tpu.memory_space<vmem>>, vector<1x16x32xf32>,
    %c2 = arith.constant 2 : index
    %c0_271 = arith.constant 0 : index
    %c0_272 = arith.constant 0 : index
    %917 = vector.load %arg21[%c2, %c0_271, %c0_272] : memref<4x8x16xf32, #tpu.memory_space<vmem>>, vector<1x8x16xf32>
    %918 = vector.shape_cast %917 : vector<1x8x16xf32> to vector<8x16xf32>
    %919 = vector.shape_cast %750 : vector<8x16xf32> to vector<1x8x16xf32>
    tpu.vector_store %arg21[%c2, %c0_271, %c0_272], %919 {strides = array<i32>} : memref<4x8x16xf32, #tpu.memory_space<vmem>>, vector<1x8x16xf32>,
    %c3 = arith.constant 3 : index
    %c0_273 = arith.constant 0 : index
    %c0_274 = arith.constant 0 : index
    %920 = vector.load %arg21[%c3, %c0_273, %c0_274] : memref<4x8x16xf32, #tpu.memory_space<vmem>>, vector<1x8x16xf32>
    %921 = vector.shape_cast %920 : vector<1x8x16xf32> to vector<8x16xf32>
    %922 = vector.shape_cast %827 : vector<8x16xf32> to vector<1x8x16xf32>
    tpu.vector_store %arg21[%c3, %c0_273, %c0_274], %922 {strides = array<i32>} : memref<4x8x16xf32, #tpu.memory_space<vmem>>, vector<1x8x16xf32>,
    return
  }
  func.func @transform_0(%arg0: i32) -> (i32, i32) {
    %c0_i32 = arith.constant 0 : i32
    %c0_i32_0 = arith.constant 0 : i32
    %c0_i32_1 = arith.constant 0 : i32
    return %c0_i32, %c0_i32_0 : i32, i32
  }
  func.func @transform_1(%arg0: i32) -> (i32, i32) {
    %c0_i32 = arith.constant 0 : i32
    %c0_i32_0 = arith.constant 0 : i32
    %c0_i32_1 = arith.constant 0 : i32
    return %c0_i32, %c0_i32_0 : i32, i32
  }
  func.func @transform_2(%arg0: i32) -> (i32, i32) {
    %c0_i32 = arith.constant 0 : i32
    %c0_i32_0 = arith.constant 0 : i32
    %c0_i32_1 = arith.constant 0 : i32
    return %c0_i32, %c0_i32_0 : i32, i32
  }
  func.func @transform_3(%arg0: i32) -> (i32, i32) {
    %c0_i32 = arith.constant 0 : i32
    %c0_i32_0 = arith.constant 0 : i32
    %c0_i32_1 = arith.constant 0 : i32
    return %c0_i32, %c0_i32_0 : i32, i32
  }
  func.func @transform_4(%arg0: i32) -> (i32, i32) {
    %c0_i32 = arith.constant 0 : i32
    %c0_i32_0 = arith.constant 0 : i32
    %c0_i32_1 = arith.constant 0 : i32
    return %c0_i32, %c0_i32_0 : i32, i32
  }
  func.func @transform_5(%arg0: i32) -> (i32, i32) {
    %c0_i32 = arith.constant 0 : i32
    %c0_i32_0 = arith.constant 0 : i32
    %c0_i32_1 = arith.constant 0 : i32
    return %c0_i32, %c0_i32_0 : i32, i32
  }
  func.func @transform_6(%arg0: i32) -> (i32, i32) {
    %c0_i32 = arith.constant 0 : i32
    %c0_i32_0 = arith.constant 0 : i32
    %c0_i32_1 = arith.constant 0 : i32
    return %c0_i32, %c0_i32_0 : i32, i32
  }
  func.func @transform_7(%arg0: i32) -> (i32, i32) {
    %c0_i32 = arith.constant 0 : i32
    %c0_i32_0 = arith.constant 0 : i32
    %c0_i32_1 = arith.constant 0 : i32
    return %c0_i32, %c0_i32_0 : i32, i32
  }
  func.func @transform_8(%arg0: i32) -> (i32, i32) {
    %c0_i32 = arith.constant 0 : i32
    %c0_i32_0 = arith.constant 0 : i32
    %c0_i32_1 = arith.constant 0 : i32
    return %c0_i32, %c0_i32_0 : i32, i32
  }
  func.func @transform_9(%arg0: i32) -> (i32, i32) {
    %c0_i32 = arith.constant 0 : i32
    %c0_i32_0 = arith.constant 0 : i32
    %c0_i32_1 = arith.constant 0 : i32
    return %c0_i32, %c0_i32_0 : i32, i32
  }
  func.func @transform_10(%arg0: i32) -> (i32, i32) {
    %c0_i32 = arith.constant 0 : i32
    %c0_i32_0 = arith.constant 0 : i32
    %c0_i32_1 = arith.constant 0 : i32
    return %c0_i32, %c0_i32_0 : i32, i32
  }
  func.func @transform_11(%arg0: i32) -> (i32, i32) {
    %c0_i32 = arith.constant 0 : i32
    %c0_i32_0 = arith.constant 0 : i32
    %c0_i32_1 = arith.constant 0 : i32
    return %c0_i32, %c0_i32_0 : i32, i32
  }
  func.func @transform_12(%arg0: i32) -> (i32, i32) {
    %c0_i32 = arith.constant 0 : i32
    %c0_i32_0 = arith.constant 0 : i32
    %c0_i32_1 = arith.constant 0 : i32
    return %c0_i32, %c0_i32_0 : i32, i32
  }
  func.func @transform_13(%arg0: i32) -> (i32, i32) {
    %c0_i32 = arith.constant 0 : i32
    %c0_i32_0 = arith.constant 0 : i32
    %c0_i32_1 = arith.constant 0 : i32
    return %c0_i32, %c0_i32_0 : i32, i32
  }
  func.func @transform_14(%arg0: i32) -> (i32, i32) {
    %c0_i32 = arith.constant 0 : i32
    %c0_i32_0 = arith.constant 0 : i32
    %c0_i32_1 = arith.constant 0 : i32
    return %c0_i32, %c0_i32_0 : i32, i32
  }
  func.func @transform_15(%arg0: i32) -> (i32, i32) {
    %c0_i32 = arith.constant 0 : i32
    %c0_i32_0 = arith.constant 0 : i32
    %c0_i32_1 = arith.constant 0 : i32
    return %c0_i32, %c0_i32_0 : i32, i32
  }
  func.func @transform_16(%arg0: i32) -> (i32, i32) {
    %c0_i32 = arith.constant 0 : i32
    %c0_i32_0 = arith.constant 0 : i32
    %c0_i32_1 = arith.constant 0 : i32
    return %c0_i32, %c0_i32_0 : i32, i32
  }
  func.func @transform_17(%arg0: i32) -> (i32, i32) {
    %c0_i32 = arith.constant 0 : i32
    %c0_i32_0 = arith.constant 0 : i32
    %c0_i32_1 = arith.constant 0 : i32
    return %c0_i32, %c0_i32_0 : i32, i32
  }
  func.func @transform_18(%arg0: i32) -> (i32, i32) {
    %c0_i32 = arith.constant 0 : i32
    %c0_i32_0 = arith.constant 0 : i32
    %c0_i32_1 = arith.constant 0 : i32
    return %c0_i32, %c0_i32_0 : i32, i32
  }
  func.func @transform_19(%arg0: i32) -> (i32, i32, i32) {
    %c0_i32 = arith.constant 0 : i32
    %c0_i32_0 = arith.constant 0 : i32
    %c0_i32_1 = arith.constant 0 : i32
    %c0_i32_2 = arith.constant 0 : i32
    return %c0_i32, %c0_i32_0, %c0_i32_1 : i32, i32, i32
  }
  func.func @transform_20(%arg0: i32) -> (i32, i32, i32) {
    %c0_i32 = arith.constant 0 : i32
    %c0_i32_0 = arith.constant 0 : i32
    %c0_i32_1 = arith.constant 0 : i32
    %c0_i32_2 = arith.constant 0 : i32
    return %c0_i32, %c0_i32_0, %c0_i32_1 : i32, i32, i32
  }
}

</mosaic_0001>

<llo_original>
// kernel: time_decoder_forward.1
$region0: #{time_decoder_forward.1}
  #allocation0 [shape = 'u32[]', space=smem, size = 0x4, offset = 0x4, fixed_abs, tag = 'smem constant byte address 0x4 - core index']
  #allocation1 [shape = 'u32[144,128]{1,0:T(1,128)}', space=vmem, size = 0x12000, scoped, tag = 'internal scratch']
  %s0 = inlined_call_operand.vmem [shape: f32[16,32], index: 0, kind: input, shape index: {}]
  %s1 = inlined_call_operand.vmem [shape: f32[32,32], index: 1, kind: input, shape index: {}]
  %s2 = inlined_call_operand.vmem [shape: f32[32,32], index: 2, kind: input, shape index: {}]
  %s3 = inlined_call_operand.vmem [shape: f32[16,32], index: 3, kind: input, shape index: {}]
  %s4 = inlined_call_operand.vmem [shape: f32[16,32], index: 4, kind: input, shape index: {}]
  %s5 = inlined_call_operand.vmem [shape: f32[32,96], index: 5, kind: input, shape index: {}]
  %s6 = inlined_call_operand.vmem [shape: f32[1,96], index: 6, kind: input, shape index: {}]
  %s7 = inlined_call_operand.vmem [shape: f32[32,32], index: 7, kind: input, shape index: {}]
  %s8 = inlined_call_operand.vmem [shape: f32[1,32], index: 8, kind: input, shape index: {}]
  %s9 = inlined_call_operand.vmem [shape: f32[32,96], index: 9, kind: input, shape index: {}]
  %s10 = inlined_call_operand.vmem [shape: f32[1,96], index: 10, kind: input, shape index: {}]
  %s11 = inlined_call_operand.vmem [shape: f32[32,32], index: 11, kind: input, shape index: {}]
  %s12 = inlined_call_operand.vmem [shape: f32[1,32], index: 12, kind: input, shape index: {}]
  %s13 = inlined_call_operand.vmem [shape: f32[32,64], index: 13, kind: input, shape index: {}]
  %s14 = inlined_call_operand.vmem [shape: f32[1,64], index: 14, kind: input, shape index: {}]
  %s15 = inlined_call_operand.vmem [shape: f32[64,32], index: 15, kind: input, shape index: {}]
  %s16 = inlined_call_operand.vmem [shape: f32[1,32], index: 16, kind: input, shape index: {}]
  %s17 = inlined_call_operand.vmem [shape: f32[4,32], index: 17, kind: input, shape index: {}]
  %s18 = inlined_call_operand.vmem [shape: f32[4,32], index: 18, kind: input, shape index: {}]
  %s19 = inlined_call_operand.hbm [shape: f32[2,16,32], index: 19, kind: output, shape index: {0}]
  %s20 = inlined_call_operand.hbm [shape: f32[4,8,16], index: 20, kind: output, shape index: {1}]
  %21 = xla_tuple %s19, %s20
  %s22 = sld [smem:[#allocation0]]
  $region94: #{time_decoder_forward.1} parent=0
    _
  %s24 = ssub.s32 1, %s22
  %s25 = scalar_select 0, %s24, %s22
  $region1: #{time_decoder_forward.1} parent=0
    #allocation2 [shape = 'u8[16384]{0}', space=vmem, size = 0x4000, scoped, tag = 'output window, operand 0, single buffered']
    #allocation3 [shape = 's32[1]{0}', space=sflag, size = 0x4, scoped, tag = 'scoped memory for time_decoder_forward.1']
    #allocation4 [shape = 'u8[16384]{0}', space=vmem, size = 0x4000, scoped, tag = 'output window, operand 1, single buffered']
    #allocation5 [shape = 's32[1]{0}', space=sflag, size = 0x4, scoped, tag = 'scoped memory for time_decoder_forward.1']
    %26 = vsyncpa [#allocation3], 0
    %27 = vsyncpa [#allocation5], 0
    // Predicated region
    $region2: #{time_decoder_forward.1} parent=1 // pred_check
      _
    $region3: #{time_decoder_forward.1} parent=1 // pred_check_branch
      %29 = sbr.rel (0) target = $region5
    $region4: #{time_decoder_forward.1} parent=1 // pred_region
      _
    $region5: #{time_decoder_forward.1} parent=1 // pred_fallthru
      _
    // Predicated region
    $region6: #{time_decoder_forward.1} parent=1 // pred_check
      _
    $region7: #{time_decoder_forward.1} parent=1 // pred_check_branch
      %31 = sbr.rel (0) target = $region9
    $region8: #{time_decoder_forward.1} parent=1 // pred_region
      _
    $region9: #{time_decoder_forward.1} parent=1 // pred_fallthru
      _
    // Predicated region
    $region10: #{time_decoder_forward.1} parent=1 // pred_check
      _
    $region11: #{time_decoder_forward.1} parent=1 // pred_check_branch
      %33 = sbr.rel (0) target = $region13
    $region12: #{time_decoder_forward.1} parent=1 // pred_region
      _
    $region13: #{time_decoder_forward.1} parent=1 // pred_fallthru
      _
    // Predicated region
    $region14: #{time_decoder_forward.1} parent=1 // pred_check
      _
    $region15: #{time_decoder_forward.1} parent=1 // pred_check_branch
      %35 = sbr.rel (0) target = $region17
    $region16: #{time_decoder_forward.1} parent=1 // pred_region
      _
    $region17: #{time_decoder_forward.1} parent=1 // pred_fallthru
      _
    // Predicated region
    $region18: #{time_decoder_forward.1} parent=1 // pred_check
      _
    $region19: #{time_decoder_forward.1} parent=1 // pred_check_branch
      %37 = sbr.rel (0) target = $region21
    $region20: #{time_decoder_forward.1} parent=1 // pred_region
      _
    $region21: #{time_decoder_forward.1} parent=1 // pred_fallthru
      _
    // Predicated region
    $region22: #{time_decoder_forward.1} parent=1 // pred_check
      _
    $region23: #{time_decoder_forward.1} parent=1 // pred_check_branch
      %39 = sbr.rel (0) target = $region25
    $region24: #{time_decoder_forward.1} parent=1 // pred_region
      _
    $region25: #{time_decoder_forward.1} parent=1 // pred_fallthru
      _
    // Predicated region
    $region26: #{time_decoder_forward.1} parent=1 // pred_check
      _
    $region27: #{time_decoder_forward.1} parent=1 // pred_check_branch
      %41 = sbr.rel (0) target = $region29
    $region28: #{time_decoder_forward.1} parent=1 // pred_region
      _
    $region29: #{time_decoder_forward.1} parent=1 // pred_fallthru
      _
    // Predicated region
    $region30: #{time_decoder_forward.1} parent=1 // pred_check
      _
    $region31: #{time_decoder_forward.1} parent=1 // pred_check_branch
      %43 = sbr.rel (0) target = $region33
    $region32: #{time_decoder_forward.1} parent=1 // pred_region
      _
    $region33: #{time_decoder_forward.1} parent=1 // pred_fallthru
      _
    // Predicated region
    $region34: #{time_decoder_forward.1} parent=1 // pred_check
      _
    $region35: #{time_decoder_forward.1} parent=1 // pred_check_branch
      %45 = sbr.rel (0) target = $region37
    $region36: #{time_decoder_forward.1} parent=1 // pred_region
      _
    $region37: #{time_decoder_forward.1} parent=1 // pred_fallthru
      _
    // Predicated region
    $region38: #{time_decoder_forward.1} parent=1 // pred_check
      _
    $region39: #{time_decoder_forward.1} parent=1 // pred_check_branch
      %47 = sbr.rel (0) target = $region41
    $region40: #{time_decoder_forward.1} parent=1 // pred_region
      _
    $region41: #{time_decoder_forward.1} parent=1 // pred_fallthru
      _
    // Predicated region
    $region42: #{time_decoder_forward.1} parent=1 // pred_check
      _
    $region43: #{time_decoder_forward.1} parent=1 // pred_check_branch
      %49 = sbr.rel (0) target = $region45
    $region44: #{time_decoder_forward.1} parent=1 // pred_region
      _
    $region45: #{time_decoder_forward.1} parent=1 // pred_fallthru
      _
    // Predicated region
    $region46: #{time_decoder_forward.1} parent=1 // pred_check
      _
    $region47: #{time_decoder_forward.1} parent=1 // pred_check_branch
      %51 = sbr.rel (0) target = $region49
    $region48: #{time_decoder_forward.1} parent=1 // pred_region
      _
    $region49: #{time_decoder_forward.1} parent=1 // pred_fallthru
      _
    // Predicated region
    $region50: #{time_decoder_forward.1} parent=1 // pred_check
      _
    $region51: #{time_decoder_forward.1} parent=1 // pred_check_branch
      %53 = sbr.rel (0) target = $region53
    $region52: #{time_decoder_forward.1} parent=1 // pred_region
      _
    $region53: #{time_decoder_forward.1} parent=1 // pred_fallthru
      _
    // Predicated region
    $region54: #{time_decoder_forward.1} parent=1 // pred_check
      _
    $region55: #{time_decoder_forward.1} parent=1 // pred_check_branch
      %55 = sbr.rel (0) target = $region57
    $region56: #{time_decoder_forward.1} parent=1 // pred_region
      _
    $region57: #{time_decoder_forward.1} parent=1 // pred_fallthru
      _
    // Predicated region
    $region58: #{time_decoder_forward.1} parent=1 // pred_check
      _
    $region59: #{time_decoder_forward.1} parent=1 // pred_check_branch
      %57 = sbr.rel (0) target = $region61
    $region60: #{time_decoder_forward.1} parent=1 // pred_region
      _
    $region61: #{time_decoder_forward.1} parent=1 // pred_fallthru
      _
    // Predicated region
    $region62: #{time_decoder_forward.1} parent=1 // pred_check
      _
    $region63: #{time_decoder_forward.1} parent=1 // pred_check_branch
      %59 = sbr.rel (0) target = $region65
    $region64: #{time_decoder_forward.1} parent=1 // pred_region
      _
    $region65: #{time_decoder_forward.1} parent=1 // pred_fallthru
      _
    // Predicated region
    $region66: #{time_decoder_forward.1} parent=1 // pred_check
      _
    $region67: #{time_decoder_forward.1} parent=1 // pred_check_branch
      %61 = sbr.rel (0) target = $region69
    $region68: #{time_decoder_forward.1} parent=1 // pred_region
      _
    $region69: #{time_decoder_forward.1} parent=1 // pred_fallthru
      _
    // Predicated region
    $region70: #{time_decoder_forward.1} parent=1 // pred_check
      _
    $region71: #{time_decoder_forward.1} parent=1 // pred_check_branch
      %63 = sbr.rel (0) target = $region73
    $region72: #{time_decoder_forward.1} parent=1 // pred_region
      _
    $region73: #{time_decoder_forward.1} parent=1 // pred_fallthru
      _
    // Predicated region
    $region74: #{time_decoder_forward.1} parent=1 // pred_check
      _
    $region75: #{time_decoder_forward.1} parent=1 // pred_check_branch
      %65 = sbr.rel (0) target = $region77
    $region76: #{time_decoder_forward.1} parent=1 // pred_region
      _
    $region77: #{time_decoder_forward.1} parent=1 // pred_fallthru
      _
    %v66 = vld [vmem:[%s0] sm:$0xff]
    %v67 = vld [vmem:[%s0 + $0x8] sm:$0xff]
    %v68 = vld [vmem:[%s1] sm:$0xff]
    %v69 = vld [vmem:[%s1 + $0x8] sm:$0xff]
    %v70 = vld [vmem:[%s1 + $0x10] sm:$0xff]
    %v71 = vld [vmem:[%s1 + $0x18] sm:$0xff]
    %v72 = vld [vmem:[%s2] sm:$0xff]
    %v73 = vld [vmem:[%s2 + $0x8] sm:$0xff]
    %v74 = vld [vmem:[%s2 + $0x10] sm:$0xff]
    %v75 = vld [vmem:[%s2 + $0x18] sm:$0xff]
    %v76 = vld [vmem:[%s3] sm:$0xff]
    %v77 = vld [vmem:[%s3 + $0x8] sm:$0xff]
    %v78 = vld [vmem:[%s4] sm:$0xff]
    %v79 = vld [vmem:[%s4 + $0x8] sm:$0xff]
    %v80 = vld [vmem:[%s5] sm:$0xff]
    %v81 = vld [vmem:[%s5 + $0x8] sm:$0xff]
    %v82 = vld [vmem:[%s5 + $0x10] sm:$0xff]
    %v83 = vld [vmem:[%s5 + $0x18] sm:$0xff]
    %v84 = vld [vmem:[%s6] sm:$0x1]
    %v85 = vld [vmem:[%s7] sm:$0xff]
    %v86 = vld [vmem:[%s7 + $0x8] sm:$0xff]
    %v87 = vld [vmem:[%s7 + $0x10] sm:$0xff]
    %v88 = vld [vmem:[%s7 + $0x18] sm:$0xff]
    %v89 = vld [vmem:[%s8] sm:$0x1]
    %v90 = vld [vmem:[%s9] sm:$0xff]
    %v91 = vld [vmem:[%s9 + $0x8] sm:$0xff]
    %v92 = vld [vmem:[%s9 + $0x10] sm:$0xff]
    %v93 = vld [vmem:[%s9 + $0x18] sm:$0xff]
    %v94 = vld [vmem:[%s10] sm:$0x1]
    %v95 = vld [vmem:[%s11] sm:$0xff]
    %v96 = vld [vmem:[%s11 + $0x8] sm:$0xff]
    %v97 = vld [vmem:[%s11 + $0x10] sm:$0xff]
    %v98 = vld [vmem:[%s11 + $0x18] sm:$0xff]
    %v99 = vld [vmem:[%s12] sm:$0x1]
    %v100 = vld [vmem:[%s13] sm:$0xff]
    %v101 = vld [vmem:[%s13 + $0x8] sm:$0xff]
    %v102 = vld [vmem:[%s13 + $0x10] sm:$0xff]
    %v103 = vld [vmem:[%s13 + $0x18] sm:$0xff]
    %v104 = vld [vmem:[%s14] sm:$0x1]
    %v105 = vld [vmem:[%s15] sm:$0xff]
    %v106 = vld [vmem:[%s15 + $0x8] sm:$0xff]
    %v107 = vld [vmem:[%s15 + $0x10] sm:$0xff]
    %v108 = vld [vmem:[%s15 + $0x18] sm:$0xff]
    %v109 = vld [vmem:[%s15 + $0x20] sm:$0xff]
    %v110 = vld [vmem:[%s15 + $0x28] sm:$0xff]
    %v111 = vld [vmem:[%s15 + $0x30] sm:$0xff]
    %v112 = vld [vmem:[%s15 + $0x38] sm:$0xff]
    %v113 = vld [vmem:[%s16] sm:$0x1]
    %v114 = vld [vmem:[%s17] sm:$0xf]
    %v115 = vld [vmem:[%s18] sm:$0xf]
    %v116 = vadd.f32 %v76, %v78
    %v117 = vadd.f32 %v77, %v79
    %v118 = vadd.f32 %v68, %v72
    %v119 = vadd.f32 %v69, %v73
    %v120 = vadd.f32 %v70, %v74
    %v121 = vadd.f32 %v71, %v75
    %v122 = vadd.f32 %v66, %v116
    %v123 = vadd.f32 %v67, %v117
    %v125 = vlaneseq
    %v126 = vshrl.u32 %v125, 7
    %v127 = vsub.s32 0, %v126
    %v128 = vrot.slane %v84, %v127
    %vm130 = vcmask 261120
    %v132 = vsel %vm130, %v122, 0
    %v135 = vsel %vm130, %v123, 0
    %137 = vmatprep.subr.mxu0 0.0
    %138 = vmatpush1.msra.mxu0 %v80
    %139 = vmatprep.subr.mxu0 0.0
    %140 = vmatpush1.msra.mxu0 %v81
    %141 = vmatprep.subr.mxu0 0.0
    %142 = vmatpush1.msra.mxu0 %v82
    %143 = vmatprep.subr.mxu0 0.0
    %144 = vmatpush1.msra.mxu0 %v83
    %145 = vmatprep.subr.mxu0 0.0
    %146 = vmatpush1.msra.mxu0 0.0
    %147 = vmatprep.subr.mxu0 0.0
    %148 = vmatpush1.msra.mxu0 0.0
    %149 = vmatprep.subr.mxu0 0.0
    %150 = vmatpush1.msra.mxu0 0.0
    %151 = vmatprep.subr.mxu0 0.0
    %152 = vmatpush1.msra.mxu0 0.0
    %153 = vmatprep.subr.mxu0 0.0
    %154 = vmatpush1.msra.mxu0 0.0
    %155 = vmatprep.subr.mxu0 0.0
    %156 = vmatpush1.msra.mxu0 0.0
    %157 = vmatprep.subr.mxu0 0.0
    %158 = vmatpush1.msra.mxu0 0.0
    %159 = vmatprep.subr.mxu0 0.0
    %160 = vmatpush1.msra.mxu0 0.0
    %161 = vmatprep.subr.mxu0 0.0
    %162 = vmatpush1.msra.mxu0 0.0
    %163 = vmatprep.subr.mxu0 0.0
    %164 = vmatpush1.msra.mxu0 0.0
    %165 = vmatprep.subr.mxu0 0.0
    %166 = vmatpush1.msra.mxu0 0.0
    %167 = vmatprep.subr.mxu0 0.0
    %168 = vmatpush1.msra.mxu0 0.0
    %169 = vmatprep.subr.mxu0 0.0
    %170 = vmatpush1.msra.mxu0 0.0
    %171 = vmatprep.subr.mxu0 0.0
    %172 = vmatpush1.msra.mxu0 0.0
    %173 = vmatprep.subr.mxu0 0.0
    %174 = vmatpush1.msra.mxu0 0.0
    %175 = vmatprep.subr.mxu0 0.0
    %176 = vmatpush1.msra.mxu0 0.0
    %177 = vmatprep.subr.mxu0 0.0
    %178 = vmatpush1.msra.mxu0 0.0
    %179 = vmatprep.subr.mxu0 0.0
    %180 = vmatpush1.msra.mxu0 0.0
    %181 = vmatprep.subr.mxu0 0.0
    %182 = vmatpush1.msra.mxu0 0.0
    %183 = vmatprep.subr.mxu0 0.0
    %184 = vmatpush1.msra.mxu0 0.0
    %185 = vmatprep.subr.mxu0 0.0
    %186 = vmatpush1.msra.mxu0 0.0
    %187 = vmatprep.subr.mxu0 0.0
    %188 = vmatpush1.msra.mxu0 0.0
    %189 = vmatprep.subr.mxu0 0.0
    %190 = vmatpush1.msra.mxu0 0.0
    %191 = vmatprep.subr.mxu0 0.0
    %192 = vmatpush1.msra.mxu0 0.0
    %193 = vmatprep.subr.mxu0 0.0
    %194 = vmatpush1.msra.mxu0 0.0
    %195 = vmatprep.subr.mxu0 0.0
    %196 = vmatpush1.msra.mxu0 0.0
    %197 = vmatprep.subr.mxu0 0.0
    %198 = vmatpush1.msra.mxu0 0.0
    %199 = vmatprep.subr.mxu0 0.0
    %200 = vmatpush1.msra.mxu0 0.0
    %201 = vmatprep.mubr.f32.mxu0 0.0
    %202 = vmatmul.mubr.f32.gmra.mrb[0].mxu0 %v132
    %v203 = vpop.f32.mrb[0].mxu0
    %v204 = vadd.f32 %v128, %v203
    %v205 = vpop.f32.mrb[0].mxu0
    %206 = vmatprep.mubr.f32.mxu0 0.0
    %207 = vmatmul.mubr.f32.gmra.mrb[0].mxu0 %v135
    %v208 = vpop.f32.mrb[0].mxu0
    %v209 = vadd.f32 %v128, %v208
    %v210 = vpop.f32.mrb[0].mxu0
    %211 = vdwg.mxu0
    %216 = vrot.lane.b32.xlu0 %v80, 64
    %v217 = vpop.permute.xlu0 %216
    %218 = vrot.lane.b32.xlu0 %v81, 64
    %v219 = vpop.permute.xlu0 %218
    %220 = vrot.lane.b32.xlu0 %v82, 64
    %v221 = vpop.permute.xlu0 %220
    %222 = vrot.lane.b32.xlu0 %v83, 64
    %v223 = vpop.permute.xlu0 %222
    %228 = vrot.lane.b32.xlu0 %v128, 64
    %v229 = vpop.permute.xlu0 %228
    %v232 = vsel %vm130, %v66, 0
    %v235 = vsel %vm130, %v67, 0
    %237 = vmatprep.subr.mxu0 0.0
    %238 = vmatpush1.msra.mxu0 %v217
    %239 = vmatprep.subr.mxu0 0.0
    %240 = vmatpush1.msra.mxu0 %v219
    %241 = vmatprep.subr.mxu0 0.0
    %242 = vmatpush1.msra.mxu0 %v221
    %243 = vmatprep.subr.mxu0 0.0
    %244 = vmatpush1.msra.mxu0 %v223
    %245 = vmatprep.subr.mxu0 0.0
    %246 = vmatpush1.msra.mxu0 0.0
    %247 = vmatprep.subr.mxu0 0.0
    %248 = vmatpush1.msra.mxu0 0.0
    %249 = vmatprep.subr.mxu0 0.0
    %250 = vmatpush1.msra.mxu0 0.0
    %251 = vmatprep.subr.mxu0 0.0
    %252 = vmatpush1.msra.mxu0 0.0
    %253 = vmatprep.subr.mxu0 0.0
    %254 = vmatpush1.msra.mxu0 0.0
    %255 = vmatprep.subr.mxu0 0.0
    %256 = vmatpush1.msra.mxu0 0.0
    %257 = vmatprep.subr.mxu0 0.0
    %258 = vmatpush1.msra.mxu0 0.0
    %259 = vmatprep.subr.mxu0 0.0
    %260 = vmatpush1.msra.mxu0 0.0
    %261 = vmatprep.subr.mxu0 0.0
    %262 = vmatpush1.msra.mxu0 0.0
    %263 = vmatprep.subr.mxu0 0.0
    %264 = vmatpush1.msra.mxu0 0.0
    %265 = vmatprep.subr.mxu0 0.0
    %266 = vmatpush1.msra.mxu0 0.0
    %267 = vmatprep.subr.mxu0 0.0
    %268 = vmatpush1.msra.mxu0 0.0
    %269 = vmatprep.subr.mxu0 0.0
    %270 = vmatpush1.msra.mxu0 0.0
    %271 = vmatprep.subr.mxu0 0.0
    %272 = vmatpush1.msra.mxu0 0.0
    %273 = vmatprep.subr.mxu0 0.0
    %274 = vmatpush1.msra.mxu0 0.0
    %275 = vmatprep.subr.mxu0 0.0
    %276 = vmatpush1.msra.mxu0 0.0
    %277 = vmatprep.subr.mxu0 0.0
    %278 = vmatpush1.msra.mxu0 0.0
    %279 = vmatprep.subr.mxu0 0.0
    %280 = vmatpush1.msra.mxu0 0.0
    %281 = vmatprep.subr.mxu0 0.0
    %282 = vmatpush1.msra.mxu0 0.0
    %283 = vmatprep.subr.mxu0 0.0
    %284 = vmatpush1.msra.mxu0 0.0
    %285 = vmatprep.subr.mxu0 0.0
    %286 = vmatpush1.msra.mxu0 0.0
    %287 = vmatprep.subr.mxu0 0.0
    %288 = vmatpush1.msra.mxu0 0.0
    %289 = vmatprep.subr.mxu0 0.0
    %290 = vmatpush1.msra.mxu0 0.0
    %291 = vmatprep.subr.mxu0 0.0
    %292 = vmatpush1.msra.mxu0 0.0
    %293 = vmatprep.subr.mxu0 0.0
    %294 = vmatpush1.msra.mxu0 0.0
    %295 = vmatprep.subr.mxu0 0.0
    %296 = vmatpush1.msra.mxu0 0.0
    %297 = vmatprep.subr.mxu0 0.0
    %298 = vmatpush1.msra.mxu0 0.0
    %299 = vmatprep.subr.mxu0 0.0
    %300 = vmatpush1.msra.mxu0 0.0
    %301 = vmatprep.mubr.f32.mxu0 0.0
    %302 = vmatmul.mubr.f32.gmra.mrb[0].mxu0 %v232
    %v303 = vpop.f32.mrb[0].mxu0
    %v304 = vadd.f32 %v229, %v303
    %v305 = vpop.f32.mrb[0].mxu0
    %306 = vmatprep.mubr.f32.mxu0 0.0
    %307 = vmatmul.mubr.f32.gmra.mrb[0].mxu0 %v235
    %v308 = vpop.f32.mrb[0].mxu0
    %v309 = vadd.f32 %v229, %v308
    %v310 = vpop.f32.mrb[0].mxu0
    %311 = vdwg.mxu0
    %313 = vrot.lane.b32.xlu0 %v204, 96
    %v314 = vpop.permute.xlu0 %313
    %vm315 = vcmask 64512
    %v316 = vsel %vm315, %v204, 0
    %v318 = vsel %vm315, %v314, 0
    %320 = vmatprep.subr.mxu0 0.0
    %321 = vmatpush1.xpose.msra.mxu0 %v318
    %322 = vmatprep.subr.mxu0 0.0
    %323 = vmatpush1.xpose.msra.mxu0 0.0
    %324 = vmatprep.subr.mxu0 0.0
    %325 = vmatpush1.xpose.msra.mxu0 0.0
    %326 = vmatprep.subr.mxu0 0.0
    %327 = vmatpush1.xpose.msra.mxu0 0.0
    %328 = vmatprep.subr.mxu0 0.0
    %329 = vmatpush1.xpose.msra.mxu0 0.0
    %330 = vmatprep.subr.mxu0 0.0
    %331 = vmatpush1.xpose.msra.mxu0 0.0
    %332 = vmatprep.subr.mxu0 0.0
    %333 = vmatpush1.xpose.msra.mxu0 0.0
    %334 = vmatprep.subr.mxu0 0.0
    %335 = vmatpush1.xpose.msra.mxu0 0.0
    %336 = vmatprep.subr.mxu0 0.0
    %337 = vmatpush1.xpose.msra.mxu0 0.0
    %338 = vmatprep.subr.mxu0 0.0
    %339 = vmatpush1.xpose.msra.mxu0 0.0
    %340 = vmatprep.subr.mxu0 0.0
    %341 = vmatpush1.xpose.msra.mxu0 0.0
    %342 = vmatprep.subr.mxu0 0.0
    %343 = vmatpush1.xpose.msra.mxu0 0.0
    %344 = vmatprep.subr.mxu0 0.0
    %345 = vmatpush1.xpose.msra.mxu0 0.0
    %346 = vmatprep.subr.mxu0 0.0
    %347 = vmatpush1.xpose.msra.mxu0 0.0
    %348 = vmatprep.subr.mxu0 0.0
    %349 = vmatpush1.xpose.msra.mxu0 0.0
    %350 = vmatprep.subr.mxu0 0.0
    %351 = vmatpush1.xpose.msra.mxu0 0.0
    %352 = vmatprep.subr.mxu0 0.0
    %353 = vmatpush1.xpose.msra.mxu0 0.0
    %354 = vmatprep.subr.mxu0 0.0
    %355 = vmatpush1.xpose.msra.mxu0 0.0
    %356 = vmatprep.subr.mxu0 0.0
    %357 = vmatpush1.xpose.msra.mxu0 0.0
    %358 = vmatprep.subr.mxu0 0.0
    %359 = vmatpush1.xpose.msra.mxu0 0.0
    %360 = vmatprep.subr.mxu0 0.0
    %361 = vmatpush1.xpose.msra.mxu0 0.0
    %362 = vmatprep.subr.mxu0 0.0
    %363 = vmatpush1.xpose.msra.mxu0 0.0
    %364 = vmatprep.subr.mxu0 0.0
    %365 = vmatpush1.xpose.msra.mxu0 0.0
    %366 = vmatprep.subr.mxu0 0.0
    %367 = vmatpush1.xpose.msra.mxu0 0.0
    %368 = vmatprep.subr.mxu0 0.0
    %369 = vmatpush1.xpose.msra.mxu0 0.0
    %370 = vmatprep.subr.mxu0 0.0
    %371 = vmatpush1.xpose.msra.mxu0 0.0
    %372 = vmatprep.subr.mxu0 0.0
    %373 = vmatpush1.xpose.msra.mxu0 0.0
    %374 = vmatprep.subr.mxu0 0.0
    %375 = vmatpush1.xpose.msra.mxu0 0.0
    %376 = vmatprep.subr.mxu0 0.0
    %377 = vmatpush1.xpose.msra.mxu0 0.0
    %378 = vmatprep.subr.mxu0 0.0
    %379 = vmatpush1.xpose.msra.mxu0 0.0
    %380 = vmatprep.subr.mxu0 0.0
    %381 = vmatpush1.xpose.msra.mxu0 0.0
    %382 = vmatprep.subr.mxu0 0.0
    %383 = vmatpush1.xpose.msra.mxu0 0.0
    %384 = vmatprep.mubr.f32.mxu0 0.0
    %385 = vmatmul.mubr.f32.gmra.mrb[0].mxu0 %v316
    %v386 = vpop.f32.mrb[0].mxu0
    %v387 = vadd.f32 0.0, %v386
    %v388 = vpop.f32.mrb[0].mxu0
    %389 = vdwg.mxu0
    %v390 = vmul.f32 %v387, 0.35355338
    %v391 = vsel %vm315, %v390, -inf
    %392 = vmax.xlane.f32.xlu0 %v391
    %v393 = vpop.xlane.xlu0 %392
    %v394 = vsub.f32 %v390, %v393
    %v395 = vmul.f32 %v394, 1.442695
    %v396 = vpow.pop %v395
    %v397 = vsel %vm315, %v396, 0.0
    %398 = vadd.xlane.f32.xlu0 %v397
    %v399 = vpop.xlane.xlu0 %398
    %v400 = vrcp.pop %v399
    %v401 = vmul.f32 %v396, %v400
    %v403 = vsel %vm315, %v401, 0
    %405 = vmatprep.subr.mxu0 0.0
    %406 = vmatpush1.msra.mxu0 %v304
    %407 = vmatprep.subr.mxu0 0.0
    %408 = vmatpush1.msra.mxu0 0.0
    %409 = vmatprep.subr.mxu0 0.0
    %410 = vmatpush1.msra.mxu0 0.0
    %411 = vmatprep.subr.mxu0 0.0
    %412 = vmatpush1.msra.mxu0 0.0
    %413 = vmatprep.subr.mxu0 0.0
    %414 = vmatpush1.msra.mxu0 0.0
    %415 = vmatprep.subr.mxu0 0.0
    %416 = vmatpush1.msra.mxu0 0.0
    %417 = vmatprep.subr.mxu0 0.0
    %418 = vmatpush1.msra.mxu0 0.0
    %419 = vmatprep.subr.mxu0 0.0
    %420 = vmatpush1.msra.mxu0 0.0
    %421 = vmatprep.subr.mxu0 0.0
    %422 = vmatpush1.msra.mxu0 0.0
    %423 = vmatprep.subr.mxu0 0.0
    %424 = vmatpush1.msra.mxu0 0.0
    %425 = vmatprep.subr.mxu0 0.0
    %426 = vmatpush1.msra.mxu0 0.0
    %427 = vmatprep.subr.mxu0 0.0
    %428 = vmatpush1.msra.mxu0 0.0
    %429 = vmatprep.subr.mxu0 0.0
    %430 = vmatpush1.msra.mxu0 0.0
    %431 = vmatprep.subr.mxu0 0.0
    %432 = vmatpush1.msra.mxu0 0.0
    %433 = vmatprep.subr.mxu0 0.0
    %434 = vmatpush1.msra.mxu0 0.0
    %435 = vmatprep.subr.mxu0 0.0
    %436 = vmatpush1.msra.mxu0 0.0
    %437 = vmatprep.subr.mxu0 0.0
    %438 = vmatpush1.msra.mxu0 0.0
    %439 = vmatprep.subr.mxu0 0.0
    %440 = vmatpush1.msra.mxu0 0.0
    %441 = vmatprep.subr.mxu0 0.0
    %442 = vmatpush1.msra.mxu0 0.0
    %443 = vmatprep.subr.mxu0 0.0
    %444 = vmatpush1.msra.mxu0 0.0
    %445 = vmatprep.subr.mxu0 0.0
    %446 = vmatpush1.msra.mxu0 0.0
    %447 = vmatprep.subr.mxu0 0.0
    %448 = vmatpush1.msra.mxu0 0.0
    %449 = vmatprep.subr.mxu0 0.0
    %450 = vmatpush1.msra.mxu0 0.0
    %451 = vmatprep.subr.mxu0 0.0
    %452 = vmatpush1.msra.mxu0 0.0
    %453 = vmatprep.subr.mxu0 0.0
    %454 = vmatpush1.msra.mxu0 0.0
    %455 = vmatprep.subr.mxu0 0.0
    %456 = vmatpush1.msra.mxu0 0.0
    %457 = vmatprep.subr.mxu0 0.0
    %458 = vmatpush1.msra.mxu0 0.0
    %459 = vmatprep.subr.mxu0 0.0
    %460 = vmatpush1.msra.mxu0 0.0
    %461 = vmatprep.subr.mxu0 0.0
    %462 = vmatpush1.msra.mxu0 0.0
    %463 = vmatprep.subr.mxu0 0.0
    %464 = vmatpush1.msra.mxu0 0.0
    %465 = vmatprep.subr.mxu0 0.0
    %466 = vmatpush1.msra.mxu0 0.0
    %467 = vmatprep.subr.mxu0 0.0
    %468 = vmatpush1.msra.mxu0 0.0
    %469 = vmatprep.mubr.f32.mxu0 0.0
    %470 = vmatmul.mubr.f32.gmra.mrb[0].mxu0 %v403
    %v471 = vpop.f32.mrb[0].mxu0
    %v472 = vadd.f32 0.0, %v471
    %v473 = vpop.f32.mrb[0].mxu0
    %474 = vdwg.mxu0
    %475 = vrot.lane.b32.xlu0 %v204, 120
    %v476 = vpop.permute.xlu0 %475
    %477 = vrot.lane.b32.xlu0 %v204, 88
    %v478 = vpop.permute.xlu0 %477
    %v479 = vsel %vm315, %v476, 0
    %v481 = vsel %vm315, %v478, 0
    %483 = vmatprep.subr.mxu0 0.0
    %484 = vmatpush1.xpose.msra.mxu0 %v481
    %485 = vmatprep.subr.mxu0 0.0
    %486 = vmatpush1.xpose.msra.mxu0 0.0
    %487 = vmatprep.subr.mxu0 0.0
    %488 = vmatpush1.xpose.msra.mxu0 0.0
    %489 = vmatprep.subr.mxu0 0.0
    %490 = vmatpush1.xpose.msra.mxu0 0.0
    %491 = vmatprep.subr.mxu0 0.0
    %492 = vmatpush1.xpose.msra.mxu0 0.0
    %493 = vmatprep.subr.mxu0 0.0
    %494 = vmatpush1.xpose.msra.mxu0 0.0
    %495 = vmatprep.subr.mxu0 0.0
    %496 = vmatpush1.xpose.msra.mxu0 0.0
    %497 = vmatprep.subr.mxu0 0.0
    %498 = vmatpush1.xpose.msra.mxu0 0.0
    %499 = vmatprep.subr.mxu0 0.0
    %500 = vmatpush1.xpose.msra.mxu0 0.0
    %501 = vmatprep.subr.mxu0 0.0
    %502 = vmatpush1.xpose.msra.mxu0 0.0
    %503 = vmatprep.subr.mxu0 0.0
    %504 = vmatpush1.xpose.msra.mxu0 0.0
    %505 = vmatprep.subr.mxu0 0.0
    %506 = vmatpush1.xpose.msra.mxu0 0.0
    %507 = vmatprep.subr.mxu0 0.0
    %508 = vmatpush1.xpose.msra.mxu0 0.0
    %509 = vmatprep.subr.mxu0 0.0
    %510 = vmatpush1.xpose.msra.mxu0 0.0
    %511 = vmatprep.subr.mxu0 0.0
    %512 = vmatpush1.xpose.msra.mxu0 0.0
    %513 = vmatprep.subr.mxu0 0.0
    %514 = vmatpush1.xpose.msra.mxu0 0.0
    %515 = vmatprep.subr.mxu0 0.0
    %516 = vmatpush1.xpose.msra.mxu0 0.0
    %517 = vmatprep.subr.mxu0 0.0
    %518 = vmatpush1.xpose.msra.mxu0 0.0
    %519 = vmatprep.subr.mxu0 0.0
    %520 = vmatpush1.xpose.msra.mxu0 0.0
    %521 = vmatprep.subr.mxu0 0.0
    %522 = vmatpush1.xpose.msra.mxu0 0.0
    %523 = vmatprep.subr.mxu0 0.0
    %524 = vmatpush1.xpose.msra.mxu0 0.0
    %525 = vmatprep.subr.mxu0 0.0
    %526 = vmatpush1.xpose.msra.mxu0 0.0
    %527 = vmatprep.subr.mxu0 0.0
    %528 = vmatpush1.xpose.msra.mxu0 0.0
    %529 = vmatprep.subr.mxu0 0.0
    %530 = vmatpush1.xpose.msra.mxu0 0.0
    %531 = vmatprep.subr.mxu0 0.0
    %532 = vmatpush1.xpose.msra.mxu0 0.0
    %533 = vmatprep.subr.mxu0 0.0
    %534 = vmatpush1.xpose.msra.mxu0 0.0
    %535 = vmatprep.subr.mxu0 0.0
    %536 = vmatpush1.xpose.msra.mxu0 0.0
    %537 = vmatprep.subr.mxu0 0.0
    %538 = vmatpush1.xpose.msra.mxu0 0.0
    %539 = vmatprep.subr.mxu0 0.0
    %540 = vmatpush1.xpose.msra.mxu0 0.0
    %541 = vmatprep.subr.mxu0 0.0
    %542 = vmatpush1.xpose.msra.mxu0 0.0
    %543 = vmatprep.subr.mxu0 0.0
    %544 = vmatpush1.xpose.msra.mxu0 0.0
    %545 = vmatprep.subr.mxu0 0.0
    %546 = vmatpush1.xpose.msra.mxu0 0.0
    %547 = vmatprep.mubr.f32.mxu0 0.0
    %548 = vmatmul.mubr.f32.gmra.mrb[0].mxu0 %v479
    %v549 = vpop.f32.mrb[0].mxu0
    %v550 = vadd.f32 0.0, %v549
    %v551 = vpop.f32.mrb[0].mxu0
    %552 = vdwg.mxu0
    %v553 = vmul.f32 %v550, 0.35355338
    %v554 = vsel %vm315, %v553, -inf
    %555 = vmax.xlane.f32.xlu0 %v554
    %v556 = vpop.xlane.xlu0 %555
    %v557 = vsub.f32 %v553, %v556
    %v558 = vmul.f32 %v557, 1.442695
    %v559 = vpow.pop %v558
    %v560 = vsel %vm315, %v559, 0.0
    %561 = vadd.xlane.f32.xlu0 %v560
    %v562 = vpop.xlane.xlu0 %561
    %v563 = vrcp.pop %v562
    %v564 = vmul.f32 %v559, %v563
    %566 = vrot.lane.b32.xlu0 %v304, 120
    %v567 = vpop.permute.xlu0 %566
    %v570 = vsel %vm315, %v564, 0
    %572 = vmatprep.subr.mxu0 0.0
    %573 = vmatpush1.msra.mxu0 %v567
    %574 = vmatprep.subr.mxu0 0.0
    %575 = vmatpush1.msra.mxu0 0.0
    %576 = vmatprep.subr.mxu0 0.0
    %577 = vmatpush1.msra.mxu0 0.0
    %578 = vmatprep.subr.mxu0 0.0
    %579 = vmatpush1.msra.mxu0 0.0
    %580 = vmatprep.subr.mxu0 0.0
    %581 = vmatpush1.msra.mxu0 0.0
    %582 = vmatprep.subr.mxu0 0.0
    %583 = vmatpush1.msra.mxu0 0.0
    %584 = vmatprep.subr.mxu0 0.0
    %585 = vmatpush1.msra.mxu0 0.0
    %586 = vmatprep.subr.mxu0 0.0
    %587 = vmatpush1.msra.mxu0 0.0
    %588 = vmatprep.subr.mxu0 0.0
    %589 = vmatpush1.msra.mxu0 0.0
    %590 = vmatprep.subr.mxu0 0.0
    %591 = vmatpush1.msra.mxu0 0.0
    %592 = vmatprep.subr.mxu0 0.0
    %593 = vmatpush1.msra.mxu0 0.0
    %594 = vmatprep.subr.mxu0 0.0
    %595 = vmatpush1.msra.mxu0 0.0
    %596 = vmatprep.subr.mxu0 0.0
    %597 = vmatpush1.msra.mxu0 0.0
    %598 = vmatprep.subr.mxu0 0.0
    %599 = vmatpush1.msra.mxu0 0.0
    %600 = vmatprep.subr.mxu0 0.0
    %601 = vmatpush1.msra.mxu0 0.0
    %602 = vmatprep.subr.mxu0 0.0
    %603 = vmatpush1.msra.mxu0 0.0
    %604 = vmatprep.subr.mxu0 0.0
    %605 = vmatpush1.msra.mxu0 0.0
    %606 = vmatprep.subr.mxu0 0.0
    %607 = vmatpush1.msra.mxu0 0.0
    %608 = vmatprep.subr.mxu0 0.0
    %609 = vmatpush1.msra.mxu0 0.0
    %610 = vmatprep.subr.mxu0 0.0
    %611 = vmatpush1.msra.mxu0 0.0
    %612 = vmatprep.subr.mxu0 0.0
    %613 = vmatpush1.msra.mxu0 0.0
    %614 = vmatprep.subr.mxu0 0.0
    %615 = vmatpush1.msra.mxu0 0.0
    %616 = vmatprep.subr.mxu0 0.0
    %617 = vmatpush1.msra.mxu0 0.0
    %618 = vmatprep.subr.mxu0 0.0
    %619 = vmatpush1.msra.mxu0 0.0
    %620 = vmatprep.subr.mxu0 0.0
    %621 = vmatpush1.msra.mxu0 0.0
    %622 = vmatprep.subr.mxu0 0.0
    %623 = vmatpush1.msra.mxu0 0.0
    %624 = vmatprep.subr.mxu0 0.0
    %625 = vmatpush1.msra.mxu0 0.0
    %626 = vmatprep.subr.mxu0 0.0
    %627 = vmatpush1.msra.mxu0 0.0
    %628 = vmatprep.subr.mxu0 0.0
    %629 = vmatpush1.msra.mxu0 0.0
    %630 = vmatprep.subr.mxu0 0.0
    %631 = vmatpush1.msra.mxu0 0.0
    %632 = vmatprep.subr.mxu0 0.0
    %633 = vmatpush1.msra.mxu0 0.0
    %634 = vmatprep.subr.mxu0 0.0
    %635 = vmatpush1.msra.mxu0 0.0
    %636 = vmatprep.mubr.f32.mxu0 0.0
    %637 = vmatmul.mubr.f32.gmra.mrb[0].mxu0 %v570
    %v638 = vpop.f32.mrb[0].mxu0
    %v639 = vadd.f32 0.0, %v638
    %v640 = vpop.f32.mrb[0].mxu0
    %641 = vdwg.mxu0
    %642 = vrot.lane.b32.xlu0 %v204, 112
    %v643 = vpop.permute.xlu0 %642
    %644 = vrot.lane.b32.xlu0 %v204, 80
    %v645 = vpop.permute.xlu0 %644
    %v646 = vsel %vm315, %v643, 0
    %v648 = vsel %vm315, %v645, 0
    %650 = vmatprep.subr.mxu0 0.0
    %651 = vmatpush1.xpose.msra.mxu0 %v648
    %652 = vmatprep.subr.mxu0 0.0
    %653 = vmatpush1.xpose.msra.mxu0 0.0
    %654 = vmatprep.subr.mxu0 0.0
    %655 = vmatpush1.xpose.msra.mxu0 0.0
    %656 = vmatprep.subr.mxu0 0.0
    %657 = vmatpush1.xpose.msra.mxu0 0.0
    %658 = vmatprep.subr.mxu0 0.0
    %659 = vmatpush1.xpose.msra.mxu0 0.0
    %660 = vmatprep.subr.mxu0 0.0
    %661 = vmatpush1.xpose.msra.mxu0 0.0
    %662 = vmatprep.subr.mxu0 0.0
    %663 = vmatpush1.xpose.msra.mxu0 0.0
    %664 = vmatprep.subr.mxu0 0.0
    %665 = vmatpush1.xpose.msra.mxu0 0.0
    %666 = vmatprep.subr.mxu0 0.0
    %667 = vmatpush1.xpose.msra.mxu0 0.0
    %668 = vmatprep.subr.mxu0 0.0
    %669 = vmatpush1.xpose.msra.mxu0 0.0
    %670 = vmatprep.subr.mxu0 0.0
    %671 = vmatpush1.xpose.msra.mxu0 0.0
    %672 = vmatprep.subr.mxu0 0.0
    %673 = vmatpush1.xpose.msra.mxu0 0.0
    %674 = vmatprep.subr.mxu0 0.0
    %675 = vmatpush1.xpose.msra.mxu0 0.0
    %676 = vmatprep.subr.mxu0 0.0
    %677 = vmatpush1.xpose.msra.mxu0 0.0
    %678 = vmatprep.subr.mxu0 0.0
    %679 = vmatpush1.xpose.msra.mxu0 0.0
    %680 = vmatprep.subr.mxu0 0.0
    %681 = vmatpush1.xpose.msra.mxu0 0.0
    %682 = vmatprep.subr.mxu0 0.0
    %683 = vmatpush1.xpose.msra.mxu0 0.0
    %684 = vmatprep.subr.mxu0 0.0
    %685 = vmatpush1.xpose.msra.mxu0 0.0
    %686 = vmatprep.subr.mxu0 0.0
    %687 = vmatpush1.xpose.msra.mxu0 0.0
    %688 = vmatprep.subr.mxu0 0.0
    %689 = vmatpush1.xpose.msra.mxu0 0.0
    %690 = vmatprep.subr.mxu0 0.0
    %691 = vmatpush1.xpose.msra.mxu0 0.0
    %692 = vmatprep.subr.mxu0 0.0
    %693 = vmatpush1.xpose.msra.mxu0 0.0
    %694 = vmatprep.subr.mxu0 0.0
    %695 = vmatpush1.xpose.msra.mxu0 0.0
    %696 = vmatprep.subr.mxu0 0.0
    %697 = vmatpush1.xpose.msra.mxu0 0.0
    %698 = vmatprep.subr.mxu0 0.0
    %699 = vmatpush1.xpose.msra.mxu0 0.0
    %700 = vmatprep.subr.mxu0 0.0
    %701 = vmatpush1.xpose.msra.mxu0 0.0
    %702 = vmatprep.subr.mxu0 0.0
    %703 = vmatpush1.xpose.msra.mxu0 0.0
    %704 = vmatprep.subr.mxu0 0.0
    %705 = vmatpush1.xpose.msra.mxu0 0.0
    %706 = vmatprep.subr.mxu0 0.0
    %707 = vmatpush1.xpose.msra.mxu0 0.0
    %708 = vmatprep.subr.mxu0 0.0
    %709 = vmatpush1.xpose.msra.mxu0 0.0
    %710 = vmatprep.subr.mxu0 0.0
    %711 = vmatpush1.xpose.msra.mxu0 0.0
    %712 = vmatprep.subr.mxu0 0.0
    %713 = vmatpush1.xpose.msra.mxu0 0.0
    %714 = vmatprep.mubr.f32.mxu0 0.0
    %715 = vmatmul.mubr.f32.gmra.mrb[0].mxu0 %v646
    %v716 = vpop.f32.mrb[0].mxu0
    %v717 = vadd.f32 0.0, %v716
    %v718 = vpop.f32.mrb[0].mxu0
    %719 = vdwg.mxu0
    %v720 = vmul.f32 %v717, 0.35355338
    %v721 = vsel %vm315, %v720, -inf
    %722 = vmax.xlane.f32.xlu0 %v721
    %v723 = vpop.xlane.xlu0 %722
    %v724 = vsub.f32 %v720, %v723
    %v725 = vmul.f32 %v724, 1.442695
    %v726 = vpow.pop %v725
    %v727 = vsel %vm315, %v726, 0.0
    %728 = vadd.xlane.f32.xlu0 %v727
    %v729 = vpop.xlane.xlu0 %728
    %v730 = vrcp.pop %v729
    %v731 = vmul.f32 %v726, %v730
    %732 = vrot.lane.b32.xlu0 %v304, 112
    %v733 = vpop.permute.xlu0 %732
    %v736 = vsel %vm315, %v731, 0
    %738 = vmatprep.subr.mxu0 0.0
    %739 = vmatpush1.msra.mxu0 %v733
    %740 = vmatprep.subr.mxu0 0.0
    %741 = vmatpush1.msra.mxu0 0.0
    %742 = vmatprep.subr.mxu0 0.0
    %743 = vmatpush1.msra.mxu0 0.0
    %744 = vmatprep.subr.mxu0 0.0
    %745 = vmatpush1.msra.mxu0 0.0
    %746 = vmatprep.subr.mxu0 0.0
    %747 = vmatpush1.msra.mxu0 0.0
    %748 = vmatprep.subr.mxu0 0.0
    %749 = vmatpush1.msra.mxu0 0.0
    %750 = vmatprep.subr.mxu0 0.0
    %751 = vmatpush1.msra.mxu0 0.0
    %752 = vmatprep.subr.mxu0 0.0
    %753 = vmatpush1.msra.mxu0 0.0
    %754 = vmatprep.subr.mxu0 0.0
    %755 = vmatpush1.msra.mxu0 0.0
    %756 = vmatprep.subr.mxu0 0.0
    %757 = vmatpush1.msra.mxu0 0.0
    %758 = vmatprep.subr.mxu0 0.0
    %759 = vmatpush1.msra.mxu0 0.0
    %760 = vmatprep.subr.mxu0 0.0
    %761 = vmatpush1.msra.mxu0 0.0
    %762 = vmatprep.subr.mxu0 0.0
    %763 = vmatpush1.msra.mxu0 0.0
    %764 = vmatprep.subr.mxu0 0.0
    %765 = vmatpush1.msra.mxu0 0.0
    %766 = vmatprep.subr.mxu0 0.0
    %767 = vmatpush1.msra.mxu0 0.0
    %768 = vmatprep.subr.mxu0 0.0
    %769 = vmatpush1.msra.mxu0 0.0
    %770 = vmatprep.subr.mxu0 0.0
    %771 = vmatpush1.msra.mxu0 0.0
    %772 = vmatprep.subr.mxu0 0.0
    %773 = vmatpush1.msra.mxu0 0.0
    %774 = vmatprep.subr.mxu0 0.0
    %775 = vmatpush1.msra.mxu0 0.0
    %776 = vmatprep.subr.mxu0 0.0
    %777 = vmatpush1.msra.mxu0 0.0
    %778 = vmatprep.subr.mxu0 0.0
    %779 = vmatpush1.msra.mxu0 0.0
    %780 = vmatprep.subr.mxu0 0.0
    %781 = vmatpush1.msra.mxu0 0.0
    %782 = vmatprep.subr.mxu0 0.0
    %783 = vmatpush1.msra.mxu0 0.0
    %784 = vmatprep.subr.mxu0 0.0
    %785 = vmatpush1.msra.mxu0 0.0
    %786 = vmatprep.subr.mxu0 0.0
    %787 = vmatpush1.msra.mxu0 0.0
    %788 = vmatprep.subr.mxu0 0.0
    %789 = vmatpush1.msra.mxu0 0.0
    %790 = vmatprep.subr.mxu0 0.0
    %791 = vmatpush1.msra.mxu0 0.0
    %792 = vmatprep.subr.mxu0 0.0
    %793 = vmatpush1.msra.mxu0 0.0
    %794 = vmatprep.subr.mxu0 0.0
    %795 = vmatpush1.msra.mxu0 0.0
    %796 = vmatprep.subr.mxu0 0.0
    %797 = vmatpush1.msra.mxu0 0.0
    %798 = vmatprep.subr.mxu0 0.0
    %799 = vmatpush1.msra.mxu0 0.0
    %800 = vmatprep.subr.mxu0 0.0
    %801 = vmatpush1.msra.mxu0 0.0
    %802 = vmatprep.mubr.f32.mxu0 0.0
    %803 = vmatmul.mubr.f32.gmra.mrb[0].mxu0 %v736
    %v804 = vpop.f32.mrb[0].mxu0
    %v805 = vadd.f32 0.0, %v804
    %v806 = vpop.f32.mrb[0].mxu0
    %807 = vdwg.mxu0
    %808 = vrot.lane.b32.xlu0 %v204, 104
    %v809 = vpop.permute.xlu0 %808
    %810 = vrot.lane.b32.xlu0 %v204, 72
    %v811 = vpop.permute.xlu0 %810
    %v812 = vsel %vm315, %v809, 0
    %v814 = vsel %vm315, %v811, 0
    %816 = vmatprep.subr.mxu0 0.0
    %817 = vmatpush1.xpose.msra.mxu0 %v814
    %818 = vmatprep.subr.mxu0 0.0
    %819 = vmatpush1.xpose.msra.mxu0 0.0
    %820 = vmatprep.subr.mxu0 0.0
    %821 = vmatpush1.xpose.msra.mxu0 0.0
    %822 = vmatprep.subr.mxu0 0.0
    %823 = vmatpush1.xpose.msra.mxu0 0.0
    %824 = vmatprep.subr.mxu0 0.0
    %825 = vmatpush1.xpose.msra.mxu0 0.0
    %826 = vmatprep.subr.mxu0 0.0
    %827 = vmatpush1.xpose.msra.mxu0 0.0
    %828 = vmatprep.subr.mxu0 0.0
    %829 = vmatpush1.xpose.msra.mxu0 0.0
    %830 = vmatprep.subr.mxu0 0.0
    %831 = vmatpush1.xpose.msra.mxu0 0.0
    %832 = vmatprep.subr.mxu0 0.0
    %833 = vmatpush1.xpose.msra.mxu0 0.0
    %834 = vmatprep.subr.mxu0 0.0
    %835 = vmatpush1.xpose.msra.mxu0 0.0
    %836 = vmatprep.subr.mxu0 0.0
    %837 = vmatpush1.xpose.msra.mxu0 0.0
    %838 = vmatprep.subr.mxu0 0.0
    %839 = vmatpush1.xpose.msra.mxu0 0.0
    %840 = vmatprep.subr.mxu0 0.0
    %841 = vmatpush1.xpose.msra.mxu0 0.0
    %842 = vmatprep.subr.mxu0 0.0
    %843 = vmatpush1.xpose.msra.mxu0 0.0
    %844 = vmatprep.subr.mxu0 0.0
    %845 = vmatpush1.xpose.msra.mxu0 0.0
    %846 = vmatprep.subr.mxu0 0.0
    %847 = vmatpush1.xpose.msra.mxu0 0.0
    %848 = vmatprep.subr.mxu0 0.0
    %849 = vmatpush1.xpose.msra.mxu0 0.0
    %850 = vmatprep.subr.mxu0 0.0
    %851 = vmatpush1.xpose.msra.mxu0 0.0
    %852 = vmatprep.subr.mxu0 0.0
    %853 = vmatpush1.xpose.msra.mxu0 0.0
    %854 = vmatprep.subr.mxu0 0.0
    %855 = vmatpush1.xpose.msra.mxu0 0.0
    %856 = vmatprep.subr.mxu0 0.0
    %857 = vmatpush1.xpose.msra.mxu0 0.0
    %858 = vmatprep.subr.mxu0 0.0
    %859 = vmatpush1.xpose.msra.mxu0 0.0
    %860 = vmatprep.subr.mxu0 0.0
    %861 = vmatpush1.xpose.msra.mxu0 0.0
    %862 = vmatprep.subr.mxu0 0.0
    %863 = vmatpush1.xpose.msra.mxu0 0.0
    %864 = vmatprep.subr.mxu0 0.0
    %865 = vmatpush1.xpose.msra.mxu0 0.0
    %866 = vmatprep.subr.mxu0 0.0
    %867 = vmatpush1.xpose.msra.mxu0 0.0
    %868 = vmatprep.subr.mxu0 0.0
    %869 = vmatpush1.xpose.msra.mxu0 0.0
    %870 = vmatprep.subr.mxu0 0.0
    %871 = vmatpush1.xpose.msra.mxu0 0.0
    %872 = vmatprep.subr.mxu0 0.0
    %873 = vmatpush1.xpose.msra.mxu0 0.0
    %874 = vmatprep.subr.mxu0 0.0
    %875 = vmatpush1.xpose.msra.mxu0 0.0
    %876 = vmatprep.subr.mxu0 0.0
    %877 = vmatpush1.xpose.msra.mxu0 0.0
    %878 = vmatprep.subr.mxu0 0.0
    %879 = vmatpush1.xpose.msra.mxu0 0.0
    %880 = vmatprep.mubr.f32.mxu0 0.0
    %881 = vmatmul.mubr.f32.gmra.mrb[0].mxu0 %v812
    %v882 = vpop.f32.mrb[0].mxu0
    %v883 = vadd.f32 0.0, %v882
    %v884 = vpop.f32.mrb[0].mxu0
    %885 = vdwg.mxu0
    %v886 = vmul.f32 %v883, 0.35355338
    %v887 = vsel %vm315, %v886, -inf
    %888 = vmax.xlane.f32.xlu0 %v887
    %v889 = vpop.xlane.xlu0 %888
    %v890 = vsub.f32 %v886, %v889
    %v891 = vmul.f32 %v890, 1.442695
    %v892 = vpow.pop %v891
    %v893 = vsel %vm315, %v892, 0.0
    %894 = vadd.xlane.f32.xlu0 %v893
    %v895 = vpop.xlane.xlu0 %894
    %v896 = vrcp.pop %v895
    %v897 = vmul.f32 %v892, %v896
    %898 = vrot.lane.b32.xlu0 %v304, 104
    %v899 = vpop.permute.xlu0 %898
    %v902 = vsel %vm315, %v897, 0
    %904 = vmatprep.subr.mxu0 0.0
    %905 = vmatpush1.msra.mxu0 %v899
    %906 = vmatprep.subr.mxu0 0.0
    %907 = vmatpush1.msra.mxu0 0.0
    %908 = vmatprep.subr.mxu0 0.0
    %909 = vmatpush1.msra.mxu0 0.0
    %910 = vmatprep.subr.mxu0 0.0
    %911 = vmatpush1.msra.mxu0 0.0
    %912 = vmatprep.subr.mxu0 0.0
    %913 = vmatpush1.msra.mxu0 0.0
    %914 = vmatprep.subr.mxu0 0.0
    %915 = vmatpush1.msra.mxu0 0.0
    %916 = vmatprep.subr.mxu0 0.0
    %917 = vmatpush1.msra.mxu0 0.0
    %918 = vmatprep.subr.mxu0 0.0
    %919 = vmatpush1.msra.mxu0 0.0
    %920 = vmatprep.subr.mxu0 0.0
    %921 = vmatpush1.msra.mxu0 0.0
    %922 = vmatprep.subr.mxu0 0.0
    %923 = vmatpush1.msra.mxu0 0.0
    %924 = vmatprep.subr.mxu0 0.0
    %925 = vmatpush1.msra.mxu0 0.0
    %926 = vmatprep.subr.mxu0 0.0
    %927 = vmatpush1.msra.mxu0 0.0
    %928 = vmatprep.subr.mxu0 0.0
    %929 = vmatpush1.msra.mxu0 0.0
    %930 = vmatprep.subr.mxu0 0.0
    %931 = vmatpush1.msra.mxu0 0.0
    %932 = vmatprep.subr.mxu0 0.0
    %933 = vmatpush1.msra.mxu0 0.0
    %934 = vmatprep.subr.mxu0 0.0
    %935 = vmatpush1.msra.mxu0 0.0
    %936 = vmatprep.subr.mxu0 0.0
    %937 = vmatpush1.msra.mxu0 0.0
    %938 = vmatprep.subr.mxu0 0.0
    %939 = vmatpush1.msra.mxu0 0.0
    %940 = vmatprep.subr.mxu0 0.0
    %941 = vmatpush1.msra.mxu0 0.0
    %942 = vmatprep.subr.mxu0 0.0
    %943 = vmatpush1.msra.mxu0 0.0
    %944 = vmatprep.subr.mxu0 0.0
    %945 = vmatpush1.msra.mxu0 0.0
    %946 = vmatprep.subr.mxu0 0.0
    %947 = vmatpush1.msra.mxu0 0.0
    %948 = vmatprep.subr.mxu0 0.0
    %949 = vmatpush1.msra.mxu0 0.0
    %950 = vmatprep.subr.mxu0 0.0
    %951 = vmatpush1.msra.mxu0 0.0
    %952 = vmatprep.subr.mxu0 0.0
    %953 = vmatpush1.msra.mxu0 0.0
    %954 = vmatprep.subr.mxu0 0.0
    %955 = vmatpush1.msra.mxu0 0.0
    %956 = vmatprep.subr.mxu0 0.0
    %957 = vmatpush1.msra.mxu0 0.0
    %958 = vmatprep.subr.mxu0 0.0
    %959 = vmatpush1.msra.mxu0 0.0
    %960 = vmatprep.subr.mxu0 0.0
    %961 = vmatpush1.msra.mxu0 0.0
    %962 = vmatprep.subr.mxu0 0.0
    %963 = vmatpush1.msra.mxu0 0.0
    %964 = vmatprep.subr.mxu0 0.0
    %965 = vmatpush1.msra.mxu0 0.0
    %966 = vmatprep.subr.mxu0 0.0
    %967 = vmatpush1.msra.mxu0 0.0
    %968 = vmatprep.mubr.f32.mxu0 0.0
    %969 = vmatmul.mubr.f32.gmra.mrb[0].mxu0 %v902
    %v970 = vpop.f32.mrb[0].mxu0
    %v971 = vadd.f32 0.0, %v970
    %v972 = vpop.f32.mrb[0].mxu0
    %973 = vdwg.mxu0
    %975 = vrot.lane.b32.xlu0 %v639, 8
    %v976 = vpop.permute.xlu0 %975
    %979 = vrot.lane.b32.xlu0 %v805, 16
    %v980 = vpop.permute.xlu0 %979
    %983 = vrot.lane.b32.xlu0 %v971, 24
    %v984 = vpop.permute.xlu0 %983
    %v986 = vsel %vm315, %v472, %v976
    %vm987 = vcmask 130048
    %v988 = vsel %vm987, %v986, %v980
    %vm989 = vcmask 195584
    %v990 = vsel %vm989, %v988, %v984
    %992 = vrot.lane.b32.xlu0 %v209, 96
    %v993 = vpop.permute.xlu0 %992
    %v994 = vsel %vm315, %v209, 0
    %v996 = vsel %vm315, %v993, 0
    %998 = vmatprep.subr.mxu0 0.0
    %999 = vmatpush1.xpose.msra.mxu0 %v996
    %1000 = vmatprep.subr.mxu0 0.0
    %1001 = vmatpush1.xpose.msra.mxu0 0.0
    %1002 = vmatprep.subr.mxu0 0.0
    %1003 = vmatpush1.xpose.msra.mxu0 0.0
    %1004 = vmatprep.subr.mxu0 0.0
    %1005 = vmatpush1.xpose.msra.mxu0 0.0
    %1006 = vmatprep.subr.mxu0 0.0
    %1007 = vmatpush1.xpose.msra.mxu0 0.0
    %1008 = vmatprep.subr.mxu0 0.0
    %1009 = vmatpush1.xpose.msra.mxu0 0.0
    %1010 = vmatprep.subr.mxu0 0.0
    %1011 = vmatpush1.xpose.msra.mxu0 0.0
    %1012 = vmatprep.subr.mxu0 0.0
    %1013 = vmatpush1.xpose.msra.mxu0 0.0
    %1014 = vmatprep.subr.mxu0 0.0
    %1015 = vmatpush1.xpose.msra.mxu0 0.0
    %1016 = vmatprep.subr.mxu0 0.0
    %1017 = vmatpush1.xpose.msra.mxu0 0.0
    %1018 = vmatprep.subr.mxu0 0.0
    %1019 = vmatpush1.xpose.msra.mxu0 0.0
    %1020 = vmatprep.subr.mxu0 0.0
    %1021 = vmatpush1.xpose.msra.mxu0 0.0
    %1022 = vmatprep.subr.mxu0 0.0
    %1023 = vmatpush1.xpose.msra.mxu0 0.0
    %1024 = vmatprep.subr.mxu0 0.0
    %1025 = vmatpush1.xpose.msra.mxu0 0.0
    %1026 = vmatprep.subr.mxu0 0.0
    %1027 = vmatpush1.xpose.msra.mxu0 0.0
    %1028 = vmatprep.subr.mxu0 0.0
    %1029 = vmatpush1.xpose.msra.mxu0 0.0
    %1030 = vmatprep.subr.mxu0 0.0
    %1031 = vmatpush1.xpose.msra.mxu0 0.0
    %1032 = vmatprep.subr.mxu0 0.0
    %1033 = vmatpush1.xpose.msra.mxu0 0.0
    %1034 = vmatprep.subr.mxu0 0.0
    %1035 = vmatpush1.xpose.msra.mxu0 0.0
    %1036 = vmatprep.subr.mxu0 0.0
    %1037 = vmatpush1.xpose.msra.mxu0 0.0
    %1038 = vmatprep.subr.mxu0 0.0
    %1039 = vmatpush1.xpose.msra.mxu0 0.0
    %1040 = vmatprep.subr.mxu0 0.0
    %1041 = vmatpush1.xpose.msra.mxu0 0.0
    %1042 = vmatprep.subr.mxu0 0.0
    %1043 = vmatpush1.xpose.msra.mxu0 0.0
    %1044 = vmatprep.subr.mxu0 0.0
    %1045 = vmatpush1.xpose.msra.mxu0 0.0
    %1046 = vmatprep.subr.mxu0 0.0
    %1047 = vmatpush1.xpose.msra.mxu0 0.0
    %1048 = vmatprep.subr.mxu0 0.0
    %1049 = vmatpush1.xpose.msra.mxu0 0.0
    %1050 = vmatprep.subr.mxu0 0.0
    %1051 = vmatpush1.xpose.msra.mxu0 0.0
    %1052 = vmatprep.subr.mxu0 0.0
    %1053 = vmatpush1.xpose.msra.mxu0 0.0
    %1054 = vmatprep.subr.mxu0 0.0
    %1055 = vmatpush1.xpose.msra.mxu0 0.0
    %1056 = vmatprep.subr.mxu0 0.0
    %1057 = vmatpush1.xpose.msra.mxu0 0.0
    %1058 = vmatprep.subr.mxu0 0.0
    %1059 = vmatpush1.xpose.msra.mxu0 0.0
    %1060 = vmatprep.subr.mxu0 0.0
    %1061 = vmatpush1.xpose.msra.mxu0 0.0
    %1062 = vmatprep.mubr.f32.mxu0 0.0
    %1063 = vmatmul.mubr.f32.gmra.mrb[0].mxu0 %v994
    %v1064 = vpop.f32.mrb[0].mxu0
    %v1065 = vadd.f32 0.0, %v1064
    %v1066 = vpop.f32.mrb[0].mxu0
    %1067 = vdwg.mxu0
    %v1068 = vmul.f32 %v1065, 0.35355338
    %v1069 = vsel %vm315, %v1068, -inf
    %1070 = vmax.xlane.f32.xlu0 %v1069
    %v1071 = vpop.xlane.xlu0 %1070
    %v1072 = vsub.f32 %v1068, %v1071
    %v1073 = vmul.f32 %v1072, 1.442695
    %v1074 = vpow.pop %v1073
    %v1075 = vsel %vm315, %v1074, 0.0
    %1076 = vadd.xlane.f32.xlu0 %v1075
    %v1077 = vpop.xlane.xlu0 %1076
    %v1078 = vrcp.pop %v1077
    %v1079 = vmul.f32 %v1074, %v1078
    %v1081 = vsel %vm315, %v1079, 0
    %1083 = vmatprep.subr.mxu0 0.0
    %1084 = vmatpush1.msra.mxu0 %v309
    %1085 = vmatprep.subr.mxu0 0.0
    %1086 = vmatpush1.msra.mxu0 0.0
    %1087 = vmatprep.subr.mxu0 0.0
    %1088 = vmatpush1.msra.mxu0 0.0
    %1089 = vmatprep.subr.mxu0 0.0
    %1090 = vmatpush1.msra.mxu0 0.0
    %1091 = vmatprep.subr.mxu0 0.0
    %1092 = vmatpush1.msra.mxu0 0.0
    %1093 = vmatprep.subr.mxu0 0.0
    %1094 = vmatpush1.msra.mxu0 0.0
    %1095 = vmatprep.subr.mxu0 0.0
    %1096 = vmatpush1.msra.mxu0 0.0
    %1097 = vmatprep.subr.mxu0 0.0
    %1098 = vmatpush1.msra.mxu0 0.0
    %1099 = vmatprep.subr.mxu0 0.0
    %1100 = vmatpush1.msra.mxu0 0.0
    %1101 = vmatprep.subr.mxu0 0.0
    %1102 = vmatpush1.msra.mxu0 0.0
    %1103 = vmatprep.subr.mxu0 0.0
    %1104 = vmatpush1.msra.mxu0 0.0
    %1105 = vmatprep.subr.mxu0 0.0
    %1106 = vmatpush1.msra.mxu0 0.0
    %1107 = vmatprep.subr.mxu0 0.0
    %1108 = vmatpush1.msra.mxu0 0.0
    %1109 = vmatprep.subr.mxu0 0.0
    %1110 = vmatpush1.msra.mxu0 0.0
    %1111 = vmatprep.subr.mxu0 0.0
    %1112 = vmatpush1.msra.mxu0 0.0
    %1113 = vmatprep.subr.mxu0 0.0
    %1114 = vmatpush1.msra.mxu0 0.0
    %1115 = vmatprep.subr.mxu0 0.0
    %1116 = vmatpush1.msra.mxu0 0.0
    %1117 = vmatprep.subr.mxu0 0.0
    %1118 = vmatpush1.msra.mxu0 0.0
    %1119 = vmatprep.subr.mxu0 0.0
    %1120 = vmatpush1.msra.mxu0 0.0
    %1121 = vmatprep.subr.mxu0 0.0
    %1122 = vmatpush1.msra.mxu0 0.0
    %1123 = vmatprep.subr.mxu0 0.0
    %1124 = vmatpush1.msra.mxu0 0.0
    %1125 = vmatprep.subr.mxu0 0.0
    %1126 = vmatpush1.msra.mxu0 0.0
    %1127 = vmatprep.subr.mxu0 0.0
    %1128 = vmatpush1.msra.mxu0 0.0
    %1129 = vmatprep.subr.mxu0 0.0
    %1130 = vmatpush1.msra.mxu0 0.0
    %1131 = vmatprep.subr.mxu0 0.0
    %1132 = vmatpush1.msra.mxu0 0.0
    %1133 = vmatprep.subr.mxu0 0.0
    %1134 = vmatpush1.msra.mxu0 0.0
    %1135 = vmatprep.subr.mxu0 0.0
    %1136 = vmatpush1.msra.mxu0 0.0
    %1137 = vmatprep.subr.mxu0 0.0
    %1138 = vmatpush1.msra.mxu0 0.0
    %1139 = vmatprep.subr.mxu0 0.0
    %1140 = vmatpush1.msra.mxu0 0.0
    %1141 = vmatprep.subr.mxu0 0.0
    %1142 = vmatpush1.msra.mxu0 0.0
    %1143 = vmatprep.subr.mxu0 0.0
    %1144 = vmatpush1.msra.mxu0 0.0
    %1145 = vmatprep.subr.mxu0 0.0
    %1146 = vmatpush1.msra.mxu0 0.0
    %1147 = vmatprep.mubr.f32.mxu0 0.0
    %1148 = vmatmul.mubr.f32.gmra.mrb[0].mxu0 %v1081
    %v1149 = vpop.f32.mrb[0].mxu0
    %v1150 = vadd.f32 0.0, %v1149
    %v1151 = vpop.f32.mrb[0].mxu0
    %1152 = vdwg.mxu0
    %1153 = vrot.lane.b32.xlu0 %v209, 120
    %v1154 = vpop.permute.xlu0 %1153
    %1155 = vrot.lane.b32.xlu0 %v209, 88
    %v1156 = vpop.permute.xlu0 %1155
    %v1157 = vsel %vm315, %v1154, 0
    %v1159 = vsel %vm315, %v1156, 0
    %1161 = vmatprep.subr.mxu0 0.0
    %1162 = vmatpush1.xpose.msra.mxu0 %v1159
    %1163 = vmatprep.subr.mxu0 0.0
    %1164 = vmatpush1.xpose.msra.mxu0 0.0
    %1165 = vmatprep.subr.mxu0 0.0
    %1166 = vmatpush1.xpose.msra.mxu0 0.0
    %1167 = vmatprep.subr.mxu0 0.0
    %1168 = vmatpush1.xpose.msra.mxu0 0.0
    %1169 = vmatprep.subr.mxu0 0.0
    %1170 = vmatpush1.xpose.msra.mxu0 0.0
    %1171 = vmatprep.subr.mxu0 0.0
    %1172 = vmatpush1.xpose.msra.mxu0 0.0
    %1173 = vmatprep.subr.mxu0 0.0
    %1174 = vmatpush1.xpose.msra.mxu0 0.0
    %1175 = vmatprep.subr.mxu0 0.0
    %1176 = vmatpush1.xpose.msra.mxu0 0.0
    %1177 = vmatprep.subr.mxu0 0.0
    %1178 = vmatpush1.xpose.msra.mxu0 0.0
    %1179 = vmatprep.subr.mxu0 0.0
    %1180 = vmatpush1.xpose.msra.mxu0 0.0
    %1181 = vmatprep.subr.mxu0 0.0
    %1182 = vmatpush1.xpose.msra.mxu0 0.0
    %1183 = vmatprep.subr.mxu0 0.0
    %1184 = vmatpush1.xpose.msra.mxu0 0.0
    %1185 = vmatprep.subr.mxu0 0.0
    %1186 = vmatpush1.xpose.msra.mxu0 0.0
    %1187 = vmatprep.subr.mxu0 0.0
    %1188 = vmatpush1.xpose.msra.mxu0 0.0
    %1189 = vmatprep.subr.mxu0 0.0
    %1190 = vmatpush1.xpose.msra.mxu0 0.0
    %1191 = vmatprep.subr.mxu0 0.0
    %1192 = vmatpush1.xpose.msra.mxu0 0.0
    %1193 = vmatprep.subr.mxu0 0.0
    %1194 = vmatpush1.xpose.msra.mxu0 0.0
    %1195 = vmatprep.subr.mxu0 0.0
    %1196 = vmatpush1.xpose.msra.mxu0 0.0
    %1197 = vmatprep.subr.mxu0 0.0
    %1198 = vmatpush1.xpose.msra.mxu0 0.0
    %1199 = vmatprep.subr.mxu0 0.0
    %1200 = vmatpush1.xpose.msra.mxu0 0.0
    %1201 = vmatprep.subr.mxu0 0.0
    %1202 = vmatpush1.xpose.msra.mxu0 0.0
    %1203 = vmatprep.subr.mxu0 0.0
    %1204 = vmatpush1.xpose.msra.mxu0 0.0
    %1205 = vmatprep.subr.mxu0 0.0
    %1206 = vmatpush1.xpose.msra.mxu0 0.0
    %1207 = vmatprep.subr.mxu0 0.0
    %1208 = vmatpush1.xpose.msra.mxu0 0.0
    %1209 = vmatprep.subr.mxu0 0.0
    %1210 = vmatpush1.xpose.msra.mxu0 0.0
    %1211 = vmatprep.subr.mxu0 0.0
    %1212 = vmatpush1.xpose.msra.mxu0 0.0
    %1213 = vmatprep.subr.mxu0 0.0
    %1214 = vmatpush1.xpose.msra.mxu0 0.0
    %1215 = vmatprep.subr.mxu0 0.0
    %1216 = vmatpush1.xpose.msra.mxu0 0.0
    %1217 = vmatprep.subr.mxu0 0.0
    %1218 = vmatpush1.xpose.msra.mxu0 0.0
    %1219 = vmatprep.subr.mxu0 0.0
    %1220 = vmatpush1.xpose.msra.mxu0 0.0
    %1221 = vmatprep.subr.mxu0 0.0
    %1222 = vmatpush1.xpose.msra.mxu0 0.0
    %1223 = vmatprep.subr.mxu0 0.0
    %1224 = vmatpush1.xpose.msra.mxu0 0.0
    %1225 = vmatprep.mubr.f32.mxu0 0.0
    %1226 = vmatmul.mubr.f32.gmra.mrb[0].mxu0 %v1157
    %v1227 = vpop.f32.mrb[0].mxu0
    %v1228 = vadd.f32 0.0, %v1227
    %v1229 = vpop.f32.mrb[0].mxu0
    %1230 = vdwg.mxu0
    %v1231 = vmul.f32 %v1228, 0.35355338
    %v1232 = vsel %vm315, %v1231, -inf
    %1233 = vmax.xlane.f32.xlu0 %v1232
    %v1234 = vpop.xlane.xlu0 %1233
    %v1235 = vsub.f32 %v1231, %v1234
    %v1236 = vmul.f32 %v1235, 1.442695
    %v1237 = vpow.pop %v1236
    %v1238 = vsel %vm315, %v1237, 0.0
    %1239 = vadd.xlane.f32.xlu0 %v1238
    %v1240 = vpop.xlane.xlu0 %1239
    %v1241 = vrcp.pop %v1240
    %v1242 = vmul.f32 %v1237, %v1241
    %1244 = vrot.lane.b32.xlu0 %v309, 120
    %v1245 = vpop.permute.xlu0 %1244
    %v1248 = vsel %vm315, %v1242, 0
    %1250 = vmatprep.subr.mxu0 0.0
    %1251 = vmatpush1.msra.mxu0 %v1245
    %1252 = vmatprep.subr.mxu0 0.0
    %1253 = vmatpush1.msra.mxu0 0.0
    %1254 = vmatprep.subr.mxu0 0.0
    %1255 = vmatpush1.msra.mxu0 0.0
    %1256 = vmatprep.subr.mxu0 0.0
    %1257 = vmatpush1.msra.mxu0 0.0
    %1258 = vmatprep.subr.mxu0 0.0
    %1259 = vmatpush1.msra.mxu0 0.0
    %1260 = vmatprep.subr.mxu0 0.0
    %1261 = vmatpush1.msra.mxu0 0.0
    %1262 = vmatprep.subr.mxu0 0.0
    %1263 = vmatpush1.msra.mxu0 0.0
    %1264 = vmatprep.subr.mxu0 0.0
    %1265 = vmatpush1.msra.mxu0 0.0
    %1266 = vmatprep.subr.mxu0 0.0
    %1267 = vmatpush1.msra.mxu0 0.0
    %1268 = vmatprep.subr.mxu0 0.0
    %1269 = vmatpush1.msra.mxu0 0.0
    %1270 = vmatprep.subr.mxu0 0.0
    %1271 = vmatpush1.msra.mxu0 0.0
    %1272 = vmatprep.subr.mxu0 0.0
    %1273 = vmatpush1.msra.mxu0 0.0
    %1274 = vmatprep.subr.mxu0 0.0
    %1275 = vmatpush1.msra.mxu0 0.0
    %1276 = vmatprep.subr.mxu0 0.0
    %1277 = vmatpush1.msra.mxu0 0.0
    %1278 = vmatprep.subr.mxu0 0.0
    %1279 = vmatpush1.msra.mxu0 0.0
    %1280 = vmatprep.subr.mxu0 0.0
    %1281 = vmatpush1.msra.mxu0 0.0
    %1282 = vmatprep.subr.mxu0 0.0
    %1283 = vmatpush1.msra.mxu0 0.0
    %1284 = vmatprep.subr.mxu0 0.0
    %1285 = vmatpush1.msra.mxu0 0.0
    %1286 = vmatprep.subr.mxu0 0.0
    %1287 = vmatpush1.msra.mxu0 0.0
    %1288 = vmatprep.subr.mxu0 0.0
    %1289 = vmatpush1.msra.mxu0 0.0
    %1290 = vmatprep.subr.mxu0 0.0
    %1291 = vmatpush1.msra.mxu0 0.0
    %1292 = vmatprep.subr.mxu0 0.0
    %1293 = vmatpush1.msra.mxu0 0.0
    %1294 = vmatprep.subr.mxu0 0.0
    %1295 = vmatpush1.msra.mxu0 0.0
    %1296 = vmatprep.subr.mxu0 0.0
    %1297 = vmatpush1.msra.mxu0 0.0
    %1298 = vmatprep.subr.mxu0 0.0
    %1299 = vmatpush1.msra.mxu0 0.0
    %1300 = vmatprep.subr.mxu0 0.0
    %1301 = vmatpush1.msra.mxu0 0.0
    %1302 = vmatprep.subr.mxu0 0.0
    %1303 = vmatpush1.msra.mxu0 0.0
    %1304 = vmatprep.subr.mxu0 0.0
    %1305 = vmatpush1.msra.mxu0 0.0
    %1306 = vmatprep.subr.mxu0 0.0
    %1307 = vmatpush1.msra.mxu0 0.0
    %1308 = vmatprep.subr.mxu0 0.0
    %1309 = vmatpush1.msra.mxu0 0.0
    %1310 = vmatprep.subr.mxu0 0.0
    %1311 = vmatpush1.msra.mxu0 0.0
    %1312 = vmatprep.subr.mxu0 0.0
    %1313 = vmatpush1.msra.mxu0 0.0
    %1314 = vmatprep.mubr.f32.mxu0 0.0
    %1315 = vmatmul.mubr.f32.gmra.mrb[0].mxu0 %v1248
    %v1316 = vpop.f32.mrb[0].mxu0
    %v1317 = vadd.f32 0.0, %v1316
    %v1318 = vpop.f32.mrb[0].mxu0
    %1319 = vdwg.mxu0
    %1320 = vrot.lane.b32.xlu0 %v209, 112
    %v1321 = vpop.permute.xlu0 %1320
    %1322 = vrot.lane.b32.xlu0 %v209, 80
    %v1323 = vpop.permute.xlu0 %1322
    %v1324 = vsel %vm315, %v1321, 0
    %v1326 = vsel %vm315, %v1323, 0
    %1328 = vmatprep.subr.mxu0 0.0
    %1329 = vmatpush1.xpose.msra.mxu0 %v1326
    %1330 = vmatprep.subr.mxu0 0.0
    %1331 = vmatpush1.xpose.msra.mxu0 0.0
    %1332 = vmatprep.subr.mxu0 0.0
    %1333 = vmatpush1.xpose.msra.mxu0 0.0
    %1334 = vmatprep.subr.mxu0 0.0
    %1335 = vmatpush1.xpose.msra.mxu0 0.0
    %1336 = vmatprep.subr.mxu0 0.0
    %1337 = vmatpush1.xpose.msra.mxu0 0.0
    %1338 = vmatprep.subr.mxu0 0.0
    %1339 = vmatpush1.xpose.msra.mxu0 0.0
    %1340 = vmatprep.subr.mxu0 0.0
    %1341 = vmatpush1.xpose.msra.mxu0 0.0
    %1342 = vmatprep.subr.mxu0 0.0
    %1343 = vmatpush1.xpose.msra.mxu0 0.0
    %1344 = vmatprep.subr.mxu0 0.0
    %1345 = vmatpush1.xpose.msra.mxu0 0.0
    %1346 = vmatprep.subr.mxu0 0.0
    %1347 = vmatpush1.xpose.msra.mxu0 0.0
    %1348 = vmatprep.subr.mxu0 0.0
    %1349 = vmatpush1.xpose.msra.mxu0 0.0
    %1350 = vmatprep.subr.mxu0 0.0
    %1351 = vmatpush1.xpose.msra.mxu0 0.0
    %1352 = vmatprep.subr.mxu0 0.0
    %1353 = vmatpush1.xpose.msra.mxu0 0.0
    %1354 = vmatprep.subr.mxu0 0.0
    %1355 = vmatpush1.xpose.msra.mxu0 0.0
    %1356 = vmatprep.subr.mxu0 0.0
    %1357 = vmatpush1.xpose.msra.mxu0 0.0
    %1358 = vmatprep.subr.mxu0 0.0
    %1359 = vmatpush1.xpose.msra.mxu0 0.0
    %1360 = vmatprep.subr.mxu0 0.0
    %1361 = vmatpush1.xpose.msra.mxu0 0.0
    %1362 = vmatprep.subr.mxu0 0.0
    %1363 = vmatpush1.xpose.msra.mxu0 0.0
    %1364 = vmatprep.subr.mxu0 0.0
    %1365 = vmatpush1.xpose.msra.mxu0 0.0
    %1366 = vmatprep.subr.mxu0 0.0
    %1367 = vmatpush1.xpose.msra.mxu0 0.0
    %1368 = vmatprep.subr.mxu0 0.0
    %1369 = vmatpush1.xpose.msra.mxu0 0.0
    %1370 = vmatprep.subr.mxu0 0.0
    %1371 = vmatpush1.xpose.msra.mxu0 0.0
    %1372 = vmatprep.subr.mxu0 0.0
    %1373 = vmatpush1.xpose.msra.mxu0 0.0
    %1374 = vmatprep.subr.mxu0 0.0
    %1375 = vmatpush1.xpose.msra.mxu0 0.0
    %1376 = vmatprep.subr.mxu0 0.0
    %1377 = vmatpush1.xpose.msra.mxu0 0.0
    %1378 = vmatprep.subr.mxu0 0.0
    %1379 = vmatpush1.xpose.msra.mxu0 0.0
    %1380 = vmatprep.subr.mxu0 0.0
    %1381 = vmatpush1.xpose.msra.mxu0 0.0
    %1382 = vmatprep.subr.mxu0 0.0
    %1383 = vmatpush1.xpose.msra.mxu0 0.0
    %1384 = vmatprep.subr.mxu0 0.0
    %1385 = vmatpush1.xpose.msra.mxu0 0.0
    %1386 = vmatprep.subr.mxu0 0.0
    %1387 = vmatpush1.xpose.msra.mxu0 0.0
    %1388 = vmatprep.subr.mxu0 0.0
    %1389 = vmatpush1.xpose.msra.mxu0 0.0
    %1390 = vmatprep.subr.mxu0 0.0
    %1391 = vmatpush1.xpose.msra.mxu0 0.0
    %1392 = vmatprep.mubr.f32.mxu0 0.0
    %1393 = vmatmul.mubr.f32.gmra.mrb[0].mxu0 %v1324
    %v1394 = vpop.f32.mrb[0].mxu0
    %v1395 = vadd.f32 0.0, %v1394
    %v1396 = vpop.f32.mrb[0].mxu0
    %1397 = vdwg.mxu0
    %v1398 = vmul.f32 %v1395, 0.35355338
    %v1399 = vsel %vm315, %v1398, -inf
    %1400 = vmax.xlane.f32.xlu0 %v1399
    %v1401 = vpop.xlane.xlu0 %1400
    %v1402 = vsub.f32 %v1398, %v1401
    %v1403 = vmul.f32 %v1402, 1.442695
    %v1404 = vpow.pop %v1403
    %v1405 = vsel %vm315, %v1404, 0.0
    %1406 = vadd.xlane.f32.xlu0 %v1405
    %v1407 = vpop.xlane.xlu0 %1406
    %v1408 = vrcp.pop %v1407
    %v1409 = vmul.f32 %v1404, %v1408
    %1410 = vrot.lane.b32.xlu0 %v309, 112
    %v1411 = vpop.permute.xlu0 %1410
    %v1414 = vsel %vm315, %v1409, 0
    %1416 = vmatprep.subr.mxu0 0.0
    %1417 = vmatpush1.msra.mxu0 %v1411
    %1418 = vmatprep.subr.mxu0 0.0
    %1419 = vmatpush1.msra.mxu0 0.0
    %1420 = vmatprep.subr.mxu0 0.0
    %1421 = vmatpush1.msra.mxu0 0.0
    %1422 = vmatprep.subr.mxu0 0.0
    %1423 = vmatpush1.msra.mxu0 0.0
    %1424 = vmatprep.subr.mxu0 0.0
    %1425 = vmatpush1.msra.mxu0 0.0
    %1426 = vmatprep.subr.mxu0 0.0
    %1427 = vmatpush1.msra.mxu0 0.0
    %1428 = vmatprep.subr.mxu0 0.0
    %1429 = vmatpush1.msra.mxu0 0.0
    %1430 = vmatprep.subr.mxu0 0.0
    %1431 = vmatpush1.msra.mxu0 0.0
    %1432 = vmatprep.subr.mxu0 0.0
    %1433 = vmatpush1.msra.mxu0 0.0
    %1434 = vmatprep.subr.mxu0 0.0
    %1435 = vmatpush1.msra.mxu0 0.0
    %1436 = vmatprep.subr.mxu0 0.0
    %1437 = vmatpush1.msra.mxu0 0.0
    %1438 = vmatprep.subr.mxu0 0.0
    %1439 = vmatpush1.msra.mxu0 0.0
    %1440 = vmatprep.subr.mxu0 0.0
    %1441 = vmatpush1.msra.mxu0 0.0
    %1442 = vmatprep.subr.mxu0 0.0
    %1443 = vmatpush1.msra.mxu0 0.0
    %1444 = vmatprep.subr.mxu0 0.0
    %1445 = vmatpush1.msra.mxu0 0.0
    %1446 = vmatprep.subr.mxu0 0.0
    %1447 = vmatpush1.msra.mxu0 0.0
    %1448 = vmatprep.subr.mxu0 0.0
    %1449 = vmatpush1.msra.mxu0 0.0
    %1450 = vmatprep.subr.mxu0 0.0
    %1451 = vmatpush1.msra.mxu0 0.0
    %1452 = vmatprep.subr.mxu0 0.0
    %1453 = vmatpush1.msra.mxu0 0.0
    %1454 = vmatprep.subr.mxu0 0.0
    %1455 = vmatpush1.msra.mxu0 0.0
    %1456 = vmatprep.subr.mxu0 0.0
    %1457 = vmatpush1.msra.mxu0 0.0
    %1458 = vmatprep.subr.mxu0 0.0
    %1459 = vmatpush1.msra.mxu0 0.0
    %1460 = vmatprep.subr.mxu0 0.0
    %1461 = vmatpush1.msra.mxu0 0.0
    %1462 = vmatprep.subr.mxu0 0.0
    %1463 = vmatpush1.msra.mxu0 0.0
    %1464 = vmatprep.subr.mxu0 0.0
    %1465 = vmatpush1.msra.mxu0 0.0
    %1466 = vmatprep.subr.mxu0 0.0
    %1467 = vmatpush1.msra.mxu0 0.0
    %1468 = vmatprep.subr.mxu0 0.0
    %1469 = vmatpush1.msra.mxu0 0.0
    %1470 = vmatprep.subr.mxu0 0.0
    %1471 = vmatpush1.msra.mxu0 0.0
    %1472 = vmatprep.subr.mxu0 0.0
    %1473 = vmatpush1.msra.mxu0 0.0
    %1474 = vmatprep.subr.mxu0 0.0
    %1475 = vmatpush1.msra.mxu0 0.0
    %1476 = vmatprep.subr.mxu0 0.0
    %1477 = vmatpush1.msra.mxu0 0.0
    %1478 = vmatprep.subr.mxu0 0.0
    %1479 = vmatpush1.msra.mxu0 0.0
    %1480 = vmatprep.mubr.f32.mxu0 0.0
    %1481 = vmatmul.mubr.f32.gmra.mrb[0].mxu0 %v1414
    %v1482 = vpop.f32.mrb[0].mxu0
    %v1483 = vadd.f32 0.0, %v1482
    %v1484 = vpop.f32.mrb[0].mxu0
    %1485 = vdwg.mxu0
    %1486 = vrot.lane.b32.xlu0 %v209, 104
    %v1487 = vpop.permute.xlu0 %1486
    %1488 = vrot.lane.b32.xlu0 %v209, 72
    %v1489 = vpop.permute.xlu0 %1488
    %v1490 = vsel %vm315, %v1487, 0
    %v1492 = vsel %vm315, %v1489, 0
    %1494 = vmatprep.subr.mxu0 0.0
    %1495 = vmatpush1.xpose.msra.mxu0 %v1492
    %1496 = vmatprep.subr.mxu0 0.0
    %1497 = vmatpush1.xpose.msra.mxu0 0.0
    %1498 = vmatprep.subr.mxu0 0.0
    %1499 = vmatpush1.xpose.msra.mxu0 0.0
    %1500 = vmatprep.subr.mxu0 0.0
    %1501 = vmatpush1.xpose.msra.mxu0 0.0
    %1502 = vmatprep.subr.mxu0 0.0
    %1503 = vmatpush1.xpose.msra.mxu0 0.0
    %1504 = vmatprep.subr.mxu0 0.0
    %1505 = vmatpush1.xpose.msra.mxu0 0.0
    %1506 = vmatprep.subr.mxu0 0.0
    %1507 = vmatpush1.xpose.msra.mxu0 0.0
    %1508 = vmatprep.subr.mxu0 0.0
    %1509 = vmatpush1.xpose.msra.mxu0 0.0
    %1510 = vmatprep.subr.mxu0 0.0
    %1511 = vmatpush1.xpose.msra.mxu0 0.0
    %1512 = vmatprep.subr.mxu0 0.0
    %1513 = vmatpush1.xpose.msra.mxu0 0.0
    %1514 = vmatprep.subr.mxu0 0.0
    %1515 = vmatpush1.xpose.msra.mxu0 0.0
    %1516 = vmatprep.subr.mxu0 0.0
    %1517 = vmatpush1.xpose.msra.mxu0 0.0
    %1518 = vmatprep.subr.mxu0 0.0
    %1519 = vmatpush1.xpose.msra.mxu0 0.0
    %1520 = vmatprep.subr.mxu0 0.0
    %1521 = vmatpush1.xpose.msra.mxu0 0.0
    %1522 = vmatprep.subr.mxu0 0.0
    %1523 = vmatpush1.xpose.msra.mxu0 0.0
    %1524 = vmatprep.subr.mxu0 0.0
    %1525 = vmatpush1.xpose.msra.mxu0 0.0
    %1526 = vmatprep.subr.mxu0 0.0
    %1527 = vmatpush1.xpose.msra.mxu0 0.0
    %1528 = vmatprep.subr.mxu0 0.0
    %1529 = vmatpush1.xpose.msra.mxu0 0.0
    %1530 = vmatprep.subr.mxu0 0.0
    %1531 = vmatpush1.xpose.msra.mxu0 0.0
    %1532 = vmatprep.subr.mxu0 0.0
    %1533 = vmatpush1.xpose.msra.mxu0 0.0
    %1534 = vmatprep.subr.mxu0 0.0
    %1535 = vmatpush1.xpose.msra.mxu0 0.0
    %1536 = vmatprep.subr.mxu0 0.0
    %1537 = vmatpush1.xpose.msra.mxu0 0.0
    %1538 = vmatprep.subr.mxu0 0.0
    %1539 = vmatpush1.xpose.msra.mxu0 0.0
    %1540 = vmatprep.subr.mxu0 0.0
    %1541 = vmatpush1.xpose.msra.mxu0 0.0
    %1542 = vmatprep.subr.mxu0 0.0
    %1543 = vmatpush1.xpose.msra.mxu0 0.0
    %1544 = vmatprep.subr.mxu0 0.0
    %1545 = vmatpush1.xpose.msra.mxu0 0.0
    %1546 = vmatprep.subr.mxu0 0.0
    %1547 = vmatpush1.xpose.msra.mxu0 0.0
    %1548 = vmatprep.subr.mxu0 0.0
    %1549 = vmatpush1.xpose.msra.mxu0 0.0
    %1550 = vmatprep.subr.mxu0 0.0
    %1551 = vmatpush1.xpose.msra.mxu0 0.0
    %1552 = vmatprep.subr.mxu0 0.0
    %1553 = vmatpush1.xpose.msra.mxu0 0.0
    %1554 = vmatprep.subr.mxu0 0.0
    %1555 = vmatpush1.xpose.msra.mxu0 0.0
    %1556 = vmatprep.subr.mxu0 0.0
    %1557 = vmatpush1.xpose.msra.mxu0 0.0
    %1558 = vmatprep.mubr.f32.mxu0 0.0
    %1559 = vmatmul.mubr.f32.gmra.mrb[0].mxu0 %v1490
    %v1560 = vpop.f32.mrb[0].mxu0
    %v1561 = vadd.f32 0.0, %v1560
    %v1562 = vpop.f32.mrb[0].mxu0
    %1563 = vdwg.mxu0
    %v1564 = vmul.f32 %v1561, 0.35355338
    %v1565 = vsel %vm315, %v1564, -inf
    %1566 = vmax.xlane.f32.xlu0 %v1565
    %v1567 = vpop.xlane.xlu0 %1566
    %v1568 = vsub.f32 %v1564, %v1567
    %v1569 = vmul.f32 %v1568, 1.442695
    %v1570 = vpow.pop %v1569
    %v1571 = vsel %vm315, %v1570, 0.0
    %1572 = vadd.xlane.f32.xlu0 %v1571
    %v1573 = vpop.xlane.xlu0 %1572
    %v1574 = vrcp.pop %v1573
    %v1575 = vmul.f32 %v1570, %v1574
    %1576 = vrot.lane.b32.xlu0 %v309, 104
    %v1577 = vpop.permute.xlu0 %1576
    %v1580 = vsel %vm315, %v1575, 0
    %1582 = vmatprep.subr.mxu0 0.0
    %1583 = vmatpush1.msra.mxu0 %v1577
    %1584 = vmatprep.subr.mxu0 0.0
    %1585 = vmatpush1.msra.mxu0 0.0
    %1586 = vmatprep.subr.mxu0 0.0
    %1587 = vmatpush1.msra.mxu0 0.0
    %1588 = vmatprep.subr.mxu0 0.0
    %1589 = vmatpush1.msra.mxu0 0.0
    %1590 = vmatprep.subr.mxu0 0.0
    %1591 = vmatpush1.msra.mxu0 0.0
    %1592 = vmatprep.subr.mxu0 0.0
    %1593 = vmatpush1.msra.mxu0 0.0
    %1594 = vmatprep.subr.mxu0 0.0
    %1595 = vmatpush1.msra.mxu0 0.0
    %1596 = vmatprep.subr.mxu0 0.0
    %1597 = vmatpush1.msra.mxu0 0.0
    %1598 = vmatprep.subr.mxu0 0.0
    %1599 = vmatpush1.msra.mxu0 0.0
    %1600 = vmatprep.subr.mxu0 0.0
    %1601 = vmatpush1.msra.mxu0 0.0
    %1602 = vmatprep.subr.mxu0 0.0
    %1603 = vmatpush1.msra.mxu0 0.0
    %1604 = vmatprep.subr.mxu0 0.0
    %1605 = vmatpush1.msra.mxu0 0.0
    %1606 = vmatprep.subr.mxu0 0.0
    %1607 = vmatpush1.msra.mxu0 0.0
    %1608 = vmatprep.subr.mxu0 0.0
    %1609 = vmatpush1.msra.mxu0 0.0
    %1610 = vmatprep.subr.mxu0 0.0
    %1611 = vmatpush1.msra.mxu0 0.0
    %1612 = vmatprep.subr.mxu0 0.0
    %1613 = vmatpush1.msra.mxu0 0.0
    %1614 = vmatprep.subr.mxu0 0.0
    %1615 = vmatpush1.msra.mxu0 0.0
    %1616 = vmatprep.subr.mxu0 0.0
    %1617 = vmatpush1.msra.mxu0 0.0
    %1618 = vmatprep.subr.mxu0 0.0
    %1619 = vmatpush1.msra.mxu0 0.0
    %1620 = vmatprep.subr.mxu0 0.0
    %1621 = vmatpush1.msra.mxu0 0.0
    %1622 = vmatprep.subr.mxu0 0.0
    %1623 = vmatpush1.msra.mxu0 0.0
    %1624 = vmatprep.subr.mxu0 0.0
    %1625 = vmatpush1.msra.mxu0 0.0
    %1626 = vmatprep.subr.mxu0 0.0
    %1627 = vmatpush1.msra.mxu0 0.0
    %1628 = vmatprep.subr.mxu0 0.0
    %1629 = vmatpush1.msra.mxu0 0.0
    %1630 = vmatprep.subr.mxu0 0.0
    %1631 = vmatpush1.msra.mxu0 0.0
    %1632 = vmatprep.subr.mxu0 0.0
    %1633 = vmatpush1.msra.mxu0 0.0
    %1634 = vmatprep.subr.mxu0 0.0
    %1635 = vmatpush1.msra.mxu0 0.0
    %1636 = vmatprep.subr.mxu0 0.0
    %1637 = vmatpush1.msra.mxu0 0.0
    %1638 = vmatprep.subr.mxu0 0.0
    %1639 = vmatpush1.msra.mxu0 0.0
    %1640 = vmatprep.subr.mxu0 0.0
    %1641 = vmatpush1.msra.mxu0 0.0
    %1642 = vmatprep.subr.mxu0 0.0
    %1643 = vmatpush1.msra.mxu0 0.0
    %1644 = vmatprep.subr.mxu0 0.0
    %1645 = vmatpush1.msra.mxu0 0.0
    %1646 = vmatprep.mubr.f32.mxu0 0.0
    %1647 = vmatmul.mubr.f32.gmra.mrb[0].mxu0 %v1580
    %v1648 = vpop.f32.mrb[0].mxu0
    %v1649 = vadd.f32 0.0, %v1648
    %v1650 = vpop.f32.mrb[0].mxu0
    %1651 = vdwg.mxu0
    %1653 = vrot.lane.b32.xlu0 %v1317, 8
    %v1654 = vpop.permute.xlu0 %1653
    %1657 = vrot.lane.b32.xlu0 %v1483, 16
    %v1658 = vpop.permute.xlu0 %1657
    %1661 = vrot.lane.b32.xlu0 %v1649, 24
    %v1662 = vpop.permute.xlu0 %1661
    %v1664 = vsel %vm315, %v1150, %v1654
    %v1665 = vsel %vm987, %v1664, %v1658
    %v1666 = vsel %vm989, %v1665, %v1662
    %v1668 = vlaneseq
    %v1669 = vshrl.u32 %v1668, 7
    %v1670 = vsub.s32 0, %v1669
    %v1671 = vrot.slane %v89, %v1670
    %v1674 = vsel %vm130, %v990, 0
    %v1677 = vsel %vm130, %v1666, 0
    %1679 = vmatprep.subr.mxu0 0.0
    %1680 = vmatpush1.msra.mxu0 %v85
    %1681 = vmatprep.subr.mxu0 0.0
    %1682 = vmatpush1.msra.mxu0 %v86
    %1683 = vmatprep.subr.mxu0 0.0
    %1684 = vmatpush1.msra.mxu0 %v87
    %1685 = vmatprep.subr.mxu0 0.0
    %1686 = vmatpush1.msra.mxu0 %v88
    %1687 = vmatprep.subr.mxu0 0.0
    %1688 = vmatpush1.msra.mxu0 0.0
    %1689 = vmatprep.subr.mxu0 0.0
    %1690 = vmatpush1.msra.mxu0 0.0
    %1691 = vmatprep.subr.mxu0 0.0
    %1692 = vmatpush1.msra.mxu0 0.0
    %1693 = vmatprep.subr.mxu0 0.0
    %1694 = vmatpush1.msra.mxu0 0.0
    %1695 = vmatprep.subr.mxu0 0.0
    %1696 = vmatpush1.msra.mxu0 0.0
    %1697 = vmatprep.subr.mxu0 0.0
    %1698 = vmatpush1.msra.mxu0 0.0
    %1699 = vmatprep.subr.mxu0 0.0
    %1700 = vmatpush1.msra.mxu0 0.0
    %1701 = vmatprep.subr.mxu0 0.0
    %1702 = vmatpush1.msra.mxu0 0.0
    %1703 = vmatprep.subr.mxu0 0.0
    %1704 = vmatpush1.msra.mxu0 0.0
    %1705 = vmatprep.subr.mxu0 0.0
    %1706 = vmatpush1.msra.mxu0 0.0
    %1707 = vmatprep.subr.mxu0 0.0
    %1708 = vmatpush1.msra.mxu0 0.0
    %1709 = vmatprep.subr.mxu0 0.0
    %1710 = vmatpush1.msra.mxu0 0.0
    %1711 = vmatprep.subr.mxu0 0.0
    %1712 = vmatpush1.msra.mxu0 0.0
    %1713 = vmatprep.subr.mxu0 0.0
    %1714 = vmatpush1.msra.mxu0 0.0
    %1715 = vmatprep.subr.mxu0 0.0
    %1716 = vmatpush1.msra.mxu0 0.0
    %1717 = vmatprep.subr.mxu0 0.0
    %1718 = vmatpush1.msra.mxu0 0.0
    %1719 = vmatprep.subr.mxu0 0.0
    %1720 = vmatpush1.msra.mxu0 0.0
    %1721 = vmatprep.subr.mxu0 0.0
    %1722 = vmatpush1.msra.mxu0 0.0
    %1723 = vmatprep.subr.mxu0 0.0
    %1724 = vmatpush1.msra.mxu0 0.0
    %1725 = vmatprep.subr.mxu0 0.0
    %1726 = vmatpush1.msra.mxu0 0.0
    %1727 = vmatprep.subr.mxu0 0.0
    %1728 = vmatpush1.msra.mxu0 0.0
    %1729 = vmatprep.subr.mxu0 0.0
    %1730 = vmatpush1.msra.mxu0 0.0
    %1731 = vmatprep.subr.mxu0 0.0
    %1732 = vmatpush1.msra.mxu0 0.0
    %1733 = vmatprep.subr.mxu0 0.0
    %1734 = vmatpush1.msra.mxu0 0.0
    %1735 = vmatprep.subr.mxu0 0.0
    %1736 = vmatpush1.msra.mxu0 0.0
    %1737 = vmatprep.subr.mxu0 0.0
    %1738 = vmatpush1.msra.mxu0 0.0
    %1739 = vmatprep.subr.mxu0 0.0
    %1740 = vmatpush1.msra.mxu0 0.0
    %1741 = vmatprep.subr.mxu0 0.0
    %1742 = vmatpush1.msra.mxu0 0.0
    %1743 = vmatprep.mubr.f32.mxu0 0.0
    %1744 = vmatmul.mubr.f32.gmra.mrb[0].mxu0 %v1674
    %v1745 = vpop.f32.mrb[0].mxu0
    %v1746 = vadd.f32 %v1671, %v1745
    %v1747 = vpop.f32.mrb[0].mxu0
    %1748 = vmatprep.mubr.f32.mxu0 0.0
    %1749 = vmatmul.mubr.f32.gmra.mrb[0].mxu0 %v1677
    %v1750 = vpop.f32.mrb[0].mxu0
    %v1751 = vadd.f32 %v1671, %v1750
    %v1752 = vpop.f32.mrb[0].mxu0
    %1753 = vdwg.mxu0
    %v1754 = vadd.f32 %v66, %v1746
    %v1755 = vadd.f32 %v67, %v1751
    %v1756 = vsel %vm130, %v1754, 0.0
    %1757 = vadd.xlane.f32.xlu0 %v1756
    %v1758 = vpop.xlane.xlu0 %1757
    %v1759 = vsel %vm130, %v1755, 0.0
    %1760 = vadd.xlane.f32.xlu0 %v1759
    %v1761 = vpop.xlane.xlu0 %1760
    %v1762 = vrcp.pop 32.0
    %v1763 = vmul.f32 %v1758, %v1762
    %v1764 = vmul.f32 %v1761, %v1762
    %v1765 = vsub.f32 %v1754, %v1763
    %v1766 = vsub.f32 %v1755, %v1764
    %v1767 = vmul.f32 %v1765, %v1765
    %v1768 = vmul.f32 %v1766, %v1766
    %v1769 = vsel %vm130, %v1767, 0.0
    %1770 = vadd.xlane.f32.xlu0 %v1769
    %v1771 = vpop.xlane.xlu0 %1770
    %v1772 = vsel %vm130, %v1768, 0.0
    %1773 = vadd.xlane.f32.xlu0 %v1772
    %v1774 = vpop.xlane.xlu0 %1773
    %v1775 = vmul.f32 %v1771, %v1762
    %v1776 = vmul.f32 %v1774, %v1762
    %v1777 = vadd.f32 %v1775, 1e-05
    %v1778 = vadd.f32 %v1776, 1e-05
    %v1779 = vrsqrt.pop %v1777
    %v1780 = vrsqrt.pop %v1778
    %v1781 = vmul.f32 %v1765, %v1779
    %v1782 = vmul.f32 %v1766, %v1780
    %v1783 = vlaneseq
    %v1784 = vshrl.u32 %v1783, 7
    %v1785 = vsub.s32 0, %v1784
    %v1786 = vrot.slane %v114, %v1785
    %v1787 = vmul.f32 %v1781, %v1786
    %v1788 = vmul.f32 %v1782, %v1786
    %v1789 = vlaneseq
    %v1790 = vshrl.u32 %v1789, 7
    %v1791 = vsub.s32 0, %v1790
    %v1792 = vrot.slane %v115, %v1791
    %v1793 = vadd.f32 %v1787, %v1792
    %v1794 = vadd.f32 %v1788, %v1792
    %v1795 = vadd.f32 %v1793, %v76
    %v1796 = vadd.f32 %v1794, %v77
    %v1798 = vlaneseq
    %v1799 = vshrl.u32 %v1798, 7
    %v1800 = vsub.s32 0, %v1799
    %v1801 = vrot.slane %v94, %v1800
    %v1804 = vsel %vm130, %v1795, 0
    %v1807 = vsel %vm130, %v1796, 0
    %1809 = vmatprep.subr.mxu0 0.0
    %1810 = vmatpush1.msra.mxu0 %v90
    %1811 = vmatprep.subr.mxu0 0.0
    %1812 = vmatpush1.msra.mxu0 %v91
    %1813 = vmatprep.subr.mxu0 0.0
    %1814 = vmatpush1.msra.mxu0 %v92
    %1815 = vmatprep.subr.mxu0 0.0
    %1816 = vmatpush1.msra.mxu0 %v93
    %1817 = vmatprep.subr.mxu0 0.0
    %1818 = vmatpush1.msra.mxu0 0.0
    %1819 = vmatprep.subr.mxu0 0.0
    %1820 = vmatpush1.msra.mxu0 0.0
    %1821 = vmatprep.subr.mxu0 0.0
    %1822 = vmatpush1.msra.mxu0 0.0
    %1823 = vmatprep.subr.mxu0 0.0
    %1824 = vmatpush1.msra.mxu0 0.0
    %1825 = vmatprep.subr.mxu0 0.0
    %1826 = vmatpush1.msra.mxu0 0.0
    %1827 = vmatprep.subr.mxu0 0.0
    %1828 = vmatpush1.msra.mxu0 0.0
    %1829 = vmatprep.subr.mxu0 0.0
    %1830 = vmatpush1.msra.mxu0 0.0
    %1831 = vmatprep.subr.mxu0 0.0
    %1832 = vmatpush1.msra.mxu0 0.0
    %1833 = vmatprep.subr.mxu0 0.0
    %1834 = vmatpush1.msra.mxu0 0.0
    %1835 = vmatprep.subr.mxu0 0.0
    %1836 = vmatpush1.msra.mxu0 0.0
    %1837 = vmatprep.subr.mxu0 0.0
    %1838 = vmatpush1.msra.mxu0 0.0
    %1839 = vmatprep.subr.mxu0 0.0
    %1840 = vmatpush1.msra.mxu0 0.0
    %1841 = vmatprep.subr.mxu0 0.0
    %1842 = vmatpush1.msra.mxu0 0.0
    %1843 = vmatprep.subr.mxu0 0.0
    %1844 = vmatpush1.msra.mxu0 0.0
    %1845 = vmatprep.subr.mxu0 0.0
    %1846 = vmatpush1.msra.mxu0 0.0
    %1847 = vmatprep.subr.mxu0 0.0
    %1848 = vmatpush1.msra.mxu0 0.0
    %1849 = vmatprep.subr.mxu0 0.0
    %1850 = vmatpush1.msra.mxu0 0.0
    %1851 = vmatprep.subr.mxu0 0.0
    %1852 = vmatpush1.msra.mxu0 0.0
    %1853 = vmatprep.subr.mxu0 0.0
    %1854 = vmatpush1.msra.mxu0 0.0
    %1855 = vmatprep.subr.mxu0 0.0
    %1856 = vmatpush1.msra.mxu0 0.0
    %1857 = vmatprep.subr.mxu0 0.0
    %1858 = vmatpush1.msra.mxu0 0.0
    %1859 = vmatprep.subr.mxu0 0.0
    %1860 = vmatpush1.msra.mxu0 0.0
    %1861 = vmatprep.subr.mxu0 0.0
    %1862 = vmatpush1.msra.mxu0 0.0
    %1863 = vmatprep.subr.mxu0 0.0
    %1864 = vmatpush1.msra.mxu0 0.0
    %1865 = vmatprep.subr.mxu0 0.0
    %1866 = vmatpush1.msra.mxu0 0.0
    %1867 = vmatprep.subr.mxu0 0.0
    %1868 = vmatpush1.msra.mxu0 0.0
    %1869 = vmatprep.subr.mxu0 0.0
    %1870 = vmatpush1.msra.mxu0 0.0
    %1871 = vmatprep.subr.mxu0 0.0
    %1872 = vmatpush1.msra.mxu0 0.0
    %1873 = vmatprep.mubr.f32.mxu0 0.0
    %1874 = vmatmul.mubr.f32.gmra.mrb[0].mxu0 %v1804
    %v1875 = vpop.f32.mrb[0].mxu0
    %v1876 = vadd.f32 %v1801, %v1875
    %v1877 = vpop.f32.mrb[0].mxu0
    %1878 = vmatprep.mubr.f32.mxu0 0.0
    %1879 = vmatmul.mubr.f32.gmra.mrb[0].mxu0 %v1807
    %v1880 = vpop.f32.mrb[0].mxu0
    %v1881 = vadd.f32 %v1801, %v1880
    %v1882 = vpop.f32.mrb[0].mxu0
    %1883 = vdwg.mxu0
    %1888 = vrot.lane.b32.xlu0 %v90, 96
    %v1889 = vpop.permute.xlu0 %1888
    %1890 = vrot.lane.b32.xlu0 %v91, 96
    %v1891 = vpop.permute.xlu0 %1890
    %1892 = vrot.lane.b32.xlu0 %v92, 96
    %v1893 = vpop.permute.xlu0 %1892
    %1894 = vrot.lane.b32.xlu0 %v93, 96
    %v1895 = vpop.permute.xlu0 %1894
    %1900 = vrot.lane.b32.xlu0 %v1801, 96
    %v1901 = vpop.permute.xlu0 %1900
    %v1904 = vsel %vm130, %v118, 0
    %v1907 = vsel %vm130, %v119, 0
    %v1910 = vsel %vm130, %v120, 0
    %v1913 = vsel %vm130, %v121, 0
    %1915 = vmatprep.subr.mxu0 0.0
    %1916 = vmatpush1.msra.mxu0 %v1889
    %1917 = vmatprep.subr.mxu0 0.0
    %1918 = vmatpush1.msra.mxu0 %v1891
    %1919 = vmatprep.subr.mxu0 0.0
    %1920 = vmatpush1.msra.mxu0 %v1893
    %1921 = vmatprep.subr.mxu0 0.0
    %1922 = vmatpush1.msra.mxu0 %v1895
    %1923 = vmatprep.subr.mxu0 0.0
    %1924 = vmatpush1.msra.mxu0 0.0
    %1925 = vmatprep.subr.mxu0 0.0
    %1926 = vmatpush1.msra.mxu0 0.0
    %1927 = vmatprep.subr.mxu0 0.0
    %1928 = vmatpush1.msra.mxu0 0.0
    %1929 = vmatprep.subr.mxu0 0.0
    %1930 = vmatpush1.msra.mxu0 0.0
    %1931 = vmatprep.subr.mxu0 0.0
    %1932 = vmatpush1.msra.mxu0 0.0
    %1933 = vmatprep.subr.mxu0 0.0
    %1934 = vmatpush1.msra.mxu0 0.0
    %1935 = vmatprep.subr.mxu0 0.0
    %1936 = vmatpush1.msra.mxu0 0.0
    %1937 = vmatprep.subr.mxu0 0.0
    %1938 = vmatpush1.msra.mxu0 0.0
    %1939 = vmatprep.subr.mxu0 0.0
    %1940 = vmatpush1.msra.mxu0 0.0
    %1941 = vmatprep.subr.mxu0 0.0
    %1942 = vmatpush1.msra.mxu0 0.0
    %1943 = vmatprep.subr.mxu0 0.0
    %1944 = vmatpush1.msra.mxu0 0.0
    %1945 = vmatprep.subr.mxu0 0.0
    %1946 = vmatpush1.msra.mxu0 0.0
    %1947 = vmatprep.subr.mxu0 0.0
    %1948 = vmatpush1.msra.mxu0 0.0
    %1949 = vmatprep.subr.mxu0 0.0
    %1950 = vmatpush1.msra.mxu0 0.0
    %1951 = vmatprep.subr.mxu0 0.0
    %1952 = vmatpush1.msra.mxu0 0.0
    %1953 = vmatprep.subr.mxu0 0.0
    %1954 = vmatpush1.msra.mxu0 0.0
    %1955 = vmatprep.subr.mxu0 0.0
    %1956 = vmatpush1.msra.mxu0 0.0
    %1957 = vmatprep.subr.mxu0 0.0
    %1958 = vmatpush1.msra.mxu0 0.0
    %1959 = vmatprep.subr.mxu0 0.0
    %1960 = vmatpush1.msra.mxu0 0.0
    %1961 = vmatprep.subr.mxu0 0.0
    %1962 = vmatpush1.msra.mxu0 0.0
    %1963 = vmatprep.subr.mxu0 0.0
    %1964 = vmatpush1.msra.mxu0 0.0
    %1965 = vmatprep.subr.mxu0 0.0
    %1966 = vmatpush1.msra.mxu0 0.0
    %1967 = vmatprep.subr.mxu0 0.0
    %1968 = vmatpush1.msra.mxu0 0.0
    %1969 = vmatprep.subr.mxu0 0.0
    %1970 = vmatpush1.msra.mxu0 0.0
    %1971 = vmatprep.subr.mxu0 0.0
    %1972 = vmatpush1.msra.mxu0 0.0
    %1973 = vmatprep.subr.mxu0 0.0
    %1974 = vmatpush1.msra.mxu0 0.0
    %1975 = vmatprep.subr.mxu0 0.0
    %1976 = vmatpush1.msra.mxu0 0.0
    %1977 = vmatprep.subr.mxu0 0.0
    %1978 = vmatpush1.msra.mxu0 0.0
    %1979 = vmatprep.mubr.f32.mxu0 0.0
    %1980 = vmatmul.mubr.f32.gmra.mrb[0].mxu0 %v1904
    %v1981 = vpop.f32.mrb[0].mxu0
    %v1982 = vadd.f32 %v1901, %v1981
    %v1983 = vpop.f32.mrb[0].mxu0
    %1984 = vmatprep.mubr.f32.mxu0 0.0
    %1985 = vmatmul.mubr.f32.gmra.mrb[0].mxu0 %v1907
    %v1986 = vpop.f32.mrb[0].mxu0
    %v1987 = vadd.f32 %v1901, %v1986
    %v1988 = vpop.f32.mrb[0].mxu0
    %1989 = vmatprep.mubr.f32.mxu0 0.0
    %1990 = vmatmul.mubr.f32.gmra.mrb[0].mxu0 %v1910
    %v1991 = vpop.f32.mrb[0].mxu0
    %v1992 = vadd.f32 %v1901, %v1991
    %v1993 = vpop.f32.mrb[0].mxu0
    %1994 = vmatprep.mubr.f32.mxu0 0.0
    %1995 = vmatmul.mubr.f32.gmra.mrb[0].mxu0 %v1913
    %v1996 = vpop.f32.mrb[0].mxu0
    %v1997 = vadd.f32 %v1901, %v1996
    %v1998 = vpop.f32.mrb[0].mxu0
    %1999 = vdwg.mxu0
    %2000 = vrot.lane.b32.xlu0 %v90, 64
    %v2001 = vpop.permute.xlu0 %2000
    %2002 = vrot.lane.b32.xlu0 %v91, 64
    %v2003 = vpop.permute.xlu0 %2002
    %2004 = vrot.lane.b32.xlu0 %v92, 64
    %v2005 = vpop.permute.xlu0 %2004
    %2006 = vrot.lane.b32.xlu0 %v93, 64
    %v2007 = vpop.permute.xlu0 %2006
    %2012 = vrot.lane.b32.xlu0 %v1801, 64
    %v2013 = vpop.permute.xlu0 %2012
    %v2016 = vsel %vm130, %v68, 0
    %v2019 = vsel %vm130, %v69, 0
    %v2022 = vsel %vm130, %v70, 0
    %v2025 = vsel %vm130, %v71, 0
    %2027 = vmatprep.subr.mxu0 0.0
    %2028 = vmatpush1.msra.mxu0 %v2001
    %2029 = vmatprep.subr.mxu0 0.0
    %2030 = vmatpush1.msra.mxu0 %v2003
    %2031 = vmatprep.subr.mxu0 0.0
    %2032 = vmatpush1.msra.mxu0 %v2005
    %2033 = vmatprep.subr.mxu0 0.0
    %2034 = vmatpush1.msra.mxu0 %v2007
    %2035 = vmatprep.subr.mxu0 0.0
    %2036 = vmatpush1.msra.mxu0 0.0
    %2037 = vmatprep.subr.mxu0 0.0
    %2038 = vmatpush1.msra.mxu0 0.0
    %2039 = vmatprep.subr.mxu0 0.0
    %2040 = vmatpush1.msra.mxu0 0.0
    %2041 = vmatprep.subr.mxu0 0.0
    %2042 = vmatpush1.msra.mxu0 0.0
    %2043 = vmatprep.subr.mxu0 0.0
    %2044 = vmatpush1.msra.mxu0 0.0
    %2045 = vmatprep.subr.mxu0 0.0
    %2046 = vmatpush1.msra.mxu0 0.0
    %2047 = vmatprep.subr.mxu0 0.0
    %2048 = vmatpush1.msra.mxu0 0.0
    %2049 = vmatprep.subr.mxu0 0.0
    %2050 = vmatpush1.msra.mxu0 0.0
    %2051 = vmatprep.subr.mxu0 0.0
    %2052 = vmatpush1.msra.mxu0 0.0
    %2053 = vmatprep.subr.mxu0 0.0
    %2054 = vmatpush1.msra.mxu0 0.0
    %2055 = vmatprep.subr.mxu0 0.0
    %2056 = vmatpush1.msra.mxu0 0.0
    %2057 = vmatprep.subr.mxu0 0.0
    %2058 = vmatpush1.msra.mxu0 0.0
    %2059 = vmatprep.subr.mxu0 0.0
    %2060 = vmatpush1.msra.mxu0 0.0
    %2061 = vmatprep.subr.mxu0 0.0
    %2062 = vmatpush1.msra.mxu0 0.0
    %2063 = vmatprep.subr.mxu0 0.0
    %2064 = vmatpush1.msra.mxu0 0.0
    %2065 = vmatprep.subr.mxu0 0.0
    %2066 = vmatpush1.msra.mxu0 0.0
    %2067 = vmatprep.subr.mxu0 0.0
    %2068 = vmatpush1.msra.mxu0 0.0
    %2069 = vmatprep.subr.mxu0 0.0
    %2070 = vmatpush1.msra.mxu0 0.0
    %2071 = vmatprep.subr.mxu0 0.0
    %2072 = vmatpush1.msra.mxu0 0.0
    %2073 = vmatprep.subr.mxu0 0.0
    %2074 = vmatpush1.msra.mxu0 0.0
    %2075 = vmatprep.subr.mxu0 0.0
    %2076 = vmatpush1.msra.mxu0 0.0
    %2077 = vmatprep.subr.mxu0 0.0
    %2078 = vmatpush1.msra.mxu0 0.0
    %2079 = vmatprep.subr.mxu0 0.0
    %2080 = vmatpush1.msra.mxu0 0.0
    %2081 = vmatprep.subr.mxu0 0.0
    %2082 = vmatpush1.msra.mxu0 0.0
    %2083 = vmatprep.subr.mxu0 0.0
    %2084 = vmatpush1.msra.mxu0 0.0
    %2085 = vmatprep.subr.mxu0 0.0
    %2086 = vmatpush1.msra.mxu0 0.0
    %2087 = vmatprep.subr.mxu0 0.0
    %2088 = vmatpush1.msra.mxu0 0.0
    %2089 = vmatprep.subr.mxu0 0.0
    %2090 = vmatpush1.msra.mxu0 0.0
    %2091 = vmatprep.mubr.f32.mxu0 0.0
    %2092 = vmatmul.mubr.f32.gmra.mrb[0].mxu0 %v2016
    %v2093 = vpop.f32.mrb[0].mxu0
    %v2094 = vadd.f32 %v2013, %v2093
    %v2095 = vpop.f32.mrb[0].mxu0
    %2096 = vmatprep.mubr.f32.mxu0 0.0
    %2097 = vmatmul.mubr.f32.gmra.mrb[0].mxu0 %v2019
    %v2098 = vpop.f32.mrb[0].mxu0
    %v2099 = vadd.f32 %v2013, %v2098
    %v2100 = vpop.f32.mrb[0].mxu0
    %2101 = vmatprep.mubr.f32.mxu0 0.0
    %2102 = vmatmul.mubr.f32.gmra.mrb[0].mxu0 %v2022
    %v2103 = vpop.f32.mrb[0].mxu0
    %v2104 = vadd.f32 %v2013, %v2103
    %v2105 = vpop.f32.mrb[0].mxu0
    %2106 = vmatprep.mubr.f32.mxu0 0.0
    %2107 = vmatmul.mubr.f32.gmra.mrb[0].mxu0 %v2025
    %v2108 = vpop.f32.mrb[0].mxu0
    %v2109 = vadd.f32 %v2013, %v2108
    %v2110 = vpop.f32.mrb[0].mxu0
    %2111 = vdwg.mxu0
    %v2113 = vsel %vm315, %v1876, 0
    %v2116 = vsel %vm315, %v1982, 0
    %v2119 = vsel %vm315, %v1987, 0
    %2121 = vmatprep.subr.mxu0 0.0
    %2122 = vmatpush1.xpose.msra.mxu0 %v2116
    %2123 = vmatprep.subr.mxu0 0.0
    %2124 = vmatpush1.xpose.msra.mxu0 %v2119
    %2125 = vmatprep.subr.mxu0 0.0
    %2126 = vmatpush1.xpose.msra.mxu0 0.0
    %2127 = vmatprep.subr.mxu0 0.0
    %2128 = vmatpush1.xpose.msra.mxu0 0.0
    %2129 = vmatprep.subr.mxu0 0.0
    %2130 = vmatpush1.xpose.msra.mxu0 0.0
    %2131 = vmatprep.subr.mxu0 0.0
    %2132 = vmatpush1.xpose.msra.mxu0 0.0
    %2133 = vmatprep.subr.mxu0 0.0
    %2134 = vmatpush1.xpose.msra.mxu0 0.0
    %2135 = vmatprep.subr.mxu0 0.0
    %2136 = vmatpush1.xpose.msra.mxu0 0.0
    %2137 = vmatprep.subr.mxu0 0.0
    %2138 = vmatpush1.xpose.msra.mxu0 0.0
    %2139 = vmatprep.subr.mxu0 0.0
    %2140 = vmatpush1.xpose.msra.mxu0 0.0
    %2141 = vmatprep.subr.mxu0 0.0
    %2142 = vmatpush1.xpose.msra.mxu0 0.0
    %2143 = vmatprep.subr.mxu0 0.0
    %2144 = vmatpush1.xpose.msra.mxu0 0.0
    %2145 = vmatprep.subr.mxu0 0.0
    %2146 = vmatpush1.xpose.msra.mxu0 0.0
    %2147 = vmatprep.subr.mxu0 0.0
    %2148 = vmatpush1.xpose.msra.mxu0 0.0
    %2149 = vmatprep.subr.mxu0 0.0
    %2150 = vmatpush1.xpose.msra.mxu0 0.0
    %2151 = vmatprep.subr.mxu0 0.0
    %2152 = vmatpush1.xpose.msra.mxu0 0.0
    %2153 = vmatprep.subr.mxu0 0.0
    %2154 = vmatpush1.xpose.msra.mxu0 0.0
    %2155 = vmatprep.subr.mxu0 0.0
    %2156 = vmatpush1.xpose.msra.mxu0 0.0
    %2157 = vmatprep.subr.mxu0 0.0
    %2158 = vmatpush1.xpose.msra.mxu0 0.0
    %2159 = vmatprep.subr.mxu0 0.0
    %2160 = vmatpush1.xpose.msra.mxu0 0.0
    %2161 = vmatprep.subr.mxu0 0.0
    %2162 = vmatpush1.xpose.msra.mxu0 0.0
    %2163 = vmatprep.subr.mxu0 0.0
    %2164 = vmatpush1.xpose.msra.mxu0 0.0
    %2165 = vmatprep.subr.mxu0 0.0
    %2166 = vmatpush1.xpose.msra.mxu0 0.0
    %2167 = vmatprep.subr.mxu0 0.0
    %2168 = vmatpush1.xpose.msra.mxu0 0.0
    %2169 = vmatprep.subr.mxu0 0.0
    %2170 = vmatpush1.xpose.msra.mxu0 0.0
    %2171 = vmatprep.subr.mxu0 0.0
    %2172 = vmatpush1.xpose.msra.mxu0 0.0
    %2173 = vmatprep.subr.mxu0 0.0
    %2174 = vmatpush1.xpose.msra.mxu0 0.0
    %2175 = vmatprep.subr.mxu0 0.0
    %2176 = vmatpush1.xpose.msra.mxu0 0.0
    %2177 = vmatprep.subr.mxu0 0.0
    %2178 = vmatpush1.xpose.msra.mxu0 0.0
    %2179 = vmatprep.subr.mxu0 0.0
    %2180 = vmatpush1.xpose.msra.mxu0 0.0
    %2181 = vmatprep.subr.mxu0 0.0
    %2182 = vmatpush1.xpose.msra.mxu0 0.0
    %2183 = vmatprep.subr.mxu0 0.0
    %2184 = vmatpush1.xpose.msra.mxu0 0.0
    %2185 = vmatprep.mubr.f32.mxu0 0.0
    %2186 = vmatmul.mubr.f32.gmra.mrb[0].mxu0 %v2113
    %v2187 = vpop.f32.mrb[0].mxu0
    %v2188 = vadd.f32 0.0, %v2187
    %v2189 = vpop.f32.mrb[0].mxu0
    %2190 = vdwg.mxu0
    %v2191 = vmul.f32 %v2188, 0.35355338
    %v2192 = vsel %vm987, %v2191, -inf
    %2193 = vmax.xlane.f32.xlu0 %v2192
    %v2194 = vpop.xlane.xlu0 %2193
    %v2195 = vsub.f32 %v2191, %v2194
    %v2196 = vmul.f32 %v2195, 1.442695
    %v2197 = vpow.pop %v2196
    %v2198 = vsel %vm987, %v2197, 0.0
    %2199 = vadd.xlane.f32.xlu0 %v2198
    %v2200 = vpop.xlane.xlu0 %2199
    %v2201 = vrcp.pop %v2200
    %v2202 = vmul.f32 %v2197, %v2201
    %v2204 = vsel %vm987, %v2202, 0
    %2206 = vmatprep.subr.mxu0 0.0
    %2207 = vmatpush1.msra.mxu0 %v2094
    %2208 = vmatprep.subr.mxu0 0.0
    %2209 = vmatpush1.msra.mxu0 %v2099
    %2210 = vmatprep.subr.mxu0 0.0
    %2211 = vmatpush1.msra.mxu0 0.0
    %2212 = vmatprep.subr.mxu0 0.0
    %2213 = vmatpush1.msra.mxu0 0.0
    %2214 = vmatprep.subr.mxu0 0.0
    %2215 = vmatpush1.msra.mxu0 0.0
    %2216 = vmatprep.subr.mxu0 0.0
    %2217 = vmatpush1.msra.mxu0 0.0
    %2218 = vmatprep.subr.mxu0 0.0
    %2219 = vmatpush1.msra.mxu0 0.0
    %2220 = vmatprep.subr.mxu0 0.0
    %2221 = vmatpush1.msra.mxu0 0.0
    %2222 = vmatprep.subr.mxu0 0.0
    %2223 = vmatpush1.msra.mxu0 0.0
    %2224 = vmatprep.subr.mxu0 0.0
    %2225 = vmatpush1.msra.mxu0 0.0
    %2226 = vmatprep.subr.mxu0 0.0
    %2227 = vmatpush1.msra.mxu0 0.0
    %2228 = vmatprep.subr.mxu0 0.0
    %2229 = vmatpush1.msra.mxu0 0.0
    %2230 = vmatprep.subr.mxu0 0.0
    %2231 = vmatpush1.msra.mxu0 0.0
    %2232 = vmatprep.subr.mxu0 0.0
    %2233 = vmatpush1.msra.mxu0 0.0
    %2234 = vmatprep.subr.mxu0 0.0
    %2235 = vmatpush1.msra.mxu0 0.0
    %2236 = vmatprep.subr.mxu0 0.0
    %2237 = vmatpush1.msra.mxu0 0.0
    %2238 = vmatprep.subr.mxu0 0.0
    %2239 = vmatpush1.msra.mxu0 0.0
    %2240 = vmatprep.subr.mxu0 0.0
    %2241 = vmatpush1.msra.mxu0 0.0
    %2242 = vmatprep.subr.mxu0 0.0
    %2243 = vmatpush1.msra.mxu0 0.0
    %2244 = vmatprep.subr.mxu0 0.0
    %2245 = vmatpush1.msra.mxu0 0.0
    %2246 = vmatprep.subr.mxu0 0.0
    %2247 = vmatpush1.msra.mxu0 0.0
    %2248 = vmatprep.subr.mxu0 0.0
    %2249 = vmatpush1.msra.mxu0 0.0
    %2250 = vmatprep.subr.mxu0 0.0
    %2251 = vmatpush1.msra.mxu0 0.0
    %2252 = vmatprep.subr.mxu0 0.0
    %2253 = vmatpush1.msra.mxu0 0.0
    %2254 = vmatprep.subr.mxu0 0.0
    %2255 = vmatpush1.msra.mxu0 0.0
    %2256 = vmatprep.subr.mxu0 0.0
    %2257 = vmatpush1.msra.mxu0 0.0
    %2258 = vmatprep.subr.mxu0 0.0
    %2259 = vmatpush1.msra.mxu0 0.0
    %2260 = vmatprep.subr.mxu0 0.0
    %2261 = vmatpush1.msra.mxu0 0.0
    %2262 = vmatprep.subr.mxu0 0.0
    %2263 = vmatpush1.msra.mxu0 0.0
    %2264 = vmatprep.subr.mxu0 0.0
    %2265 = vmatpush1.msra.mxu0 0.0
    %2266 = vmatprep.subr.mxu0 0.0
    %2267 = vmatpush1.msra.mxu0 0.0
    %2268 = vmatprep.subr.mxu0 0.0
    %2269 = vmatpush1.msra.mxu0 0.0
    %2270 = vmatprep.mubr.f32.mxu0 0.0
    %2271 = vmatmul.mubr.f32.gmra.mrb[0].mxu0 %v2204
    %v2272 = vpop.f32.mrb[0].mxu0
    %v2273 = vadd.f32 0.0, %v2272
    %v2274 = vpop.f32.mrb[0].mxu0
    %2275 = vdwg.mxu0
    %2276 = vrot.lane.b32.xlu0 %v1876, 120
    %v2277 = vpop.permute.xlu0 %2276
    %2278 = vrot.lane.b32.xlu0 %v1982, 120
    %v2279 = vpop.permute.xlu0 %2278
    %2280 = vrot.lane.b32.xlu0 %v1987, 120
    %v2281 = vpop.permute.xlu0 %2280
    %v2282 = vsel %vm315, %v2277, 0
    %v2284 = vsel %vm315, %v2279, 0
    %v2286 = vsel %vm315, %v2281, 0
    %2288 = vmatprep.subr.mxu0 0.0
    %2289 = vmatpush1.xpose.msra.mxu0 %v2284
    %2290 = vmatprep.subr.mxu0 0.0
    %2291 = vmatpush1.xpose.msra.mxu0 %v2286
    %2292 = vmatprep.subr.mxu0 0.0
    %2293 = vmatpush1.xpose.msra.mxu0 0.0
    %2294 = vmatprep.subr.mxu0 0.0
    %2295 = vmatpush1.xpose.msra.mxu0 0.0
    %2296 = vmatprep.subr.mxu0 0.0
    %2297 = vmatpush1.xpose.msra.mxu0 0.0
    %2298 = vmatprep.subr.mxu0 0.0
    %2299 = vmatpush1.xpose.msra.mxu0 0.0
    %2300 = vmatprep.subr.mxu0 0.0
    %2301 = vmatpush1.xpose.msra.mxu0 0.0
    %2302 = vmatprep.subr.mxu0 0.0
    %2303 = vmatpush1.xpose.msra.mxu0 0.0
    %2304 = vmatprep.subr.mxu0 0.0
    %2305 = vmatpush1.xpose.msra.mxu0 0.0
    %2306 = vmatprep.subr.mxu0 0.0
    %2307 = vmatpush1.xpose.msra.mxu0 0.0
    %2308 = vmatprep.subr.mxu0 0.0
    %2309 = vmatpush1.xpose.msra.mxu0 0.0
    %2310 = vmatprep.subr.mxu0 0.0
    %2311 = vmatpush1.xpose.msra.mxu0 0.0
    %2312 = vmatprep.subr.mxu0 0.0
    %2313 = vmatpush1.xpose.msra.mxu0 0.0
    %2314 = vmatprep.subr.mxu0 0.0
    %2315 = vmatpush1.xpose.msra.mxu0 0.0
    %2316 = vmatprep.subr.mxu0 0.0
    %2317 = vmatpush1.xpose.msra.mxu0 0.0
    %2318 = vmatprep.subr.mxu0 0.0
    %2319 = vmatpush1.xpose.msra.mxu0 0.0
    %2320 = vmatprep.subr.mxu0 0.0
    %2321 = vmatpush1.xpose.msra.mxu0 0.0
    %2322 = vmatprep.subr.mxu0 0.0
    %2323 = vmatpush1.xpose.msra.mxu0 0.0
    %2324 = vmatprep.subr.mxu0 0.0
    %2325 = vmatpush1.xpose.msra.mxu0 0.0
    %2326 = vmatprep.subr.mxu0 0.0
    %2327 = vmatpush1.xpose.msra.mxu0 0.0
    %2328 = vmatprep.subr.mxu0 0.0
    %2329 = vmatpush1.xpose.msra.mxu0 0.0
    %2330 = vmatprep.subr.mxu0 0.0
    %2331 = vmatpush1.xpose.msra.mxu0 0.0
    %2332 = vmatprep.subr.mxu0 0.0
    %2333 = vmatpush1.xpose.msra.mxu0 0.0
    %2334 = vmatprep.subr.mxu0 0.0
    %2335 = vmatpush1.xpose.msra.mxu0 0.0
    %2336 = vmatprep.subr.mxu0 0.0
    %2337 = vmatpush1.xpose.msra.mxu0 0.0
    %2338 = vmatprep.subr.mxu0 0.0
    %2339 = vmatpush1.xpose.msra.mxu0 0.0
    %2340 = vmatprep.subr.mxu0 0.0
    %2341 = vmatpush1.xpose.msra.mxu0 0.0
    %2342 = vmatprep.subr.mxu0 0.0
    %2343 = vmatpush1.xpose.msra.mxu0 0.0
    %2344 = vmatprep.subr.mxu0 0.0
    %2345 = vmatpush1.xpose.msra.mxu0 0.0
    %2346 = vmatprep.subr.mxu0 0.0
    %2347 = vmatpush1.xpose.msra.mxu0 0.0
    %2348 = vmatprep.subr.mxu0 0.0
    %2349 = vmatpush1.xpose.msra.mxu0 0.0
    %2350 = vmatprep.subr.mxu0 0.0
    %2351 = vmatpush1.xpose.msra.mxu0 0.0
    %2352 = vmatprep.mubr.f32.mxu0 0.0
    %2353 = vmatmul.mubr.f32.gmra.mrb[0].mxu0 %v2282
    %v2354 = vpop.f32.mrb[0].mxu0
    %v2355 = vadd.f32 0.0, %v2354
    %v2356 = vpop.f32.mrb[0].mxu0
    %2357 = vdwg.mxu0
    %v2358 = vmul.f32 %v2355, 0.35355338
    %v2359 = vsel %vm987, %v2358, -inf
    %2360 = vmax.xlane.f32.xlu0 %v2359
    %v2361 = vpop.xlane.xlu0 %2360
    %v2362 = vsub.f32 %v2358, %v2361
    %v2363 = vmul.f32 %v2362, 1.442695
    %v2364 = vpow.pop %v2363
    %v2365 = vsel %vm987, %v2364, 0.0
    %2366 = vadd.xlane.f32.xlu0 %v2365
    %v2367 = vpop.xlane.xlu0 %2366
    %v2368 = vrcp.pop %v2367
    %v2369 = vmul.f32 %v2364, %v2368
    %2372 = vrot.lane.b32.xlu0 %v2094, 120
    %v2373 = vpop.permute.xlu0 %2372
    %2374 = vrot.lane.b32.xlu0 %v2099, 120
    %v2375 = vpop.permute.xlu0 %2374
    %v2379 = vsel %vm987, %v2369, 0
    %2381 = vmatprep.subr.mxu0 0.0
    %2382 = vmatpush1.msra.mxu0 %v2373
    %2383 = vmatprep.subr.mxu0 0.0
    %2384 = vmatpush1.msra.mxu0 %v2375
    %2385 = vmatprep.subr.mxu0 0.0
    %2386 = vmatpush1.msra.mxu0 0.0
    %2387 = vmatprep.subr.mxu0 0.0
    %2388 = vmatpush1.msra.mxu0 0.0
    %2389 = vmatprep.subr.mxu0 0.0
    %2390 = vmatpush1.msra.mxu0 0.0
    %2391 = vmatprep.subr.mxu0 0.0
    %2392 = vmatpush1.msra.mxu0 0.0
    %2393 = vmatprep.subr.mxu0 0.0
    %2394 = vmatpush1.msra.mxu0 0.0
    %2395 = vmatprep.subr.mxu0 0.0
    %2396 = vmatpush1.msra.mxu0 0.0
    %2397 = vmatprep.subr.mxu0 0.0
    %2398 = vmatpush1.msra.mxu0 0.0
    %2399 = vmatprep.subr.mxu0 0.0
    %2400 = vmatpush1.msra.mxu0 0.0
    %2401 = vmatprep.subr.mxu0 0.0
    %2402 = vmatpush1.msra.mxu0 0.0
    %2403 = vmatprep.subr.mxu0 0.0
    %2404 = vmatpush1.msra.mxu0 0.0
    %2405 = vmatprep.subr.mxu0 0.0
    %2406 = vmatpush1.msra.mxu0 0.0
    %2407 = vmatprep.subr.mxu0 0.0
    %2408 = vmatpush1.msra.mxu0 0.0
    %2409 = vmatprep.subr.mxu0 0.0
    %2410 = vmatpush1.msra.mxu0 0.0
    %2411 = vmatprep.subr.mxu0 0.0
    %2412 = vmatpush1.msra.mxu0 0.0
    %2413 = vmatprep.subr.mxu0 0.0
    %2414 = vmatpush1.msra.mxu0 0.0
    %2415 = vmatprep.subr.mxu0 0.0
    %2416 = vmatpush1.msra.mxu0 0.0
    %2417 = vmatprep.subr.mxu0 0.0
    %2418 = vmatpush1.msra.mxu0 0.0
    %2419 = vmatprep.subr.mxu0 0.0
    %2420 = vmatpush1.msra.mxu0 0.0
    %2421 = vmatprep.subr.mxu0 0.0
    %2422 = vmatpush1.msra.mxu0 0.0
    %2423 = vmatprep.subr.mxu0 0.0
    %2424 = vmatpush1.msra.mxu0 0.0
    %2425 = vmatprep.subr.mxu0 0.0
    %2426 = vmatpush1.msra.mxu0 0.0
    %2427 = vmatprep.subr.mxu0 0.0
    %2428 = vmatpush1.msra.mxu0 0.0
    %2429 = vmatprep.subr.mxu0 0.0
    %2430 = vmatpush1.msra.mxu0 0.0
    %2431 = vmatprep.subr.mxu0 0.0
    %2432 = vmatpush1.msra.mxu0 0.0
    %2433 = vmatprep.subr.mxu0 0.0
    %2434 = vmatpush1.msra.mxu0 0.0
    %2435 = vmatprep.subr.mxu0 0.0
    %2436 = vmatpush1.msra.mxu0 0.0
    %2437 = vmatprep.subr.mxu0 0.0
    %2438 = vmatpush1.msra.mxu0 0.0
    %2439 = vmatprep.subr.mxu0 0.0
    %2440 = vmatpush1.msra.mxu0 0.0
    %2441 = vmatprep.subr.mxu0 0.0
    %2442 = vmatpush1.msra.mxu0 0.0
    %2443 = vmatprep.subr.mxu0 0.0
    %2444 = vmatpush1.msra.mxu0 0.0
    %2445 = vmatprep.mubr.f32.mxu0 0.0
    %2446 = vmatmul.mubr.f32.gmra.mrb[0].mxu0 %v2379
    %v2447 = vpop.f32.mrb[0].mxu0
    %v2448 = vadd.f32 0.0, %v2447
    %v2449 = vpop.f32.mrb[0].mxu0
    %2450 = vdwg.mxu0
    %v2451 = vadd.f32 %v2202, %v2369
    %2452 = vrot.lane.b32.xlu0 %v1876, 112
    %v2453 = vpop.permute.xlu0 %2452
    %2454 = vrot.lane.b32.xlu0 %v1982, 112
    %v2455 = vpop.permute.xlu0 %2454
    %2456 = vrot.lane.b32.xlu0 %v1987, 112
    %v2457 = vpop.permute.xlu0 %2456
    %v2458 = vsel %vm315, %v2453, 0
    %v2460 = vsel %vm315, %v2455, 0
    %v2462 = vsel %vm315, %v2457, 0
    %2464 = vmatprep.subr.mxu0 0.0
    %2465 = vmatpush1.xpose.msra.mxu0 %v2460
    %2466 = vmatprep.subr.mxu0 0.0
    %2467 = vmatpush1.xpose.msra.mxu0 %v2462
    %2468 = vmatprep.subr.mxu0 0.0
    %2469 = vmatpush1.xpose.msra.mxu0 0.0
    %2470 = vmatprep.subr.mxu0 0.0
    %2471 = vmatpush1.xpose.msra.mxu0 0.0
    %2472 = vmatprep.subr.mxu0 0.0
    %2473 = vmatpush1.xpose.msra.mxu0 0.0
    %2474 = vmatprep.subr.mxu0 0.0
    %2475 = vmatpush1.xpose.msra.mxu0 0.0
    %2476 = vmatprep.subr.mxu0 0.0
    %2477 = vmatpush1.xpose.msra.mxu0 0.0
    %2478 = vmatprep.subr.mxu0 0.0
    %2479 = vmatpush1.xpose.msra.mxu0 0.0
    %2480 = vmatprep.subr.mxu0 0.0
    %2481 = vmatpush1.xpose.msra.mxu0 0.0
    %2482 = vmatprep.subr.mxu0 0.0
    %2483 = vmatpush1.xpose.msra.mxu0 0.0
    %2484 = vmatprep.subr.mxu0 0.0
    %2485 = vmatpush1.xpose.msra.mxu0 0.0
    %2486 = vmatprep.subr.mxu0 0.0
    %2487 = vmatpush1.xpose.msra.mxu0 0.0
    %2488 = vmatprep.subr.mxu0 0.0
    %2489 = vmatpush1.xpose.msra.mxu0 0.0
    %2490 = vmatprep.subr.mxu0 0.0
    %2491 = vmatpush1.xpose.msra.mxu0 0.0
    %2492 = vmatprep.subr.mxu0 0.0
    %2493 = vmatpush1.xpose.msra.mxu0 0.0
    %2494 = vmatprep.subr.mxu0 0.0
    %2495 = vmatpush1.xpose.msra.mxu0 0.0
    %2496 = vmatprep.subr.mxu0 0.0
    %2497 = vmatpush1.xpose.msra.mxu0 0.0
    %2498 = vmatprep.subr.mxu0 0.0
    %2499 = vmatpush1.xpose.msra.mxu0 0.0
    %2500 = vmatprep.subr.mxu0 0.0
    %2501 = vmatpush1.xpose.msra.mxu0 0.0
    %2502 = vmatprep.subr.mxu0 0.0
    %2503 = vmatpush1.xpose.msra.mxu0 0.0
    %2504 = vmatprep.subr.mxu0 0.0
    %2505 = vmatpush1.xpose.msra.mxu0 0.0
    %2506 = vmatprep.subr.mxu0 0.0
    %2507 = vmatpush1.xpose.msra.mxu0 0.0
    %2508 = vmatprep.subr.mxu0 0.0
    %2509 = vmatpush1.xpose.msra.mxu0 0.0
    %2510 = vmatprep.subr.mxu0 0.0
    %2511 = vmatpush1.xpose.msra.mxu0 0.0
    %2512 = vmatprep.subr.mxu0 0.0
    %2513 = vmatpush1.xpose.msra.mxu0 0.0
    %2514 = vmatprep.subr.mxu0 0.0
    %2515 = vmatpush1.xpose.msra.mxu0 0.0
    %2516 = vmatprep.subr.mxu0 0.0
    %2517 = vmatpush1.xpose.msra.mxu0 0.0
    %2518 = vmatprep.subr.mxu0 0.0
    %2519 = vmatpush1.xpose.msra.mxu0 0.0
    %2520 = vmatprep.subr.mxu0 0.0
    %2521 = vmatpush1.xpose.msra.mxu0 0.0
    %2522 = vmatprep.subr.mxu0 0.0
    %2523 = vmatpush1.xpose.msra.mxu0 0.0
    %2524 = vmatprep.subr.mxu0 0.0
    %2525 = vmatpush1.xpose.msra.mxu0 0.0
    %2526 = vmatprep.subr.mxu0 0.0
    %2527 = vmatpush1.xpose.msra.mxu0 0.0
    %2528 = vmatprep.mubr.f32.mxu0 0.0
    %2529 = vmatmul.mubr.f32.gmra.mrb[0].mxu0 %v2458
    %v2530 = vpop.f32.mrb[0].mxu0
    %v2531 = vadd.f32 0.0, %v2530
    %v2532 = vpop.f32.mrb[0].mxu0
    %2533 = vdwg.mxu0
    %v2534 = vmul.f32 %v2531, 0.35355338
    %v2535 = vsel %vm987, %v2534, -inf
    %2536 = vmax.xlane.f32.xlu0 %v2535
    %v2537 = vpop.xlane.xlu0 %2536
    %v2538 = vsub.f32 %v2534, %v2537
    %v2539 = vmul.f32 %v2538, 1.442695
    %v2540 = vpow.pop %v2539
    %v2541 = vsel %vm987, %v2540, 0.0
    %2542 = vadd.xlane.f32.xlu0 %v2541
    %v2543 = vpop.xlane.xlu0 %2542
    %v2544 = vrcp.pop %v2543
    %v2545 = vmul.f32 %v2540, %v2544
    %2546 = vrot.lane.b32.xlu0 %v2094, 112
    %v2547 = vpop.permute.xlu0 %2546
    %2548 = vrot.lane.b32.xlu0 %v2099, 112
    %v2549 = vpop.permute.xlu0 %2548
    %v2553 = vsel %vm987, %v2545, 0
    %2555 = vmatprep.subr.mxu0 0.0
    %2556 = vmatpush1.msra.mxu0 %v2547
    %2557 = vmatprep.subr.mxu0 0.0
    %2558 = vmatpush1.msra.mxu0 %v2549
    %2559 = vmatprep.subr.mxu0 0.0
    %2560 = vmatpush1.msra.mxu0 0.0
    %2561 = vmatprep.subr.mxu0 0.0
    %2562 = vmatpush1.msra.mxu0 0.0
    %2563 = vmatprep.subr.mxu0 0.0
    %2564 = vmatpush1.msra.mxu0 0.0
    %2565 = vmatprep.subr.mxu0 0.0
    %2566 = vmatpush1.msra.mxu0 0.0
    %2567 = vmatprep.subr.mxu0 0.0
    %2568 = vmatpush1.msra.mxu0 0.0
    %2569 = vmatprep.subr.mxu0 0.0
    %2570 = vmatpush1.msra.mxu0 0.0
    %2571 = vmatprep.subr.mxu0 0.0
    %2572 = vmatpush1.msra.mxu0 0.0
    %2573 = vmatprep.subr.mxu0 0.0
    %2574 = vmatpush1.msra.mxu0 0.0
    %2575 = vmatprep.subr.mxu0 0.0
    %2576 = vmatpush1.msra.mxu0 0.0
    %2577 = vmatprep.subr.mxu0 0.0
    %2578 = vmatpush1.msra.mxu0 0.0
    %2579 = vmatprep.subr.mxu0 0.0
    %2580 = vmatpush1.msra.mxu0 0.0
    %2581 = vmatprep.subr.mxu0 0.0
    %2582 = vmatpush1.msra.mxu0 0.0
    %2583 = vmatprep.subr.mxu0 0.0
    %2584 = vmatpush1.msra.mxu0 0.0
    %2585 = vmatprep.subr.mxu0 0.0
    %2586 = vmatpush1.msra.mxu0 0.0
    %2587 = vmatprep.subr.mxu0 0.0
    %2588 = vmatpush1.msra.mxu0 0.0
    %2589 = vmatprep.subr.mxu0 0.0
    %2590 = vmatpush1.msra.mxu0 0.0
    %2591 = vmatprep.subr.mxu0 0.0
    %2592 = vmatpush1.msra.mxu0 0.0
    %2593 = vmatprep.subr.mxu0 0.0
    %2594 = vmatpush1.msra.mxu0 0.0
    %2595 = vmatprep.subr.mxu0 0.0
    %2596 = vmatpush1.msra.mxu0 0.0
    %2597 = vmatprep.subr.mxu0 0.0
    %2598 = vmatpush1.msra.mxu0 0.0
    %2599 = vmatprep.subr.mxu0 0.0
    %2600 = vmatpush1.msra.mxu0 0.0
    %2601 = vmatprep.subr.mxu0 0.0
    %2602 = vmatpush1.msra.mxu0 0.0
    %2603 = vmatprep.subr.mxu0 0.0
    %2604 = vmatpush1.msra.mxu0 0.0
    %2605 = vmatprep.subr.mxu0 0.0
    %2606 = vmatpush1.msra.mxu0 0.0
    %2607 = vmatprep.subr.mxu0 0.0
    %2608 = vmatpush1.msra.mxu0 0.0
    %2609 = vmatprep.subr.mxu0 0.0
    %2610 = vmatpush1.msra.mxu0 0.0
    %2611 = vmatprep.subr.mxu0 0.0
    %2612 = vmatpush1.msra.mxu0 0.0
    %2613 = vmatprep.subr.mxu0 0.0
    %2614 = vmatpush1.msra.mxu0 0.0
    %2615 = vmatprep.subr.mxu0 0.0
    %2616 = vmatpush1.msra.mxu0 0.0
    %2617 = vmatprep.subr.mxu0 0.0
    %2618 = vmatpush1.msra.mxu0 0.0
    %2619 = vmatprep.mubr.f32.mxu0 0.0
    %2620 = vmatmul.mubr.f32.gmra.mrb[0].mxu0 %v2553
    %v2621 = vpop.f32.mrb[0].mxu0
    %v2622 = vadd.f32 0.0, %v2621
    %v2623 = vpop.f32.mrb[0].mxu0
    %2624 = vdwg.mxu0
    %v2625 = vadd.f32 %v2451, %v2545
    %2626 = vrot.lane.b32.xlu0 %v1876, 104
    %v2627 = vpop.permute.xlu0 %2626
    %2628 = vrot.lane.b32.xlu0 %v1982, 104
    %v2629 = vpop.permute.xlu0 %2628
    %2630 = vrot.lane.b32.xlu0 %v1987, 104
    %v2631 = vpop.permute.xlu0 %2630
    %v2632 = vsel %vm315, %v2627, 0
    %v2634 = vsel %vm315, %v2629, 0
    %v2636 = vsel %vm315, %v2631, 0
    %2638 = vmatprep.subr.mxu0 0.0
    %2639 = vmatpush1.xpose.msra.mxu0 %v2634
    %2640 = vmatprep.subr.mxu0 0.0
    %2641 = vmatpush1.xpose.msra.mxu0 %v2636
    %2642 = vmatprep.subr.mxu0 0.0
    %2643 = vmatpush1.xpose.msra.mxu0 0.0
    %2644 = vmatprep.subr.mxu0 0.0
    %2645 = vmatpush1.xpose.msra.mxu0 0.0
    %2646 = vmatprep.subr.mxu0 0.0
    %2647 = vmatpush1.xpose.msra.mxu0 0.0
    %2648 = vmatprep.subr.mxu0 0.0
    %2649 = vmatpush1.xpose.msra.mxu0 0.0
    %2650 = vmatprep.subr.mxu0 0.0
    %2651 = vmatpush1.xpose.msra.mxu0 0.0
    %2652 = vmatprep.subr.mxu0 0.0
    %2653 = vmatpush1.xpose.msra.mxu0 0.0
    %2654 = vmatprep.subr.mxu0 0.0
    %2655 = vmatpush1.xpose.msra.mxu0 0.0
    %2656 = vmatprep.subr.mxu0 0.0
    %2657 = vmatpush1.xpose.msra.mxu0 0.0
    %2658 = vmatprep.subr.mxu0 0.0
    %2659 = vmatpush1.xpose.msra.mxu0 0.0
    %2660 = vmatprep.subr.mxu0 0.0
    %2661 = vmatpush1.xpose.msra.mxu0 0.0
    %2662 = vmatprep.subr.mxu0 0.0
    %2663 = vmatpush1.xpose.msra.mxu0 0.0
    %2664 = vmatprep.subr.mxu0 0.0
    %2665 = vmatpush1.xpose.msra.mxu0 0.0
    %2666 = vmatprep.subr.mxu0 0.0
    %2667 = vmatpush1.xpose.msra.mxu0 0.0
    %2668 = vmatprep.subr.mxu0 0.0
    %2669 = vmatpush1.xpose.msra.mxu0 0.0
    %2670 = vmatprep.subr.mxu0 0.0
    %2671 = vmatpush1.xpose.msra.mxu0 0.0
    %2672 = vmatprep.subr.mxu0 0.0
    %2673 = vmatpush1.xpose.msra.mxu0 0.0
    %2674 = vmatprep.subr.mxu0 0.0
    %2675 = vmatpush1.xpose.msra.mxu0 0.0
    %2676 = vmatprep.subr.mxu0 0.0
    %2677 = vmatpush1.xpose.msra.mxu0 0.0
    %2678 = vmatprep.subr.mxu0 0.0
    %2679 = vmatpush1.xpose.msra.mxu0 0.0
    %2680 = vmatprep.subr.mxu0 0.0
    %2681 = vmatpush1.xpose.msra.mxu0 0.0
    %2682 = vmatprep.subr.mxu0 0.0
    %2683 = vmatpush1.xpose.msra.mxu0 0.0
    %2684 = vmatprep.subr.mxu0 0.0
    %2685 = vmatpush1.xpose.msra.mxu0 0.0
    %2686 = vmatprep.subr.mxu0 0.0
    %2687 = vmatpush1.xpose.msra.mxu0 0.0
    %2688 = vmatprep.subr.mxu0 0.0
    %2689 = vmatpush1.xpose.msra.mxu0 0.0
    %2690 = vmatprep.subr.mxu0 0.0
    %2691 = vmatpush1.xpose.msra.mxu0 0.0
    %2692 = vmatprep.subr.mxu0 0.0
    %2693 = vmatpush1.xpose.msra.mxu0 0.0
    %2694 = vmatprep.subr.mxu0 0.0
    %2695 = vmatpush1.xpose.msra.mxu0 0.0
    %2696 = vmatprep.subr.mxu0 0.0
    %2697 = vmatpush1.xpose.msra.mxu0 0.0
    %2698 = vmatprep.subr.mxu0 0.0
    %2699 = vmatpush1.xpose.msra.mxu0 0.0
    %2700 = vmatprep.subr.mxu0 0.0
    %2701 = vmatpush1.xpose.msra.mxu0 0.0
    %2702 = vmatprep.mubr.f32.mxu0 0.0
    %2703 = vmatmul.mubr.f32.gmra.mrb[0].mxu0 %v2632
    %v2704 = vpop.f32.mrb[0].mxu0
    %v2705 = vadd.f32 0.0, %v2704
    %v2706 = vpop.f32.mrb[0].mxu0
    %2707 = vdwg.mxu0
    %v2708 = vmul.f32 %v2705, 0.35355338
    %v2709 = vsel %vm987, %v2708, -inf
    %2710 = vmax.xlane.f32.xlu0 %v2709
    %v2711 = vpop.xlane.xlu0 %2710
    %v2712 = vsub.f32 %v2708, %v2711
    %v2713 = vmul.f32 %v2712, 1.442695
    %v2714 = vpow.pop %v2713
    %v2715 = vsel %vm987, %v2714, 0.0
    %2716 = vadd.xlane.f32.xlu0 %v2715
    %v2717 = vpop.xlane.xlu0 %2716
    %v2718 = vrcp.pop %v2717
    %v2719 = vmul.f32 %v2714, %v2718
    %2720 = vrot.lane.b32.xlu0 %v2094, 104
    %v2721 = vpop.permute.xlu0 %2720
    %2722 = vrot.lane.b32.xlu0 %v2099, 104
    %v2723 = vpop.permute.xlu0 %2722
    %v2727 = vsel %vm987, %v2719, 0
    %2729 = vmatprep.subr.mxu0 0.0
    %2730 = vmatpush1.msra.mxu0 %v2721
    %2731 = vmatprep.subr.mxu0 0.0
    %2732 = vmatpush1.msra.mxu0 %v2723
    %2733 = vmatprep.subr.mxu0 0.0
    %2734 = vmatpush1.msra.mxu0 0.0
    %2735 = vmatprep.subr.mxu0 0.0
    %2736 = vmatpush1.msra.mxu0 0.0
    %2737 = vmatprep.subr.mxu0 0.0
    %2738 = vmatpush1.msra.mxu0 0.0
    %2739 = vmatprep.subr.mxu0 0.0
    %2740 = vmatpush1.msra.mxu0 0.0
    %2741 = vmatprep.subr.mxu0 0.0
    %2742 = vmatpush1.msra.mxu0 0.0
    %2743 = vmatprep.subr.mxu0 0.0
    %2744 = vmatpush1.msra.mxu0 0.0
    %2745 = vmatprep.subr.mxu0 0.0
    %2746 = vmatpush1.msra.mxu0 0.0
    %2747 = vmatprep.subr.mxu0 0.0
    %2748 = vmatpush1.msra.mxu0 0.0
    %2749 = vmatprep.subr.mxu0 0.0
    %2750 = vmatpush1.msra.mxu0 0.0
    %2751 = vmatprep.subr.mxu0 0.0
    %2752 = vmatpush1.msra.mxu0 0.0
    %2753 = vmatprep.subr.mxu0 0.0
    %2754 = vmatpush1.msra.mxu0 0.0
    %2755 = vmatprep.subr.mxu0 0.0
    %2756 = vmatpush1.msra.mxu0 0.0
    %2757 = vmatprep.subr.mxu0 0.0
    %2758 = vmatpush1.msra.mxu0 0.0
    %2759 = vmatprep.subr.mxu0 0.0
    %2760 = vmatpush1.msra.mxu0 0.0
    %2761 = vmatprep.subr.mxu0 0.0
    %2762 = vmatpush1.msra.mxu0 0.0
    %2763 = vmatprep.subr.mxu0 0.0
    %2764 = vmatpush1.msra.mxu0 0.0
    %2765 = vmatprep.subr.mxu0 0.0
    %2766 = vmatpush1.msra.mxu0 0.0
    %2767 = vmatprep.subr.mxu0 0.0
    %2768 = vmatpush1.msra.mxu0 0.0
    %2769 = vmatprep.subr.mxu0 0.0
    %2770 = vmatpush1.msra.mxu0 0.0
    %2771 = vmatprep.subr.mxu0 0.0
    %2772 = vmatpush1.msra.mxu0 0.0
    %2773 = vmatprep.subr.mxu0 0.0
    %2774 = vmatpush1.msra.mxu0 0.0
    %2775 = vmatprep.subr.mxu0 0.0
    %2776 = vmatpush1.msra.mxu0 0.0
    %2777 = vmatprep.subr.mxu0 0.0
    %2778 = vmatpush1.msra.mxu0 0.0
    %2779 = vmatprep.subr.mxu0 0.0
    %2780 = vmatpush1.msra.mxu0 0.0
    %2781 = vmatprep.subr.mxu0 0.0
    %2782 = vmatpush1.msra.mxu0 0.0
    %2783 = vmatprep.subr.mxu0 0.0
    %2784 = vmatpush1.msra.mxu0 0.0
    %2785 = vmatprep.subr.mxu0 0.0
    %2786 = vmatpush1.msra.mxu0 0.0
    %2787 = vmatprep.subr.mxu0 0.0
    %2788 = vmatpush1.msra.mxu0 0.0
    %2789 = vmatprep.subr.mxu0 0.0
    %2790 = vmatpush1.msra.mxu0 0.0
    %2791 = vmatprep.subr.mxu0 0.0
    %2792 = vmatpush1.msra.mxu0 0.0
    %2793 = vmatprep.mubr.f32.mxu0 0.0
    %2794 = vmatmul.mubr.f32.gmra.mrb[0].mxu0 %v2727
    %v2795 = vpop.f32.mrb[0].mxu0
    %v2796 = vadd.f32 0.0, %v2795
    %v2797 = vpop.f32.mrb[0].mxu0
    %2798 = vdwg.mxu0
    %v2799 = vadd.f32 %v2625, %v2719
    %2801 = vrot.lane.b32.xlu0 %v2448, 8
    %v2802 = vpop.permute.xlu0 %2801
    %2805 = vrot.lane.b32.xlu0 %v2622, 16
    %v2806 = vpop.permute.xlu0 %2805
    %2809 = vrot.lane.b32.xlu0 %v2796, 24
    %v2810 = vpop.permute.xlu0 %2809
    %v2812 = vsel %vm315, %v2273, %v2802
    %v2813 = vsel %vm987, %v2812, %v2806
    %v2814 = vsel %vm989, %v2813, %v2810
    %v2815 = vmul.f32 %v2799, 0.25
    %v2817 = vsel %vm315, %v1881, 0
    %v2820 = vsel %vm315, %v1992, 0
    %v2823 = vsel %vm315, %v1997, 0
    %2825 = vmatprep.subr.mxu0 0.0
    %2826 = vmatpush1.xpose.msra.mxu0 %v2820
    %2827 = vmatprep.subr.mxu0 0.0
    %2828 = vmatpush1.xpose.msra.mxu0 %v2823
    %2829 = vmatprep.subr.mxu0 0.0
    %2830 = vmatpush1.xpose.msra.mxu0 0.0
    %2831 = vmatprep.subr.mxu0 0.0
    %2832 = vmatpush1.xpose.msra.mxu0 0.0
    %2833 = vmatprep.subr.mxu0 0.0
    %2834 = vmatpush1.xpose.msra.mxu0 0.0
    %2835 = vmatprep.subr.mxu0 0.0
    %2836 = vmatpush1.xpose.msra.mxu0 0.0
    %2837 = vmatprep.subr.mxu0 0.0
    %2838 = vmatpush1.xpose.msra.mxu0 0.0
    %2839 = vmatprep.subr.mxu0 0.0
    %2840 = vmatpush1.xpose.msra.mxu0 0.0
    %2841 = vmatprep.subr.mxu0 0.0
    %2842 = vmatpush1.xpose.msra.mxu0 0.0
    %2843 = vmatprep.subr.mxu0 0.0
    %2844 = vmatpush1.xpose.msra.mxu0 0.0
    %2845 = vmatprep.subr.mxu0 0.0
    %2846 = vmatpush1.xpose.msra.mxu0 0.0
    %2847 = vmatprep.subr.mxu0 0.0
    %2848 = vmatpush1.xpose.msra.mxu0 0.0
    %2849 = vmatprep.subr.mxu0 0.0
    %2850 = vmatpush1.xpose.msra.mxu0 0.0
    %2851 = vmatprep.subr.mxu0 0.0
    %2852 = vmatpush1.xpose.msra.mxu0 0.0
    %2853 = vmatprep.subr.mxu0 0.0
    %2854 = vmatpush1.xpose.msra.mxu0 0.0
    %2855 = vmatprep.subr.mxu0 0.0
    %2856 = vmatpush1.xpose.msra.mxu0 0.0
    %2857 = vmatprep.subr.mxu0 0.0
    %2858 = vmatpush1.xpose.msra.mxu0 0.0
    %2859 = vmatprep.subr.mxu0 0.0
    %2860 = vmatpush1.xpose.msra.mxu0 0.0
    %2861 = vmatprep.subr.mxu0 0.0
    %2862 = vmatpush1.xpose.msra.mxu0 0.0
    %2863 = vmatprep.subr.mxu0 0.0
    %2864 = vmatpush1.xpose.msra.mxu0 0.0
    %2865 = vmatprep.subr.mxu0 0.0
    %2866 = vmatpush1.xpose.msra.mxu0 0.0
    %2867 = vmatprep.subr.mxu0 0.0
    %2868 = vmatpush1.xpose.msra.mxu0 0.0
    %2869 = vmatprep.subr.mxu0 0.0
    %2870 = vmatpush1.xpose.msra.mxu0 0.0
    %2871 = vmatprep.subr.mxu0 0.0
    %2872 = vmatpush1.xpose.msra.mxu0 0.0
    %2873 = vmatprep.subr.mxu0 0.0
    %2874 = vmatpush1.xpose.msra.mxu0 0.0
    %2875 = vmatprep.subr.mxu0 0.0
    %2876 = vmatpush1.xpose.msra.mxu0 0.0
    %2877 = vmatprep.subr.mxu0 0.0
    %2878 = vmatpush1.xpose.msra.mxu0 0.0
    %2879 = vmatprep.subr.mxu0 0.0
    %2880 = vmatpush1.xpose.msra.mxu0 0.0
    %2881 = vmatprep.subr.mxu0 0.0
    %2882 = vmatpush1.xpose.msra.mxu0 0.0
    %2883 = vmatprep.subr.mxu0 0.0
    %2884 = vmatpush1.xpose.msra.mxu0 0.0
    %2885 = vmatprep.subr.mxu0 0.0
    %2886 = vmatpush1.xpose.msra.mxu0 0.0
    %2887 = vmatprep.subr.mxu0 0.0
    %2888 = vmatpush1.xpose.msra.mxu0 0.0
    %2889 = vmatprep.mubr.f32.mxu0 0.0
    %2890 = vmatmul.mubr.f32.gmra.mrb[0].mxu0 %v2817
    %v2891 = vpop.f32.mrb[0].mxu0
    %v2892 = vadd.f32 0.0, %v2891
    %v2893 = vpop.f32.mrb[0].mxu0
    %2894 = vdwg.mxu0
    %v2895 = vmul.f32 %v2892, 0.35355338
    %v2896 = vsel %vm987, %v2895, -inf
    %2897 = vmax.xlane.f32.xlu0 %v2896
    %v2898 = vpop.xlane.xlu0 %2897
    %v2899 = vsub.f32 %v2895, %v2898
    %v2900 = vmul.f32 %v2899, 1.442695
    %v2901 = vpow.pop %v2900
    %v2902 = vsel %vm987, %v2901, 0.0
    %2903 = vadd.xlane.f32.xlu0 %v2902
    %v2904 = vpop.xlane.xlu0 %2903
    %v2905 = vrcp.pop %v2904
    %v2906 = vmul.f32 %v2901, %v2905
    %v2908 = vsel %vm987, %v2906, 0
    %2910 = vmatprep.subr.mxu0 0.0
    %2911 = vmatpush1.msra.mxu0 %v2104
    %2912 = vmatprep.subr.mxu0 0.0
    %2913 = vmatpush1.msra.mxu0 %v2109
    %2914 = vmatprep.subr.mxu0 0.0
    %2915 = vmatpush1.msra.mxu0 0.0
    %2916 = vmatprep.subr.mxu0 0.0
    %2917 = vmatpush1.msra.mxu0 0.0
    %2918 = vmatprep.subr.mxu0 0.0
    %2919 = vmatpush1.msra.mxu0 0.0
    %2920 = vmatprep.subr.mxu0 0.0
    %2921 = vmatpush1.msra.mxu0 0.0
    %2922 = vmatprep.subr.mxu0 0.0
    %2923 = vmatpush1.msra.mxu0 0.0
    %2924 = vmatprep.subr.mxu0 0.0
    %2925 = vmatpush1.msra.mxu0 0.0
    %2926 = vmatprep.subr.mxu0 0.0
    %2927 = vmatpush1.msra.mxu0 0.0
    %2928 = vmatprep.subr.mxu0 0.0
    %2929 = vmatpush1.msra.mxu0 0.0
    %2930 = vmatprep.subr.mxu0 0.0
    %2931 = vmatpush1.msra.mxu0 0.0
    %2932 = vmatprep.subr.mxu0 0.0
    %2933 = vmatpush1.msra.mxu0 0.0
    %2934 = vmatprep.subr.mxu0 0.0
    %2935 = vmatpush1.msra.mxu0 0.0
    %2936 = vmatprep.subr.mxu0 0.0
    %2937 = vmatpush1.msra.mxu0 0.0
    %2938 = vmatprep.subr.mxu0 0.0
    %2939 = vmatpush1.msra.mxu0 0.0
    %2940 = vmatprep.subr.mxu0 0.0
    %2941 = vmatpush1.msra.mxu0 0.0
    %2942 = vmatprep.subr.mxu0 0.0
    %2943 = vmatpush1.msra.mxu0 0.0
    %2944 = vmatprep.subr.mxu0 0.0
    %2945 = vmatpush1.msra.mxu0 0.0
    %2946 = vmatprep.subr.mxu0 0.0
    %2947 = vmatpush1.msra.mxu0 0.0
    %2948 = vmatprep.subr.mxu0 0.0
    %2949 = vmatpush1.msra.mxu0 0.0
    %2950 = vmatprep.subr.mxu0 0.0
    %2951 = vmatpush1.msra.mxu0 0.0
    %2952 = vmatprep.subr.mxu0 0.0
    %2953 = vmatpush1.msra.mxu0 0.0
    %2954 = vmatprep.subr.mxu0 0.0
    %2955 = vmatpush1.msra.mxu0 0.0
    %2956 = vmatprep.subr.mxu0 0.0
    %2957 = vmatpush1.msra.mxu0 0.0
    %2958 = vmatprep.subr.mxu0 0.0
    %2959 = vmatpush1.msra.mxu0 0.0
    %2960 = vmatprep.subr.mxu0 0.0
    %2961 = vmatpush1.msra.mxu0 0.0
    %2962 = vmatprep.subr.mxu0 0.0
    %2963 = vmatpush1.msra.mxu0 0.0
    %2964 = vmatprep.subr.mxu0 0.0
    %2965 = vmatpush1.msra.mxu0 0.0
    %2966 = vmatprep.subr.mxu0 0.0
    %2967 = vmatpush1.msra.mxu0 0.0
    %2968 = vmatprep.subr.mxu0 0.0
    %2969 = vmatpush1.msra.mxu0 0.0
    %2970 = vmatprep.subr.mxu0 0.0
    %2971 = vmatpush1.msra.mxu0 0.0
    %2972 = vmatprep.subr.mxu0 0.0
    %2973 = vmatpush1.msra.mxu0 0.0
    %2974 = vmatprep.mubr.f32.mxu0 0.0
    %2975 = vmatmul.mubr.f32.gmra.mrb[0].mxu0 %v2908
    %v2976 = vpop.f32.mrb[0].mxu0
    %v2977 = vadd.f32 0.0, %v2976
    %v2978 = vpop.f32.mrb[0].mxu0
    %2979 = vdwg.mxu0
    %2980 = vrot.lane.b32.xlu0 %v1881, 120
    %v2981 = vpop.permute.xlu0 %2980
    %2982 = vrot.lane.b32.xlu0 %v1992, 120
    %v2983 = vpop.permute.xlu0 %2982
    %2984 = vrot.lane.b32.xlu0 %v1997, 120
    %v2985 = vpop.permute.xlu0 %2984
    %v2986 = vsel %vm315, %v2981, 0
    %v2988 = vsel %vm315, %v2983, 0
    %v2990 = vsel %vm315, %v2985, 0
    %2992 = vmatprep.subr.mxu0 0.0
    %2993 = vmatpush1.xpose.msra.mxu0 %v2988
    %2994 = vmatprep.subr.mxu0 0.0
    %2995 = vmatpush1.xpose.msra.mxu0 %v2990
    %2996 = vmatprep.subr.mxu0 0.0
    %2997 = vmatpush1.xpose.msra.mxu0 0.0
    %2998 = vmatprep.subr.mxu0 0.0
    %2999 = vmatpush1.xpose.msra.mxu0 0.0
    %3000 = vmatprep.subr.mxu0 0.0
    %3001 = vmatpush1.xpose.msra.mxu0 0.0
    %3002 = vmatprep.subr.mxu0 0.0
    %3003 = vmatpush1.xpose.msra.mxu0 0.0
    %3004 = vmatprep.subr.mxu0 0.0
    %3005 = vmatpush1.xpose.msra.mxu0 0.0
    %3006 = vmatprep.subr.mxu0 0.0
    %3007 = vmatpush1.xpose.msra.mxu0 0.0
    %3008 = vmatprep.subr.mxu0 0.0
    %3009 = vmatpush1.xpose.msra.mxu0 0.0
    %3010 = vmatprep.subr.mxu0 0.0
    %3011 = vmatpush1.xpose.msra.mxu0 0.0
    %3012 = vmatprep.subr.mxu0 0.0
    %3013 = vmatpush1.xpose.msra.mxu0 0.0
    %3014 = vmatprep.subr.mxu0 0.0
    %3015 = vmatpush1.xpose.msra.mxu0 0.0
    %3016 = vmatprep.subr.mxu0 0.0
    %3017 = vmatpush1.xpose.msra.mxu0 0.0
    %3018 = vmatprep.subr.mxu0 0.0
    %3019 = vmatpush1.xpose.msra.mxu0 0.0
    %3020 = vmatprep.subr.mxu0 0.0
    %3021 = vmatpush1.xpose.msra.mxu0 0.0
    %3022 = vmatprep.subr.mxu0 0.0
    %3023 = vmatpush1.xpose.msra.mxu0 0.0
    %3024 = vmatprep.subr.mxu0 0.0
    %3025 = vmatpush1.xpose.msra.mxu0 0.0
    %3026 = vmatprep.subr.mxu0 0.0
    %3027 = vmatpush1.xpose.msra.mxu0 0.0
    %3028 = vmatprep.subr.mxu0 0.0
    %3029 = vmatpush1.xpose.msra.mxu0 0.0
    %3030 = vmatprep.subr.mxu0 0.0
    %3031 = vmatpush1.xpose.msra.mxu0 0.0
    %3032 = vmatprep.subr.mxu0 0.0
    %3033 = vmatpush1.xpose.msra.mxu0 0.0
    %3034 = vmatprep.subr.mxu0 0.0
    %3035 = vmatpush1.xpose.msra.mxu0 0.0
    %3036 = vmatprep.subr.mxu0 0.0
    %3037 = vmatpush1.xpose.msra.mxu0 0.0
    %3038 = vmatprep.subr.mxu0 0.0
    %3039 = vmatpush1.xpose.msra.mxu0 0.0
    %3040 = vmatprep.subr.mxu0 0.0
    %3041 = vmatpush1.xpose.msra.mxu0 0.0
    %3042 = vmatprep.subr.mxu0 0.0
    %3043 = vmatpush1.xpose.msra.mxu0 0.0
    %3044 = vmatprep.subr.mxu0 0.0
    %3045 = vmatpush1.xpose.msra.mxu0 0.0
    %3046 = vmatprep.subr.mxu0 0.0
    %3047 = vmatpush1.xpose.msra.mxu0 0.0
    %3048 = vmatprep.subr.mxu0 0.0
    %3049 = vmatpush1.xpose.msra.mxu0 0.0
    %3050 = vmatprep.subr.mxu0 0.0
    %3051 = vmatpush1.xpose.msra.mxu0 0.0
    %3052 = vmatprep.subr.mxu0 0.0
    %3053 = vmatpush1.xpose.msra.mxu0 0.0
    %3054 = vmatprep.subr.mxu0 0.0
    %3055 = vmatpush1.xpose.msra.mxu0 0.0
    %3056 = vmatprep.mubr.f32.mxu0 0.0
    %3057 = vmatmul.mubr.f32.gmra.mrb[0].mxu0 %v2986
    %v3058 = vpop.f32.mrb[0].mxu0
    %v3059 = vadd.f32 0.0, %v3058
    %v3060 = vpop.f32.mrb[0].mxu0
    %3061 = vdwg.mxu0
    %v3062 = vmul.f32 %v3059, 0.35355338
    %v3063 = vsel %vm987, %v3062, -inf
    %3064 = vmax.xlane.f32.xlu0 %v3063
    %v3065 = vpop.xlane.xlu0 %3064
    %v3066 = vsub.f32 %v3062, %v3065
    %v3067 = vmul.f32 %v3066, 1.442695
    %v3068 = vpow.pop %v3067
    %v3069 = vsel %vm987, %v3068, 0.0
    %3070 = vadd.xlane.f32.xlu0 %v3069
    %v3071 = vpop.xlane.xlu0 %3070
    %v3072 = vrcp.pop %v3071
    %v3073 = vmul.f32 %v3068, %v3072
    %3076 = vrot.lane.b32.xlu0 %v2104, 120
    %v3077 = vpop.permute.xlu0 %3076
    %3078 = vrot.lane.b32.xlu0 %v2109, 120
    %v3079 = vpop.permute.xlu0 %3078
    %v3083 = vsel %vm987, %v3073, 0
    %3085 = vmatprep.subr.mxu0 0.0
    %3086 = vmatpush1.msra.mxu0 %v3077
    %3087 = vmatprep.subr.mxu0 0.0
    %3088 = vmatpush1.msra.mxu0 %v3079
    %3089 = vmatprep.subr.mxu0 0.0
    %3090 = vmatpush1.msra.mxu0 0.0
    %3091 = vmatprep.subr.mxu0 0.0
    %3092 = vmatpush1.msra.mxu0 0.0
    %3093 = vmatprep.subr.mxu0 0.0
    %3094 = vmatpush1.msra.mxu0 0.0
    %3095 = vmatprep.subr.mxu0 0.0
    %3096 = vmatpush1.msra.mxu0 0.0
    %3097 = vmatprep.subr.mxu0 0.0
    %3098 = vmatpush1.msra.mxu0 0.0
    %3099 = vmatprep.subr.mxu0 0.0
    %3100 = vmatpush1.msra.mxu0 0.0
    %3101 = vmatprep.subr.mxu0 0.0
    %3102 = vmatpush1.msra.mxu0 0.0
    %3103 = vmatprep.subr.mxu0 0.0
    %3104 = vmatpush1.msra.mxu0 0.0
    %3105 = vmatprep.subr.mxu0 0.0
    %3106 = vmatpush1.msra.mxu0 0.0
    %3107 = vmatprep.subr.mxu0 0.0
    %3108 = vmatpush1.msra.mxu0 0.0
    %3109 = vmatprep.subr.mxu0 0.0
    %3110 = vmatpush1.msra.mxu0 0.0
    %3111 = vmatprep.subr.mxu0 0.0
    %3112 = vmatpush1.msra.mxu0 0.0
    %3113 = vmatprep.subr.mxu0 0.0
    %3114 = vmatpush1.msra.mxu0 0.0
    %3115 = vmatprep.subr.mxu0 0.0
    %3116 = vmatpush1.msra.mxu0 0.0
    %3117 = vmatprep.subr.mxu0 0.0
    %3118 = vmatpush1.msra.mxu0 0.0
    %3119 = vmatprep.subr.mxu0 0.0
    %3120 = vmatpush1.msra.mxu0 0.0
    %3121 = vmatprep.subr.mxu0 0.0
    %3122 = vmatpush1.msra.mxu0 0.0
    %3123 = vmatprep.subr.mxu0 0.0
    %3124 = vmatpush1.msra.mxu0 0.0
    %3125 = vmatprep.subr.mxu0 0.0
    %3126 = vmatpush1.msra.mxu0 0.0
    %3127 = vmatprep.subr.mxu0 0.0
    %3128 = vmatpush1.msra.mxu0 0.0
    %3129 = vmatprep.subr.mxu0 0.0
    %3130 = vmatpush1.msra.mxu0 0.0
    %3131 = vmatprep.subr.mxu0 0.0
    %3132 = vmatpush1.msra.mxu0 0.0
    %3133 = vmatprep.subr.mxu0 0.0
    %3134 = vmatpush1.msra.mxu0 0.0
    %3135 = vmatprep.subr.mxu0 0.0
    %3136 = vmatpush1.msra.mxu0 0.0
    %3137 = vmatprep.subr.mxu0 0.0
    %3138 = vmatpush1.msra.mxu0 0.0
    %3139 = vmatprep.subr.mxu0 0.0
    %3140 = vmatpush1.msra.mxu0 0.0
    %3141 = vmatprep.subr.mxu0 0.0
    %3142 = vmatpush1.msra.mxu0 0.0
    %3143 = vmatprep.subr.mxu0 0.0
    %3144 = vmatpush1.msra.mxu0 0.0
    %3145 = vmatprep.subr.mxu0 0.0
    %3146 = vmatpush1.msra.mxu0 0.0
    %3147 = vmatprep.subr.mxu0 0.0
    %3148 = vmatpush1.msra.mxu0 0.0
    %3149 = vmatprep.mubr.f32.mxu0 0.0
    %3150 = vmatmul.mubr.f32.gmra.mrb[0].mxu0 %v3083
    %v3151 = vpop.f32.mrb[0].mxu0
    %v3152 = vadd.f32 0.0, %v3151
    %v3153 = vpop.f32.mrb[0].mxu0
    %3154 = vdwg.mxu0
    %v3155 = vadd.f32 %v2906, %v3073
    %3156 = vrot.lane.b32.xlu0 %v1881, 112
    %v3157 = vpop.permute.xlu0 %3156
    %3158 = vrot.lane.b32.xlu0 %v1992, 112
    %v3159 = vpop.permute.xlu0 %3158
    %3160 = vrot.lane.b32.xlu0 %v1997, 112
    %v3161 = vpop.permute.xlu0 %3160
    %v3162 = vsel %vm315, %v3157, 0
    %v3164 = vsel %vm315, %v3159, 0
    %v3166 = vsel %vm315, %v3161, 0
    %3168 = vmatprep.subr.mxu0 0.0
    %3169 = vmatpush1.xpose.msra.mxu0 %v3164
    %3170 = vmatprep.subr.mxu0 0.0
    %3171 = vmatpush1.xpose.msra.mxu0 %v3166
    %3172 = vmatprep.subr.mxu0 0.0
    %3173 = vmatpush1.xpose.msra.mxu0 0.0
    %3174 = vmatprep.subr.mxu0 0.0
    %3175 = vmatpush1.xpose.msra.mxu0 0.0
    %3176 = vmatprep.subr.mxu0 0.0
    %3177 = vmatpush1.xpose.msra.mxu0 0.0
    %3178 = vmatprep.subr.mxu0 0.0
    %3179 = vmatpush1.xpose.msra.mxu0 0.0
    %3180 = vmatprep.subr.mxu0 0.0
    %3181 = vmatpush1.xpose.msra.mxu0 0.0
    %3182 = vmatprep.subr.mxu0 0.0
    %3183 = vmatpush1.xpose.msra.mxu0 0.0
    %3184 = vmatprep.subr.mxu0 0.0
    %3185 = vmatpush1.xpose.msra.mxu0 0.0
    %3186 = vmatprep.subr.mxu0 0.0
    %3187 = vmatpush1.xpose.msra.mxu0 0.0
    %3188 = vmatprep.subr.mxu0 0.0
    %3189 = vmatpush1.xpose.msra.mxu0 0.0
    %3190 = vmatprep.subr.mxu0 0.0
    %3191 = vmatpush1.xpose.msra.mxu0 0.0
    %3192 = vmatprep.subr.mxu0 0.0
    %3193 = vmatpush1.xpose.msra.mxu0 0.0
    %3194 = vmatprep.subr.mxu0 0.0
    %3195 = vmatpush1.xpose.msra.mxu0 0.0
    %3196 = vmatprep.subr.mxu0 0.0
    %3197 = vmatpush1.xpose.msra.mxu0 0.0
    %3198 = vmatprep.subr.mxu0 0.0
    %3199 = vmatpush1.xpose.msra.mxu0 0.0
    %3200 = vmatprep.subr.mxu0 0.0
    %3201 = vmatpush1.xpose.msra.mxu0 0.0
    %3202 = vmatprep.subr.mxu0 0.0
    %3203 = vmatpush1.xpose.msra.mxu0 0.0
    %3204 = vmatprep.subr.mxu0 0.0
    %3205 = vmatpush1.xpose.msra.mxu0 0.0
    %3206 = vmatprep.subr.mxu0 0.0
    %3207 = vmatpush1.xpose.msra.mxu0 0.0
    %3208 = vmatprep.subr.mxu0 0.0
    %3209 = vmatpush1.xpose.msra.mxu0 0.0
    %3210 = vmatprep.subr.mxu0 0.0
    %3211 = vmatpush1.xpose.msra.mxu0 0.0
    %3212 = vmatprep.subr.mxu0 0.0
    %3213 = vmatpush1.xpose.msra.mxu0 0.0
    %3214 = vmatprep.subr.mxu0 0.0
    %3215 = vmatpush1.xpose.msra.mxu0 0.0
    %3216 = vmatprep.subr.mxu0 0.0
    %3217 = vmatpush1.xpose.msra.mxu0 0.0
    %3218 = vmatprep.subr.mxu0 0.0
    %3219 = vmatpush1.xpose.msra.mxu0 0.0
    %3220 = vmatprep.subr.mxu0 0.0
    %3221 = vmatpush1.xpose.msra.mxu0 0.0
    %3222 = vmatprep.subr.mxu0 0.0
    %3223 = vmatpush1.xpose.msra.mxu0 0.0
    %3224 = vmatprep.subr.mxu0 0.0
    %3225 = vmatpush1.xpose.msra.mxu0 0.0
    %3226 = vmatprep.subr.mxu0 0.0
    %3227 = vmatpush1.xpose.msra.mxu0 0.0
    %3228 = vmatprep.subr.mxu0 0.0
    %3229 = vmatpush1.xpose.msra.mxu0 0.0
    %3230 = vmatprep.subr.mxu0 0.0
    %3231 = vmatpush1.xpose.msra.mxu0 0.0
    %3232 = vmatprep.mubr.f32.mxu0 0.0
    %3233 = vmatmul.mubr.f32.gmra.mrb[0].mxu0 %v3162
    %v3234 = vpop.f32.mrb[0].mxu0
    %v3235 = vadd.f32 0.0, %v3234
    %v3236 = vpop.f32.mrb[0].mxu0
    %3237 = vdwg.mxu0
    %v3238 = vmul.f32 %v3235, 0.35355338
    %v3239 = vsel %vm987, %v3238, -inf
    %3240 = vmax.xlane.f32.xlu0 %v3239
    %v3241 = vpop.xlane.xlu0 %3240
    %v3242 = vsub.f32 %v3238, %v3241
    %v3243 = vmul.f32 %v3242, 1.442695
    %v3244 = vpow.pop %v3243
    %v3245 = vsel %vm987, %v3244, 0.0
    %3246 = vadd.xlane.f32.xlu0 %v3245
    %v3247 = vpop.xlane.xlu0 %3246
    %v3248 = vrcp.pop %v3247
    %v3249 = vmul.f32 %v3244, %v3248
    %3250 = vrot.lane.b32.xlu0 %v2104, 112
    %v3251 = vpop.permute.xlu0 %3250
    %3252 = vrot.lane.b32.xlu0 %v2109, 112
    %v3253 = vpop.permute.xlu0 %3252
    %v3257 = vsel %vm987, %v3249, 0
    %3259 = vmatprep.subr.mxu0 0.0
    %3260 = vmatpush1.msra.mxu0 %v3251
    %3261 = vmatprep.subr.mxu0 0.0
    %3262 = vmatpush1.msra.mxu0 %v3253
    %3263 = vmatprep.subr.mxu0 0.0
    %3264 = vmatpush1.msra.mxu0 0.0
    %3265 = vmatprep.subr.mxu0 0.0
    %3266 = vmatpush1.msra.mxu0 0.0
    %3267 = vmatprep.subr.mxu0 0.0
    %3268 = vmatpush1.msra.mxu0 0.0
    %3269 = vmatprep.subr.mxu0 0.0
    %3270 = vmatpush1.msra.mxu0 0.0
    %3271 = vmatprep.subr.mxu0 0.0
    %3272 = vmatpush1.msra.mxu0 0.0
    %3273 = vmatprep.subr.mxu0 0.0
    %3274 = vmatpush1.msra.mxu0 0.0
    %3275 = vmatprep.subr.mxu0 0.0
    %3276 = vmatpush1.msra.mxu0 0.0
    %3277 = vmatprep.subr.mxu0 0.0
    %3278 = vmatpush1.msra.mxu0 0.0
    %3279 = vmatprep.subr.mxu0 0.0
    %3280 = vmatpush1.msra.mxu0 0.0
    %3281 = vmatprep.subr.mxu0 0.0
    %3282 = vmatpush1.msra.mxu0 0.0
    %3283 = vmatprep.subr.mxu0 0.0
    %3284 = vmatpush1.msra.mxu0 0.0
    %3285 = vmatprep.subr.mxu0 0.0
    %3286 = vmatpush1.msra.mxu0 0.0
    %3287 = vmatprep.subr.mxu0 0.0
    %3288 = vmatpush1.msra.mxu0 0.0
    %3289 = vmatprep.subr.mxu0 0.0
    %3290 = vmatpush1.msra.mxu0 0.0
    %3291 = vmatprep.subr.mxu0 0.0
    %3292 = vmatpush1.msra.mxu0 0.0
    %3293 = vmatprep.subr.mxu0 0.0
    %3294 = vmatpush1.msra.mxu0 0.0
    %3295 = vmatprep.subr.mxu0 0.0
    %3296 = vmatpush1.msra.mxu0 0.0
    %3297 = vmatprep.subr.mxu0 0.0
    %3298 = vmatpush1.msra.mxu0 0.0
    %3299 = vmatprep.subr.mxu0 0.0
    %3300 = vmatpush1.msra.mxu0 0.0
    %3301 = vmatprep.subr.mxu0 0.0
    %3302 = vmatpush1.msra.mxu0 0.0
    %3303 = vmatprep.subr.mxu0 0.0
    %3304 = vmatpush1.msra.mxu0 0.0
    %3305 = vmatprep.subr.mxu0 0.0
    %3306 = vmatpush1.msra.mxu0 0.0
    %3307 = vmatprep.subr.mxu0 0.0
    %3308 = vmatpush1.msra.mxu0 0.0
    %3309 = vmatprep.subr.mxu0 0.0
    %3310 = vmatpush1.msra.mxu0 0.0
    %3311 = vmatprep.subr.mxu0 0.0
    %3312 = vmatpush1.msra.mxu0 0.0
    %3313 = vmatprep.subr.mxu0 0.0
    %3314 = vmatpush1.msra.mxu0 0.0
    %3315 = vmatprep.subr.mxu0 0.0
    %3316 = vmatpush1.msra.mxu0 0.0
    %3317 = vmatprep.subr.mxu0 0.0
    %3318 = vmatpush1.msra.mxu0 0.0
    %3319 = vmatprep.subr.mxu0 0.0
    %3320 = vmatpush1.msra.mxu0 0.0
    %3321 = vmatprep.subr.mxu0 0.0
    %3322 = vmatpush1.msra.mxu0 0.0
    %3323 = vmatprep.mubr.f32.mxu0 0.0
    %3324 = vmatmul.mubr.f32.gmra.mrb[0].mxu0 %v3257
    %v3325 = vpop.f32.mrb[0].mxu0
    %v3326 = vadd.f32 0.0, %v3325
    %v3327 = vpop.f32.mrb[0].mxu0
    %3328 = vdwg.mxu0
    %v3329 = vadd.f32 %v3155, %v3249
    %3330 = vrot.lane.b32.xlu0 %v1881, 104
    %v3331 = vpop.permute.xlu0 %3330
    %3332 = vrot.lane.b32.xlu0 %v1992, 104
    %v3333 = vpop.permute.xlu0 %3332
    %3334 = vrot.lane.b32.xlu0 %v1997, 104
    %v3335 = vpop.permute.xlu0 %3334
    %v3336 = vsel %vm315, %v3331, 0
    %v3338 = vsel %vm315, %v3333, 0
    %v3340 = vsel %vm315, %v3335, 0
    %3342 = vmatprep.subr.mxu0 0.0
    %3343 = vmatpush1.xpose.msra.mxu0 %v3338
    %3344 = vmatprep.subr.mxu0 0.0
    %3345 = vmatpush1.xpose.msra.mxu0 %v3340
    %3346 = vmatprep.subr.mxu0 0.0
    %3347 = vmatpush1.xpose.msra.mxu0 0.0
    %3348 = vmatprep.subr.mxu0 0.0
    %3349 = vmatpush1.xpose.msra.mxu0 0.0
    %3350 = vmatprep.subr.mxu0 0.0
    %3351 = vmatpush1.xpose.msra.mxu0 0.0
    %3352 = vmatprep.subr.mxu0 0.0
    %3353 = vmatpush1.xpose.msra.mxu0 0.0
    %3354 = vmatprep.subr.mxu0 0.0
    %3355 = vmatpush1.xpose.msra.mxu0 0.0
    %3356 = vmatprep.subr.mxu0 0.0
    %3357 = vmatpush1.xpose.msra.mxu0 0.0
    %3358 = vmatprep.subr.mxu0 0.0
    %3359 = vmatpush1.xpose.msra.mxu0 0.0
    %3360 = vmatprep.subr.mxu0 0.0
    %3361 = vmatpush1.xpose.msra.mxu0 0.0
    %3362 = vmatprep.subr.mxu0 0.0
    %3363 = vmatpush1.xpose.msra.mxu0 0.0
    %3364 = vmatprep.subr.mxu0 0.0
    %3365 = vmatpush1.xpose.msra.mxu0 0.0
    %3366 = vmatprep.subr.mxu0 0.0
    %3367 = vmatpush1.xpose.msra.mxu0 0.0
    %3368 = vmatprep.subr.mxu0 0.0
    %3369 = vmatpush1.xpose.msra.mxu0 0.0
    %3370 = vmatprep.subr.mxu0 0.0
    %3371 = vmatpush1.xpose.msra.mxu0 0.0
    %3372 = vmatprep.subr.mxu0 0.0
    %3373 = vmatpush1.xpose.msra.mxu0 0.0
    %3374 = vmatprep.subr.mxu0 0.0
    %3375 = vmatpush1.xpose.msra.mxu0 0.0
    %3376 = vmatprep.subr.mxu0 0.0
    %3377 = vmatpush1.xpose.msra.mxu0 0.0
    %3378 = vmatprep.subr.mxu0 0.0
    %3379 = vmatpush1.xpose.msra.mxu0 0.0
    %3380 = vmatprep.subr.mxu0 0.0
    %3381 = vmatpush1.xpose.msra.mxu0 0.0
    %3382 = vmatprep.subr.mxu0 0.0
    %3383 = vmatpush1.xpose.msra.mxu0 0.0
    %3384 = vmatprep.subr.mxu0 0.0
    %3385 = vmatpush1.xpose.msra.mxu0 0.0
    %3386 = vmatprep.subr.mxu0 0.0
    %3387 = vmatpush1.xpose.msra.mxu0 0.0
    %3388 = vmatprep.subr.mxu0 0.0
    %3389 = vmatpush1.xpose.msra.mxu0 0.0
    %3390 = vmatprep.subr.mxu0 0.0
    %3391 = vmatpush1.xpose.msra.mxu0 0.0
    %3392 = vmatprep.subr.mxu0 0.0
    %3393 = vmatpush1.xpose.msra.mxu0 0.0
    %3394 = vmatprep.subr.mxu0 0.0
    %3395 = vmatpush1.xpose.msra.mxu0 0.0
    %3396 = vmatprep.subr.mxu0 0.0
    %3397 = vmatpush1.xpose.msra.mxu0 0.0
    %3398 = vmatprep.subr.mxu0 0.0
    %3399 = vmatpush1.xpose.msra.mxu0 0.0
    %3400 = vmatprep.subr.mxu0 0.0
    %3401 = vmatpush1.xpose.msra.mxu0 0.0
    %3402 = vmatprep.subr.mxu0 0.0
    %3403 = vmatpush1.xpose.msra.mxu0 0.0
    %3404 = vmatprep.subr.mxu0 0.0
    %3405 = vmatpush1.xpose.msra.mxu0 0.0
    %3406 = vmatprep.mubr.f32.mxu0 0.0
    %3407 = vmatmul.mubr.f32.gmra.mrb[0].mxu0 %v3336
    %v3408 = vpop.f32.mrb[0].mxu0
    %v3409 = vadd.f32 0.0, %v3408
    %v3410 = vpop.f32.mrb[0].mxu0
    %3411 = vdwg.mxu0
    %v3412 = vmul.f32 %v3409, 0.35355338
    %v3413 = vsel %vm987, %v3412, -inf
    %3414 = vmax.xlane.f32.xlu0 %v3413
    %v3415 = vpop.xlane.xlu0 %3414
    %v3416 = vsub.f32 %v3412, %v3415
    %v3417 = vmul.f32 %v3416, 1.442695
    %v3418 = vpow.pop %v3417
    %v3419 = vsel %vm987, %v3418, 0.0
    %3420 = vadd.xlane.f32.xlu0 %v3419
    %v3421 = vpop.xlane.xlu0 %3420
    %v3422 = vrcp.pop %v3421
    %v3423 = vmul.f32 %v3418, %v3422
    %3424 = vrot.lane.b32.xlu0 %v2104, 104
    %v3425 = vpop.permute.xlu0 %3424
    %3426 = vrot.lane.b32.xlu0 %v2109, 104
    %v3427 = vpop.permute.xlu0 %3426
    %v3431 = vsel %vm987, %v3423, 0
    %3433 = vmatprep.subr.mxu0 0.0
    %3434 = vmatpush1.msra.mxu0 %v3425
    %3435 = vmatprep.subr.mxu0 0.0
    %3436 = vmatpush1.msra.mxu0 %v3427
    %3437 = vmatprep.subr.mxu0 0.0
    %3438 = vmatpush1.msra.mxu0 0.0
    %3439 = vmatprep.subr.mxu0 0.0
    %3440 = vmatpush1.msra.mxu0 0.0
    %3441 = vmatprep.subr.mxu0 0.0
    %3442 = vmatpush1.msra.mxu0 0.0
    %3443 = vmatprep.subr.mxu0 0.0
    %3444 = vmatpush1.msra.mxu0 0.0
    %3445 = vmatprep.subr.mxu0 0.0
    %3446 = vmatpush1.msra.mxu0 0.0
    %3447 = vmatprep.subr.mxu0 0.0
    %3448 = vmatpush1.msra.mxu0 0.0
    %3449 = vmatprep.subr.mxu0 0.0
    %3450 = vmatpush1.msra.mxu0 0.0
    %3451 = vmatprep.subr.mxu0 0.0
    %3452 = vmatpush1.msra.mxu0 0.0
    %3453 = vmatprep.subr.mxu0 0.0
    %3454 = vmatpush1.msra.mxu0 0.0
    %3455 = vmatprep.subr.mxu0 0.0
    %3456 = vmatpush1.msra.mxu0 0.0
    %3457 = vmatprep.subr.mxu0 0.0
    %3458 = vmatpush1.msra.mxu0 0.0
    %3459 = vmatprep.subr.mxu0 0.0
    %3460 = vmatpush1.msra.mxu0 0.0
    %3461 = vmatprep.subr.mxu0 0.0
    %3462 = vmatpush1.msra.mxu0 0.0
    %3463 = vmatprep.subr.mxu0 0.0
    %3464 = vmatpush1.msra.mxu0 0.0
    %3465 = vmatprep.subr.mxu0 0.0
    %3466 = vmatpush1.msra.mxu0 0.0
    %3467 = vmatprep.subr.mxu0 0.0
    %3468 = vmatpush1.msra.mxu0 0.0
    %3469 = vmatprep.subr.mxu0 0.0
    %3470 = vmatpush1.msra.mxu0 0.0
    %3471 = vmatprep.subr.mxu0 0.0
    %3472 = vmatpush1.msra.mxu0 0.0
    %3473 = vmatprep.subr.mxu0 0.0
    %3474 = vmatpush1.msra.mxu0 0.0
    %3475 = vmatprep.subr.mxu0 0.0
    %3476 = vmatpush1.msra.mxu0 0.0
    %3477 = vmatprep.subr.mxu0 0.0
    %3478 = vmatpush1.msra.mxu0 0.0
    %3479 = vmatprep.subr.mxu0 0.0
    %3480 = vmatpush1.msra.mxu0 0.0
    %3481 = vmatprep.subr.mxu0 0.0
    %3482 = vmatpush1.msra.mxu0 0.0
    %3483 = vmatprep.subr.mxu0 0.0
    %3484 = vmatpush1.msra.mxu0 0.0
    %3485 = vmatprep.subr.mxu0 0.0
    %3486 = vmatpush1.msra.mxu0 0.0
    %3487 = vmatprep.subr.mxu0 0.0
    %3488 = vmatpush1.msra.mxu0 0.0
    %3489 = vmatprep.subr.mxu0 0.0
    %3490 = vmatpush1.msra.mxu0 0.0
    %3491 = vmatprep.subr.mxu0 0.0
    %3492 = vmatpush1.msra.mxu0 0.0
    %3493 = vmatprep.subr.mxu0 0.0
    %3494 = vmatpush1.msra.mxu0 0.0
    %3495 = vmatprep.subr.mxu0 0.0
    %3496 = vmatpush1.msra.mxu0 0.0
    %3497 = vmatprep.mubr.f32.mxu0 0.0
    %3498 = vmatmul.mubr.f32.gmra.mrb[0].mxu0 %v3431
    %v3499 = vpop.f32.mrb[0].mxu0
    %v3500 = vadd.f32 0.0, %v3499
    %v3501 = vpop.f32.mrb[0].mxu0
    %3502 = vdwg.mxu0
    %v3503 = vadd.f32 %v3329, %v3423
    %3505 = vrot.lane.b32.xlu0 %v3152, 8
    %v3506 = vpop.permute.xlu0 %3505
    %3509 = vrot.lane.b32.xlu0 %v3326, 16
    %v3510 = vpop.permute.xlu0 %3509
    %3513 = vrot.lane.b32.xlu0 %v3500, 24
    %v3514 = vpop.permute.xlu0 %3513
    %v3516 = vsel %vm315, %v2977, %v3506
    %v3517 = vsel %vm987, %v3516, %v3510
    %v3518 = vsel %vm989, %v3517, %v3514
    %v3519 = vmul.f32 %v3503, 0.25
    %v3521 = vlaneseq
    %v3522 = vshrl.u32 %v3521, 7
    %v3523 = vsub.s32 0, %v3522
    %v3524 = vrot.slane %v99, %v3523
    %v3527 = vsel %vm130, %v2814, 0
    %v3530 = vsel %vm130, %v3518, 0
    %3532 = vmatprep.subr.mxu0 0.0
    %3533 = vmatpush1.msra.mxu0 %v95
    %3534 = vmatprep.subr.mxu0 0.0
    %3535 = vmatpush1.msra.mxu0 %v96
    %3536 = vmatprep.subr.mxu0 0.0
    %3537 = vmatpush1.msra.mxu0 %v97
    %3538 = vmatprep.subr.mxu0 0.0
    %3539 = vmatpush1.msra.mxu0 %v98
    %3540 = vmatprep.subr.mxu0 0.0
    %3541 = vmatpush1.msra.mxu0 0.0
    %3542 = vmatprep.subr.mxu0 0.0
    %3543 = vmatpush1.msra.mxu0 0.0
    %3544 = vmatprep.subr.mxu0 0.0
    %3545 = vmatpush1.msra.mxu0 0.0
    %3546 = vmatprep.subr.mxu0 0.0
    %3547 = vmatpush1.msra.mxu0 0.0
    %3548 = vmatprep.subr.mxu0 0.0
    %3549 = vmatpush1.msra.mxu0 0.0
    %3550 = vmatprep.subr.mxu0 0.0
    %3551 = vmatpush1.msra.mxu0 0.0
    %3552 = vmatprep.subr.mxu0 0.0
    %3553 = vmatpush1.msra.mxu0 0.0
    %3554 = vmatprep.subr.mxu0 0.0
    %3555 = vmatpush1.msra.mxu0 0.0
    %3556 = vmatprep.subr.mxu0 0.0
    %3557 = vmatpush1.msra.mxu0 0.0
    %3558 = vmatprep.subr.mxu0 0.0
    %3559 = vmatpush1.msra.mxu0 0.0
    %3560 = vmatprep.subr.mxu0 0.0
    %3561 = vmatpush1.msra.mxu0 0.0
    %3562 = vmatprep.subr.mxu0 0.0
    %3563 = vmatpush1.msra.mxu0 0.0
    %3564 = vmatprep.subr.mxu0 0.0
    %3565 = vmatpush1.msra.mxu0 0.0
    %3566 = vmatprep.subr.mxu0 0.0
    %3567 = vmatpush1.msra.mxu0 0.0
    %3568 = vmatprep.subr.mxu0 0.0
    %3569 = vmatpush1.msra.mxu0 0.0
    %3570 = vmatprep.subr.mxu0 0.0
    %3571 = vmatpush1.msra.mxu0 0.0
    %3572 = vmatprep.subr.mxu0 0.0
    %3573 = vmatpush1.msra.mxu0 0.0
    %3574 = vmatprep.subr.mxu0 0.0
    %3575 = vmatpush1.msra.mxu0 0.0
    %3576 = vmatprep.subr.mxu0 0.0
    %3577 = vmatpush1.msra.mxu0 0.0
    %3578 = vmatprep.subr.mxu0 0.0
    %3579 = vmatpush1.msra.mxu0 0.0
    %3580 = vmatprep.subr.mxu0 0.0
    %3581 = vmatpush1.msra.mxu0 0.0
    %3582 = vmatprep.subr.mxu0 0.0
    %3583 = vmatpush1.msra.mxu0 0.0
    %3584 = vmatprep.subr.mxu0 0.0
    %3585 = vmatpush1.msra.mxu0 0.0
    %3586 = vmatprep.subr.mxu0 0.0
    %3587 = vmatpush1.msra.mxu0 0.0
    %3588 = vmatprep.subr.mxu0 0.0
    %3589 = vmatpush1.msra.mxu0 0.0
    %3590 = vmatprep.subr.mxu0 0.0
    %3591 = vmatpush1.msra.mxu0 0.0
    %3592 = vmatprep.subr.mxu0 0.0
    %3593 = vmatpush1.msra.mxu0 0.0
    %3594 = vmatprep.subr.mxu0 0.0
    %3595 = vmatpush1.msra.mxu0 0.0
    %3596 = vmatprep.mubr.f32.mxu0 0.0
    %3597 = vmatmul.mubr.f32.gmra.mrb[0].mxu0 %v3527
    %v3598 = vpop.f32.mrb[0].mxu0
    %v3599 = vadd.f32 %v3524, %v3598
    %v3600 = vpop.f32.mrb[0].mxu0
    %3601 = vmatprep.mubr.f32.mxu0 0.0
    %3602 = vmatmul.mubr.f32.gmra.mrb[0].mxu0 %v3530
    %v3603 = vpop.f32.mrb[0].mxu0
    %v3604 = vadd.f32 %v3524, %v3603
    %v3605 = vpop.f32.mrb[0].mxu0
    %3606 = vdwg.mxu0
    %v3607 = vadd.f32 %v1793, %v3599
    %v3608 = vadd.f32 %v1794, %v3604
    %v3609 = vsel %vm130, %v3607, 0.0
    %3610 = vadd.xlane.f32.xlu0 %v3609
    %v3611 = vpop.xlane.xlu0 %3610
    %v3612 = vsel %vm130, %v3608, 0.0
    %3613 = vadd.xlane.f32.xlu0 %v3612
    %v3614 = vpop.xlane.xlu0 %3613
    %v3615 = vmul.f32 %v3611, %v1762
    %v3616 = vmul.f32 %v3614, %v1762
    %v3617 = vsub.f32 %v3607, %v3615
    %v3618 = vsub.f32 %v3608, %v3616
    %v3619 = vmul.f32 %v3617, %v3617
    %v3620 = vmul.f32 %v3618, %v3618
    %v3621 = vsel %vm130, %v3619, 0.0
    %3622 = vadd.xlane.f32.xlu0 %v3621
    %v3623 = vpop.xlane.xlu0 %3622
    %v3624 = vsel %vm130, %v3620, 0.0
    %3625 = vadd.xlane.f32.xlu0 %v3624
    %v3626 = vpop.xlane.xlu0 %3625
    %v3627 = vmul.f32 %v3623, %v1762
    %v3628 = vmul.f32 %v3626, %v1762
    %v3629 = vadd.f32 %v3627, 1e-05
    %v3630 = vadd.f32 %v3628, 1e-05
    %v3631 = vrsqrt.pop %v3629
    %v3632 = vrsqrt.pop %v3630
    %v3633 = vmul.f32 %v3617, %v3631
    %v3634 = vmul.f32 %v3618, %v3632
    %v3635 = vlaneseq
    %v3636 = vshrl.u32 %v3635, 7
    %v3637 = vsub.s32 1, %v3636
    %v3638 = vrot.slane %v114, %v3637
    %v3639 = vmul.f32 %v3633, %v3638
    %v3640 = vmul.f32 %v3634, %v3638
    %v3641 = vlaneseq
    %v3642 = vshrl.u32 %v3641, 7
    %v3643 = vsub.s32 1, %v3642
    %v3644 = vrot.slane %v115, %v3643
    %v3645 = vadd.f32 %v3639, %v3644
    %v3646 = vadd.f32 %v3640, %v3644
    %v3648 = vlaneseq
    %v3649 = vshrl.u32 %v3648, 7
    %v3650 = vsub.s32 0, %v3649
    %v3651 = vrot.slane %v104, %v3650
    %v3654 = vsel %vm130, %v3645, 0
    %v3657 = vsel %vm130, %v3646, 0
    %3659 = vmatprep.subr.mxu0 0.0
    %3660 = vmatpush1.msra.mxu0 %v100
    %3661 = vmatprep.subr.mxu0 0.0
    %3662 = vmatpush1.msra.mxu0 %v101
    %3663 = vmatprep.subr.mxu0 0.0
    %3664 = vmatpush1.msra.mxu0 %v102
    %3665 = vmatprep.subr.mxu0 0.0
    %3666 = vmatpush1.msra.mxu0 %v103
    %3667 = vmatprep.subr.mxu0 0.0
    %3668 = vmatpush1.msra.mxu0 0.0
    %3669 = vmatprep.subr.mxu0 0.0
    %3670 = vmatpush1.msra.mxu0 0.0
    %3671 = vmatprep.subr.mxu0 0.0
    %3672 = vmatpush1.msra.mxu0 0.0
    %3673 = vmatprep.subr.mxu0 0.0
    %3674 = vmatpush1.msra.mxu0 0.0
    %3675 = vmatprep.subr.mxu0 0.0
    %3676 = vmatpush1.msra.mxu0 0.0
    %3677 = vmatprep.subr.mxu0 0.0
    %3678 = vmatpush1.msra.mxu0 0.0
    %3679 = vmatprep.subr.mxu0 0.0
    %3680 = vmatpush1.msra.mxu0 0.0
    %3681 = vmatprep.subr.mxu0 0.0
    %3682 = vmatpush1.msra.mxu0 0.0
    %3683 = vmatprep.subr.mxu0 0.0
    %3684 = vmatpush1.msra.mxu0 0.0
    %3685 = vmatprep.subr.mxu0 0.0
    %3686 = vmatpush1.msra.mxu0 0.0
    %3687 = vmatprep.subr.mxu0 0.0
    %3688 = vmatpush1.msra.mxu0 0.0
    %3689 = vmatprep.subr.mxu0 0.0
    %3690 = vmatpush1.msra.mxu0 0.0
    %3691 = vmatprep.subr.mxu0 0.0
    %3692 = vmatpush1.msra.mxu0 0.0
    %3693 = vmatprep.subr.mxu0 0.0
    %3694 = vmatpush1.msra.mxu0 0.0
    %3695 = vmatprep.subr.mxu0 0.0
    %3696 = vmatpush1.msra.mxu0 0.0
    %3697 = vmatprep.subr.mxu0 0.0
    %3698 = vmatpush1.msra.mxu0 0.0
    %3699 = vmatprep.subr.mxu0 0.0
    %3700 = vmatpush1.msra.mxu0 0.0
    %3701 = vmatprep.subr.mxu0 0.0
    %3702 = vmatpush1.msra.mxu0 0.0
    %3703 = vmatprep.subr.mxu0 0.0
    %3704 = vmatpush1.msra.mxu0 0.0
    %3705 = vmatprep.subr.mxu0 0.0
    %3706 = vmatpush1.msra.mxu0 0.0
    %3707 = vmatprep.subr.mxu0 0.0
    %3708 = vmatpush1.msra.mxu0 0.0
    %3709 = vmatprep.subr.mxu0 0.0
    %3710 = vmatpush1.msra.mxu0 0.0
    %3711 = vmatprep.subr.mxu0 0.0
    %3712 = vmatpush1.msra.mxu0 0.0
    %3713 = vmatprep.subr.mxu0 0.0
    %3714 = vmatpush1.msra.mxu0 0.0
    %3715 = vmatprep.subr.mxu0 0.0
    %3716 = vmatpush1.msra.mxu0 0.0
    %3717 = vmatprep.subr.mxu0 0.0
    %3718 = vmatpush1.msra.mxu0 0.0
    %3719 = vmatprep.subr.mxu0 0.0
    %3720 = vmatpush1.msra.mxu0 0.0
    %3721 = vmatprep.subr.mxu0 0.0
    %3722 = vmatpush1.msra.mxu0 0.0
    %3723 = vmatprep.mubr.f32.mxu0 0.0
    %3724 = vmatmul.mubr.f32.gmra.mrb[0].mxu0 %v3654
    %v3725 = vpop.f32.mrb[0].mxu0
    %v3726 = vadd.f32 %v3651, %v3725
    %v3727 = vpop.f32.mrb[0].mxu0
    %3728 = vmatprep.mubr.f32.mxu0 0.0
    %3729 = vmatmul.mubr.f32.gmra.mrb[0].mxu0 %v3657
    %v3730 = vpop.f32.mrb[0].mxu0
    %v3731 = vadd.f32 %v3651, %v3730
    %v3732 = vpop.f32.mrb[0].mxu0
    %3733 = vdwg.mxu0
    %v3734 = vmax.f32 %v3726, 0.0
    %v3735 = vmax.f32 %v3731, 0.0
    %v3737 = vlaneseq
    %v3738 = vshrl.u32 %v3737, 7
    %v3739 = vsub.s32 0, %v3738
    %v3740 = vrot.slane %v113, %v3739
    %vm3742 = vcmask 523264
    %v3744 = vsel %vm3742, %v3734, 0
    %v3747 = vsel %vm3742, %v3735, 0
    %3749 = vmatprep.subr.mxu0 0.0
    %3750 = vmatpush1.msra.mxu0 %v105
    %3751 = vmatprep.subr.mxu0 0.0
    %3752 = vmatpush1.msra.mxu0 %v106
    %3753 = vmatprep.subr.mxu0 0.0
    %3754 = vmatpush1.msra.mxu0 %v107
    %3755 = vmatprep.subr.mxu0 0.0
    %3756 = vmatpush1.msra.mxu0 %v108
    %3757 = vmatprep.subr.mxu0 0.0
    %3758 = vmatpush1.msra.mxu0 %v109
    %3759 = vmatprep.subr.mxu0 0.0
    %3760 = vmatpush1.msra.mxu0 %v110
    %3761 = vmatprep.subr.mxu0 0.0
    %3762 = vmatpush1.msra.mxu0 %v111
    %3763 = vmatprep.subr.mxu0 0.0
    %3764 = vmatpush1.msra.mxu0 %v112
    %3765 = vmatprep.subr.mxu0 0.0
    %3766 = vmatpush1.msra.mxu0 0.0
    %3767 = vmatprep.subr.mxu0 0.0
    %3768 = vmatpush1.msra.mxu0 0.0
    %3769 = vmatprep.subr.mxu0 0.0
    %3770 = vmatpush1.msra.mxu0 0.0
    %3771 = vmatprep.subr.mxu0 0.0
    %3772 = vmatpush1.msra.mxu0 0.0
    %3773 = vmatprep.subr.mxu0 0.0
    %3774 = vmatpush1.msra.mxu0 0.0
    %3775 = vmatprep.subr.mxu0 0.0
    %3776 = vmatpush1.msra.mxu0 0.0
    %3777 = vmatprep.subr.mxu0 0.0
    %3778 = vmatpush1.msra.mxu0 0.0
    %3779 = vmatprep.subr.mxu0 0.0
    %3780 = vmatpush1.msra.mxu0 0.0
    %3781 = vmatprep.subr.mxu0 0.0
    %3782 = vmatpush1.msra.mxu0 0.0
    %3783 = vmatprep.subr.mxu0 0.0
    %3784 = vmatpush1.msra.mxu0 0.0
    %3785 = vmatprep.subr.mxu0 0.0
    %3786 = vmatpush1.msra.mxu0 0.0
    %3787 = vmatprep.subr.mxu0 0.0
    %3788 = vmatpush1.msra.mxu0 0.0
    %3789 = vmatprep.subr.mxu0 0.0
    %3790 = vmatpush1.msra.mxu0 0.0
    %3791 = vmatprep.subr.mxu0 0.0
    %3792 = vmatpush1.msra.mxu0 0.0
    %3793 = vmatprep.subr.mxu0 0.0
    %3794 = vmatpush1.msra.mxu0 0.0
    %3795 = vmatprep.subr.mxu0 0.0
    %3796 = vmatpush1.msra.mxu0 0.0
    %3797 = vmatprep.subr.mxu0 0.0
    %3798 = vmatpush1.msra.mxu0 0.0
    %3799 = vmatprep.subr.mxu0 0.0
    %3800 = vmatpush1.msra.mxu0 0.0
    %3801 = vmatprep.subr.mxu0 0.0
    %3802 = vmatpush1.msra.mxu0 0.0
    %3803 = vmatprep.subr.mxu0 0.0
    %3804 = vmatpush1.msra.mxu0 0.0
    %3805 = vmatprep.subr.mxu0 0.0
    %3806 = vmatpush1.msra.mxu0 0.0
    %3807 = vmatprep.subr.mxu0 0.0
    %3808 = vmatpush1.msra.mxu0 0.0
    %3809 = vmatprep.subr.mxu0 0.0
    %3810 = vmatpush1.msra.mxu0 0.0
    %3811 = vmatprep.subr.mxu0 0.0
    %3812 = vmatpush1.msra.mxu0 0.0
    %3813 = vmatprep.mubr.f32.mxu0 0.0
    %3814 = vmatmul.mubr.f32.gmra.mrb[0].mxu0 %v3744
    %v3815 = vpop.f32.mrb[0].mxu0
    %v3816 = vadd.f32 %v3740, %v3815
    %v3817 = vpop.f32.mrb[0].mxu0
    %3818 = vmatprep.mubr.f32.mxu0 0.0
    %3819 = vmatmul.mubr.f32.gmra.mrb[0].mxu0 %v3747
    %v3820 = vpop.f32.mrb[0].mxu0
    %v3821 = vadd.f32 %v3740, %v3820
    %v3822 = vpop.f32.mrb[0].mxu0
    %3823 = vdwg.mxu0
    %v3824 = vadd.f32 %v3645, %v3816
    %v3825 = vadd.f32 %v3646, %v3821
    %v3826 = vsel %vm130, %v3824, 0.0
    %3827 = vadd.xlane.f32.xlu0 %v3826
    %v3828 = vpop.xlane.xlu0 %3827
    %v3829 = vsel %vm130, %v3825, 0.0
    %3830 = vadd.xlane.f32.xlu0 %v3829
    %v3831 = vpop.xlane.xlu0 %3830
    %v3832 = vmul.f32 %v3828, %v1762
    %v3833 = vmul.f32 %v3831, %v1762
    %v3834 = vsub.f32 %v3824, %v3832
    %v3835 = vsub.f32 %v3825, %v3833
    %v3836 = vmul.f32 %v3834, %v3834
    %v3837 = vmul.f32 %v3835, %v3835
    %v3838 = vsel %vm130, %v3836, 0.0
    %3839 = vadd.xlane.f32.xlu0 %v3838
    %v3840 = vpop.xlane.xlu0 %3839
    %v3841 = vsel %vm130, %v3837, 0.0
    %3842 = vadd.xlane.f32.xlu0 %v3841
    %v3843 = vpop.xlane.xlu0 %3842
    %v3844 = vmul.f32 %v3840, %v1762
    %v3845 = vmul.f32 %v3843, %v1762
    %v3846 = vadd.f32 %v3844, 1e-05
    %v3847 = vadd.f32 %v3845, 1e-05
    %v3848 = vrsqrt.pop %v3846
    %v3849 = vrsqrt.pop %v3847
    %v3850 = vmul.f32 %v3834, %v3848
    %v3851 = vmul.f32 %v3835, %v3849
    %v3852 = vlaneseq
    %v3853 = vshrl.u32 %v3852, 7
    %v3854 = vsub.s32 2, %v3853
    %v3855 = vrot.slane %v114, %v3854
    %v3856 = vmul.f32 %v3850, %v3855
    %v3857 = vmul.f32 %v3851, %v3855
    %v3858 = vlaneseq
    %v3859 = vshrl.u32 %v3858, 7
    %v3860 = vsub.s32 2, %v3859
    %v3861 = vrot.slane %v115, %v3860
    %v3862 = vadd.f32 %v3856, %v3861
    %v3863 = vadd.f32 %v3857, %v3861
    %v3864 = vsel %vm130, %v3862, 0.0
    %3865 = vadd.xlane.f32.xlu0 %v3864
    %v3866 = vpop.xlane.xlu0 %3865
    %v3867 = vsel %vm130, %v3863, 0.0
    %3868 = vadd.xlane.f32.xlu0 %v3867
    %v3869 = vpop.xlane.xlu0 %3868
    %v3870 = vmul.f32 %v3866, %v1762
    %v3871 = vmul.f32 %v3869, %v1762
    %v3872 = vsub.f32 %v3862, %v3870
    %v3873 = vsub.f32 %v3863, %v3871
    %v3874 = vmul.f32 %v3872, %v3872
    %v3875 = vmul.f32 %v3873, %v3873
    %v3876 = vsel %vm130, %v3874, 0.0
    %3877 = vadd.xlane.f32.xlu0 %v3876
    %v3878 = vpop.xlane.xlu0 %3877
    %v3879 = vsel %vm130, %v3875, 0.0
    %3880 = vadd.xlane.f32.xlu0 %v3879
    %v3881 = vpop.xlane.xlu0 %3880
    %v3882 = vmul.f32 %v3878, %v1762
    %v3883 = vmul.f32 %v3881, %v1762
    %v3884 = vadd.f32 %v3882, 1e-05
    %v3885 = vadd.f32 %v3883, 1e-05
    %v3886 = vrsqrt.pop %v3884
    %v3887 = vrsqrt.pop %v3885
    %v3888 = vmul.f32 %v3872, %v3886
    %v3889 = vmul.f32 %v3873, %v3887
    %v3890 = vlaneseq
    %v3891 = vshrl.u32 %v3890, 7
    %v3892 = vsub.s32 3, %v3891
    %v3893 = vrot.slane %v114, %v3892
    %v3894 = vmul.f32 %v3888, %v3893
    %v3895 = vmul.f32 %v3889, %v3893
    %v3896 = vlaneseq
    %v3897 = vshrl.u32 %v3896, 7
    %v3898 = vsub.s32 3, %v3897
    %v3899 = vrot.slane %v115, %v3898
    %v3900 = vadd.f32 %v3894, %v3899
    %v3901 = vadd.f32 %v3895, %v3899
    %3902 = vst.msk [vmem:[#allocation2] sm:$0xff] %vm130, %v3900
    %3903 = vst.msk [vmem:[#allocation2 + $0x8] sm:$0xff] %vm130, %v3901
    %3904 = vst.msk [vmem:[#allocation4] sm:$0xff] %vm987, %v2815
    %s3905 = scalar_lea.vmem [#allocation4], 8
    %3906 = vst.msk [vmem:[%s3905] sm:$0xff] %vm987, %v3519
    %v3907 = vadd.f32 %v3862, %v116
    %v3908 = vadd.f32 %v3863, %v117
    %v3910 = vsel %vm130, %v3907, 0
    %v3913 = vsel %vm130, %v3908, 0
    %3915 = vmatprep.subr.mxu0 0.0
    %3916 = vmatpush1.msra.mxu0 %v80
    %3917 = vmatprep.subr.mxu0 0.0
    %3918 = vmatpush1.msra.mxu0 %v81
    %3919 = vmatprep.subr.mxu0 0.0
    %3920 = vmatpush1.msra.mxu0 %v82
    %3921 = vmatprep.subr.mxu0 0.0
    %3922 = vmatpush1.msra.mxu0 %v83
    %3923 = vmatprep.subr.mxu0 0.0
    %3924 = vmatpush1.msra.mxu0 0.0
    %3925 = vmatprep.subr.mxu0 0.0
    %3926 = vmatpush1.msra.mxu0 0.0
    %3927 = vmatprep.subr.mxu0 0.0
    %3928 = vmatpush1.msra.mxu0 0.0
    %3929 = vmatprep.subr.mxu0 0.0
    %3930 = vmatpush1.msra.mxu0 0.0
    %3931 = vmatprep.subr.mxu0 0.0
    %3932 = vmatpush1.msra.mxu0 0.0
    %3933 = vmatprep.subr.mxu0 0.0
    %3934 = vmatpush1.msra.mxu0 0.0
    %3935 = vmatprep.subr.mxu0 0.0
    %3936 = vmatpush1.msra.mxu0 0.0
    %3937 = vmatprep.subr.mxu0 0.0
    %3938 = vmatpush1.msra.mxu0 0.0
    %3939 = vmatprep.subr.mxu0 0.0
    %3940 = vmatpush1.msra.mxu0 0.0
    %3941 = vmatprep.subr.mxu0 0.0
    %3942 = vmatpush1.msra.mxu0 0.0
    %3943 = vmatprep.subr.mxu0 0.0
    %3944 = vmatpush1.msra.mxu0 0.0
    %3945 = vmatprep.subr.mxu0 0.0
    %3946 = vmatpush1.msra.mxu0 0.0
    %3947 = vmatprep.subr.mxu0 0.0
    %3948 = vmatpush1.msra.mxu0 0.0
    %3949 = vmatprep.subr.mxu0 0.0
    %3950 = vmatpush1.msra.mxu0 0.0
    %3951 = vmatprep.subr.mxu0 0.0
    %3952 = vmatpush1.msra.mxu0 0.0
    %3953 = vmatprep.subr.mxu0 0.0
    %3954 = vmatpush1.msra.mxu0 0.0
    %3955 = vmatprep.subr.mxu0 0.0
    %3956 = vmatpush1.msra.mxu0 0.0
    %3957 = vmatprep.subr.mxu0 0.0
    %3958 = vmatpush1.msra.mxu0 0.0
    %3959 = vmatprep.subr.mxu0 0.0
    %3960 = vmatpush1.msra.mxu0 0.0
    %3961 = vmatprep.subr.mxu0 0.0
    %3962 = vmatpush1.msra.mxu0 0.0
    %3963 = vmatprep.subr.mxu0 0.0
    %3964 = vmatpush1.msra.mxu0 0.0
    %3965 = vmatprep.subr.mxu0 0.0
    %3966 = vmatpush1.msra.mxu0 0.0
    %3967 = vmatprep.subr.mxu0 0.0
    %3968 = vmatpush1.msra.mxu0 0.0
    %3969 = vmatprep.subr.mxu0 0.0
    %3970 = vmatpush1.msra.mxu0 0.0
    %3971 = vmatprep.subr.mxu0 0.0
    %3972 = vmatpush1.msra.mxu0 0.0
    %3973 = vmatprep.subr.mxu0 0.0
    %3974 = vmatpush1.msra.mxu0 0.0
    %3975 = vmatprep.subr.mxu0 0.0
    %3976 = vmatpush1.msra.mxu0 0.0
    %3977 = vmatprep.subr.mxu0 0.0
    %3978 = vmatpush1.msra.mxu0 0.0
    %3979 = vmatprep.mubr.f32.mxu0 0.0
    %3980 = vmatmul.mubr.f32.gmra.mrb[0].mxu0 %v3910
    %v3981 = vpop.f32.mrb[0].mxu0
    %v3982 = vadd.f32 %v128, %v3981
    %v3983 = vpop.f32.mrb[0].mxu0
    %3984 = vmatprep.mubr.f32.mxu0 0.0
    %3985 = vmatmul.mubr.f32.gmra.mrb[0].mxu0 %v3913
    %v3986 = vpop.f32.mrb[0].mxu0
    %v3987 = vadd.f32 %v128, %v3986
    %v3988 = vpop.f32.mrb[0].mxu0
    %3989 = vdwg.mxu0
    %v3991 = vsel %vm130, %v3862, 0
    %v3994 = vsel %vm130, %v3863, 0
    %3996 = vmatprep.subr.mxu0 0.0
    %3997 = vmatpush1.msra.mxu0 %v217
    %3998 = vmatprep.subr.mxu0 0.0
    %3999 = vmatpush1.msra.mxu0 %v219
    %4000 = vmatprep.subr.mxu0 0.0
    %4001 = vmatpush1.msra.mxu0 %v221
    %4002 = vmatprep.subr.mxu0 0.0
    %4003 = vmatpush1.msra.mxu0 %v223
    %4004 = vmatprep.subr.mxu0 0.0
    %4005 = vmatpush1.msra.mxu0 0.0
    %4006 = vmatprep.subr.mxu0 0.0
    %4007 = vmatpush1.msra.mxu0 0.0
    %4008 = vmatprep.subr.mxu0 0.0
    %4009 = vmatpush1.msra.mxu0 0.0
    %4010 = vmatprep.subr.mxu0 0.0
    %4011 = vmatpush1.msra.mxu0 0.0
    %4012 = vmatprep.subr.mxu0 0.0
    %4013 = vmatpush1.msra.mxu0 0.0
    %4014 = vmatprep.subr.mxu0 0.0
    %4015 = vmatpush1.msra.mxu0 0.0
    %4016 = vmatprep.subr.mxu0 0.0
    %4017 = vmatpush1.msra.mxu0 0.0
    %4018 = vmatprep.subr.mxu0 0.0
    %4019 = vmatpush1.msra.mxu0 0.0
    %4020 = vmatprep.subr.mxu0 0.0
    %4021 = vmatpush1.msra.mxu0 0.0
    %4022 = vmatprep.subr.mxu0 0.0
    %4023 = vmatpush1.msra.mxu0 0.0
    %4024 = vmatprep.subr.mxu0 0.0
    %4025 = vmatpush1.msra.mxu0 0.0
    %4026 = vmatprep.subr.mxu0 0.0
    %4027 = vmatpush1.msra.mxu0 0.0
    %4028 = vmatprep.subr.mxu0 0.0
    %4029 = vmatpush1.msra.mxu0 0.0
    %4030 = vmatprep.subr.mxu0 0.0
    %4031 = vmatpush1.msra.mxu0 0.0
    %4032 = vmatprep.subr.mxu0 0.0
    %4033 = vmatpush1.msra.mxu0 0.0
    %4034 = vmatprep.subr.mxu0 0.0
    %4035 = vmatpush1.msra.mxu0 0.0
    %4036 = vmatprep.subr.mxu0 0.0
    %4037 = vmatpush1.msra.mxu0 0.0
    %4038 = vmatprep.subr.mxu0 0.0
    %4039 = vmatpush1.msra.mxu0 0.0
    %4040 = vmatprep.subr.mxu0 0.0
    %4041 = vmatpush1.msra.mxu0 0.0
    %4042 = vmatprep.subr.mxu0 0.0
    %4043 = vmatpush1.msra.mxu0 0.0
    %4044 = vmatprep.subr.mxu0 0.0
    %4045 = vmatpush1.msra.mxu0 0.0
    %4046 = vmatprep.subr.mxu0 0.0
    %4047 = vmatpush1.msra.mxu0 0.0
    %4048 = vmatprep.subr.mxu0 0.0
    %4049 = vmatpush1.msra.mxu0 0.0
    %4050 = vmatprep.subr.mxu0 0.0
    %4051 = vmatpush1.msra.mxu0 0.0
    %4052 = vmatprep.subr.mxu0 0.0
    %4053 = vmatpush1.msra.mxu0 0.0
    %4054 = vmatprep.subr.mxu0 0.0
    %4055 = vmatpush1.msra.mxu0 0.0
    %4056 = vmatprep.subr.mxu0 0.0
    %4057 = vmatpush1.msra.mxu0 0.0
    %4058 = vmatprep.subr.mxu0 0.0
    %4059 = vmatpush1.msra.mxu0 0.0
    %4060 = vmatprep.mubr.f32.mxu0 0.0
    %4061 = vmatmul.mubr.f32.gmra.mrb[0].mxu0 %v3991
    %v4062 = vpop.f32.mrb[0].mxu0
    %v4063 = vadd.f32 %v229, %v4062
    %v4064 = vpop.f32.mrb[0].mxu0
    %4065 = vmatprep.mubr.f32.mxu0 0.0
    %4066 = vmatmul.mubr.f32.gmra.mrb[0].mxu0 %v3994
    %v4067 = vpop.f32.mrb[0].mxu0
    %v4068 = vadd.f32 %v229, %v4067
    %v4069 = vpop.f32.mrb[0].mxu0
    %4070 = vdwg.mxu0
    %4072 = vrot.lane.b32.xlu0 %v3982, 96
    %v4073 = vpop.permute.xlu0 %4072
    %v4074 = vsel %vm315, %v3982, 0
    %v4076 = vsel %vm315, %v4073, 0
    %4078 = vmatprep.subr.mxu0 0.0
    %4079 = vmatpush1.xpose.msra.mxu0 %v4076
    %4080 = vmatprep.subr.mxu0 0.0
    %4081 = vmatpush1.xpose.msra.mxu0 0.0
    %4082 = vmatprep.subr.mxu0 0.0
    %4083 = vmatpush1.xpose.msra.mxu0 0.0
    %4084 = vmatprep.subr.mxu0 0.0
    %4085 = vmatpush1.xpose.msra.mxu0 0.0
    %4086 = vmatprep.subr.mxu0 0.0
    %4087 = vmatpush1.xpose.msra.mxu0 0.0
    %4088 = vmatprep.subr.mxu0 0.0
    %4089 = vmatpush1.xpose.msra.mxu0 0.0
    %4090 = vmatprep.subr.mxu0 0.0
    %4091 = vmatpush1.xpose.msra.mxu0 0.0
    %4092 = vmatprep.subr.mxu0 0.0
    %4093 = vmatpush1.xpose.msra.mxu0 0.0
    %4094 = vmatprep.subr.mxu0 0.0
    %4095 = vmatpush1.xpose.msra.mxu0 0.0
    %4096 = vmatprep.subr.mxu0 0.0
    %4097 = vmatpush1.xpose.msra.mxu0 0.0
    %4098 = vmatprep.subr.mxu0 0.0
    %4099 = vmatpush1.xpose.msra.mxu0 0.0
    %4100 = vmatprep.subr.mxu0 0.0
    %4101 = vmatpush1.xpose.msra.mxu0 0.0
    %4102 = vmatprep.subr.mxu0 0.0
    %4103 = vmatpush1.xpose.msra.mxu0 0.0
    %4104 = vmatprep.subr.mxu0 0.0
    %4105 = vmatpush1.xpose.msra.mxu0 0.0
    %4106 = vmatprep.subr.mxu0 0.0
    %4107 = vmatpush1.xpose.msra.mxu0 0.0
    %4108 = vmatprep.subr.mxu0 0.0
    %4109 = vmatpush1.xpose.msra.mxu0 0.0
    %4110 = vmatprep.subr.mxu0 0.0
    %4111 = vmatpush1.xpose.msra.mxu0 0.0
    %4112 = vmatprep.subr.mxu0 0.0
    %4113 = vmatpush1.xpose.msra.mxu0 0.0
    %4114 = vmatprep.subr.mxu0 0.0
    %4115 = vmatpush1.xpose.msra.mxu0 0.0
    %4116 = vmatprep.subr.mxu0 0.0
    %4117 = vmatpush1.xpose.msra.mxu0 0.0
    %4118 = vmatprep.subr.mxu0 0.0
    %4119 = vmatpush1.xpose.msra.mxu0 0.0
    %4120 = vmatprep.subr.mxu0 0.0
    %4121 = vmatpush1.xpose.msra.mxu0 0.0
    %4122 = vmatprep.subr.mxu0 0.0
    %4123 = vmatpush1.xpose.msra.mxu0 0.0
    %4124 = vmatprep.subr.mxu0 0.0
    %4125 = vmatpush1.xpose.msra.mxu0 0.0
    %4126 = vmatprep.subr.mxu0 0.0
    %4127 = vmatpush1.xpose.msra.mxu0 0.0
    %4128 = vmatprep.subr.mxu0 0.0
    %4129 = vmatpush1.xpose.msra.mxu0 0.0
    %4130 = vmatprep.subr.mxu0 0.0
    %4131 = vmatpush1.xpose.msra.mxu0 0.0
    %4132 = vmatprep.subr.mxu0 0.0
    %4133 = vmatpush1.xpose.msra.mxu0 0.0
    %4134 = vmatprep.subr.mxu0 0.0
    %4135 = vmatpush1.xpose.msra.mxu0 0.0
    %4136 = vmatprep.subr.mxu0 0.0
    %4137 = vmatpush1.xpose.msra.mxu0 0.0
    %4138 = vmatprep.subr.mxu0 0.0
    %4139 = vmatpush1.xpose.msra.mxu0 0.0
    %4140 = vmatprep.subr.mxu0 0.0
    %4141 = vmatpush1.xpose.msra.mxu0 0.0
    %4142 = vmatprep.mubr.f32.mxu0 0.0
    %4143 = vmatmul.mubr.f32.gmra.mrb[0].mxu0 %v4074
    %v4144 = vpop.f32.mrb[0].mxu0
    %v4145 = vadd.f32 0.0, %v4144
    %v4146 = vpop.f32.mrb[0].mxu0
    %4147 = vdwg.mxu0
    %v4148 = vmul.f32 %v4145, 0.35355338
    %v4149 = vsel %vm315, %v4148, -inf
    %4150 = vmax.xlane.f32.xlu0 %v4149
    %v4151 = vpop.xlane.xlu0 %4150
    %v4152 = vsub.f32 %v4148, %v4151
    %v4153 = vmul.f32 %v4152, 1.442695
    %v4154 = vpow.pop %v4153
    %v4155 = vsel %vm315, %v4154, 0.0
    %4156 = vadd.xlane.f32.xlu0 %v4155
    %v4157 = vpop.xlane.xlu0 %4156
    %v4158 = vrcp.pop %v4157
    %v4159 = vmul.f32 %v4154, %v4158
    %v4161 = vsel %vm315, %v4159, 0
    %4163 = vmatprep.subr.mxu0 0.0
    %4164 = vmatpush1.msra.mxu0 %v4063
    %4165 = vmatprep.subr.mxu0 0.0
    %4166 = vmatpush1.msra.mxu0 0.0
    %4167 = vmatprep.subr.mxu0 0.0
    %4168 = vmatpush1.msra.mxu0 0.0
    %4169 = vmatprep.subr.mxu0 0.0
    %4170 = vmatpush1.msra.mxu0 0.0
    %4171 = vmatprep.subr.mxu0 0.0
    %4172 = vmatpush1.msra.mxu0 0.0
    %4173 = vmatprep.subr.mxu0 0.0
    %4174 = vmatpush1.msra.mxu0 0.0
    %4175 = vmatprep.subr.mxu0 0.0
    %4176 = vmatpush1.msra.mxu0 0.0
    %4177 = vmatprep.subr.mxu0 0.0
    %4178 = vmatpush1.msra.mxu0 0.0
    %4179 = vmatprep.subr.mxu0 0.0
    %4180 = vmatpush1.msra.mxu0 0.0
    %4181 = vmatprep.subr.mxu0 0.0
    %4182 = vmatpush1.msra.mxu0 0.0
    %4183 = vmatprep.subr.mxu0 0.0
    %4184 = vmatpush1.msra.mxu0 0.0
    %4185 = vmatprep.subr.mxu0 0.0
    %4186 = vmatpush1.msra.mxu0 0.0
    %4187 = vmatprep.subr.mxu0 0.0
    %4188 = vmatpush1.msra.mxu0 0.0
    %4189 = vmatprep.subr.mxu0 0.0
    %4190 = vmatpush1.msra.mxu0 0.0
    %4191 = vmatprep.subr.mxu0 0.0
    %4192 = vmatpush1.msra.mxu0 0.0
    %4193 = vmatprep.subr.mxu0 0.0
    %4194 = vmatpush1.msra.mxu0 0.0
    %4195 = vmatprep.subr.mxu0 0.0
    %4196 = vmatpush1.msra.mxu0 0.0
    %4197 = vmatprep.subr.mxu0 0.0
    %4198 = vmatpush1.msra.mxu0 0.0
    %4199 = vmatprep.subr.mxu0 0.0
    %4200 = vmatpush1.msra.mxu0 0.0
    %4201 = vmatprep.subr.mxu0 0.0
    %4202 = vmatpush1.msra.mxu0 0.0
    %4203 = vmatprep.subr.mxu0 0.0
    %4204 = vmatpush1.msra.mxu0 0.0
    %4205 = vmatprep.subr.mxu0 0.0
    %4206 = vmatpush1.msra.mxu0 0.0
    %4207 = vmatprep.subr.mxu0 0.0
    %4208 = vmatpush1.msra.mxu0 0.0
    %4209 = vmatprep.subr.mxu0 0.0
    %4210 = vmatpush1.msra.mxu0 0.0
    %4211 = vmatprep.subr.mxu0 0.0
    %4212 = vmatpush1.msra.mxu0 0.0
    %4213 = vmatprep.subr.mxu0 0.0
    %4214 = vmatpush1.msra.mxu0 0.0
    %4215 = vmatprep.subr.mxu0 0.0
    %4216 = vmatpush1.msra.mxu0 0.0
    %4217 = vmatprep.subr.mxu0 0.0
    %4218 = vmatpush1.msra.mxu0 0.0
    %4219 = vmatprep.subr.mxu0 0.0
    %4220 = vmatpush1.msra.mxu0 0.0
    %4221 = vmatprep.subr.mxu0 0.0
    %4222 = vmatpush1.msra.mxu0 0.0
    %4223 = vmatprep.subr.mxu0 0.0
    %4224 = vmatpush1.msra.mxu0 0.0
    %4225 = vmatprep.subr.mxu0 0.0
    %4226 = vmatpush1.msra.mxu0 0.0
    %4227 = vmatprep.mubr.f32.mxu0 0.0
    %4228 = vmatmul.mubr.f32.gmra.mrb[0].mxu0 %v4161
    %v4229 = vpop.f32.mrb[0].mxu0
    %v4230 = vadd.f32 0.0, %v4229
    %v4231 = vpop.f32.mrb[0].mxu0
    %4232 = vdwg.mxu0
    %4233 = vrot.lane.b32.xlu0 %v3982, 120
    %v4234 = vpop.permute.xlu0 %4233
    %4235 = vrot.lane.b32.xlu0 %v3982, 88
    %v4236 = vpop.permute.xlu0 %4235
    %v4237 = vsel %vm315, %v4234, 0
    %v4239 = vsel %vm315, %v4236, 0
    %4241 = vmatprep.subr.mxu0 0.0
    %4242 = vmatpush1.xpose.msra.mxu0 %v4239
    %4243 = vmatprep.subr.mxu0 0.0
    %4244 = vmatpush1.xpose.msra.mxu0 0.0
    %4245 = vmatprep.subr.mxu0 0.0
    %4246 = vmatpush1.xpose.msra.mxu0 0.0
    %4247 = vmatprep.subr.mxu0 0.0
    %4248 = vmatpush1.xpose.msra.mxu0 0.0
    %4249 = vmatprep.subr.mxu0 0.0
    %4250 = vmatpush1.xpose.msra.mxu0 0.0
    %4251 = vmatprep.subr.mxu0 0.0
    %4252 = vmatpush1.xpose.msra.mxu0 0.0
    %4253 = vmatprep.subr.mxu0 0.0
    %4254 = vmatpush1.xpose.msra.mxu0 0.0
    %4255 = vmatprep.subr.mxu0 0.0
    %4256 = vmatpush1.xpose.msra.mxu0 0.0
    %4257 = vmatprep.subr.mxu0 0.0
    %4258 = vmatpush1.xpose.msra.mxu0 0.0
    %4259 = vmatprep.subr.mxu0 0.0
    %4260 = vmatpush1.xpose.msra.mxu0 0.0
    %4261 = vmatprep.subr.mxu0 0.0
    %4262 = vmatpush1.xpose.msra.mxu0 0.0
    %4263 = vmatprep.subr.mxu0 0.0
    %4264 = vmatpush1.xpose.msra.mxu0 0.0
    %4265 = vmatprep.subr.mxu0 0.0
    %4266 = vmatpush1.xpose.msra.mxu0 0.0
    %4267 = vmatprep.subr.mxu0 0.0
    %4268 = vmatpush1.xpose.msra.mxu0 0.0
    %4269 = vmatprep.subr.mxu0 0.0
    %4270 = vmatpush1.xpose.msra.mxu0 0.0
    %4271 = vmatprep.subr.mxu0 0.0
    %4272 = vmatpush1.xpose.msra.mxu0 0.0
    %4273 = vmatprep.subr.mxu0 0.0
    %4274 = vmatpush1.xpose.msra.mxu0 0.0
    %4275 = vmatprep.subr.mxu0 0.0
    %4276 = vmatpush1.xpose.msra.mxu0 0.0
    %4277 = vmatprep.subr.mxu0 0.0
    %4278 = vmatpush1.xpose.msra.mxu0 0.0
    %4279 = vmatprep.subr.mxu0 0.0
    %4280 = vmatpush1.xpose.msra.mxu0 0.0
    %4281 = vmatprep.subr.mxu0 0.0
    %4282 = vmatpush1.xpose.msra.mxu0 0.0
    %4283 = vmatprep.subr.mxu0 0.0
    %4284 = vmatpush1.xpose.msra.mxu0 0.0
    %4285 = vmatprep.subr.mxu0 0.0
    %4286 = vmatpush1.xpose.msra.mxu0 0.0
    %4287 = vmatprep.subr.mxu0 0.0
    %4288 = vmatpush1.xpose.msra.mxu0 0.0
    %4289 = vmatprep.subr.mxu0 0.0
    %4290 = vmatpush1.xpose.msra.mxu0 0.0
    %4291 = vmatprep.subr.mxu0 0.0
    %4292 = vmatpush1.xpose.msra.mxu0 0.0
    %4293 = vmatprep.subr.mxu0 0.0
    %4294 = vmatpush1.xpose.msra.mxu0 0.0
    %4295 = vmatprep.subr.mxu0 0.0
    %4296 = vmatpush1.xpose.msra.mxu0 0.0
    %4297 = vmatprep.subr.mxu0 0.0
    %4298 = vmatpush1.xpose.msra.mxu0 0.0
    %4299 = vmatprep.subr.mxu0 0.0
    %4300 = vmatpush1.xpose.msra.mxu0 0.0
    %4301 = vmatprep.subr.mxu0 0.0
    %4302 = vmatpush1.xpose.msra.mxu0 0.0
    %4303 = vmatprep.subr.mxu0 0.0
    %4304 = vmatpush1.xpose.msra.mxu0 0.0
    %4305 = vmatprep.mubr.f32.mxu0 0.0
    %4306 = vmatmul.mubr.f32.gmra.mrb[0].mxu0 %v4237
    %v4307 = vpop.f32.mrb[0].mxu0
    %v4308 = vadd.f32 0.0, %v4307
    %v4309 = vpop.f32.mrb[0].mxu0
    %4310 = vdwg.mxu0
    %v4311 = vmul.f32 %v4308, 0.35355338
    %v4312 = vsel %vm315, %v4311, -inf
    %4313 = vmax.xlane.f32.xlu0 %v4312
    %v4314 = vpop.xlane.xlu0 %4313
    %v4315 = vsub.f32 %v4311, %v4314
    %v4316 = vmul.f32 %v4315, 1.442695
    %v4317 = vpow.pop %v4316
    %v4318 = vsel %vm315, %v4317, 0.0
    %4319 = vadd.xlane.f32.xlu0 %v4318
    %v4320 = vpop.xlane.xlu0 %4319
    %v4321 = vrcp.pop %v4320
    %v4322 = vmul.f32 %v4317, %v4321
    %4324 = vrot.lane.b32.xlu0 %v4063, 120
    %v4325 = vpop.permute.xlu0 %4324
    %v4328 = vsel %vm315, %v4322, 0
    %4330 = vmatprep.subr.mxu0 0.0
    %4331 = vmatpush1.msra.mxu0 %v4325
    %4332 = vmatprep.subr.mxu0 0.0
    %4333 = vmatpush1.msra.mxu0 0.0
    %4334 = vmatprep.subr.mxu0 0.0
    %4335 = vmatpush1.msra.mxu0 0.0
    %4336 = vmatprep.subr.mxu0 0.0
    %4337 = vmatpush1.msra.mxu0 0.0
    %4338 = vmatprep.subr.mxu0 0.0
    %4339 = vmatpush1.msra.mxu0 0.0
    %4340 = vmatprep.subr.mxu0 0.0
    %4341 = vmatpush1.msra.mxu0 0.0
    %4342 = vmatprep.subr.mxu0 0.0
    %4343 = vmatpush1.msra.mxu0 0.0
    %4344 = vmatprep.subr.mxu0 0.0
    %4345 = vmatpush1.msra.mxu0 0.0
    %4346 = vmatprep.subr.mxu0 0.0
    %4347 = vmatpush1.msra.mxu0 0.0
    %4348 = vmatprep.subr.mxu0 0.0
    %4349 = vmatpush1.msra.mxu0 0.0
    %4350 = vmatprep.subr.mxu0 0.0
    %4351 = vmatpush1.msra.mxu0 0.0
    %4352 = vmatprep.subr.mxu0 0.0
    %4353 = vmatpush1.msra.mxu0 0.0
    %4354 = vmatprep.subr.mxu0 0.0
    %4355 = vmatpush1.msra.mxu0 0.0
    %4356 = vmatprep.subr.mxu0 0.0
    %4357 = vmatpush1.msra.mxu0 0.0
    %4358 = vmatprep.subr.mxu0 0.0
    %4359 = vmatpush1.msra.mxu0 0.0
    %4360 = vmatprep.subr.mxu0 0.0
    %4361 = vmatpush1.msra.mxu0 0.0
    %4362 = vmatprep.subr.mxu0 0.0
    %4363 = vmatpush1.msra.mxu0 0.0
    %4364 = vmatprep.subr.mxu0 0.0
    %4365 = vmatpush1.msra.mxu0 0.0
    %4366 = vmatprep.subr.mxu0 0.0
    %4367 = vmatpush1.msra.mxu0 0.0
    %4368 = vmatprep.subr.mxu0 0.0
    %4369 = vmatpush1.msra.mxu0 0.0
    %4370 = vmatprep.subr.mxu0 0.0
    %4371 = vmatpush1.msra.mxu0 0.0
    %4372 = vmatprep.subr.mxu0 0.0
    %4373 = vmatpush1.msra.mxu0 0.0
    %4374 = vmatprep.subr.mxu0 0.0
    %4375 = vmatpush1.msra.mxu0 0.0
    %4376 = vmatprep.subr.mxu0 0.0
    %4377 = vmatpush1.msra.mxu0 0.0
    %4378 = vmatprep.subr.mxu0 0.0
    %4379 = vmatpush1.msra.mxu0 0.0
    %4380 = vmatprep.subr.mxu0 0.0
    %4381 = vmatpush1.msra.mxu0 0.0
    %4382 = vmatprep.subr.mxu0 0.0
    %4383 = vmatpush1.msra.mxu0 0.0
    %4384 = vmatprep.subr.mxu0 0.0
    %4385 = vmatpush1.msra.mxu0 0.0
    %4386 = vmatprep.subr.mxu0 0.0
    %4387 = vmatpush1.msra.mxu0 0.0
    %4388 = vmatprep.subr.mxu0 0.0
    %4389 = vmatpush1.msra.mxu0 0.0
    %4390 = vmatprep.subr.mxu0 0.0
    %4391 = vmatpush1.msra.mxu0 0.0
    %4392 = vmatprep.subr.mxu0 0.0
    %4393 = vmatpush1.msra.mxu0 0.0
    %4394 = vmatprep.mubr.f32.mxu0 0.0
    %4395 = vmatmul.mubr.f32.gmra.mrb[0].mxu0 %v4328
    %v4396 = vpop.f32.mrb[0].mxu0
    %v4397 = vadd.f32 0.0, %v4396
    %v4398 = vpop.f32.mrb[0].mxu0
    %4399 = vdwg.mxu0
    %4400 = vrot.lane.b32.xlu0 %v3982, 112
    %v4401 = vpop.permute.xlu0 %4400
    %4402 = vrot.lane.b32.xlu0 %v3982, 80
    %v4403 = vpop.permute.xlu0 %4402
    %v4404 = vsel %vm315, %v4401, 0
    %v4406 = vsel %vm315, %v4403, 0
    %4408 = vmatprep.subr.mxu0 0.0
    %4409 = vmatpush1.xpose.msra.mxu0 %v4406
    %4410 = vmatprep.subr.mxu0 0.0
    %4411 = vmatpush1.xpose.msra.mxu0 0.0
    %4412 = vmatprep.subr.mxu0 0.0
    %4413 = vmatpush1.xpose.msra.mxu0 0.0
    %4414 = vmatprep.subr.mxu0 0.0
    %4415 = vmatpush1.xpose.msra.mxu0 0.0
    %4416 = vmatprep.subr.mxu0 0.0
    %4417 = vmatpush1.xpose.msra.mxu0 0.0
    %4418 = vmatprep.subr.mxu0 0.0
    %4419 = vmatpush1.xpose.msra.mxu0 0.0
    %4420 = vmatprep.subr.mxu0 0.0
    %4421 = vmatpush1.xpose.msra.mxu0 0.0
    %4422 = vmatprep.subr.mxu0 0.0
    %4423 = vmatpush1.xpose.msra.mxu0 0.0
    %4424 = vmatprep.subr.mxu0 0.0
    %4425 = vmatpush1.xpose.msra.mxu0 0.0
    %4426 = vmatprep.subr.mxu0 0.0
    %4427 = vmatpush1.xpose.msra.mxu0 0.0
    %4428 = vmatprep.subr.mxu0 0.0
    %4429 = vmatpush1.xpose.msra.mxu0 0.0
    %4430 = vmatprep.subr.mxu0 0.0
    %4431 = vmatpush1.xpose.msra.mxu0 0.0
    %4432 = vmatprep.subr.mxu0 0.0
    %4433 = vmatpush1.xpose.msra.mxu0 0.0
    %4434 = vmatprep.subr.mxu0 0.0
    %4435 = vmatpush1.xpose.msra.mxu0 0.0
    %4436 = vmatprep.subr.mxu0 0.0
    %4437 = vmatpush1.xpose.msra.mxu0 0.0
    %4438 = vmatprep.subr.mxu0 0.0
    %4439 = vmatpush1.xpose.msra.mxu0 0.0
    %4440 = vmatprep.subr.mxu0 0.0
    %4441 = vmatpush1.xpose.msra.mxu0 0.0
    %4442 = vmatprep.subr.mxu0 0.0
    %4443 = vmatpush1.xpose.msra.mxu0 0.0
    %4444 = vmatprep.subr.mxu0 0.0
    %4445 = vmatpush1.xpose.msra.mxu0 0.0
    %4446 = vmatprep.subr.mxu0 0.0
    %4447 = vmatpush1.xpose.msra.mxu0 0.0
    %4448 = vmatprep.subr.mxu0 0.0
    %4449 = vmatpush1.xpose.msra.mxu0 0.0
    %4450 = vmatprep.subr.mxu0 0.0
    %4451 = vmatpush1.xpose.msra.mxu0 0.0
    %4452 = vmatprep.subr.mxu0 0.0
    %4453 = vmatpush1.xpose.msra.mxu0 0.0
    %4454 = vmatprep.subr.mxu0 0.0
    %4455 = vmatpush1.xpose.msra.mxu0 0.0
    %4456 = vmatprep.subr.mxu0 0.0
    %4457 = vmatpush1.xpose.msra.mxu0 0.0
    %4458 = vmatprep.subr.mxu0 0.0
    %4459 = vmatpush1.xpose.msra.mxu0 0.0
    %4460 = vmatprep.subr.mxu0 0.0
    %4461 = vmatpush1.xpose.msra.mxu0 0.0
    %4462 = vmatprep.subr.mxu0 0.0
    %4463 = vmatpush1.xpose.msra.mxu0 0.0
    %4464 = vmatprep.subr.mxu0 0.0
    %4465 = vmatpush1.xpose.msra.mxu0 0.0
    %4466 = vmatprep.subr.mxu0 0.0
    %4467 = vmatpush1.xpose.msra.mxu0 0.0
    %4468 = vmatprep.subr.mxu0 0.0
    %4469 = vmatpush1.xpose.msra.mxu0 0.0
    %4470 = vmatprep.subr.mxu0 0.0
    %4471 = vmatpush1.xpose.msra.mxu0 0.0
    %4472 = vmatprep.mubr.f32.mxu0 0.0
    %4473 = vmatmul.mubr.f32.gmra.mrb[0].mxu0 %v4404
    %v4474 = vpop.f32.mrb[0].mxu0
    %v4475 = vadd.f32 0.0, %v4474
    %v4476 = vpop.f32.mrb[0].mxu0
    %4477 = vdwg.mxu0
    %v4478 = vmul.f32 %v4475, 0.35355338
    %v4479 = vsel %vm315, %v4478, -inf
    %4480 = vmax.xlane.f32.xlu0 %v4479
    %v4481 = vpop.xlane.xlu0 %4480
    %v4482 = vsub.f32 %v4478, %v4481
    %v4483 = vmul.f32 %v4482, 1.442695
    %v4484 = vpow.pop %v4483
    %v4485 = vsel %vm315, %v4484, 0.0
    %4486 = vadd.xlane.f32.xlu0 %v4485
    %v4487 = vpop.xlane.xlu0 %4486
    %v4488 = vrcp.pop %v4487
    %v4489 = vmul.f32 %v4484, %v4488
    %4490 = vrot.lane.b32.xlu0 %v4063, 112
    %v4491 = vpop.permute.xlu0 %4490
    %v4494 = vsel %vm315, %v4489, 0
    %4496 = vmatprep.subr.mxu0 0.0
    %4497 = vmatpush1.msra.mxu0 %v4491
    %4498 = vmatprep.subr.mxu0 0.0
    %4499 = vmatpush1.msra.mxu0 0.0
    %4500 = vmatprep.subr.mxu0 0.0
    %4501 = vmatpush1.msra.mxu0 0.0
    %4502 = vmatprep.subr.mxu0 0.0
    %4503 = vmatpush1.msra.mxu0 0.0
    %4504 = vmatprep.subr.mxu0 0.0
    %4505 = vmatpush1.msra.mxu0 0.0
    %4506 = vmatprep.subr.mxu0 0.0
    %4507 = vmatpush1.msra.mxu0 0.0
    %4508 = vmatprep.subr.mxu0 0.0
    %4509 = vmatpush1.msra.mxu0 0.0
    %4510 = vmatprep.subr.mxu0 0.0
    %4511 = vmatpush1.msra.mxu0 0.0
    %4512 = vmatprep.subr.mxu0 0.0
    %4513 = vmatpush1.msra.mxu0 0.0
    %4514 = vmatprep.subr.mxu0 0.0
    %4515 = vmatpush1.msra.mxu0 0.0
    %4516 = vmatprep.subr.mxu0 0.0
    %4517 = vmatpush1.msra.mxu0 0.0
    %4518 = vmatprep.subr.mxu0 0.0
    %4519 = vmatpush1.msra.mxu0 0.0
    %4520 = vmatprep.subr.mxu0 0.0
    %4521 = vmatpush1.msra.mxu0 0.0
    %4522 = vmatprep.subr.mxu0 0.0
    %4523 = vmatpush1.msra.mxu0 0.0
    %4524 = vmatprep.subr.mxu0 0.0
    %4525 = vmatpush1.msra.mxu0 0.0
    %4526 = vmatprep.subr.mxu0 0.0
    %4527 = vmatpush1.msra.mxu0 0.0
    %4528 = vmatprep.subr.mxu0 0.0
    %4529 = vmatpush1.msra.mxu0 0.0
    %4530 = vmatprep.subr.mxu0 0.0
    %4531 = vmatpush1.msra.mxu0 0.0
    %4532 = vmatprep.subr.mxu0 0.0
    %4533 = vmatpush1.msra.mxu0 0.0
    %4534 = vmatprep.subr.mxu0 0.0
    %4535 = vmatpush1.msra.mxu0 0.0
    %4536 = vmatprep.subr.mxu0 0.0
    %4537 = vmatpush1.msra.mxu0 0.0
    %4538 = vmatprep.subr.mxu0 0.0
    %4539 = vmatpush1.msra.mxu0 0.0
    %4540 = vmatprep.subr.mxu0 0.0
    %4541 = vmatpush1.msra.mxu0 0.0
    %4542 = vmatprep.subr.mxu0 0.0
    %4543 = vmatpush1.msra.mxu0 0.0
    %4544 = vmatprep.subr.mxu0 0.0
    %4545 = vmatpush1.msra.mxu0 0.0
    %4546 = vmatprep.subr.mxu0 0.0
    %4547 = vmatpush1.msra.mxu0 0.0
    %4548 = vmatprep.subr.mxu0 0.0
    %4549 = vmatpush1.msra.mxu0 0.0
    %4550 = vmatprep.subr.mxu0 0.0
    %4551 = vmatpush1.msra.mxu0 0.0
    %4552 = vmatprep.subr.mxu0 0.0
    %4553 = vmatpush1.msra.mxu0 0.0
    %4554 = vmatprep.subr.mxu0 0.0
    %4555 = vmatpush1.msra.mxu0 0.0
    %4556 = vmatprep.subr.mxu0 0.0
    %4557 = vmatpush1.msra.mxu0 0.0
    %4558 = vmatprep.subr.mxu0 0.0
    %4559 = vmatpush1.msra.mxu0 0.0
    %4560 = vmatprep.mubr.f32.mxu0 0.0
    %4561 = vmatmul.mubr.f32.gmra.mrb[0].mxu0 %v4494
    %v4562 = vpop.f32.mrb[0].mxu0
    %v4563 = vadd.f32 0.0, %v4562
    %v4564 = vpop.f32.mrb[0].mxu0
    %4565 = vdwg.mxu0
    %4566 = vrot.lane.b32.xlu0 %v3982, 104
    %v4567 = vpop.permute.xlu0 %4566
    %4568 = vrot.lane.b32.xlu0 %v3982, 72
    %v4569 = vpop.permute.xlu0 %4568
    %v4570 = vsel %vm315, %v4567, 0
    %v4572 = vsel %vm315, %v4569, 0
    %4574 = vmatprep.subr.mxu0 0.0
    %4575 = vmatpush1.xpose.msra.mxu0 %v4572
    %4576 = vmatprep.subr.mxu0 0.0
    %4577 = vmatpush1.xpose.msra.mxu0 0.0
    %4578 = vmatprep.subr.mxu0 0.0
    %4579 = vmatpush1.xpose.msra.mxu0 0.0
    %4580 = vmatprep.subr.mxu0 0.0
    %4581 = vmatpush1.xpose.msra.mxu0 0.0
    %4582 = vmatprep.subr.mxu0 0.0
    %4583 = vmatpush1.xpose.msra.mxu0 0.0
    %4584 = vmatprep.subr.mxu0 0.0
    %4585 = vmatpush1.xpose.msra.mxu0 0.0
    %4586 = vmatprep.subr.mxu0 0.0
    %4587 = vmatpush1.xpose.msra.mxu0 0.0
    %4588 = vmatprep.subr.mxu0 0.0
    %4589 = vmatpush1.xpose.msra.mxu0 0.0
    %4590 = vmatprep.subr.mxu0 0.0
    %4591 = vmatpush1.xpose.msra.mxu0 0.0
    %4592 = vmatprep.subr.mxu0 0.0
    %4593 = vmatpush1.xpose.msra.mxu0 0.0
    %4594 = vmatprep.subr.mxu0 0.0
    %4595 = vmatpush1.xpose.msra.mxu0 0.0
    %4596 = vmatprep.subr.mxu0 0.0
    %4597 = vmatpush1.xpose.msra.mxu0 0.0
    %4598 = vmatprep.subr.mxu0 0.0
    %4599 = vmatpush1.xpose.msra.mxu0 0.0
    %4600 = vmatprep.subr.mxu0 0.0
    %4601 = vmatpush1.xpose.msra.mxu0 0.0
    %4602 = vmatprep.subr.mxu0 0.0
    %4603 = vmatpush1.xpose.msra.mxu0 0.0
    %4604 = vmatprep.subr.mxu0 0.0
    %4605 = vmatpush1.xpose.msra.mxu0 0.0
    %4606 = vmatprep.subr.mxu0 0.0
    %4607 = vmatpush1.xpose.msra.mxu0 0.0
    %4608 = vmatprep.subr.mxu0 0.0
    %4609 = vmatpush1.xpose.msra.mxu0 0.0
    %4610 = vmatprep.subr.mxu0 0.0
    %4611 = vmatpush1.xpose.msra.mxu0 0.0
    %4612 = vmatprep.subr.mxu0 0.0
    %4613 = vmatpush1.xpose.msra.mxu0 0.0
    %4614 = vmatprep.subr.mxu0 0.0
    %4615 = vmatpush1.xpose.msra.mxu0 0.0
    %4616 = vmatprep.subr.mxu0 0.0
    %4617 = vmatpush1.xpose.msra.mxu0 0.0
    %4618 = vmatprep.subr.mxu0 0.0
    %4619 = vmatpush1.xpose.msra.mxu0 0.0
    %4620 = vmatprep.subr.mxu0 0.0
    %4621 = vmatpush1.xpose.msra.mxu0 0.0
    %4622 = vmatprep.subr.mxu0 0.0
    %4623 = vmatpush1.xpose.msra.mxu0 0.0
    %4624 = vmatprep.subr.mxu0 0.0
    %4625 = vmatpush1.xpose.msra.mxu0 0.0
    %4626 = vmatprep.subr.mxu0 0.0
    %4627 = vmatpush1.xpose.msra.mxu0 0.0
    %4628 = vmatprep.subr.mxu0 0.0
    %4629 = vmatpush1.xpose.msra.mxu0 0.0
    %4630 = vmatprep.subr.mxu0 0.0
    %4631 = vmatpush1.xpose.msra.mxu0 0.0
    %4632 = vmatprep.subr.mxu0 0.0
    %4633 = vmatpush1.xpose.msra.mxu0 0.0
    %4634 = vmatprep.subr.mxu0 0.0
    %4635 = vmatpush1.xpose.msra.mxu0 0.0
    %4636 = vmatprep.subr.mxu0 0.0
    %4637 = vmatpush1.xpose.msra.mxu0 0.0
    %4638 = vmatprep.mubr.f32.mxu0 0.0
    %4639 = vmatmul.mubr.f32.gmra.mrb[0].mxu0 %v4570
    %v4640 = vpop.f32.mrb[0].mxu0
    %v4641 = vadd.f32 0.0, %v4640
    %v4642 = vpop.f32.mrb[0].mxu0
    %4643 = vdwg.mxu0
    %v4644 = vmul.f32 %v4641, 0.35355338
    %v4645 = vsel %vm315, %v4644, -inf
    %4646 = vmax.xlane.f32.xlu0 %v4645
    %v4647 = vpop.xlane.xlu0 %4646
    %v4648 = vsub.f32 %v4644, %v4647
    %v4649 = vmul.f32 %v4648, 1.442695
    %v4650 = vpow.pop %v4649
    %v4651 = vsel %vm315, %v4650, 0.0
    %4652 = vadd.xlane.f32.xlu0 %v4651
    %v4653 = vpop.xlane.xlu0 %4652
    %v4654 = vrcp.pop %v4653
    %v4655 = vmul.f32 %v4650, %v4654
    %4656 = vrot.lane.b32.xlu0 %v4063, 104
    %v4657 = vpop.permute.xlu0 %4656
    %v4660 = vsel %vm315, %v4655, 0
    %4662 = vmatprep.subr.mxu0 0.0
    %4663 = vmatpush1.msra.mxu0 %v4657
    %4664 = vmatprep.subr.mxu0 0.0
    %4665 = vmatpush1.msra.mxu0 0.0
    %4666 = vmatprep.subr.mxu0 0.0
    %4667 = vmatpush1.msra.mxu0 0.0
    %4668 = vmatprep.subr.mxu0 0.0
    %4669 = vmatpush1.msra.mxu0 0.0
    %4670 = vmatprep.subr.mxu0 0.0
    %4671 = vmatpush1.msra.mxu0 0.0
    %4672 = vmatprep.subr.mxu0 0.0
    %4673 = vmatpush1.msra.mxu0 0.0
    %4674 = vmatprep.subr.mxu0 0.0
    %4675 = vmatpush1.msra.mxu0 0.0
    %4676 = vmatprep.subr.mxu0 0.0
    %4677 = vmatpush1.msra.mxu0 0.0
    %4678 = vmatprep.subr.mxu0 0.0
    %4679 = vmatpush1.msra.mxu0 0.0
    %4680 = vmatprep.subr.mxu0 0.0
    %4681 = vmatpush1.msra.mxu0 0.0
    %4682 = vmatprep.subr.mxu0 0.0
    %4683 = vmatpush1.msra.mxu0 0.0
    %4684 = vmatprep.subr.mxu0 0.0
    %4685 = vmatpush1.msra.mxu0 0.0
    %4686 = vmatprep.subr.mxu0 0.0
    %4687 = vmatpush1.msra.mxu0 0.0
    %4688 = vmatprep.subr.mxu0 0.0
    %4689 = vmatpush1.msra.mxu0 0.0
    %4690 = vmatprep.subr.mxu0 0.0
    %4691 = vmatpush1.msra.mxu0 0.0
    %4692 = vmatprep.subr.mxu0 0.0
    %4693 = vmatpush1.msra.mxu0 0.0
    %4694 = vmatprep.subr.mxu0 0.0
    %4695 = vmatpush1.msra.mxu0 0.0
    %4696 = vmatprep.subr.mxu0 0.0
    %4697 = vmatpush1.msra.mxu0 0.0
    %4698 = vmatprep.subr.mxu0 0.0
    %4699 = vmatpush1.msra.mxu0 0.0
    %4700 = vmatprep.subr.mxu0 0.0
    %4701 = vmatpush1.msra.mxu0 0.0
    %4702 = vmatprep.subr.mxu0 0.0
    %4703 = vmatpush1.msra.mxu0 0.0
    %4704 = vmatprep.subr.mxu0 0.0
    %4705 = vmatpush1.msra.mxu0 0.0
    %4706 = vmatprep.subr.mxu0 0.0
    %4707 = vmatpush1.msra.mxu0 0.0
    %4708 = vmatprep.subr.mxu0 0.0
    %4709 = vmatpush1.msra.mxu0 0.0
    %4710 = vmatprep.subr.mxu0 0.0
    %4711 = vmatpush1.msra.mxu0 0.0
    %4712 = vmatprep.subr.mxu0 0.0
    %4713 = vmatpush1.msra.mxu0 0.0
    %4714 = vmatprep.subr.mxu0 0.0
    %4715 = vmatpush1.msra.mxu0 0.0
    %4716 = vmatprep.subr.mxu0 0.0
    %4717 = vmatpush1.msra.mxu0 0.0
    %4718 = vmatprep.subr.mxu0 0.0
    %4719 = vmatpush1.msra.mxu0 0.0
    %4720 = vmatprep.subr.mxu0 0.0
    %4721 = vmatpush1.msra.mxu0 0.0
    %4722 = vmatprep.subr.mxu0 0.0
    %4723 = vmatpush1.msra.mxu0 0.0
    %4724 = vmatprep.subr.mxu0 0.0
    %4725 = vmatpush1.msra.mxu0 0.0
    %4726 = vmatprep.mubr.f32.mxu0 0.0
    %4727 = vmatmul.mubr.f32.gmra.mrb[0].mxu0 %v4660
    %v4728 = vpop.f32.mrb[0].mxu0
    %v4729 = vadd.f32 0.0, %v4728
    %v4730 = vpop.f32.mrb[0].mxu0
    %4731 = vdwg.mxu0
    %4733 = vrot.lane.b32.xlu0 %v4397, 8
    %v4734 = vpop.permute.xlu0 %4733
    %4737 = vrot.lane.b32.xlu0 %v4563, 16
    %v4738 = vpop.permute.xlu0 %4737
    %4741 = vrot.lane.b32.xlu0 %v4729, 24
    %v4742 = vpop.permute.xlu0 %4741
    %v4744 = vsel %vm315, %v4230, %v4734
    %v4745 = vsel %vm987, %v4744, %v4738
    %v4746 = vsel %vm989, %v4745, %v4742
    %4748 = vrot.lane.b32.xlu0 %v3987, 96
    %v4749 = vpop.permute.xlu0 %4748
    %v4750 = vsel %vm315, %v3987, 0
    %v4752 = vsel %vm315, %v4749, 0
    %4754 = vmatprep.subr.mxu0 0.0
    %4755 = vmatpush1.xpose.msra.mxu0 %v4752
    %4756 = vmatprep.subr.mxu0 0.0
    %4757 = vmatpush1.xpose.msra.mxu0 0.0
    %4758 = vmatprep.subr.mxu0 0.0
    %4759 = vmatpush1.xpose.msra.mxu0 0.0
    %4760 = vmatprep.subr.mxu0 0.0
    %4761 = vmatpush1.xpose.msra.mxu0 0.0
    %4762 = vmatprep.subr.mxu0 0.0
    %4763 = vmatpush1.xpose.msra.mxu0 0.0
    %4764 = vmatprep.subr.mxu0 0.0
    %4765 = vmatpush1.xpose.msra.mxu0 0.0
    %4766 = vmatprep.subr.mxu0 0.0
    %4767 = vmatpush1.xpose.msra.mxu0 0.0
    %4768 = vmatprep.subr.mxu0 0.0
    %4769 = vmatpush1.xpose.msra.mxu0 0.0
    %4770 = vmatprep.subr.mxu0 0.0
    %4771 = vmatpush1.xpose.msra.mxu0 0.0
    %4772 = vmatprep.subr.mxu0 0.0
    %4773 = vmatpush1.xpose.msra.mxu0 0.0
    %4774 = vmatprep.subr.mxu0 0.0
    %4775 = vmatpush1.xpose.msra.mxu0 0.0
    %4776 = vmatprep.subr.mxu0 0.0
    %4777 = vmatpush1.xpose.msra.mxu0 0.0
    %4778 = vmatprep.subr.mxu0 0.0
    %4779 = vmatpush1.xpose.msra.mxu0 0.0
    %4780 = vmatprep.subr.mxu0 0.0
    %4781 = vmatpush1.xpose.msra.mxu0 0.0
    %4782 = vmatprep.subr.mxu0 0.0
    %4783 = vmatpush1.xpose.msra.mxu0 0.0
    %4784 = vmatprep.subr.mxu0 0.0
    %4785 = vmatpush1.xpose.msra.mxu0 0.0
    %4786 = vmatprep.subr.mxu0 0.0
    %4787 = vmatpush1.xpose.msra.mxu0 0.0
    %4788 = vmatprep.subr.mxu0 0.0
    %4789 = vmatpush1.xpose.msra.mxu0 0.0
    %4790 = vmatprep.subr.mxu0 0.0
    %4791 = vmatpush1.xpose.msra.mxu0 0.0
    %4792 = vmatprep.subr.mxu0 0.0
    %4793 = vmatpush1.xpose.msra.mxu0 0.0
    %4794 = vmatprep.subr.mxu0 0.0
    %4795 = vmatpush1.xpose.msra.mxu0 0.0
    %4796 = vmatprep.subr.mxu0 0.0
    %4797 = vmatpush1.xpose.msra.mxu0 0.0
    %4798 = vmatprep.subr.mxu0 0.0
    %4799 = vmatpush1.xpose.msra.mxu0 0.0
    %4800 = vmatprep.subr.mxu0 0.0
    %4801 = vmatpush1.xpose.msra.mxu0 0.0
    %4802 = vmatprep.subr.mxu0 0.0
    %4803 = vmatpush1.xpose.msra.mxu0 0.0
    %4804 = vmatprep.subr.mxu0 0.0
    %4805 = vmatpush1.xpose.msra.mxu0 0.0
    %4806 = vmatprep.subr.mxu0 0.0
    %4807 = vmatpush1.xpose.msra.mxu0 0.0
    %4808 = vmatprep.subr.mxu0 0.0
    %4809 = vmatpush1.xpose.msra.mxu0 0.0
    %4810 = vmatprep.subr.mxu0 0.0
    %4811 = vmatpush1.xpose.msra.mxu0 0.0
    %4812 = vmatprep.subr.mxu0 0.0
    %4813 = vmatpush1.xpose.msra.mxu0 0.0
    %4814 = vmatprep.subr.mxu0 0.0
    %4815 = vmatpush1.xpose.msra.mxu0 0.0
    %4816 = vmatprep.subr.mxu0 0.0
    %4817 = vmatpush1.xpose.msra.mxu0 0.0
    %4818 = vmatprep.mubr.f32.mxu0 0.0
    %4819 = vmatmul.mubr.f32.gmra.mrb[0].mxu0 %v4750
    %v4820 = vpop.f32.mrb[0].mxu0
    %v4821 = vadd.f32 0.0, %v4820
    %v4822 = vpop.f32.mrb[0].mxu0
    %4823 = vdwg.mxu0
    %v4824 = vmul.f32 %v4821, 0.35355338
    %v4825 = vsel %vm315, %v4824, -inf
    %4826 = vmax.xlane.f32.xlu0 %v4825
    %v4827 = vpop.xlane.xlu0 %4826
    %v4828 = vsub.f32 %v4824, %v4827
    %v4829 = vmul.f32 %v4828, 1.442695
    %v4830 = vpow.pop %v4829
    %v4831 = vsel %vm315, %v4830, 0.0
    %4832 = vadd.xlane.f32.xlu0 %v4831
    %v4833 = vpop.xlane.xlu0 %4832
    %v4834 = vrcp.pop %v4833
    %v4835 = vmul.f32 %v4830, %v4834
    %v4837 = vsel %vm315, %v4835, 0
    %4839 = vmatprep.subr.mxu0 0.0
    %4840 = vmatpush1.msra.mxu0 %v4068
    %4841 = vmatprep.subr.mxu0 0.0
    %4842 = vmatpush1.msra.mxu0 0.0
    %4843 = vmatprep.subr.mxu0 0.0
    %4844 = vmatpush1.msra.mxu0 0.0
    %4845 = vmatprep.subr.mxu0 0.0
    %4846 = vmatpush1.msra.mxu0 0.0
    %4847 = vmatprep.subr.mxu0 0.0
    %4848 = vmatpush1.msra.mxu0 0.0
    %4849 = vmatprep.subr.mxu0 0.0
    %4850 = vmatpush1.msra.mxu0 0.0
    %4851 = vmatprep.subr.mxu0 0.0
    %4852 = vmatpush1.msra.mxu0 0.0
    %4853 = vmatprep.subr.mxu0 0.0
    %4854 = vmatpush1.msra.mxu0 0.0
    %4855 = vmatprep.subr.mxu0 0.0
    %4856 = vmatpush1.msra.mxu0 0.0
    %4857 = vmatprep.subr.mxu0 0.0
    %4858 = vmatpush1.msra.mxu0 0.0
    %4859 = vmatprep.subr.mxu0 0.0
    %4860 = vmatpush1.msra.mxu0 0.0
    %4861 = vmatprep.subr.mxu0 0.0
    %4862 = vmatpush1.msra.mxu0 0.0
    %4863 = vmatprep.subr.mxu0 0.0
    %4864 = vmatpush1.msra.mxu0 0.0
    %4865 = vmatprep.subr.mxu0 0.0
    %4866 = vmatpush1.msra.mxu0 0.0
    %4867 = vmatprep.subr.mxu0 0.0
    %4868 = vmatpush1.msra.mxu0 0.0
    %4869 = vmatprep.subr.mxu0 0.0
    %4870 = vmatpush1.msra.mxu0 0.0
    %4871 = vmatprep.subr.mxu0 0.0
    %4872 = vmatpush1.msra.mxu0 0.0
    %4873 = vmatprep.subr.mxu0 0.0
    %4874 = vmatpush1.msra.mxu0 0.0
    %4875 = vmatprep.subr.mxu0 0.0
    %4876 = vmatpush1.msra.mxu0 0.0
    %4877 = vmatprep.subr.mxu0 0.0
    %4878 = vmatpush1.msra.mxu0 0.0
    %4879 = vmatprep.subr.mxu0 0.0
    %4880 = vmatpush1.msra.mxu0 0.0
    %4881 = vmatprep.subr.mxu0 0.0
    %4882 = vmatpush1.msra.mxu0 0.0
    %4883 = vmatprep.subr.mxu0 0.0
    %4884 = vmatpush1.msra.mxu0 0.0
    %4885 = vmatprep.subr.mxu0 0.0
    %4886 = vmatpush1.msra.mxu0 0.0
    %4887 = vmatprep.subr.mxu0 0.0
    %4888 = vmatpush1.msra.mxu0 0.0
    %4889 = vmatprep.subr.mxu0 0.0
    %4890 = vmatpush1.msra.mxu0 0.0
    %4891 = vmatprep.subr.mxu0 0.0
    %4892 = vmatpush1.msra.mxu0 0.0
    %4893 = vmatprep.subr.mxu0 0.0
    %4894 = vmatpush1.msra.mxu0 0.0
    %4895 = vmatprep.subr.mxu0 0.0
    %4896 = vmatpush1.msra.mxu0 0.0
    %4897 = vmatprep.subr.mxu0 0.0
    %4898 = vmatpush1.msra.mxu0 0.0
    %4899 = vmatprep.subr.mxu0 0.0
    %4900 = vmatpush1.msra.mxu0 0.0
    %4901 = vmatprep.subr.mxu0 0.0
    %4902 = vmatpush1.msra.mxu0 0.0
    %4903 = vmatprep.mubr.f32.mxu0 0.0
    %4904 = vmatmul.mubr.f32.gmra.mrb[0].mxu0 %v4837
    %v4905 = vpop.f32.mrb[0].mxu0
    %v4906 = vadd.f32 0.0, %v4905
    %v4907 = vpop.f32.mrb[0].mxu0
    %4908 = vdwg.mxu0
    %4909 = vrot.lane.b32.xlu0 %v3987, 120
    %v4910 = vpop.permute.xlu0 %4909
    %4911 = vrot.lane.b32.xlu0 %v3987, 88
    %v4912 = vpop.permute.xlu0 %4911
    %v4913 = vsel %vm315, %v4910, 0
    %v4915 = vsel %vm315, %v4912, 0
    %4917 = vmatprep.subr.mxu0 0.0
    %4918 = vmatpush1.xpose.msra.mxu0 %v4915
    %4919 = vmatprep.subr.mxu0 0.0
    %4920 = vmatpush1.xpose.msra.mxu0 0.0
    %4921 = vmatprep.subr.mxu0 0.0
    %4922 = vmatpush1.xpose.msra.mxu0 0.0
    %4923 = vmatprep.subr.mxu0 0.0
    %4924 = vmatpush1.xpose.msra.mxu0 0.0
    %4925 = vmatprep.subr.mxu0 0.0
    %4926 = vmatpush1.xpose.msra.mxu0 0.0
    %4927 = vmatprep.subr.mxu0 0.0
    %4928 = vmatpush1.xpose.msra.mxu0 0.0
    %4929 = vmatprep.subr.mxu0 0.0
    %4930 = vmatpush1.xpose.msra.mxu0 0.0
    %4931 = vmatprep.subr.mxu0 0.0
    %4932 = vmatpush1.xpose.msra.mxu0 0.0
    %4933 = vmatprep.subr.mxu0 0.0
    %4934 = vmatpush1.xpose.msra.mxu0 0.0
    %4935 = vmatprep.subr.mxu0 0.0
    %4936 = vmatpush1.xpose.msra.mxu0 0.0
    %4937 = vmatprep.subr.mxu0 0.0
    %4938 = vmatpush1.xpose.msra.mxu0 0.0
    %4939 = vmatprep.subr.mxu0 0.0
    %4940 = vmatpush1.xpose.msra.mxu0 0.0
    %4941 = vmatprep.subr.mxu0 0.0
    %4942 = vmatpush1.xpose.msra.mxu0 0.0
    %4943 = vmatprep.subr.mxu0 0.0
    %4944 = vmatpush1.xpose.msra.mxu0 0.0
    %4945 = vmatprep.subr.mxu0 0.0
    %4946 = vmatpush1.xpose.msra.mxu0 0.0
    %4947 = vmatprep.subr.mxu0 0.0
    %4948 = vmatpush1.xpose.msra.mxu0 0.0
    %4949 = vmatprep.subr.mxu0 0.0
    %4950 = vmatpush1.xpose.msra.mxu0 0.0
    %4951 = vmatprep.subr.mxu0 0.0
    %4952 = vmatpush1.xpose.msra.mxu0 0.0
    %4953 = vmatprep.subr.mxu0 0.0
    %4954 = vmatpush1.xpose.msra.mxu0 0.0
    %4955 = vmatprep.subr.mxu0 0.0
    %4956 = vmatpush1.xpose.msra.mxu0 0.0
    %4957 = vmatprep.subr.mxu0 0.0
    %4958 = vmatpush1.xpose.msra.mxu0 0.0
    %4959 = vmatprep.subr.mxu0 0.0
    %4960 = vmatpush1.xpose.msra.mxu0 0.0
    %4961 = vmatprep.subr.mxu0 0.0
    %4962 = vmatpush1.xpose.msra.mxu0 0.0
    %4963 = vmatprep.subr.mxu0 0.0
    %4964 = vmatpush1.xpose.msra.mxu0 0.0
    %4965 = vmatprep.subr.mxu0 0.0
    %4966 = vmatpush1.xpose.msra.mxu0 0.0
    %4967 = vmatprep.subr.mxu0 0.0
    %4968 = vmatpush1.xpose.msra.mxu0 0.0
    %4969 = vmatprep.subr.mxu0 0.0
    %4970 = vmatpush1.xpose.msra.mxu0 0.0
    %4971 = vmatprep.subr.mxu0 0.0
    %4972 = vmatpush1.xpose.msra.mxu0 0.0
    %4973 = vmatprep.subr.mxu0 0.0
    %4974 = vmatpush1.xpose.msra.mxu0 0.0
    %4975 = vmatprep.subr.mxu0 0.0
    %4976 = vmatpush1.xpose.msra.mxu0 0.0
    %4977 = vmatprep.subr.mxu0 0.0
    %4978 = vmatpush1.xpose.msra.mxu0 0.0
    %4979 = vmatprep.subr.mxu0 0.0
    %4980 = vmatpush1.xpose.msra.mxu0 0.0
    %4981 = vmatprep.mubr.f32.mxu0 0.0
    %4982 = vmatmul.mubr.f32.gmra.mrb[0].mxu0 %v4913
    %v4983 = vpop.f32.mrb[0].mxu0
    %v4984 = vadd.f32 0.0, %v4983
    %v4985 = vpop.f32.mrb[0].mxu0
    %4986 = vdwg.mxu0
    %v4987 = vmul.f32 %v4984, 0.35355338
    %v4988 = vsel %vm315, %v4987, -inf
    %4989 = vmax.xlane.f32.xlu0 %v4988
    %v4990 = vpop.xlane.xlu0 %4989
    %v4991 = vsub.f32 %v4987, %v4990
    %v4992 = vmul.f32 %v4991, 1.442695
    %v4993 = vpow.pop %v4992
    %v4994 = vsel %vm315, %v4993, 0.0
    %4995 = vadd.xlane.f32.xlu0 %v4994
    %v4996 = vpop.xlane.xlu0 %4995
    %v4997 = vrcp.pop %v4996
    %v4998 = vmul.f32 %v4993, %v4997
    %5000 = vrot.lane.b32.xlu0 %v4068, 120
    %v5001 = vpop.permute.xlu0 %5000
    %v5004 = vsel %vm315, %v4998, 0
    %5006 = vmatprep.subr.mxu0 0.0
    %5007 = vmatpush1.msra.mxu0 %v5001
    %5008 = vmatprep.subr.mxu0 0.0
    %5009 = vmatpush1.msra.mxu0 0.0
    %5010 = vmatprep.subr.mxu0 0.0
    %5011 = vmatpush1.msra.mxu0 0.0
    %5012 = vmatprep.subr.mxu0 0.0
    %5013 = vmatpush1.msra.mxu0 0.0
    %5014 = vmatprep.subr.mxu0 0.0
    %5015 = vmatpush1.msra.mxu0 0.0
    %5016 = vmatprep.subr.mxu0 0.0
    %5017 = vmatpush1.msra.mxu0 0.0
    %5018 = vmatprep.subr.mxu0 0.0
    %5019 = vmatpush1.msra.mxu0 0.0
    %5020 = vmatprep.subr.mxu0 0.0
    %5021 = vmatpush1.msra.mxu0 0.0
    %5022 = vmatprep.subr.mxu0 0.0
    %5023 = vmatpush1.msra.mxu0 0.0
    %5024 = vmatprep.subr.mxu0 0.0
    %5025 = vmatpush1.msra.mxu0 0.0
    %5026 = vmatprep.subr.mxu0 0.0
    %5027 = vmatpush1.msra.mxu0 0.0
    %5028 = vmatprep.subr.mxu0 0.0
    %5029 = vmatpush1.msra.mxu0 0.0
    %5030 = vmatprep.subr.mxu0 0.0
    %5031 = vmatpush1.msra.mxu0 0.0
    %5032 = vmatprep.subr.mxu0 0.0
    %5033 = vmatpush1.msra.mxu0 0.0
    %5034 = vmatprep.subr.mxu0 0.0
    %5035 = vmatpush1.msra.mxu0 0.0
    %5036 = vmatprep.subr.mxu0 0.0
    %5037 = vmatpush1.msra.mxu0 0.0
    %5038 = vmatprep.subr.mxu0 0.0
    %5039 = vmatpush1.msra.mxu0 0.0
    %5040 = vmatprep.subr.mxu0 0.0
    %5041 = vmatpush1.msra.mxu0 0.0
    %5042 = vmatprep.subr.mxu0 0.0
    %5043 = vmatpush1.msra.mxu0 0.0
    %5044 = vmatprep.subr.mxu0 0.0
    %5045 = vmatpush1.msra.mxu0 0.0
    %5046 = vmatprep.subr.mxu0 0.0
    %5047 = vmatpush1.msra.mxu0 0.0
    %5048 = vmatprep.subr.mxu0 0.0
    %5049 = vmatpush1.msra.mxu0 0.0
    %5050 = vmatprep.subr.mxu0 0.0
    %5051 = vmatpush1.msra.mxu0 0.0
    %5052 = vmatprep.subr.mxu0 0.0
    %5053 = vmatpush1.msra.mxu0 0.0
    %5054 = vmatprep.subr.mxu0 0.0
    %5055 = vmatpush1.msra.mxu0 0.0
    %5056 = vmatprep.subr.mxu0 0.0
    %5057 = vmatpush1.msra.mxu0 0.0
    %5058 = vmatprep.subr.mxu0 0.0
    %5059 = vmatpush1.msra.mxu0 0.0
    %5060 = vmatprep.subr.mxu0 0.0
    %5061 = vmatpush1.msra.mxu0 0.0
    %5062 = vmatprep.subr.mxu0 0.0
    %5063 = vmatpush1.msra.mxu0 0.0
    %5064 = vmatprep.subr.mxu0 0.0
    %5065 = vmatpush1.msra.mxu0 0.0
    %5066 = vmatprep.subr.mxu0 0.0
    %5067 = vmatpush1.msra.mxu0 0.0
    %5068 = vmatprep.subr.mxu0 0.0
    %5069 = vmatpush1.msra.mxu0 0.0
    %5070 = vmatprep.mubr.f32.mxu0 0.0
    %5071 = vmatmul.mubr.f32.gmra.mrb[0].mxu0 %v5004
    %v5072 = vpop.f32.mrb[0].mxu0
    %v5073 = vadd.f32 0.0, %v5072
    %v5074 = vpop.f32.mrb[0].mxu0
    %5075 = vdwg.mxu0
    %5076 = vrot.lane.b32.xlu0 %v3987, 112
    %v5077 = vpop.permute.xlu0 %5076
    %5078 = vrot.lane.b32.xlu0 %v3987, 80
    %v5079 = vpop.permute.xlu0 %5078
    %v5080 = vsel %vm315, %v5077, 0
    %v5082 = vsel %vm315, %v5079, 0
    %5084 = vmatprep.subr.mxu0 0.0
    %5085 = vmatpush1.xpose.msra.mxu0 %v5082
    %5086 = vmatprep.subr.mxu0 0.0
    %5087 = vmatpush1.xpose.msra.mxu0 0.0
    %5088 = vmatprep.subr.mxu0 0.0
    %5089 = vmatpush1.xpose.msra.mxu0 0.0
    %5090 = vmatprep.subr.mxu0 0.0
    %5091 = vmatpush1.xpose.msra.mxu0 0.0
    %5092 = vmatprep.subr.mxu0 0.0
    %5093 = vmatpush1.xpose.msra.mxu0 0.0
    %5094 = vmatprep.subr.mxu0 0.0
    %5095 = vmatpush1.xpose.msra.mxu0 0.0
    %5096 = vmatprep.subr.mxu0 0.0
    %5097 = vmatpush1.xpose.msra.mxu0 0.0
    %5098 = vmatprep.subr.mxu0 0.0
    %5099 = vmatpush1.xpose.msra.mxu0 0.0
    %5100 = vmatprep.subr.mxu0 0.0
    %5101 = vmatpush1.xpose.msra.mxu0 0.0
    %5102 = vmatprep.subr.mxu0 0.0
    %5103 = vmatpush1.xpose.msra.mxu0 0.0
    %5104 = vmatprep.subr.mxu0 0.0
    %5105 = vmatpush1.xpose.msra.mxu0 0.0
    %5106 = vmatprep.subr.mxu0 0.0
    %5107 = vmatpush1.xpose.msra.mxu0 0.0
    %5108 = vmatprep.subr.mxu0 0.0
    %5109 = vmatpush1.xpose.msra.mxu0 0.0
    %5110 = vmatprep.subr.mxu0 0.0
    %5111 = vmatpush1.xpose.msra.mxu0 0.0
    %5112 = vmatprep.subr.mxu0 0.0
    %5113 = vmatpush1.xpose.msra.mxu0 0.0
    %5114 = vmatprep.subr.mxu0 0.0
    %5115 = vmatpush1.xpose.msra.mxu0 0.0
    %5116 = vmatprep.subr.mxu0 0.0
    %5117 = vmatpush1.xpose.msra.mxu0 0.0
    %5118 = vmatprep.subr.mxu0 0.0
    %5119 = vmatpush1.xpose.msra.mxu0 0.0
    %5120 = vmatprep.subr.mxu0 0.0
    %5121 = vmatpush1.xpose.msra.mxu0 0.0
    %5122 = vmatprep.subr.mxu0 0.0
    %5123 = vmatpush1.xpose.msra.mxu0 0.0
    %5124 = vmatprep.subr.mxu0 0.0
    %5125 = vmatpush1.xpose.msra.mxu0 0.0
    %5126 = vmatprep.subr.mxu0 0.0
    %5127 = vmatpush1.xpose.msra.mxu0 0.0
    %5128 = vmatprep.subr.mxu0 0.0
    %5129 = vmatpush1.xpose.msra.mxu0 0.0
    %5130 = vmatprep.subr.mxu0 0.0
    %5131 = vmatpush1.xpose.msra.mxu0 0.0
    %5132 = vmatprep.subr.mxu0 0.0
    %5133 = vmatpush1.xpose.msra.mxu0 0.0
    %5134 = vmatprep.subr.mxu0 0.0
    %5135 = vmatpush1.xpose.msra.mxu0 0.0
    %5136 = vmatprep.subr.mxu0 0.0
    %5137 = vmatpush1.xpose.msra.mxu0 0.0
    %5138 = vmatprep.subr.mxu0 0.0
    %5139 = vmatpush1.xpose.msra.mxu0 0.0
    %5140 = vmatprep.subr.mxu0 0.0
    %5141 = vmatpush1.xpose.msra.mxu0 0.0
    %5142 = vmatprep.subr.mxu0 0.0
    %5143 = vmatpush1.xpose.msra.mxu0 0.0
    %5144 = vmatprep.subr.mxu0 0.0
    %5145 = vmatpush1.xpose.msra.mxu0 0.0
    %5146 = vmatprep.subr.mxu0 0.0
    %5147 = vmatpush1.xpose.msra.mxu0 0.0
    %5148 = vmatprep.mubr.f32.mxu0 0.0
    %5149 = vmatmul.mubr.f32.gmra.mrb[0].mxu0 %v5080
    %v5150 = vpop.f32.mrb[0].mxu0
    %v5151 = vadd.f32 0.0, %v5150
    %v5152 = vpop.f32.mrb[0].mxu0
    %5153 = vdwg.mxu0
    %v5154 = vmul.f32 %v5151, 0.35355338
    %v5155 = vsel %vm315, %v5154, -inf
    %5156 = vmax.xlane.f32.xlu0 %v5155
    %v5157 = vpop.xlane.xlu0 %5156
    %v5158 = vsub.f32 %v5154, %v5157
    %v5159 = vmul.f32 %v5158, 1.442695
    %v5160 = vpow.pop %v5159
    %v5161 = vsel %vm315, %v5160, 0.0
    %5162 = vadd.xlane.f32.xlu0 %v5161
    %v5163 = vpop.xlane.xlu0 %5162
    %v5164 = vrcp.pop %v5163
    %v5165 = vmul.f32 %v5160, %v5164
    %5166 = vrot.lane.b32.xlu0 %v4068, 112
    %v5167 = vpop.permute.xlu0 %5166
    %v5170 = vsel %vm315, %v5165, 0
    %5172 = vmatprep.subr.mxu0 0.0
    %5173 = vmatpush1.msra.mxu0 %v5167
    %5174 = vmatprep.subr.mxu0 0.0
    %5175 = vmatpush1.msra.mxu0 0.0
    %5176 = vmatprep.subr.mxu0 0.0
    %5177 = vmatpush1.msra.mxu0 0.0
    %5178 = vmatprep.subr.mxu0 0.0
    %5179 = vmatpush1.msra.mxu0 0.0
    %5180 = vmatprep.subr.mxu0 0.0
    %5181 = vmatpush1.msra.mxu0 0.0
    %5182 = vmatprep.subr.mxu0 0.0
    %5183 = vmatpush1.msra.mxu0 0.0
    %5184 = vmatprep.subr.mxu0 0.0
    %5185 = vmatpush1.msra.mxu0 0.0
    %5186 = vmatprep.subr.mxu0 0.0
    %5187 = vmatpush1.msra.mxu0 0.0
    %5188 = vmatprep.subr.mxu0 0.0
    %5189 = vmatpush1.msra.mxu0 0.0
    %5190 = vmatprep.subr.mxu0 0.0
    %5191 = vmatpush1.msra.mxu0 0.0
    %5192 = vmatprep.subr.mxu0 0.0
    %5193 = vmatpush1.msra.mxu0 0.0
    %5194 = vmatprep.subr.mxu0 0.0
    %5195 = vmatpush1.msra.mxu0 0.0
    %5196 = vmatprep.subr.mxu0 0.0
    %5197 = vmatpush1.msra.mxu0 0.0
    %5198 = vmatprep.subr.mxu0 0.0
    %5199 = vmatpush1.msra.mxu0 0.0
    %5200 = vmatprep.subr.mxu0 0.0
    %5201 = vmatpush1.msra.mxu0 0.0
    %5202 = vmatprep.subr.mxu0 0.0
    %5203 = vmatpush1.msra.mxu0 0.0
    %5204 = vmatprep.subr.mxu0 0.0
    %5205 = vmatpush1.msra.mxu0 0.0
    %5206 = vmatprep.subr.mxu0 0.0
    %5207 = vmatpush1.msra.mxu0 0.0
    %5208 = vmatprep.subr.mxu0 0.0
    %5209 = vmatpush1.msra.mxu0 0.0
    %5210 = vmatprep.subr.mxu0 0.0
    %5211 = vmatpush1.msra.mxu0 0.0
    %5212 = vmatprep.subr.mxu0 0.0
    %5213 = vmatpush1.msra.mxu0 0.0
    %5214 = vmatprep.subr.mxu0 0.0
    %5215 = vmatpush1.msra.mxu0 0.0
    %5216 = vmatprep.subr.mxu0 0.0
    %5217 = vmatpush1.msra.mxu0 0.0
    %5218 = vmatprep.subr.mxu0 0.0
    %5219 = vmatpush1.msra.mxu0 0.0
    %5220 = vmatprep.subr.mxu0 0.0
    %5221 = vmatpush1.msra.mxu0 0.0
    %5222 = vmatprep.subr.mxu0 0.0
    %5223 = vmatpush1.msra.mxu0 0.0
    %5224 = vmatprep.subr.mxu0 0.0
    %5225 = vmatpush1.msra.mxu0 0.0
    %5226 = vmatprep.subr.mxu0 0.0
    %5227 = vmatpush1.msra.mxu0 0.0
    %5228 = vmatprep.subr.mxu0 0.0
    %5229 = vmatpush1.msra.mxu0 0.0
    %5230 = vmatprep.subr.mxu0 0.0
    %5231 = vmatpush1.msra.mxu0 0.0
    %5232 = vmatprep.subr.mxu0 0.0
    %5233 = vmatpush1.msra.mxu0 0.0
    %5234 = vmatprep.subr.mxu0 0.0
    %5235 = vmatpush1.msra.mxu0 0.0
    %5236 = vmatprep.mubr.f32.mxu0 0.0
    %5237 = vmatmul.mubr.f32.gmra.mrb[0].mxu0 %v5170
    %v5238 = vpop.f32.mrb[0].mxu0
    %v5239 = vadd.f32 0.0, %v5238
    %v5240 = vpop.f32.mrb[0].mxu0
    %5241 = vdwg.mxu0
    %5242 = vrot.lane.b32.xlu0 %v3987, 104
    %v5243 = vpop.permute.xlu0 %5242
    %5244 = vrot.lane.b32.xlu0 %v3987, 72
    %v5245 = vpop.permute.xlu0 %5244
    %v5246 = vsel %vm315, %v5243, 0
    %v5248 = vsel %vm315, %v5245, 0
    %5250 = vmatprep.subr.mxu0 0.0
    %5251 = vmatpush1.xpose.msra.mxu0 %v5248
    %5252 = vmatprep.subr.mxu0 0.0
    %5253 = vmatpush1.xpose.msra.mxu0 0.0
    %5254 = vmatprep.subr.mxu0 0.0
    %5255 = vmatpush1.xpose.msra.mxu0 0.0
    %5256 = vmatprep.subr.mxu0 0.0
    %5257 = vmatpush1.xpose.msra.mxu0 0.0
    %5258 = vmatprep.subr.mxu0 0.0
    %5259 = vmatpush1.xpose.msra.mxu0 0.0
    %5260 = vmatprep.subr.mxu0 0.0
    %5261 = vmatpush1.xpose.msra.mxu0 0.0
    %5262 = vmatprep.subr.mxu0 0.0
    %5263 = vmatpush1.xpose.msra.mxu0 0.0
    %5264 = vmatprep.subr.mxu0 0.0
    %5265 = vmatpush1.xpose.msra.mxu0 0.0
    %5266 = vmatprep.subr.mxu0 0.0
    %5267 = vmatpush1.xpose.msra.mxu0 0.0
    %5268 = vmatprep.subr.mxu0 0.0
    %5269 = vmatpush1.xpose.msra.mxu0 0.0
    %5270 = vmatprep.subr.mxu0 0.0
    %5271 = vmatpush1.xpose.msra.mxu0 0.0
    %5272 = vmatprep.subr.mxu0 0.0
    %5273 = vmatpush1.xpose.msra.mxu0 0.0
    %5274 = vmatprep.subr.mxu0 0.0
    %5275 = vmatpush1.xpose.msra.mxu0 0.0
    %5276 = vmatprep.subr.mxu0 0.0
    %5277 = vmatpush1.xpose.msra.mxu0 0.0
    %5278 = vmatprep.subr.mxu0 0.0
    %5279 = vmatpush1.xpose.msra.mxu0 0.0
    %5280 = vmatprep.subr.mxu0 0.0
    %5281 = vmatpush1.xpose.msra.mxu0 0.0
    %5282 = vmatprep.subr.mxu0 0.0
    %5283 = vmatpush1.xpose.msra.mxu0 0.0
    %5284 = vmatprep.subr.mxu0 0.0
    %5285 = vmatpush1.xpose.msra.mxu0 0.0
    %5286 = vmatprep.subr.mxu0 0.0
    %5287 = vmatpush1.xpose.msra.mxu0 0.0
    %5288 = vmatprep.subr.mxu0 0.0
    %5289 = vmatpush1.xpose.msra.mxu0 0.0
    %5290 = vmatprep.subr.mxu0 0.0
    %5291 = vmatpush1.xpose.msra.mxu0 0.0
    %5292 = vmatprep.subr.mxu0 0.0
    %5293 = vmatpush1.xpose.msra.mxu0 0.0
    %5294 = vmatprep.subr.mxu0 0.0
    %5295 = vmatpush1.xpose.msra.mxu0 0.0
    %5296 = vmatprep.subr.mxu0 0.0
    %5297 = vmatpush1.xpose.msra.mxu0 0.0
    %5298 = vmatprep.subr.mxu0 0.0
    %5299 = vmatpush1.xpose.msra.mxu0 0.0
    %5300 = vmatprep.subr.mxu0 0.0
    %5301 = vmatpush1.xpose.msra.mxu0 0.0
    %5302 = vmatprep.subr.mxu0 0.0
    %5303 = vmatpush1.xpose.msra.mxu0 0.0
    %5304 = vmatprep.subr.mxu0 0.0
    %5305 = vmatpush1.xpose.msra.mxu0 0.0
    %5306 = vmatprep.subr.mxu0 0.0
    %5307 = vmatpush1.xpose.msra.mxu0 0.0
    %5308 = vmatprep.subr.mxu0 0.0
    %5309 = vmatpush1.xpose.msra.mxu0 0.0
    %5310 = vmatprep.subr.mxu0 0.0
    %5311 = vmatpush1.xpose.msra.mxu0 0.0
    %5312 = vmatprep.subr.mxu0 0.0
    %5313 = vmatpush1.xpose.msra.mxu0 0.0
    %5314 = vmatprep.mubr.f32.mxu0 0.0
    %5315 = vmatmul.mubr.f32.gmra.mrb[0].mxu0 %v5246
    %v5316 = vpop.f32.mrb[0].mxu0
    %v5317 = vadd.f32 0.0, %v5316
    %v5318 = vpop.f32.mrb[0].mxu0
    %5319 = vdwg.mxu0
    %v5320 = vmul.f32 %v5317, 0.35355338
    %v5321 = vsel %vm315, %v5320, -inf
    %5322 = vmax.xlane.f32.xlu0 %v5321
    %v5323 = vpop.xlane.xlu0 %5322
    %v5324 = vsub.f32 %v5320, %v5323
    %v5325 = vmul.f32 %v5324, 1.442695
    %v5326 = vpow.pop %v5325
    %v5327 = vsel %vm315, %v5326, 0.0
    %5328 = vadd.xlane.f32.xlu0 %v5327
    %v5329 = vpop.xlane.xlu0 %5328
    %v5330 = vrcp.pop %v5329
    %v5331 = vmul.f32 %v5326, %v5330
    %5332 = vrot.lane.b32.xlu0 %v4068, 104
    %v5333 = vpop.permute.xlu0 %5332
    %v5336 = vsel %vm315, %v5331, 0
    %5338 = vmatprep.subr.mxu0 0.0
    %5339 = vmatpush1.msra.mxu0 %v5333
    %5340 = vmatprep.subr.mxu0 0.0
    %5341 = vmatpush1.msra.mxu0 0.0
    %5342 = vmatprep.subr.mxu0 0.0
    %5343 = vmatpush1.msra.mxu0 0.0
    %5344 = vmatprep.subr.mxu0 0.0
    %5345 = vmatpush1.msra.mxu0 0.0
    %5346 = vmatprep.subr.mxu0 0.0
    %5347 = vmatpush1.msra.mxu0 0.0
    %5348 = vmatprep.subr.mxu0 0.0
    %5349 = vmatpush1.msra.mxu0 0.0
    %5350 = vmatprep.subr.mxu0 0.0
    %5351 = vmatpush1.msra.mxu0 0.0
    %5352 = vmatprep.subr.mxu0 0.0
    %5353 = vmatpush1.msra.mxu0 0.0
    %5354 = vmatprep.subr.mxu0 0.0
    %5355 = vmatpush1.msra.mxu0 0.0
    %5356 = vmatprep.subr.mxu0 0.0
    %5357 = vmatpush1.msra.mxu0 0.0
    %5358 = vmatprep.subr.mxu0 0.0
    %5359 = vmatpush1.msra.mxu0 0.0
    %5360 = vmatprep.subr.mxu0 0.0
    %5361 = vmatpush1.msra.mxu0 0.0
    %5362 = vmatprep.subr.mxu0 0.0
    %5363 = vmatpush1.msra.mxu0 0.0
    %5364 = vmatprep.subr.mxu0 0.0
    %5365 = vmatpush1.msra.mxu0 0.0
    %5366 = vmatprep.subr.mxu0 0.0
    %5367 = vmatpush1.msra.mxu0 0.0
    %5368 = vmatprep.subr.mxu0 0.0
    %5369 = vmatpush1.msra.mxu0 0.0
    %5370 = vmatprep.subr.mxu0 0.0
    %5371 = vmatpush1.msra.mxu0 0.0
    %5372 = vmatprep.subr.mxu0 0.0
    %5373 = vmatpush1.msra.mxu0 0.0
    %5374 = vmatprep.subr.mxu0 0.0
    %5375 = vmatpush1.msra.mxu0 0.0
    %5376 = vmatprep.subr.mxu0 0.0
    %5377 = vmatpush1.msra.mxu0 0.0
    %5378 = vmatprep.subr.mxu0 0.0
    %5379 = vmatpush1.msra.mxu0 0.0
    %5380 = vmatprep.subr.mxu0 0.0
    %5381 = vmatpush1.msra.mxu0 0.0
    %5382 = vmatprep.subr.mxu0 0.0
    %5383 = vmatpush1.msra.mxu0 0.0
    %5384 = vmatprep.subr.mxu0 0.0
    %5385 = vmatpush1.msra.mxu0 0.0
    %5386 = vmatprep.subr.mxu0 0.0
    %5387 = vmatpush1.msra.mxu0 0.0
    %5388 = vmatprep.subr.mxu0 0.0
    %5389 = vmatpush1.msra.mxu0 0.0
    %5390 = vmatprep.subr.mxu0 0.0
    %5391 = vmatpush1.msra.mxu0 0.0
    %5392 = vmatprep.subr.mxu0 0.0
    %5393 = vmatpush1.msra.mxu0 0.0
    %5394 = vmatprep.subr.mxu0 0.0
    %5395 = vmatpush1.msra.mxu0 0.0
    %5396 = vmatprep.subr.mxu0 0.0
    %5397 = vmatpush1.msra.mxu0 0.0
    %5398 = vmatprep.subr.mxu0 0.0
    %5399 = vmatpush1.msra.mxu0 0.0
    %5400 = vmatprep.subr.mxu0 0.0
    %5401 = vmatpush1.msra.mxu0 0.0
    %5402 = vmatprep.mubr.f32.mxu0 0.0
    %5403 = vmatmul.mubr.f32.gmra.mrb[0].mxu0 %v5336
    %v5404 = vpop.f32.mrb[0].mxu0
    %v5405 = vadd.f32 0.0, %v5404
    %v5406 = vpop.f32.mrb[0].mxu0
    %5407 = vdwg.mxu0
    %5409 = vrot.lane.b32.xlu0 %v5073, 8
    %v5410 = vpop.permute.xlu0 %5409
    %5413 = vrot.lane.b32.xlu0 %v5239, 16
    %v5414 = vpop.permute.xlu0 %5413
    %5417 = vrot.lane.b32.xlu0 %v5405, 24
    %v5418 = vpop.permute.xlu0 %5417
    %v5420 = vsel %vm315, %v4906, %v5410
    %v5421 = vsel %vm987, %v5420, %v5414
    %v5422 = vsel %vm989, %v5421, %v5418
    %v5424 = vsel %vm130, %v4746, 0
    %v5427 = vsel %vm130, %v5422, 0
    %5429 = vmatprep.subr.mxu0 0.0
    %5430 = vmatpush1.msra.mxu0 %v85
    %5431 = vmatprep.subr.mxu0 0.0
    %5432 = vmatpush1.msra.mxu0 %v86
    %5433 = vmatprep.subr.mxu0 0.0
    %5434 = vmatpush1.msra.mxu0 %v87
    %5435 = vmatprep.subr.mxu0 0.0
    %5436 = vmatpush1.msra.mxu0 %v88
    %5437 = vmatprep.subr.mxu0 0.0
    %5438 = vmatpush1.msra.mxu0 0.0
    %5439 = vmatprep.subr.mxu0 0.0
    %5440 = vmatpush1.msra.mxu0 0.0
    %5441 = vmatprep.subr.mxu0 0.0
    %5442 = vmatpush1.msra.mxu0 0.0
    %5443 = vmatprep.subr.mxu0 0.0
    %5444 = vmatpush1.msra.mxu0 0.0
    %5445 = vmatprep.subr.mxu0 0.0
    %5446 = vmatpush1.msra.mxu0 0.0
    %5447 = vmatprep.subr.mxu0 0.0
    %5448 = vmatpush1.msra.mxu0 0.0
    %5449 = vmatprep.subr.mxu0 0.0
    %5450 = vmatpush1.msra.mxu0 0.0
    %5451 = vmatprep.subr.mxu0 0.0
    %5452 = vmatpush1.msra.mxu0 0.0
    %5453 = vmatprep.subr.mxu0 0.0
    %5454 = vmatpush1.msra.mxu0 0.0
    %5455 = vmatprep.subr.mxu0 0.0
    %5456 = vmatpush1.msra.mxu0 0.0
    %5457 = vmatprep.subr.mxu0 0.0
    %5458 = vmatpush1.msra.mxu0 0.0
    %5459 = vmatprep.subr.mxu0 0.0
    %5460 = vmatpush1.msra.mxu0 0.0
    %5461 = vmatprep.subr.mxu0 0.0
    %5462 = vmatpush1.msra.mxu0 0.0
    %5463 = vmatprep.subr.mxu0 0.0
    %5464 = vmatpush1.msra.mxu0 0.0
    %5465 = vmatprep.subr.mxu0 0.0
    %5466 = vmatpush1.msra.mxu0 0.0
    %5467 = vmatprep.subr.mxu0 0.0
    %5468 = vmatpush1.msra.mxu0 0.0
    %5469 = vmatprep.subr.mxu0 0.0
    %5470 = vmatpush1.msra.mxu0 0.0
    %5471 = vmatprep.subr.mxu0 0.0
    %5472 = vmatpush1.msra.mxu0 0.0
    %5473 = vmatprep.subr.mxu0 0.0
    %5474 = vmatpush1.msra.mxu0 0.0
    %5475 = vmatprep.subr.mxu0 0.0
    %5476 = vmatpush1.msra.mxu0 0.0
    %5477 = vmatprep.subr.mxu0 0.0
    %5478 = vmatpush1.msra.mxu0 0.0
    %5479 = vmatprep.subr.mxu0 0.0
    %5480 = vmatpush1.msra.mxu0 0.0
    %5481 = vmatprep.subr.mxu0 0.0
    %5482 = vmatpush1.msra.mxu0 0.0
    %5483 = vmatprep.subr.mxu0 0.0
    %5484 = vmatpush1.msra.mxu0 0.0
    %5485 = vmatprep.subr.mxu0 0.0
    %5486 = vmatpush1.msra.mxu0 0.0
    %5487 = vmatprep.subr.mxu0 0.0
    %5488 = vmatpush1.msra.mxu0 0.0
    %5489 = vmatprep.subr.mxu0 0.0
    %5490 = vmatpush1.msra.mxu0 0.0
    %5491 = vmatprep.subr.mxu0 0.0
    %5492 = vmatpush1.msra.mxu0 0.0
    %5493 = vmatprep.mubr.f32.mxu0 0.0
    %5494 = vmatmul.mubr.f32.gmra.mrb[0].mxu0 %v5424
    %v5495 = vpop.f32.mrb[0].mxu0
    %v5496 = vadd.f32 %v1671, %v5495
    %v5497 = vpop.f32.mrb[0].mxu0
    %5498 = vmatprep.mubr.f32.mxu0 0.0
    %5499 = vmatmul.mubr.f32.gmra.mrb[0].mxu0 %v5427
    %v5500 = vpop.f32.mrb[0].mxu0
    %v5501 = vadd.f32 %v1671, %v5500
    %v5502 = vpop.f32.mrb[0].mxu0
    %5503 = vdwg.mxu0
    %v5504 = vadd.f32 %v3862, %v5496
    %v5505 = vadd.f32 %v3863, %v5501
    %v5506 = vsel %vm130, %v5504, 0.0
    %5507 = vadd.xlane.f32.xlu0 %v5506
    %v5508 = vpop.xlane.xlu0 %5507
    %v5509 = vsel %vm130, %v5505, 0.0
    %5510 = vadd.xlane.f32.xlu0 %v5509
    %v5511 = vpop.xlane.xlu0 %5510
    %v5512 = vmul.f32 %v5508, %v1762
    %v5513 = vmul.f32 %v5511, %v1762
    %v5514 = vsub.f32 %v5504, %v5512
    %v5515 = vsub.f32 %v5505, %v5513
    %v5516 = vmul.f32 %v5514, %v5514
    %v5517 = vmul.f32 %v5515, %v5515
    %v5518 = vsel %vm130, %v5516, 0.0
    %5519 = vadd.xlane.f32.xlu0 %v5518
    %v5520 = vpop.xlane.xlu0 %5519
    %v5521 = vsel %vm130, %v5517, 0.0
    %5522 = vadd.xlane.f32.xlu0 %v5521
    %v5523 = vpop.xlane.xlu0 %5522
    %v5524 = vmul.f32 %v5520, %v1762
    %v5525 = vmul.f32 %v5523, %v1762
    %v5526 = vadd.f32 %v5524, 1e-05
    %v5527 = vadd.f32 %v5525, 1e-05
    %v5528 = vrsqrt.pop %v5526
    %v5529 = vrsqrt.pop %v5527
    %v5530 = vmul.f32 %v5514, %v5528
    %v5531 = vmul.f32 %v5515, %v5529
    %v5532 = vmul.f32 %v5530, %v1786
    %v5533 = vmul.f32 %v5531, %v1786
    %v5534 = vadd.f32 %v5532, %v1792
    %v5535 = vadd.f32 %v5533, %v1792
    %v5536 = vadd.f32 %v5534, %v76
    %v5537 = vadd.f32 %v5535, %v77
    %v5539 = vsel %vm130, %v5536, 0
    %v5542 = vsel %vm130, %v5537, 0
    %5544 = vmatprep.subr.mxu0 0.0
    %5545 = vmatpush1.msra.mxu0 %v90
    %5546 = vmatprep.subr.mxu0 0.0
    %5547 = vmatpush1.msra.mxu0 %v91
    %5548 = vmatprep.subr.mxu0 0.0
    %5549 = vmatpush1.msra.mxu0 %v92
    %5550 = vmatprep.subr.mxu0 0.0
    %5551 = vmatpush1.msra.mxu0 %v93
    %5552 = vmatprep.subr.mxu0 0.0
    %5553 = vmatpush1.msra.mxu0 0.0
    %5554 = vmatprep.subr.mxu0 0.0
    %5555 = vmatpush1.msra.mxu0 0.0
    %5556 = vmatprep.subr.mxu0 0.0
    %5557 = vmatpush1.msra.mxu0 0.0
    %5558 = vmatprep.subr.mxu0 0.0
    %5559 = vmatpush1.msra.mxu0 0.0
    %5560 = vmatprep.subr.mxu0 0.0
    %5561 = vmatpush1.msra.mxu0 0.0
    %5562 = vmatprep.subr.mxu0 0.0
    %5563 = vmatpush1.msra.mxu0 0.0
    %5564 = vmatprep.subr.mxu0 0.0
    %5565 = vmatpush1.msra.mxu0 0.0
    %5566 = vmatprep.subr.mxu0 0.0
    %5567 = vmatpush1.msra.mxu0 0.0
    %5568 = vmatprep.subr.mxu0 0.0
    %5569 = vmatpush1.msra.mxu0 0.0
    %5570 = vmatprep.subr.mxu0 0.0
    %5571 = vmatpush1.msra.mxu0 0.0
    %5572 = vmatprep.subr.mxu0 0.0
    %5573 = vmatpush1.msra.mxu0 0.0
    %5574 = vmatprep.subr.mxu0 0.0
    %5575 = vmatpush1.msra.mxu0 0.0
    %5576 = vmatprep.subr.mxu0 0.0
    %5577 = vmatpush1.msra.mxu0 0.0
    %5578 = vmatprep.subr.mxu0 0.0
    %5579 = vmatpush1.msra.mxu0 0.0
    %5580 = vmatprep.subr.mxu0 0.0
    %5581 = vmatpush1.msra.mxu0 0.0
    %5582 = vmatprep.subr.mxu0 0.0
    %5583 = vmatpush1.msra.mxu0 0.0
    %5584 = vmatprep.subr.mxu0 0.0
    %5585 = vmatpush1.msra.mxu0 0.0
    %5586 = vmatprep.subr.mxu0 0.0
    %5587 = vmatpush1.msra.mxu0 0.0
    %5588 = vmatprep.subr.mxu0 0.0
    %5589 = vmatpush1.msra.mxu0 0.0
    %5590 = vmatprep.subr.mxu0 0.0
    %5591 = vmatpush1.msra.mxu0 0.0
    %5592 = vmatprep.subr.mxu0 0.0
    %5593 = vmatpush1.msra.mxu0 0.0
    %5594 = vmatprep.subr.mxu0 0.0
    %5595 = vmatpush1.msra.mxu0 0.0
    %5596 = vmatprep.subr.mxu0 0.0
    %5597 = vmatpush1.msra.mxu0 0.0
    %5598 = vmatprep.subr.mxu0 0.0
    %5599 = vmatpush1.msra.mxu0 0.0
    %5600 = vmatprep.subr.mxu0 0.0
    %5601 = vmatpush1.msra.mxu0 0.0
    %5602 = vmatprep.subr.mxu0 0.0
    %5603 = vmatpush1.msra.mxu0 0.0
    %5604 = vmatprep.subr.mxu0 0.0
    %5605 = vmatpush1.msra.mxu0 0.0
    %5606 = vmatprep.subr.mxu0 0.0
    %5607 = vmatpush1.msra.mxu0 0.0
    %5608 = vmatprep.mubr.f32.mxu0 0.0
    %5609 = vmatmul.mubr.f32.gmra.mrb[0].mxu0 %v5539
    %v5610 = vpop.f32.mrb[0].mxu0
    %v5611 = vadd.f32 %v1801, %v5610
    %v5612 = vpop.f32.mrb[0].mxu0
    %5613 = vmatprep.mubr.f32.mxu0 0.0
    %5614 = vmatmul.mubr.f32.gmra.mrb[0].mxu0 %v5542
    %v5615 = vpop.f32.mrb[0].mxu0
    %v5616 = vadd.f32 %v1801, %v5615
    %v5617 = vpop.f32.mrb[0].mxu0
    %5618 = vdwg.mxu0
    %v5620 = vsel %vm315, %v5611, 0
    %5622 = vmatprep.subr.mxu0 0.0
    %5623 = vmatpush1.xpose.msra.mxu0 %v2116
    %5624 = vmatprep.subr.mxu0 0.0
    %5625 = vmatpush1.xpose.msra.mxu0 %v2119
    %5626 = vmatprep.subr.mxu0 0.0
    %5627 = vmatpush1.xpose.msra.mxu0 0.0
    %5628 = vmatprep.subr.mxu0 0.0
    %5629 = vmatpush1.xpose.msra.mxu0 0.0
    %5630 = vmatprep.subr.mxu0 0.0
    %5631 = vmatpush1.xpose.msra.mxu0 0.0
    %5632 = vmatprep.subr.mxu0 0.0
    %5633 = vmatpush1.xpose.msra.mxu0 0.0
    %5634 = vmatprep.subr.mxu0 0.0
    %5635 = vmatpush1.xpose.msra.mxu0 0.0
    %5636 = vmatprep.subr.mxu0 0.0
    %5637 = vmatpush1.xpose.msra.mxu0 0.0
    %5638 = vmatprep.subr.mxu0 0.0
    %5639 = vmatpush1.xpose.msra.mxu0 0.0
    %5640 = vmatprep.subr.mxu0 0.0
    %5641 = vmatpush1.xpose.msra.mxu0 0.0
    %5642 = vmatprep.subr.mxu0 0.0
    %5643 = vmatpush1.xpose.msra.mxu0 0.0
    %5644 = vmatprep.subr.mxu0 0.0
    %5645 = vmatpush1.xpose.msra.mxu0 0.0
    %5646 = vmatprep.subr.mxu0 0.0
    %5647 = vmatpush1.xpose.msra.mxu0 0.0
    %5648 = vmatprep.subr.mxu0 0.0
    %5649 = vmatpush1.xpose.msra.mxu0 0.0
    %5650 = vmatprep.subr.mxu0 0.0
    %5651 = vmatpush1.xpose.msra.mxu0 0.0
    %5652 = vmatprep.subr.mxu0 0.0
    %5653 = vmatpush1.xpose.msra.mxu0 0.0
    %5654 = vmatprep.subr.mxu0 0.0
    %5655 = vmatpush1.xpose.msra.mxu0 0.0
    %5656 = vmatprep.subr.mxu0 0.0
    %5657 = vmatpush1.xpose.msra.mxu0 0.0
    %5658 = vmatprep.subr.mxu0 0.0
    %5659 = vmatpush1.xpose.msra.mxu0 0.0
    %5660 = vmatprep.subr.mxu0 0.0
    %5661 = vmatpush1.xpose.msra.mxu0 0.0
    %5662 = vmatprep.subr.mxu0 0.0
    %5663 = vmatpush1.xpose.msra.mxu0 0.0
    %5664 = vmatprep.subr.mxu0 0.0
    %5665 = vmatpush1.xpose.msra.mxu0 0.0
    %5666 = vmatprep.subr.mxu0 0.0
    %5667 = vmatpush1.xpose.msra.mxu0 0.0
    %5668 = vmatprep.subr.mxu0 0.0
    %5669 = vmatpush1.xpose.msra.mxu0 0.0
    %5670 = vmatprep.subr.mxu0 0.0
    %5671 = vmatpush1.xpose.msra.mxu0 0.0
    %5672 = vmatprep.subr.mxu0 0.0
    %5673 = vmatpush1.xpose.msra.mxu0 0.0
    %5674 = vmatprep.subr.mxu0 0.0
    %5675 = vmatpush1.xpose.msra.mxu0 0.0
    %5676 = vmatprep.subr.mxu0 0.0
    %5677 = vmatpush1.xpose.msra.mxu0 0.0
    %5678 = vmatprep.subr.mxu0 0.0
    %5679 = vmatpush1.xpose.msra.mxu0 0.0
    %5680 = vmatprep.subr.mxu0 0.0
    %5681 = vmatpush1.xpose.msra.mxu0 0.0
    %5682 = vmatprep.subr.mxu0 0.0
    %5683 = vmatpush1.xpose.msra.mxu0 0.0
    %5684 = vmatprep.subr.mxu0 0.0
    %5685 = vmatpush1.xpose.msra.mxu0 0.0
    %5686 = vmatprep.mubr.f32.mxu0 0.0
    %5687 = vmatmul.mubr.f32.gmra.mrb[0].mxu0 %v5620
    %v5688 = vpop.f32.mrb[0].mxu0
    %v5689 = vadd.f32 0.0, %v5688
    %v5690 = vpop.f32.mrb[0].mxu0
    %5691 = vdwg.mxu0
    %v5692 = vmul.f32 %v5689, 0.35355338
    %v5693 = vsel %vm987, %v5692, -inf
    %5694 = vmax.xlane.f32.xlu0 %v5693
    %v5695 = vpop.xlane.xlu0 %5694
    %v5696 = vsub.f32 %v5692, %v5695
    %v5697 = vmul.f32 %v5696, 1.442695
    %v5698 = vpow.pop %v5697
    %v5699 = vsel %vm987, %v5698, 0.0
    %5700 = vadd.xlane.f32.xlu0 %v5699
    %v5701 = vpop.xlane.xlu0 %5700
    %v5702 = vrcp.pop %v5701
    %v5703 = vmul.f32 %v5698, %v5702
    %v5705 = vsel %vm987, %v5703, 0
    %5707 = vmatprep.subr.mxu0 0.0
    %5708 = vmatpush1.msra.mxu0 %v2094
    %5709 = vmatprep.subr.mxu0 0.0
    %5710 = vmatpush1.msra.mxu0 %v2099
    %5711 = vmatprep.subr.mxu0 0.0
    %5712 = vmatpush1.msra.mxu0 0.0
    %5713 = vmatprep.subr.mxu0 0.0
    %5714 = vmatpush1.msra.mxu0 0.0
    %5715 = vmatprep.subr.mxu0 0.0
    %5716 = vmatpush1.msra.mxu0 0.0
    %5717 = vmatprep.subr.mxu0 0.0
    %5718 = vmatpush1.msra.mxu0 0.0
    %5719 = vmatprep.subr.mxu0 0.0
    %5720 = vmatpush1.msra.mxu0 0.0
    %5721 = vmatprep.subr.mxu0 0.0
    %5722 = vmatpush1.msra.mxu0 0.0
    %5723 = vmatprep.subr.mxu0 0.0
    %5724 = vmatpush1.msra.mxu0 0.0
    %5725 = vmatprep.subr.mxu0 0.0
    %5726 = vmatpush1.msra.mxu0 0.0
    %5727 = vmatprep.subr.mxu0 0.0
    %5728 = vmatpush1.msra.mxu0 0.0
    %5729 = vmatprep.subr.mxu0 0.0
    %5730 = vmatpush1.msra.mxu0 0.0
    %5731 = vmatprep.subr.mxu0 0.0
    %5732 = vmatpush1.msra.mxu0 0.0
    %5733 = vmatprep.subr.mxu0 0.0
    %5734 = vmatpush1.msra.mxu0 0.0
    %5735 = vmatprep.subr.mxu0 0.0
    %5736 = vmatpush1.msra.mxu0 0.0
    %5737 = vmatprep.subr.mxu0 0.0
    %5738 = vmatpush1.msra.mxu0 0.0
    %5739 = vmatprep.subr.mxu0 0.0
    %5740 = vmatpush1.msra.mxu0 0.0
    %5741 = vmatprep.subr.mxu0 0.0
    %5742 = vmatpush1.msra.mxu0 0.0
    %5743 = vmatprep.subr.mxu0 0.0
    %5744 = vmatpush1.msra.mxu0 0.0
    %5745 = vmatprep.subr.mxu0 0.0
    %5746 = vmatpush1.msra.mxu0 0.0
    %5747 = vmatprep.subr.mxu0 0.0
    %5748 = vmatpush1.msra.mxu0 0.0
    %5749 = vmatprep.subr.mxu0 0.0
    %5750 = vmatpush1.msra.mxu0 0.0
    %5751 = vmatprep.subr.mxu0 0.0
    %5752 = vmatpush1.msra.mxu0 0.0
    %5753 = vmatprep.subr.mxu0 0.0
    %5754 = vmatpush1.msra.mxu0 0.0
    %5755 = vmatprep.subr.mxu0 0.0
    %5756 = vmatpush1.msra.mxu0 0.0
    %5757 = vmatprep.subr.mxu0 0.0
    %5758 = vmatpush1.msra.mxu0 0.0
    %5759 = vmatprep.subr.mxu0 0.0
    %5760 = vmatpush1.msra.mxu0 0.0
    %5761 = vmatprep.subr.mxu0 0.0
    %5762 = vmatpush1.msra.mxu0 0.0
    %5763 = vmatprep.subr.mxu0 0.0
    %5764 = vmatpush1.msra.mxu0 0.0
    %5765 = vmatprep.subr.mxu0 0.0
    %5766 = vmatpush1.msra.mxu0 0.0
    %5767 = vmatprep.subr.mxu0 0.0
    %5768 = vmatpush1.msra.mxu0 0.0
    %5769 = vmatprep.subr.mxu0 0.0
    %5770 = vmatpush1.msra.mxu0 0.0
    %5771 = vmatprep.mubr.f32.mxu0 0.0
    %5772 = vmatmul.mubr.f32.gmra.mrb[0].mxu0 %v5705
    %v5773 = vpop.f32.mrb[0].mxu0
    %v5774 = vadd.f32 0.0, %v5773
    %v5775 = vpop.f32.mrb[0].mxu0
    %5776 = vdwg.mxu0
    %5777 = vrot.lane.b32.xlu0 %v5611, 120
    %v5778 = vpop.permute.xlu0 %5777
    %v5779 = vsel %vm315, %v5778, 0
    %5781 = vmatprep.subr.mxu0 0.0
    %5782 = vmatpush1.xpose.msra.mxu0 %v2284
    %5783 = vmatprep.subr.mxu0 0.0
    %5784 = vmatpush1.xpose.msra.mxu0 %v2286
    %5785 = vmatprep.subr.mxu0 0.0
    %5786 = vmatpush1.xpose.msra.mxu0 0.0
    %5787 = vmatprep.subr.mxu0 0.0
    %5788 = vmatpush1.xpose.msra.mxu0 0.0
    %5789 = vmatprep.subr.mxu0 0.0
    %5790 = vmatpush1.xpose.msra.mxu0 0.0
    %5791 = vmatprep.subr.mxu0 0.0
    %5792 = vmatpush1.xpose.msra.mxu0 0.0
    %5793 = vmatprep.subr.mxu0 0.0
    %5794 = vmatpush1.xpose.msra.mxu0 0.0
    %5795 = vmatprep.subr.mxu0 0.0
    %5796 = vmatpush1.xpose.msra.mxu0 0.0
    %5797 = vmatprep.subr.mxu0 0.0
    %5798 = vmatpush1.xpose.msra.mxu0 0.0
    %5799 = vmatprep.subr.mxu0 0.0
    %5800 = vmatpush1.xpose.msra.mxu0 0.0
    %5801 = vmatprep.subr.mxu0 0.0
    %5802 = vmatpush1.xpose.msra.mxu0 0.0
    %5803 = vmatprep.subr.mxu0 0.0
    %5804 = vmatpush1.xpose.msra.mxu0 0.0
    %5805 = vmatprep.subr.mxu0 0.0
    %5806 = vmatpush1.xpose.msra.mxu0 0.0
    %5807 = vmatprep.subr.mxu0 0.0
    %5808 = vmatpush1.xpose.msra.mxu0 0.0
    %5809 = vmatprep.subr.mxu0 0.0
    %5810 = vmatpush1.xpose.msra.mxu0 0.0
    %5811 = vmatprep.subr.mxu0 0.0
    %5812 = vmatpush1.xpose.msra.mxu0 0.0
    %5813 = vmatprep.subr.mxu0 0.0
    %5814 = vmatpush1.xpose.msra.mxu0 0.0
    %5815 = vmatprep.subr.mxu0 0.0
    %5816 = vmatpush1.xpose.msra.mxu0 0.0
    %5817 = vmatprep.subr.mxu0 0.0
    %5818 = vmatpush1.xpose.msra.mxu0 0.0
    %5819 = vmatprep.subr.mxu0 0.0
    %5820 = vmatpush1.xpose.msra.mxu0 0.0
    %5821 = vmatprep.subr.mxu0 0.0
    %5822 = vmatpush1.xpose.msra.mxu0 0.0
    %5823 = vmatprep.subr.mxu0 0.0
    %5824 = vmatpush1.xpose.msra.mxu0 0.0
    %5825 = vmatprep.subr.mxu0 0.0
    %5826 = vmatpush1.xpose.msra.mxu0 0.0
    %5827 = vmatprep.subr.mxu0 0.0
    %5828 = vmatpush1.xpose.msra.mxu0 0.0
    %5829 = vmatprep.subr.mxu0 0.0
    %5830 = vmatpush1.xpose.msra.mxu0 0.0
    %5831 = vmatprep.subr.mxu0 0.0
    %5832 = vmatpush1.xpose.msra.mxu0 0.0
    %5833 = vmatprep.subr.mxu0 0.0
    %5834 = vmatpush1.xpose.msra.mxu0 0.0
    %5835 = vmatprep.subr.mxu0 0.0
    %5836 = vmatpush1.xpose.msra.mxu0 0.0
    %5837 = vmatprep.subr.mxu0 0.0
    %5838 = vmatpush1.xpose.msra.mxu0 0.0
    %5839 = vmatprep.subr.mxu0 0.0
    %5840 = vmatpush1.xpose.msra.mxu0 0.0
    %5841 = vmatprep.subr.mxu0 0.0
    %5842 = vmatpush1.xpose.msra.mxu0 0.0
    %5843 = vmatprep.subr.mxu0 0.0
    %5844 = vmatpush1.xpose.msra.mxu0 0.0
    %5845 = vmatprep.mubr.f32.mxu0 0.0
    %5846 = vmatmul.mubr.f32.gmra.mrb[0].mxu0 %v5779
    %v5847 = vpop.f32.mrb[0].mxu0
    %v5848 = vadd.f32 0.0, %v5847
    %v5849 = vpop.f32.mrb[0].mxu0
    %5850 = vdwg.mxu0
    %v5851 = vmul.f32 %v5848, 0.35355338
    %v5852 = vsel %vm987, %v5851, -inf
    %5853 = vmax.xlane.f32.xlu0 %v5852
    %v5854 = vpop.xlane.xlu0 %5853
    %v5855 = vsub.f32 %v5851, %v5854
    %v5856 = vmul.f32 %v5855, 1.442695
    %v5857 = vpow.pop %v5856
    %v5858 = vsel %vm987, %v5857, 0.0
    %5859 = vadd.xlane.f32.xlu0 %v5858
    %v5860 = vpop.xlane.xlu0 %5859
    %v5861 = vrcp.pop %v5860
    %v5862 = vmul.f32 %v5857, %v5861
    %v5864 = vsel %vm987, %v5862, 0
    %5866 = vmatprep.subr.mxu0 0.0
    %5867 = vmatpush1.msra.mxu0 %v2373
    %5868 = vmatprep.subr.mxu0 0.0
    %5869 = vmatpush1.msra.mxu0 %v2375
    %5870 = vmatprep.subr.mxu0 0.0
    %5871 = vmatpush1.msra.mxu0 0.0
    %5872 = vmatprep.subr.mxu0 0.0
    %5873 = vmatpush1.msra.mxu0 0.0
    %5874 = vmatprep.subr.mxu0 0.0
    %5875 = vmatpush1.msra.mxu0 0.0
    %5876 = vmatprep.subr.mxu0 0.0
    %5877 = vmatpush1.msra.mxu0 0.0
    %5878 = vmatprep.subr.mxu0 0.0
    %5879 = vmatpush1.msra.mxu0 0.0
    %5880 = vmatprep.subr.mxu0 0.0
    %5881 = vmatpush1.msra.mxu0 0.0
    %5882 = vmatprep.subr.mxu0 0.0
    %5883 = vmatpush1.msra.mxu0 0.0
    %5884 = vmatprep.subr.mxu0 0.0
    %5885 = vmatpush1.msra.mxu0 0.0
    %5886 = vmatprep.subr.mxu0 0.0
    %5887 = vmatpush1.msra.mxu0 0.0
    %5888 = vmatprep.subr.mxu0 0.0
    %5889 = vmatpush1.msra.mxu0 0.0
    %5890 = vmatprep.subr.mxu0 0.0
    %5891 = vmatpush1.msra.mxu0 0.0
    %5892 = vmatprep.subr.mxu0 0.0
    %5893 = vmatpush1.msra.mxu0 0.0
    %5894 = vmatprep.subr.mxu0 0.0
    %5895 = vmatpush1.msra.mxu0 0.0
    %5896 = vmatprep.subr.mxu0 0.0
    %5897 = vmatpush1.msra.mxu0 0.0
    %5898 = vmatprep.subr.mxu0 0.0
    %5899 = vmatpush1.msra.mxu0 0.0
    %5900 = vmatprep.subr.mxu0 0.0
    %5901 = vmatpush1.msra.mxu0 0.0
    %5902 = vmatprep.subr.mxu0 0.0
    %5903 = vmatpush1.msra.mxu0 0.0
    %5904 = vmatprep.subr.mxu0 0.0
    %5905 = vmatpush1.msra.mxu0 0.0
    %5906 = vmatprep.subr.mxu0 0.0
    %5907 = vmatpush1.msra.mxu0 0.0
    %5908 = vmatprep.subr.mxu0 0.0
    %5909 = vmatpush1.msra.mxu0 0.0
    %5910 = vmatprep.subr.mxu0 0.0
    %5911 = vmatpush1.msra.mxu0 0.0
    %5912 = vmatprep.subr.mxu0 0.0
    %5913 = vmatpush1.msra.mxu0 0.0
    %5914 = vmatprep.subr.mxu0 0.0
    %5915 = vmatpush1.msra.mxu0 0.0
    %5916 = vmatprep.subr.mxu0 0.0
    %5917 = vmatpush1.msra.mxu0 0.0
    %5918 = vmatprep.subr.mxu0 0.0
    %5919 = vmatpush1.msra.mxu0 0.0
    %5920 = vmatprep.subr.mxu0 0.0
    %5921 = vmatpush1.msra.mxu0 0.0
    %5922 = vmatprep.subr.mxu0 0.0
    %5923 = vmatpush1.msra.mxu0 0.0
    %5924 = vmatprep.subr.mxu0 0.0
    %5925 = vmatpush1.msra.mxu0 0.0
    %5926 = vmatprep.subr.mxu0 0.0
    %5927 = vmatpush1.msra.mxu0 0.0
    %5928 = vmatprep.subr.mxu0 0.0
    %5929 = vmatpush1.msra.mxu0 0.0
    %5930 = vmatprep.mubr.f32.mxu0 0.0
    %5931 = vmatmul.mubr.f32.gmra.mrb[0].mxu0 %v5864
    %v5932 = vpop.f32.mrb[0].mxu0
    %v5933 = vadd.f32 0.0, %v5932
    %v5934 = vpop.f32.mrb[0].mxu0
    %5935 = vdwg.mxu0
    %v5936 = vadd.f32 %v5703, %v5862
    %5937 = vrot.lane.b32.xlu0 %v5611, 112
    %v5938 = vpop.permute.xlu0 %5937
    %v5939 = vsel %vm315, %v5938, 0
    %5941 = vmatprep.subr.mxu0 0.0
    %5942 = vmatpush1.xpose.msra.mxu0 %v2460
    %5943 = vmatprep.subr.mxu0 0.0
    %5944 = vmatpush1.xpose.msra.mxu0 %v2462
    %5945 = vmatprep.subr.mxu0 0.0
    %5946 = vmatpush1.xpose.msra.mxu0 0.0
    %5947 = vmatprep.subr.mxu0 0.0
    %5948 = vmatpush1.xpose.msra.mxu0 0.0
    %5949 = vmatprep.subr.mxu0 0.0
    %5950 = vmatpush1.xpose.msra.mxu0 0.0
    %5951 = vmatprep.subr.mxu0 0.0
    %5952 = vmatpush1.xpose.msra.mxu0 0.0
    %5953 = vmatprep.subr.mxu0 0.0
    %5954 = vmatpush1.xpose.msra.mxu0 0.0
    %5955 = vmatprep.subr.mxu0 0.0
    %5956 = vmatpush1.xpose.msra.mxu0 0.0
    %5957 = vmatprep.subr.mxu0 0.0
    %5958 = vmatpush1.xpose.msra.mxu0 0.0
    %5959 = vmatprep.subr.mxu0 0.0
    %5960 = vmatpush1.xpose.msra.mxu0 0.0
    %5961 = vmatprep.subr.mxu0 0.0
    %5962 = vmatpush1.xpose.msra.mxu0 0.0
    %5963 = vmatprep.subr.mxu0 0.0
    %5964 = vmatpush1.xpose.msra.mxu0 0.0
    %5965 = vmatprep.subr.mxu0 0.0
    %5966 = vmatpush1.xpose.msra.mxu0 0.0
    %5967 = vmatprep.subr.mxu0 0.0
    %5968 = vmatpush1.xpose.msra.mxu0 0.0
    %5969 = vmatprep.subr.mxu0 0.0
    %5970 = vmatpush1.xpose.msra.mxu0 0.0
    %5971 = vmatprep.subr.mxu0 0.0
    %5972 = vmatpush1.xpose.msra.mxu0 0.0
    %5973 = vmatprep.subr.mxu0 0.0
    %5974 = vmatpush1.xpose.msra.mxu0 0.0
    %5975 = vmatprep.subr.mxu0 0.0
    %5976 = vmatpush1.xpose.msra.mxu0 0.0
    %5977 = vmatprep.subr.mxu0 0.0
    %5978 = vmatpush1.xpose.msra.mxu0 0.0
    %5979 = vmatprep.subr.mxu0 0.0
    %5980 = vmatpush1.xpose.msra.mxu0 0.0
    %5981 = vmatprep.subr.mxu0 0.0
    %5982 = vmatpush1.xpose.msra.mxu0 0.0
    %5983 = vmatprep.subr.mxu0 0.0
    %5984 = vmatpush1.xpose.msra.mxu0 0.0
    %5985 = vmatprep.subr.mxu0 0.0
    %5986 = vmatpush1.xpose.msra.mxu0 0.0
    %5987 = vmatprep.subr.mxu0 0.0
    %5988 = vmatpush1.xpose.msra.mxu0 0.0
    %5989 = vmatprep.subr.mxu0 0.0
    %5990 = vmatpush1.xpose.msra.mxu0 0.0
    %5991 = vmatprep.subr.mxu0 0.0
    %5992 = vmatpush1.xpose.msra.mxu0 0.0
    %5993 = vmatprep.subr.mxu0 0.0
    %5994 = vmatpush1.xpose.msra.mxu0 0.0
    %5995 = vmatprep.subr.mxu0 0.0
    %5996 = vmatpush1.xpose.msra.mxu0 0.0
    %5997 = vmatprep.subr.mxu0 0.0
    %5998 = vmatpush1.xpose.msra.mxu0 0.0
    %5999 = vmatprep.subr.mxu0 0.0
    %6000 = vmatpush1.xpose.msra.mxu0 0.0
    %6001 = vmatprep.subr.mxu0 0.0
    %6002 = vmatpush1.xpose.msra.mxu0 0.0
    %6003 = vmatprep.subr.mxu0 0.0
    %6004 = vmatpush1.xpose.msra.mxu0 0.0
    %6005 = vmatprep.mubr.f32.mxu0 0.0
    %6006 = vmatmul.mubr.f32.gmra.mrb[0].mxu0 %v5939
    %v6007 = vpop.f32.mrb[0].mxu0
    %v6008 = vadd.f32 0.0, %v6007
    %v6009 = vpop.f32.mrb[0].mxu0
    %6010 = vdwg.mxu0
    %v6011 = vmul.f32 %v6008, 0.35355338
    %v6012 = vsel %vm987, %v6011, -inf
    %6013 = vmax.xlane.f32.xlu0 %v6012
    %v6014 = vpop.xlane.xlu0 %6013
    %v6015 = vsub.f32 %v6011, %v6014
    %v6016 = vmul.f32 %v6015, 1.442695
    %v6017 = vpow.pop %v6016
    %v6018 = vsel %vm987, %v6017, 0.0
    %6019 = vadd.xlane.f32.xlu0 %v6018
    %v6020 = vpop.xlane.xlu0 %6019
    %v6021 = vrcp.pop %v6020
    %v6022 = vmul.f32 %v6017, %v6021
    %v6024 = vsel %vm987, %v6022, 0
    %6026 = vmatprep.subr.mxu0 0.0
    %6027 = vmatpush1.msra.mxu0 %v2547
    %6028 = vmatprep.subr.mxu0 0.0
    %6029 = vmatpush1.msra.mxu0 %v2549
    %6030 = vmatprep.subr.mxu0 0.0
    %6031 = vmatpush1.msra.mxu0 0.0
    %6032 = vmatprep.subr.mxu0 0.0
    %6033 = vmatpush1.msra.mxu0 0.0
    %6034 = vmatprep.subr.mxu0 0.0
    %6035 = vmatpush1.msra.mxu0 0.0
    %6036 = vmatprep.subr.mxu0 0.0
    %6037 = vmatpush1.msra.mxu0 0.0
    %6038 = vmatprep.subr.mxu0 0.0
    %6039 = vmatpush1.msra.mxu0 0.0
    %6040 = vmatprep.subr.mxu0 0.0
    %6041 = vmatpush1.msra.mxu0 0.0
    %6042 = vmatprep.subr.mxu0 0.0
    %6043 = vmatpush1.msra.mxu0 0.0
    %6044 = vmatprep.subr.mxu0 0.0
    %6045 = vmatpush1.msra.mxu0 0.0
    %6046 = vmatprep.subr.mxu0 0.0
    %6047 = vmatpush1.msra.mxu0 0.0
    %6048 = vmatprep.subr.mxu0 0.0
    %6049 = vmatpush1.msra.mxu0 0.0
    %6050 = vmatprep.subr.mxu0 0.0
    %6051 = vmatpush1.msra.mxu0 0.0
    %6052 = vmatprep.subr.mxu0 0.0
    %6053 = vmatpush1.msra.mxu0 0.0
    %6054 = vmatprep.subr.mxu0 0.0
    %6055 = vmatpush1.msra.mxu0 0.0
    %6056 = vmatprep.subr.mxu0 0.0
    %6057 = vmatpush1.msra.mxu0 0.0
    %6058 = vmatprep.subr.mxu0 0.0
    %6059 = vmatpush1.msra.mxu0 0.0
    %6060 = vmatprep.subr.mxu0 0.0
    %6061 = vmatpush1.msra.mxu0 0.0
    %6062 = vmatprep.subr.mxu0 0.0
    %6063 = vmatpush1.msra.mxu0 0.0
    %6064 = vmatprep.subr.mxu0 0.0
    %6065 = vmatpush1.msra.mxu0 0.0
    %6066 = vmatprep.subr.mxu0 0.0
    %6067 = vmatpush1.msra.mxu0 0.0
    %6068 = vmatprep.subr.mxu0 0.0
    %6069 = vmatpush1.msra.mxu0 0.0
    %6070 = vmatprep.subr.mxu0 0.0
    %6071 = vmatpush1.msra.mxu0 0.0
    %6072 = vmatprep.subr.mxu0 0.0
    %6073 = vmatpush1.msra.mxu0 0.0
    %6074 = vmatprep.subr.mxu0 0.0
    %6075 = vmatpush1.msra.mxu0 0.0
    %6076 = vmatprep.subr.mxu0 0.0
    %6077 = vmatpush1.msra.mxu0 0.0
    %6078 = vmatprep.subr.mxu0 0.0
    %6079 = vmatpush1.msra.mxu0 0.0
    %6080 = vmatprep.subr.mxu0 0.0
    %6081 = vmatpush1.msra.mxu0 0.0
    %6082 = vmatprep.subr.mxu0 0.0
    %6083 = vmatpush1.msra.mxu0 0.0
    %6084 = vmatprep.subr.mxu0 0.0
    %6085 = vmatpush1.msra.mxu0 0.0
    %6086 = vmatprep.subr.mxu0 0.0
    %6087 = vmatpush1.msra.mxu0 0.0
    %6088 = vmatprep.subr.mxu0 0.0
    %6089 = vmatpush1.msra.mxu0 0.0
    %6090 = vmatprep.mubr.f32.mxu0 0.0
    %6091 = vmatmul.mubr.f32.gmra.mrb[0].mxu0 %v6024
    %v6092 = vpop.f32.mrb[0].mxu0
    %v6093 = vadd.f32 0.0, %v6092
    %v6094 = vpop.f32.mrb[0].mxu0
    %6095 = vdwg.mxu0
    %v6096 = vadd.f32 %v5936, %v6022
    %6097 = vrot.lane.b32.xlu0 %v5611, 104
    %v6098 = vpop.permute.xlu0 %6097
    %v6099 = vsel %vm315, %v6098, 0
    %6101 = vmatprep.subr.mxu0 0.0
    %6102 = vmatpush1.xpose.msra.mxu0 %v2634
    %6103 = vmatprep.subr.mxu0 0.0
    %6104 = vmatpush1.xpose.msra.mxu0 %v2636
    %6105 = vmatprep.subr.mxu0 0.0
    %6106 = vmatpush1.xpose.msra.mxu0 0.0
    %6107 = vmatprep.subr.mxu0 0.0
    %6108 = vmatpush1.xpose.msra.mxu0 0.0
    %6109 = vmatprep.subr.mxu0 0.0
    %6110 = vmatpush1.xpose.msra.mxu0 0.0
    %6111 = vmatprep.subr.mxu0 0.0
    %6112 = vmatpush1.xpose.msra.mxu0 0.0
    %6113 = vmatprep.subr.mxu0 0.0
    %6114 = vmatpush1.xpose.msra.mxu0 0.0
    %6115 = vmatprep.subr.mxu0 0.0
    %6116 = vmatpush1.xpose.msra.mxu0 0.0
    %6117 = vmatprep.subr.mxu0 0.0
    %6118 = vmatpush1.xpose.msra.mxu0 0.0
    %6119 = vmatprep.subr.mxu0 0.0
    %6120 = vmatpush1.xpose.msra.mxu0 0.0
    %6121 = vmatprep.subr.mxu0 0.0
    %6122 = vmatpush1.xpose.msra.mxu0 0.0
    %6123 = vmatprep.subr.mxu0 0.0
    %6124 = vmatpush1.xpose.msra.mxu0 0.0
    %6125 = vmatprep.subr.mxu0 0.0
    %6126 = vmatpush1.xpose.msra.mxu0 0.0
    %6127 = vmatprep.subr.mxu0 0.0
    %6128 = vmatpush1.xpose.msra.mxu0 0.0
    %6129 = vmatprep.subr.mxu0 0.0
    %6130 = vmatpush1.xpose.msra.mxu0 0.0
    %6131 = vmatprep.subr.mxu0 0.0
    %6132 = vmatpush1.xpose.msra.mxu0 0.0
    %6133 = vmatprep.subr.mxu0 0.0
    %6134 = vmatpush1.xpose.msra.mxu0 0.0
    %6135 = vmatprep.subr.mxu0 0.0
    %6136 = vmatpush1.xpose.msra.mxu0 0.0
    %6137 = vmatprep.subr.mxu0 0.0
    %6138 = vmatpush1.xpose.msra.mxu0 0.0
    %6139 = vmatprep.subr.mxu0 0.0
    %6140 = vmatpush1.xpose.msra.mxu0 0.0
    %6141 = vmatprep.subr.mxu0 0.0
    %6142 = vmatpush1.xpose.msra.mxu0 0.0
    %6143 = vmatprep.subr.mxu0 0.0
    %6144 = vmatpush1.xpose.msra.mxu0 0.0
    %6145 = vmatprep.subr.mxu0 0.0
    %6146 = vmatpush1.xpose.msra.mxu0 0.0
    %6147 = vmatprep.subr.mxu0 0.0
    %6148 = vmatpush1.xpose.msra.mxu0 0.0
    %6149 = vmatprep.subr.mxu0 0.0
    %6150 = vmatpush1.xpose.msra.mxu0 0.0
    %6151 = vmatprep.subr.mxu0 0.0
    %6152 = vmatpush1.xpose.msra.mxu0 0.0
    %6153 = vmatprep.subr.mxu0 0.0
    %6154 = vmatpush1.xpose.msra.mxu0 0.0
    %6155 = vmatprep.subr.mxu0 0.0
    %6156 = vmatpush1.xpose.msra.mxu0 0.0
    %6157 = vmatprep.subr.mxu0 0.0
    %6158 = vmatpush1.xpose.msra.mxu0 0.0
    %6159 = vmatprep.subr.mxu0 0.0
    %6160 = vmatpush1.xpose.msra.mxu0 0.0
    %6161 = vmatprep.subr.mxu0 0.0
    %6162 = vmatpush1.xpose.msra.mxu0 0.0
    %6163 = vmatprep.subr.mxu0 0.0
    %6164 = vmatpush1.xpose.msra.mxu0 0.0
    %6165 = vmatprep.mubr.f32.mxu0 0.0
    %6166 = vmatmul.mubr.f32.gmra.mrb[0].mxu0 %v6099
    %v6167 = vpop.f32.mrb[0].mxu0
    %v6168 = vadd.f32 0.0, %v6167
    %v6169 = vpop.f32.mrb[0].mxu0
    %6170 = vdwg.mxu0
    %v6171 = vmul.f32 %v6168, 0.35355338
    %v6172 = vsel %vm987, %v6171, -inf
    %6173 = vmax.xlane.f32.xlu0 %v6172
    %v6174 = vpop.xlane.xlu0 %6173
    %v6175 = vsub.f32 %v6171, %v6174
    %v6176 = vmul.f32 %v6175, 1.442695
    %v6177 = vpow.pop %v6176
    %v6178 = vsel %vm987, %v6177, 0.0
    %6179 = vadd.xlane.f32.xlu0 %v6178
    %v6180 = vpop.xlane.xlu0 %6179
    %v6181 = vrcp.pop %v6180
    %v6182 = vmul.f32 %v6177, %v6181
    %v6184 = vsel %vm987, %v6182, 0
    %6186 = vmatprep.subr.mxu0 0.0
    %6187 = vmatpush1.msra.mxu0 %v2721
    %6188 = vmatprep.subr.mxu0 0.0
    %6189 = vmatpush1.msra.mxu0 %v2723
    %6190 = vmatprep.subr.mxu0 0.0
    %6191 = vmatpush1.msra.mxu0 0.0
    %6192 = vmatprep.subr.mxu0 0.0
    %6193 = vmatpush1.msra.mxu0 0.0
    %6194 = vmatprep.subr.mxu0 0.0
    %6195 = vmatpush1.msra.mxu0 0.0
    %6196 = vmatprep.subr.mxu0 0.0
    %6197 = vmatpush1.msra.mxu0 0.0
    %6198 = vmatprep.subr.mxu0 0.0
    %6199 = vmatpush1.msra.mxu0 0.0
    %6200 = vmatprep.subr.mxu0 0.0
    %6201 = vmatpush1.msra.mxu0 0.0
    %6202 = vmatprep.subr.mxu0 0.0
    %6203 = vmatpush1.msra.mxu0 0.0
    %6204 = vmatprep.subr.mxu0 0.0
    %6205 = vmatpush1.msra.mxu0 0.0
    %6206 = vmatprep.subr.mxu0 0.0
    %6207 = vmatpush1.msra.mxu0 0.0
    %6208 = vmatprep.subr.mxu0 0.0
    %6209 = vmatpush1.msra.mxu0 0.0
    %6210 = vmatprep.subr.mxu0 0.0
    %6211 = vmatpush1.msra.mxu0 0.0
    %6212 = vmatprep.subr.mxu0 0.0
    %6213 = vmatpush1.msra.mxu0 0.0
    %6214 = vmatprep.subr.mxu0 0.0
    %6215 = vmatpush1.msra.mxu0 0.0
    %6216 = vmatprep.subr.mxu0 0.0
    %6217 = vmatpush1.msra.mxu0 0.0
    %6218 = vmatprep.subr.mxu0 0.0
    %6219 = vmatpush1.msra.mxu0 0.0
    %6220 = vmatprep.subr.mxu0 0.0
    %6221 = vmatpush1.msra.mxu0 0.0
    %6222 = vmatprep.subr.mxu0 0.0
    %6223 = vmatpush1.msra.mxu0 0.0
    %6224 = vmatprep.subr.mxu0 0.0
    %6225 = vmatpush1.msra.mxu0 0.0
    %6226 = vmatprep.subr.mxu0 0.0
    %6227 = vmatpush1.msra.mxu0 0.0
    %6228 = vmatprep.subr.mxu0 0.0
    %6229 = vmatpush1.msra.mxu0 0.0
    %6230 = vmatprep.subr.mxu0 0.0
    %6231 = vmatpush1.msra.mxu0 0.0
    %6232 = vmatprep.subr.mxu0 0.0
    %6233 = vmatpush1.msra.mxu0 0.0
    %6234 = vmatprep.subr.mxu0 0.0
    %6235 = vmatpush1.msra.mxu0 0.0
    %6236 = vmatprep.subr.mxu0 0.0
    %6237 = vmatpush1.msra.mxu0 0.0
    %6238 = vmatprep.subr.mxu0 0.0
    %6239 = vmatpush1.msra.mxu0 0.0
    %6240 = vmatprep.subr.mxu0 0.0
    %6241 = vmatpush1.msra.mxu0 0.0
    %6242 = vmatprep.subr.mxu0 0.0
    %6243 = vmatpush1.msra.mxu0 0.0
    %6244 = vmatprep.subr.mxu0 0.0
    %6245 = vmatpush1.msra.mxu0 0.0
    %6246 = vmatprep.subr.mxu0 0.0
    %6247 = vmatpush1.msra.mxu0 0.0
    %6248 = vmatprep.subr.mxu0 0.0
    %6249 = vmatpush1.msra.mxu0 0.0
    %6250 = vmatprep.mubr.f32.mxu0 0.0
    %6251 = vmatmul.mubr.f32.gmra.mrb[0].mxu0 %v6184
    %v6252 = vpop.f32.mrb[0].mxu0
    %v6253 = vadd.f32 0.0, %v6252
    %v6254 = vpop.f32.mrb[0].mxu0
    %6255 = vdwg.mxu0
    %v6256 = vadd.f32 %v6096, %v6182
    %6258 = vrot.lane.b32.xlu0 %v5933, 8
    %v6259 = vpop.permute.xlu0 %6258
    %6262 = vrot.lane.b32.xlu0 %v6093, 16
    %v6263 = vpop.permute.xlu0 %6262
    %6266 = vrot.lane.b32.xlu0 %v6253, 24
    %v6267 = vpop.permute.xlu0 %6266
    %v6269 = vsel %vm315, %v5774, %v6259
    %v6270 = vsel %vm987, %v6269, %v6263
    %v6271 = vsel %vm989, %v6270, %v6267
    %v6272 = vmul.f32 %v6256, 0.25
    %v6274 = vsel %vm315, %v5616, 0
    %6276 = vmatprep.subr.mxu0 0.0
    %6277 = vmatpush1.xpose.msra.mxu0 %v2820
    %6278 = vmatprep.subr.mxu0 0.0
    %6279 = vmatpush1.xpose.msra.mxu0 %v2823
    %6280 = vmatprep.subr.mxu0 0.0
    %6281 = vmatpush1.xpose.msra.mxu0 0.0
    %6282 = vmatprep.subr.mxu0 0.0
    %6283 = vmatpush1.xpose.msra.mxu0 0.0
    %6284 = vmatprep.subr.mxu0 0.0
    %6285 = vmatpush1.xpose.msra.mxu0 0.0
    %6286 = vmatprep.subr.mxu0 0.0
    %6287 = vmatpush1.xpose.msra.mxu0 0.0
    %6288 = vmatprep.subr.mxu0 0.0
    %6289 = vmatpush1.xpose.msra.mxu0 0.0
    %6290 = vmatprep.subr.mxu0 0.0
    %6291 = vmatpush1.xpose.msra.mxu0 0.0
    %6292 = vmatprep.subr.mxu0 0.0
    %6293 = vmatpush1.xpose.msra.mxu0 0.0
    %6294 = vmatprep.subr.mxu0 0.0
    %6295 = vmatpush1.xpose.msra.mxu0 0.0
    %6296 = vmatprep.subr.mxu0 0.0
    %6297 = vmatpush1.xpose.msra.mxu0 0.0
    %6298 = vmatprep.subr.mxu0 0.0
    %6299 = vmatpush1.xpose.msra.mxu0 0.0
    %6300 = vmatprep.subr.mxu0 0.0
    %6301 = vmatpush1.xpose.msra.mxu0 0.0
    %6302 = vmatprep.subr.mxu0 0.0
    %6303 = vmatpush1.xpose.msra.mxu0 0.0
    %6304 = vmatprep.subr.mxu0 0.0
    %6305 = vmatpush1.xpose.msra.mxu0 0.0
    %6306 = vmatprep.subr.mxu0 0.0
    %6307 = vmatpush1.xpose.msra.mxu0 0.0
    %6308 = vmatprep.subr.mxu0 0.0
    %6309 = vmatpush1.xpose.msra.mxu0 0.0
    %6310 = vmatprep.subr.mxu0 0.0
    %6311 = vmatpush1.xpose.msra.mxu0 0.0
    %6312 = vmatprep.subr.mxu0 0.0
    %6313 = vmatpush1.xpose.msra.mxu0 0.0
    %6314 = vmatprep.subr.mxu0 0.0
    %6315 = vmatpush1.xpose.msra.mxu0 0.0
    %6316 = vmatprep.subr.mxu0 0.0
    %6317 = vmatpush1.xpose.msra.mxu0 0.0
    %6318 = vmatprep.subr.mxu0 0.0
    %6319 = vmatpush1.xpose.msra.mxu0 0.0
    %6320 = vmatprep.subr.mxu0 0.0
    %6321 = vmatpush1.xpose.msra.mxu0 0.0
    %6322 = vmatprep.subr.mxu0 0.0
    %6323 = vmatpush1.xpose.msra.mxu0 0.0
    %6324 = vmatprep.subr.mxu0 0.0
    %6325 = vmatpush1.xpose.msra.mxu0 0.0
    %6326 = vmatprep.subr.mxu0 0.0
    %6327 = vmatpush1.xpose.msra.mxu0 0.0
    %6328 = vmatprep.subr.mxu0 0.0
    %6329 = vmatpush1.xpose.msra.mxu0 0.0
    %6330 = vmatprep.subr.mxu0 0.0
    %6331 = vmatpush1.xpose.msra.mxu0 0.0
    %6332 = vmatprep.subr.mxu0 0.0
    %6333 = vmatpush1.xpose.msra.mxu0 0.0
    %6334 = vmatprep.subr.mxu0 0.0
    %6335 = vmatpush1.xpose.msra.mxu0 0.0
    %6336 = vmatprep.subr.mxu0 0.0
    %6337 = vmatpush1.xpose.msra.mxu0 0.0
    %6338 = vmatprep.subr.mxu0 0.0
    %6339 = vmatpush1.xpose.msra.mxu0 0.0
    %6340 = vmatprep.mubr.f32.mxu0 0.0
    %6341 = vmatmul.mubr.f32.gmra.mrb[0].mxu0 %v6274
    %v6342 = vpop.f32.mrb[0].mxu0
    %v6343 = vadd.f32 0.0, %v6342
    %v6344 = vpop.f32.mrb[0].mxu0
    %6345 = vdwg.mxu0
    %v6346 = vmul.f32 %v6343, 0.35355338
    %v6347 = vsel %vm987, %v6346, -inf
    %6348 = vmax.xlane.f32.xlu0 %v6347
    %v6349 = vpop.xlane.xlu0 %6348
    %v6350 = vsub.f32 %v6346, %v6349
    %v6351 = vmul.f32 %v6350, 1.442695
    %v6352 = vpow.pop %v6351
    %v6353 = vsel %vm987, %v6352, 0.0
    %6354 = vadd.xlane.f32.xlu0 %v6353
    %v6355 = vpop.xlane.xlu0 %6354
    %v6356 = vrcp.pop %v6355
    %v6357 = vmul.f32 %v6352, %v6356
    %v6359 = vsel %vm987, %v6357, 0
    %6361 = vmatprep.subr.mxu0 0.0
    %6362 = vmatpush1.msra.mxu0 %v2104
    %6363 = vmatprep.subr.mxu0 0.0
    %6364 = vmatpush1.msra.mxu0 %v2109
    %6365 = vmatprep.subr.mxu0 0.0
    %6366 = vmatpush1.msra.mxu0 0.0
    %6367 = vmatprep.subr.mxu0 0.0
    %6368 = vmatpush1.msra.mxu0 0.0
    %6369 = vmatprep.subr.mxu0 0.0
    %6370 = vmatpush1.msra.mxu0 0.0
    %6371 = vmatprep.subr.mxu0 0.0
    %6372 = vmatpush1.msra.mxu0 0.0
    %6373 = vmatprep.subr.mxu0 0.0
    %6374 = vmatpush1.msra.mxu0 0.0
    %6375 = vmatprep.subr.mxu0 0.0
    %6376 = vmatpush1.msra.mxu0 0.0
    %6377 = vmatprep.subr.mxu0 0.0
    %6378 = vmatpush1.msra.mxu0 0.0
    %6379 = vmatprep.subr.mxu0 0.0
    %6380 = vmatpush1.msra.mxu0 0.0
    %6381 = vmatprep.subr.mxu0 0.0
    %6382 = vmatpush1.msra.mxu0 0.0
    %6383 = vmatprep.subr.mxu0 0.0
    %6384 = vmatpush1.msra.mxu0 0.0
    %6385 = vmatprep.subr.mxu0 0.0
    %6386 = vmatpush1.msra.mxu0 0.0
    %6387 = vmatprep.subr.mxu0 0.0
    %6388 = vmatpush1.msra.mxu0 0.0
    %6389 = vmatprep.subr.mxu0 0.0
    %6390 = vmatpush1.msra.mxu0 0.0
    %6391 = vmatprep.subr.mxu0 0.0
    %6392 = vmatpush1.msra.mxu0 0.0
    %6393 = vmatprep.subr.mxu0 0.0
    %6394 = vmatpush1.msra.mxu0 0.0
    %6395 = vmatprep.subr.mxu0 0.0
    %6396 = vmatpush1.msra.mxu0 0.0
    %6397 = vmatprep.subr.mxu0 0.0
    %6398 = vmatpush1.msra.mxu0 0.0
    %6399 = vmatprep.subr.mxu0 0.0
    %6400 = vmatpush1.msra.mxu0 0.0
    %6401 = vmatprep.subr.mxu0 0.0
    %6402 = vmatpush1.msra.mxu0 0.0
    %6403 = vmatprep.subr.mxu0 0.0
    %6404 = vmatpush1.msra.mxu0 0.0
    %6405 = vmatprep.subr.mxu0 0.0
    %6406 = vmatpush1.msra.mxu0 0.0
    %6407 = vmatprep.subr.mxu0 0.0
    %6408 = vmatpush1.msra.mxu0 0.0
    %6409 = vmatprep.subr.mxu0 0.0
    %6410 = vmatpush1.msra.mxu0 0.0
    %6411 = vmatprep.subr.mxu0 0.0
    %6412 = vmatpush1.msra.mxu0 0.0
    %6413 = vmatprep.subr.mxu0 0.0
    %6414 = vmatpush1.msra.mxu0 0.0
    %6415 = vmatprep.subr.mxu0 0.0
    %6416 = vmatpush1.msra.mxu0 0.0
    %6417 = vmatprep.subr.mxu0 0.0
    %6418 = vmatpush1.msra.mxu0 0.0
    %6419 = vmatprep.subr.mxu0 0.0
    %6420 = vmatpush1.msra.mxu0 0.0
    %6421 = vmatprep.subr.mxu0 0.0
    %6422 = vmatpush1.msra.mxu0 0.0
    %6423 = vmatprep.subr.mxu0 0.0
    %6424 = vmatpush1.msra.mxu0 0.0
    %6425 = vmatprep.mubr.f32.mxu0 0.0
    %6426 = vmatmul.mubr.f32.gmra.mrb[0].mxu0 %v6359
    %v6427 = vpop.f32.mrb[0].mxu0
    %v6428 = vadd.f32 0.0, %v6427
    %v6429 = vpop.f32.mrb[0].mxu0
    %6430 = vdwg.mxu0
    %6431 = vrot.lane.b32.xlu0 %v5616, 120
    %v6432 = vpop.permute.xlu0 %6431
    %v6433 = vsel %vm315, %v6432, 0
    %6435 = vmatprep.subr.mxu0 0.0
    %6436 = vmatpush1.xpose.msra.mxu0 %v2988
    %6437 = vmatprep.subr.mxu0 0.0
    %6438 = vmatpush1.xpose.msra.mxu0 %v2990
    %6439 = vmatprep.subr.mxu0 0.0
    %6440 = vmatpush1.xpose.msra.mxu0 0.0
    %6441 = vmatprep.subr.mxu0 0.0
    %6442 = vmatpush1.xpose.msra.mxu0 0.0
    %6443 = vmatprep.subr.mxu0 0.0
    %6444 = vmatpush1.xpose.msra.mxu0 0.0
    %6445 = vmatprep.subr.mxu0 0.0
    %6446 = vmatpush1.xpose.msra.mxu0 0.0
    %6447 = vmatprep.subr.mxu0 0.0
    %6448 = vmatpush1.xpose.msra.mxu0 0.0
    %6449 = vmatprep.subr.mxu0 0.0
    %6450 = vmatpush1.xpose.msra.mxu0 0.0
    %6451 = vmatprep.subr.mxu0 0.0
    %6452 = vmatpush1.xpose.msra.mxu0 0.0
    %6453 = vmatprep.subr.mxu0 0.0
    %6454 = vmatpush1.xpose.msra.mxu0 0.0
    %6455 = vmatprep.subr.mxu0 0.0
    %6456 = vmatpush1.xpose.msra.mxu0 0.0
    %6457 = vmatprep.subr.mxu0 0.0
    %6458 = vmatpush1.xpose.msra.mxu0 0.0
    %6459 = vmatprep.subr.mxu0 0.0
    %6460 = vmatpush1.xpose.msra.mxu0 0.0
    %6461 = vmatprep.subr.mxu0 0.0
    %6462 = vmatpush1.xpose.msra.mxu0 0.0
    %6463 = vmatprep.subr.mxu0 0.0
    %6464 = vmatpush1.xpose.msra.mxu0 0.0
    %6465 = vmatprep.subr.mxu0 0.0
    %6466 = vmatpush1.xpose.msra.mxu0 0.0
    %6467 = vmatprep.subr.mxu0 0.0
    %6468 = vmatpush1.xpose.msra.mxu0 0.0
    %6469 = vmatprep.subr.mxu0 0.0
    %6470 = vmatpush1.xpose.msra.mxu0 0.0
    %6471 = vmatprep.subr.mxu0 0.0
    %6472 = vmatpush1.xpose.msra.mxu0 0.0
    %6473 = vmatprep.subr.mxu0 0.0
    %6474 = vmatpush1.xpose.msra.mxu0 0.0
    %6475 = vmatprep.subr.mxu0 0.0
    %6476 = vmatpush1.xpose.msra.mxu0 0.0
    %6477 = vmatprep.subr.mxu0 0.0
    %6478 = vmatpush1.xpose.msra.mxu0 0.0
    %6479 = vmatprep.subr.mxu0 0.0
    %6480 = vmatpush1.xpose.msra.mxu0 0.0
    %6481 = vmatprep.subr.mxu0 0.0
    %6482 = vmatpush1.xpose.msra.mxu0 0.0
    %6483 = vmatprep.subr.mxu0 0.0
    %6484 = vmatpush1.xpose.msra.mxu0 0.0
    %6485 = vmatprep.subr.mxu0 0.0
    %6486 = vmatpush1.xpose.msra.mxu0 0.0
    %6487 = vmatprep.subr.mxu0 0.0
    %6488 = vmatpush1.xpose.msra.mxu0 0.0
    %6489 = vmatprep.subr.mxu0 0.0
    %6490 = vmatpush1.xpose.msra.mxu0 0.0
    %6491 = vmatprep.subr.mxu0 0.0
    %6492 = vmatpush1.xpose.msra.mxu0 0.0
    %6493 = vmatprep.subr.mxu0 0.0
    %6494 = vmatpush1.xpose.msra.mxu0 0.0
    %6495 = vmatprep.subr.mxu0 0.0
    %6496 = vmatpush1.xpose.msra.mxu0 0.0
    %6497 = vmatprep.subr.mxu0 0.0
    %6498 = vmatpush1.xpose.msra.mxu0 0.0
    %6499 = vmatprep.mubr.f32.mxu0 0.0
    %6500 = vmatmul.mubr.f32.gmra.mrb[0].mxu0 %v6433
    %v6501 = vpop.f32.mrb[0].mxu0
    %v6502 = vadd.f32 0.0, %v6501
    %v6503 = vpop.f32.mrb[0].mxu0
    %6504 = vdwg.mxu0
    %v6505 = vmul.f32 %v6502, 0.35355338
    %v6506 = vsel %vm987, %v6505, -inf
    %6507 = vmax.xlane.f32.xlu0 %v6506
    %v6508 = vpop.xlane.xlu0 %6507
    %v6509 = vsub.f32 %v6505, %v6508
    %v6510 = vmul.f32 %v6509, 1.442695
    %v6511 = vpow.pop %v6510
    %v6512 = vsel %vm987, %v6511, 0.0
    %6513 = vadd.xlane.f32.xlu0 %v6512
    %v6514 = vpop.xlane.xlu0 %6513
    %v6515 = vrcp.pop %v6514
    %v6516 = vmul.f32 %v6511, %v6515
    %v6518 = vsel %vm987, %v6516, 0
    %6520 = vmatprep.subr.mxu0 0.0
    %6521 = vmatpush1.msra.mxu0 %v3077
    %6522 = vmatprep.subr.mxu0 0.0
    %6523 = vmatpush1.msra.mxu0 %v3079
    %6524 = vmatprep.subr.mxu0 0.0
    %6525 = vmatpush1.msra.mxu0 0.0
    %6526 = vmatprep.subr.mxu0 0.0
    %6527 = vmatpush1.msra.mxu0 0.0
    %6528 = vmatprep.subr.mxu0 0.0
    %6529 = vmatpush1.msra.mxu0 0.0
    %6530 = vmatprep.subr.mxu0 0.0
    %6531 = vmatpush1.msra.mxu0 0.0
    %6532 = vmatprep.subr.mxu0 0.0
    %6533 = vmatpush1.msra.mxu0 0.0
    %6534 = vmatprep.subr.mxu0 0.0
    %6535 = vmatpush1.msra.mxu0 0.0
    %6536 = vmatprep.subr.mxu0 0.0
    %6537 = vmatpush1.msra.mxu0 0.0
    %6538 = vmatprep.subr.mxu0 0.0
    %6539 = vmatpush1.msra.mxu0 0.0
    %6540 = vmatprep.subr.mxu0 0.0
    %6541 = vmatpush1.msra.mxu0 0.0
    %6542 = vmatprep.subr.mxu0 0.0
    %6543 = vmatpush1.msra.mxu0 0.0
    %6544 = vmatprep.subr.mxu0 0.0
    %6545 = vmatpush1.msra.mxu0 0.0
    %6546 = vmatprep.subr.mxu0 0.0
    %6547 = vmatpush1.msra.mxu0 0.0
    %6548 = vmatprep.subr.mxu0 0.0
    %6549 = vmatpush1.msra.mxu0 0.0
    %6550 = vmatprep.subr.mxu0 0.0
    %6551 = vmatpush1.msra.mxu0 0.0
    %6552 = vmatprep.subr.mxu0 0.0
    %6553 = vmatpush1.msra.mxu0 0.0
    %6554 = vmatprep.subr.mxu0 0.0
    %6555 = vmatpush1.msra.mxu0 0.0
    %6556 = vmatprep.subr.mxu0 0.0
    %6557 = vmatpush1.msra.mxu0 0.0
    %6558 = vmatprep.subr.mxu0 0.0
    %6559 = vmatpush1.msra.mxu0 0.0
    %6560 = vmatprep.subr.mxu0 0.0
    %6561 = vmatpush1.msra.mxu0 0.0
    %6562 = vmatprep.subr.mxu0 0.0
    %6563 = vmatpush1.msra.mxu0 0.0
    %6564 = vmatprep.subr.mxu0 0.0
    %6565 = vmatpush1.msra.mxu0 0.0
    %6566 = vmatprep.subr.mxu0 0.0
    %6567 = vmatpush1.msra.mxu0 0.0
    %6568 = vmatprep.subr.mxu0 0.0
    %6569 = vmatpush1.msra.mxu0 0.0
    %6570 = vmatprep.subr.mxu0 0.0
    %6571 = vmatpush1.msra.mxu0 0.0
    %6572 = vmatprep.subr.mxu0 0.0
    %6573 = vmatpush1.msra.mxu0 0.0
    %6574 = vmatprep.subr.mxu0 0.0
    %6575 = vmatpush1.msra.mxu0 0.0
    %6576 = vmatprep.subr.mxu0 0.0
    %6577 = vmatpush1.msra.mxu0 0.0
    %6578 = vmatprep.subr.mxu0 0.0
    %6579 = vmatpush1.msra.mxu0 0.0
    %6580 = vmatprep.subr.mxu0 0.0
    %6581 = vmatpush1.msra.mxu0 0.0
    %6582 = vmatprep.subr.mxu0 0.0
    %6583 = vmatpush1.msra.mxu0 0.0
    %6584 = vmatprep.mubr.f32.mxu0 0.0
    %6585 = vmatmul.mubr.f32.gmra.mrb[0].mxu0 %v6518
    %v6586 = vpop.f32.mrb[0].mxu0
    %v6587 = vadd.f32 0.0, %v6586
    %v6588 = vpop.f32.mrb[0].mxu0
    %6589 = vdwg.mxu0
    %v6590 = vadd.f32 %v6357, %v6516
    %6591 = vrot.lane.b32.xlu0 %v5616, 112
    %v6592 = vpop.permute.xlu0 %6591
    %v6593 = vsel %vm315, %v6592, 0
    %6595 = vmatprep.subr.mxu0 0.0
    %6596 = vmatpush1.xpose.msra.mxu0 %v3164
    %6597 = vmatprep.subr.mxu0 0.0
    %6598 = vmatpush1.xpose.msra.mxu0 %v3166
    %6599 = vmatprep.subr.mxu0 0.0
    %6600 = vmatpush1.xpose.msra.mxu0 0.0
    %6601 = vmatprep.subr.mxu0 0.0
    %6602 = vmatpush1.xpose.msra.mxu0 0.0
    %6603 = vmatprep.subr.mxu0 0.0
    %6604 = vmatpush1.xpose.msra.mxu0 0.0
    %6605 = vmatprep.subr.mxu0 0.0
    %6606 = vmatpush1.xpose.msra.mxu0 0.0
    %6607 = vmatprep.subr.mxu0 0.0
    %6608 = vmatpush1.xpose.msra.mxu0 0.0
    %6609 = vmatprep.subr.mxu0 0.0
    %6610 = vmatpush1.xpose.msra.mxu0 0.0
    %6611 = vmatprep.subr.mxu0 0.0
    %6612 = vmatpush1.xpose.msra.mxu0 0.0
    %6613 = vmatprep.subr.mxu0 0.0
    %6614 = vmatpush1.xpose.msra.mxu0 0.0
    %6615 = vmatprep.subr.mxu0 0.0
    %6616 = vmatpush1.xpose.msra.mxu0 0.0
    %6617 = vmatprep.subr.mxu0 0.0
    %6618 = vmatpush1.xpose.msra.mxu0 0.0
    %6619 = vmatprep.subr.mxu0 0.0
    %6620 = vmatpush1.xpose.msra.mxu0 0.0
    %6621 = vmatprep.subr.mxu0 0.0
    %6622 = vmatpush1.xpose.msra.mxu0 0.0
    %6623 = vmatprep.subr.mxu0 0.0
    %6624 = vmatpush1.xpose.msra.mxu0 0.0
    %6625 = vmatprep.subr.mxu0 0.0
    %6626 = vmatpush1.xpose.msra.mxu0 0.0
    %6627 = vmatprep.subr.mxu0 0.0
    %6628 = vmatpush1.xpose.msra.mxu0 0.0
    %6629 = vmatprep.subr.mxu0 0.0
    %6630 = vmatpush1.xpose.msra.mxu0 0.0
    %6631 = vmatprep.subr.mxu0 0.0
    %6632 = vmatpush1.xpose.msra.mxu0 0.0
    %6633 = vmatprep.subr.mxu0 0.0
    %6634 = vmatpush1.xpose.msra.mxu0 0.0
    %6635 = vmatprep.subr.mxu0 0.0
    %6636 = vmatpush1.xpose.msra.mxu0 0.0
    %6637 = vmatprep.subr.mxu0 0.0
    %6638 = vmatpush1.xpose.msra.mxu0 0.0
    %6639 = vmatprep.subr.mxu0 0.0
    %6640 = vmatpush1.xpose.msra.mxu0 0.0
    %6641 = vmatprep.subr.mxu0 0.0
    %6642 = vmatpush1.xpose.msra.mxu0 0.0
    %6643 = vmatprep.subr.mxu0 0.0
    %6644 = vmatpush1.xpose.msra.mxu0 0.0
    %6645 = vmatprep.subr.mxu0 0.0
    %6646 = vmatpush1.xpose.msra.mxu0 0.0
    %6647 = vmatprep.subr.mxu0 0.0
    %6648 = vmatpush1.xpose.msra.mxu0 0.0
    %6649 = vmatprep.subr.mxu0 0.0
    %6650 = vmatpush1.xpose.msra.mxu0 0.0
    %6651 = vmatprep.subr.mxu0 0.0
    %6652 = vmatpush1.xpose.msra.mxu0 0.0
    %6653 = vmatprep.subr.mxu0 0.0
    %6654 = vmatpush1.xpose.msra.mxu0 0.0
    %6655 = vmatprep.subr.mxu0 0.0
    %6656 = vmatpush1.xpose.msra.mxu0 0.0
    %6657 = vmatprep.subr.mxu0 0.0
    %6658 = vmatpush1.xpose.msra.mxu0 0.0
    %6659 = vmatprep.mubr.f32.mxu0 0.0
    %6660 = vmatmul.mubr.f32.gmra.mrb[0].mxu0 %v6593
    %v6661 = vpop.f32.mrb[0].mxu0
    %v6662 = vadd.f32 0.0, %v6661
    %v6663 = vpop.f32.mrb[0].mxu0
    %6664 = vdwg.mxu0
    %v6665 = vmul.f32 %v6662, 0.35355338
    %v6666 = vsel %vm987, %v6665, -inf
    %6667 = vmax.xlane.f32.xlu0 %v6666
    %v6668 = vpop.xlane.xlu0 %6667
    %v6669 = vsub.f32 %v6665, %v6668
    %v6670 = vmul.f32 %v6669, 1.442695
    %v6671 = vpow.pop %v6670
    %v6672 = vsel %vm987, %v6671, 0.0
    %6673 = vadd.xlane.f32.xlu0 %v6672
    %v6674 = vpop.xlane.xlu0 %6673
    %v6675 = vrcp.pop %v6674
    %v6676 = vmul.f32 %v6671, %v6675
    %v6678 = vsel %vm987, %v6676, 0
    %6680 = vmatprep.subr.mxu0 0.0
    %6681 = vmatpush1.msra.mxu0 %v3251
    %6682 = vmatprep.subr.mxu0 0.0
    %6683 = vmatpush1.msra.mxu0 %v3253
    %6684 = vmatprep.subr.mxu0 0.0
    %6685 = vmatpush1.msra.mxu0 0.0
    %6686 = vmatprep.subr.mxu0 0.0
    %6687 = vmatpush1.msra.mxu0 0.0
    %6688 = vmatprep.subr.mxu0 0.0
    %6689 = vmatpush1.msra.mxu0 0.0
    %6690 = vmatprep.subr.mxu0 0.0
    %6691 = vmatpush1.msra.mxu0 0.0
    %6692 = vmatprep.subr.mxu0 0.0
    %6693 = vmatpush1.msra.mxu0 0.0
    %6694 = vmatprep.subr.mxu0 0.0
    %6695 = vmatpush1.msra.mxu0 0.0
    %6696 = vmatprep.subr.mxu0 0.0
    %6697 = vmatpush1.msra.mxu0 0.0
    %6698 = vmatprep.subr.mxu0 0.0
    %6699 = vmatpush1.msra.mxu0 0.0
    %6700 = vmatprep.subr.mxu0 0.0
    %6701 = vmatpush1.msra.mxu0 0.0
    %6702 = vmatprep.subr.mxu0 0.0
    %6703 = vmatpush1.msra.mxu0 0.0
    %6704 = vmatprep.subr.mxu0 0.0
    %6705 = vmatpush1.msra.mxu0 0.0
    %6706 = vmatprep.subr.mxu0 0.0
    %6707 = vmatpush1.msra.mxu0 0.0
    %6708 = vmatprep.subr.mxu0 0.0
    %6709 = vmatpush1.msra.mxu0 0.0
    %6710 = vmatprep.subr.mxu0 0.0
    %6711 = vmatpush1.msra.mxu0 0.0
    %6712 = vmatprep.subr.mxu0 0.0
    %6713 = vmatpush1.msra.mxu0 0.0
    %6714 = vmatprep.subr.mxu0 0.0
    %6715 = vmatpush1.msra.mxu0 0.0
    %6716 = vmatprep.subr.mxu0 0.0
    %6717 = vmatpush1.msra.mxu0 0.0
    %6718 = vmatprep.subr.mxu0 0.0
    %6719 = vmatpush1.msra.mxu0 0.0
    %6720 = vmatprep.subr.mxu0 0.0
    %6721 = vmatpush1.msra.mxu0 0.0
    %6722 = vmatprep.subr.mxu0 0.0
    %6723 = vmatpush1.msra.mxu0 0.0
    %6724 = vmatprep.subr.mxu0 0.0
    %6725 = vmatpush1.msra.mxu0 0.0
    %6726 = vmatprep.subr.mxu0 0.0
    %6727 = vmatpush1.msra.mxu0 0.0
    %6728 = vmatprep.subr.mxu0 0.0
    %6729 = vmatpush1.msra.mxu0 0.0
    %6730 = vmatprep.subr.mxu0 0.0
    %6731 = vmatpush1.msra.mxu0 0.0
    %6732 = vmatprep.subr.mxu0 0.0
    %6733 = vmatpush1.msra.mxu0 0.0
    %6734 = vmatprep.subr.mxu0 0.0
    %6735 = vmatpush1.msra.mxu0 0.0
    %6736 = vmatprep.subr.mxu0 0.0
    %6737 = vmatpush1.msra.mxu0 0.0
    %6738 = vmatprep.subr.mxu0 0.0
    %6739 = vmatpush1.msra.mxu0 0.0
    %6740 = vmatprep.subr.mxu0 0.0
    %6741 = vmatpush1.msra.mxu0 0.0
    %6742 = vmatprep.subr.mxu0 0.0
    %6743 = vmatpush1.msra.mxu0 0.0
    %6744 = vmatprep.mubr.f32.mxu0 0.0
    %6745 = vmatmul.mubr.f32.gmra.mrb[0].mxu0 %v6678
    %v6746 = vpop.f32.mrb[0].mxu0
    %v6747 = vadd.f32 0.0, %v6746
    %v6748 = vpop.f32.mrb[0].mxu0
    %6749 = vdwg.mxu0
    %v6750 = vadd.f32 %v6590, %v6676
    %6751 = vrot.lane.b32.xlu0 %v5616, 104
    %v6752 = vpop.permute.xlu0 %6751
    %v6753 = vsel %vm315, %v6752, 0
    %6755 = vmatprep.subr.mxu0 0.0
    %6756 = vmatpush1.xpose.msra.mxu0 %v3338
    %6757 = vmatprep.subr.mxu0 0.0
    %6758 = vmatpush1.xpose.msra.mxu0 %v3340
    %6759 = vmatprep.subr.mxu0 0.0
    %6760 = vmatpush1.xpose.msra.mxu0 0.0
    %6761 = vmatprep.subr.mxu0 0.0
    %6762 = vmatpush1.xpose.msra.mxu0 0.0
    %6763 = vmatprep.subr.mxu0 0.0
    %6764 = vmatpush1.xpose.msra.mxu0 0.0
    %6765 = vmatprep.subr.mxu0 0.0
    %6766 = vmatpush1.xpose.msra.mxu0 0.0
    %6767 = vmatprep.subr.mxu0 0.0
    %6768 = vmatpush1.xpose.msra.mxu0 0.0
    %6769 = vmatprep.subr.mxu0 0.0
    %6770 = vmatpush1.xpose.msra.mxu0 0.0
    %6771 = vmatprep.subr.mxu0 0.0
    %6772 = vmatpush1.xpose.msra.mxu0 0.0
    %6773 = vmatprep.subr.mxu0 0.0
    %6774 = vmatpush1.xpose.msra.mxu0 0.0
    %6775 = vmatprep.subr.mxu0 0.0
    %6776 = vmatpush1.xpose.msra.mxu0 0.0
    %6777 = vmatprep.subr.mxu0 0.0
    %6778 = vmatpush1.xpose.msra.mxu0 0.0
    %6779 = vmatprep.subr.mxu0 0.0
    %6780 = vmatpush1.xpose.msra.mxu0 0.0
    %6781 = vmatprep.subr.mxu0 0.0
    %6782 = vmatpush1.xpose.msra.mxu0 0.0
    %6783 = vmatprep.subr.mxu0 0.0
    %6784 = vmatpush1.xpose.msra.mxu0 0.0
    %6785 = vmatprep.subr.mxu0 0.0
    %6786 = vmatpush1.xpose.msra.mxu0 0.0
    %6787 = vmatprep.subr.mxu0 0.0
    %6788 = vmatpush1.xpose.msra.mxu0 0.0
    %6789 = vmatprep.subr.mxu0 0.0
    %6790 = vmatpush1.xpose.msra.mxu0 0.0
    %6791 = vmatprep.subr.mxu0 0.0
    %6792 = vmatpush1.xpose.msra.mxu0 0.0
    %6793 = vmatprep.subr.mxu0 0.0
    %6794 = vmatpush1.xpose.msra.mxu0 0.0
    %6795 = vmatprep.subr.mxu0 0.0
    %6796 = vmatpush1.xpose.msra.mxu0 0.0
    %6797 = vmatprep.subr.mxu0 0.0
    %6798 = vmatpush1.xpose.msra.mxu0 0.0
    %6799 = vmatprep.subr.mxu0 0.0
    %6800 = vmatpush1.xpose.msra.mxu0 0.0
    %6801 = vmatprep.subr.mxu0 0.0
    %6802 = vmatpush1.xpose.msra.mxu0 0.0
    %6803 = vmatprep.subr.mxu0 0.0
    %6804 = vmatpush1.xpose.msra.mxu0 0.0
    %6805 = vmatprep.subr.mxu0 0.0
    %6806 = vmatpush1.xpose.msra.mxu0 0.0
    %6807 = vmatprep.subr.mxu0 0.0
    %6808 = vmatpush1.xpose.msra.mxu0 0.0
    %6809 = vmatprep.subr.mxu0 0.0
    %6810 = vmatpush1.xpose.msra.mxu0 0.0
    %6811 = vmatprep.subr.mxu0 0.0
    %6812 = vmatpush1.xpose.msra.mxu0 0.0
    %6813 = vmatprep.subr.mxu0 0.0
    %6814 = vmatpush1.xpose.msra.mxu0 0.0
    %6815 = vmatprep.subr.mxu0 0.0
    %6816 = vmatpush1.xpose.msra.mxu0 0.0
    %6817 = vmatprep.subr.mxu0 0.0
    %6818 = vmatpush1.xpose.msra.mxu0 0.0
    %6819 = vmatprep.mubr.f32.mxu0 0.0
    %6820 = vmatmul.mubr.f32.gmra.mrb[0].mxu0 %v6753
    %v6821 = vpop.f32.mrb[0].mxu0
    %v6822 = vadd.f32 0.0, %v6821
    %v6823 = vpop.f32.mrb[0].mxu0
    %6824 = vdwg.mxu0
    %v6825 = vmul.f32 %v6822, 0.35355338
    %v6826 = vsel %vm987, %v6825, -inf
    %6827 = vmax.xlane.f32.xlu0 %v6826
    %v6828 = vpop.xlane.xlu0 %6827
    %v6829 = vsub.f32 %v6825, %v6828
    %v6830 = vmul.f32 %v6829, 1.442695
    %v6831 = vpow.pop %v6830
    %v6832 = vsel %vm987, %v6831, 0.0
    %6833 = vadd.xlane.f32.xlu0 %v6832
    %v6834 = vpop.xlane.xlu0 %6833
    %v6835 = vrcp.pop %v6834
    %v6836 = vmul.f32 %v6831, %v6835
    %v6838 = vsel %vm987, %v6836, 0
    %6840 = vmatprep.subr.mxu0 0.0
    %6841 = vmatpush1.msra.mxu0 %v3425
    %6842 = vmatprep.subr.mxu0 0.0
    %6843 = vmatpush1.msra.mxu0 %v3427
    %6844 = vmatprep.subr.mxu0 0.0
    %6845 = vmatpush1.msra.mxu0 0.0
    %6846 = vmatprep.subr.mxu0 0.0
    %6847 = vmatpush1.msra.mxu0 0.0
    %6848 = vmatprep.subr.mxu0 0.0
    %6849 = vmatpush1.msra.mxu0 0.0
    %6850 = vmatprep.subr.mxu0 0.0
    %6851 = vmatpush1.msra.mxu0 0.0
    %6852 = vmatprep.subr.mxu0 0.0
    %6853 = vmatpush1.msra.mxu0 0.0
    %6854 = vmatprep.subr.mxu0 0.0
    %6855 = vmatpush1.msra.mxu0 0.0
    %6856 = vmatprep.subr.mxu0 0.0
    %6857 = vmatpush1.msra.mxu0 0.0
    %6858 = vmatprep.subr.mxu0 0.0
    %6859 = vmatpush1.msra.mxu0 0.0
    %6860 = vmatprep.subr.mxu0 0.0
    %6861 = vmatpush1.msra.mxu0 0.0
    %6862 = vmatprep.subr.mxu0 0.0
    %6863 = vmatpush1.msra.mxu0 0.0
    %6864 = vmatprep.subr.mxu0 0.0
    %6865 = vmatpush1.msra.mxu0 0.0
    %6866 = vmatprep.subr.mxu0 0.0
    %6867 = vmatpush1.msra.mxu0 0.0
    %6868 = vmatprep.subr.mxu0 0.0
    %6869 = vmatpush1.msra.mxu0 0.0
    %6870 = vmatprep.subr.mxu0 0.0
    %6871 = vmatpush1.msra.mxu0 0.0
    %6872 = vmatprep.subr.mxu0 0.0
    %6873 = vmatpush1.msra.mxu0 0.0
    %6874 = vmatprep.subr.mxu0 0.0
    %6875 = vmatpush1.msra.mxu0 0.0
    %6876 = vmatprep.subr.mxu0 0.0
    %6877 = vmatpush1.msra.mxu0 0.0
    %6878 = vmatprep.subr.mxu0 0.0
    %6879 = vmatpush1.msra.mxu0 0.0
    %6880 = vmatprep.subr.mxu0 0.0
    %6881 = vmatpush1.msra.mxu0 0.0
    %6882 = vmatprep.subr.mxu0 0.0
    %6883 = vmatpush1.msra.mxu0 0.0
    %6884 = vmatprep.subr.mxu0 0.0
    %6885 = vmatpush1.msra.mxu0 0.0
    %6886 = vmatprep.subr.mxu0 0.0
    %6887 = vmatpush1.msra.mxu0 0.0
    %6888 = vmatprep.subr.mxu0 0.0
    %6889 = vmatpush1.msra.mxu0 0.0
    %6890 = vmatprep.subr.mxu0 0.0
    %6891 = vmatpush1.msra.mxu0 0.0
    %6892 = vmatprep.subr.mxu0 0.0
    %6893 = vmatpush1.msra.mxu0 0.0
    %6894 = vmatprep.subr.mxu0 0.0
    %6895 = vmatpush1.msra.mxu0 0.0
    %6896 = vmatprep.subr.mxu0 0.0
    %6897 = vmatpush1.msra.mxu0 0.0
    %6898 = vmatprep.subr.mxu0 0.0
    %6899 = vmatpush1.msra.mxu0 0.0
    %6900 = vmatprep.subr.mxu0 0.0
    %6901 = vmatpush1.msra.mxu0 0.0
    %6902 = vmatprep.subr.mxu0 0.0
    %6903 = vmatpush1.msra.mxu0 0.0
    %6904 = vmatprep.mubr.f32.mxu0 0.0
    %6905 = vmatmul.mubr.f32.gmra.mrb[0].mxu0 %v6838
    %v6906 = vpop.f32.mrb[0].mxu0
    %v6907 = vadd.f32 0.0, %v6906
    %v6908 = vpop.f32.mrb[0].mxu0
    %6909 = vdwg.mxu0
    %v6910 = vadd.f32 %v6750, %v6836
    %6912 = vrot.lane.b32.xlu0 %v6587, 8
    %v6913 = vpop.permute.xlu0 %6912
    %6916 = vrot.lane.b32.xlu0 %v6747, 16
    %v6917 = vpop.permute.xlu0 %6916
    %6920 = vrot.lane.b32.xlu0 %v6907, 24
    %v6921 = vpop.permute.xlu0 %6920
    %v6923 = vsel %vm315, %v6428, %v6913
    %v6924 = vsel %vm987, %v6923, %v6917
    %v6925 = vsel %vm989, %v6924, %v6921
    %v6926 = vmul.f32 %v6910, 0.25
    %v6928 = vsel %vm130, %v6271, 0
    %v6931 = vsel %vm130, %v6925, 0
    %6933 = vmatprep.subr.mxu0 0.0
    %6934 = vmatpush1.msra.mxu0 %v95
    %6935 = vmatprep.subr.mxu0 0.0
    %6936 = vmatpush1.msra.mxu0 %v96
    %6937 = vmatprep.subr.mxu0 0.0
    %6938 = vmatpush1.msra.mxu0 %v97
    %6939 = vmatprep.subr.mxu0 0.0
    %6940 = vmatpush1.msra.mxu0 %v98
    %6941 = vmatprep.subr.mxu0 0.0
    %6942 = vmatpush1.msra.mxu0 0.0
    %6943 = vmatprep.subr.mxu0 0.0
    %6944 = vmatpush1.msra.mxu0 0.0
    %6945 = vmatprep.subr.mxu0 0.0
    %6946 = vmatpush1.msra.mxu0 0.0
    %6947 = vmatprep.subr.mxu0 0.0
    %6948 = vmatpush1.msra.mxu0 0.0
    %6949 = vmatprep.subr.mxu0 0.0
    %6950 = vmatpush1.msra.mxu0 0.0
    %6951 = vmatprep.subr.mxu0 0.0
    %6952 = vmatpush1.msra.mxu0 0.0
    %6953 = vmatprep.subr.mxu0 0.0
    %6954 = vmatpush1.msra.mxu0 0.0
    %6955 = vmatprep.subr.mxu0 0.0
    %6956 = vmatpush1.msra.mxu0 0.0
    %6957 = vmatprep.subr.mxu0 0.0
    %6958 = vmatpush1.msra.mxu0 0.0
    %6959 = vmatprep.subr.mxu0 0.0
    %6960 = vmatpush1.msra.mxu0 0.0
    %6961 = vmatprep.subr.mxu0 0.0
    %6962 = vmatpush1.msra.mxu0 0.0
    %6963 = vmatprep.subr.mxu0 0.0
    %6964 = vmatpush1.msra.mxu0 0.0
    %6965 = vmatprep.subr.mxu0 0.0
    %6966 = vmatpush1.msra.mxu0 0.0
    %6967 = vmatprep.subr.mxu0 0.0
    %6968 = vmatpush1.msra.mxu0 0.0
    %6969 = vmatprep.subr.mxu0 0.0
    %6970 = vmatpush1.msra.mxu0 0.0
    %6971 = vmatprep.subr.mxu0 0.0
    %6972 = vmatpush1.msra.mxu0 0.0
    %6973 = vmatprep.subr.mxu0 0.0
    %6974 = vmatpush1.msra.mxu0 0.0
    %6975 = vmatprep.subr.mxu0 0.0
    %6976 = vmatpush1.msra.mxu0 0.0
    %6977 = vmatprep.subr.mxu0 0.0
    %6978 = vmatpush1.msra.mxu0 0.0
    %6979 = vmatprep.subr.mxu0 0.0
    %6980 = vmatpush1.msra.mxu0 0.0
    %6981 = vmatprep.subr.mxu0 0.0
    %6982 = vmatpush1.msra.mxu0 0.0
    %6983 = vmatprep.subr.mxu0 0.0
    %6984 = vmatpush1.msra.mxu0 0.0
    %6985 = vmatprep.subr.mxu0 0.0
    %6986 = vmatpush1.msra.mxu0 0.0
    %6987 = vmatprep.subr.mxu0 0.0
    %6988 = vmatpush1.msra.mxu0 0.0
    %6989 = vmatprep.subr.mxu0 0.0
    %6990 = vmatpush1.msra.mxu0 0.0
    %6991 = vmatprep.subr.mxu0 0.0
    %6992 = vmatpush1.msra.mxu0 0.0
    %6993 = vmatprep.subr.mxu0 0.0
    %6994 = vmatpush1.msra.mxu0 0.0
    %6995 = vmatprep.subr.mxu0 0.0
    %6996 = vmatpush1.msra.mxu0 0.0
    %6997 = vmatprep.mubr.f32.mxu0 0.0
    %6998 = vmatmul.mubr.f32.gmra.mrb[0].mxu0 %v6928
    %v6999 = vpop.f32.mrb[0].mxu0
    %v7000 = vadd.f32 %v3524, %v6999
    %v7001 = vpop.f32.mrb[0].mxu0
    %7002 = vmatprep.mubr.f32.mxu0 0.0
    %7003 = vmatmul.mubr.f32.gmra.mrb[0].mxu0 %v6931
    %v7004 = vpop.f32.mrb[0].mxu0
    %v7005 = vadd.f32 %v3524, %v7004
    %v7006 = vpop.f32.mrb[0].mxu0
    %7007 = vdwg.mxu0
    %v7008 = vadd.f32 %v5534, %v7000
    %v7009 = vadd.f32 %v5535, %v7005
    %v7010 = vsel %vm130, %v7008, 0.0
    %7011 = vadd.xlane.f32.xlu0 %v7010
    %v7012 = vpop.xlane.xlu0 %7011
    %v7013 = vsel %vm130, %v7009, 0.0
    %7014 = vadd.xlane.f32.xlu0 %v7013
    %v7015 = vpop.xlane.xlu0 %7014
    %v7016 = vmul.f32 %v7012, %v1762
    %v7017 = vmul.f32 %v7015, %v1762
    %v7018 = vsub.f32 %v7008, %v7016
    %v7019 = vsub.f32 %v7009, %v7017
    %v7020 = vmul.f32 %v7018, %v7018
    %v7021 = vmul.f32 %v7019, %v7019
    %v7022 = vsel %vm130, %v7020, 0.0
    %7023 = vadd.xlane.f32.xlu0 %v7022
    %v7024 = vpop.xlane.xlu0 %7023
    %v7025 = vsel %vm130, %v7021, 0.0
    %7026 = vadd.xlane.f32.xlu0 %v7025
    %v7027 = vpop.xlane.xlu0 %7026
    %v7028 = vmul.f32 %v7024, %v1762
    %v7029 = vmul.f32 %v7027, %v1762
    %v7030 = vadd.f32 %v7028, 1e-05
    %v7031 = vadd.f32 %v7029, 1e-05
    %v7032 = vrsqrt.pop %v7030
    %v7033 = vrsqrt.pop %v7031
    %v7034 = vmul.f32 %v7018, %v7032
    %v7035 = vmul.f32 %v7019, %v7033
    %v7036 = vmul.f32 %v7034, %v3638
    %v7037 = vmul.f32 %v7035, %v3638
    %v7038 = vadd.f32 %v7036, %v3644
    %v7039 = vadd.f32 %v7037, %v3644
    %v7041 = vsel %vm130, %v7038, 0
    %v7044 = vsel %vm130, %v7039, 0
    %7046 = vmatprep.subr.mxu0 0.0
    %7047 = vmatpush1.msra.mxu0 %v100
    %7048 = vmatprep.subr.mxu0 0.0
    %7049 = vmatpush1.msra.mxu0 %v101
    %7050 = vmatprep.subr.mxu0 0.0
    %7051 = vmatpush1.msra.mxu0 %v102
    %7052 = vmatprep.subr.mxu0 0.0
    %7053 = vmatpush1.msra.mxu0 %v103
    %7054 = vmatprep.subr.mxu0 0.0
    %7055 = vmatpush1.msra.mxu0 0.0
    %7056 = vmatprep.subr.mxu0 0.0
    %7057 = vmatpush1.msra.mxu0 0.0
    %7058 = vmatprep.subr.mxu0 0.0
    %7059 = vmatpush1.msra.mxu0 0.0
    %7060 = vmatprep.subr.mxu0 0.0
    %7061 = vmatpush1.msra.mxu0 0.0
    %7062 = vmatprep.subr.mxu0 0.0
    %7063 = vmatpush1.msra.mxu0 0.0
    %7064 = vmatprep.subr.mxu0 0.0
    %7065 = vmatpush1.msra.mxu0 0.0
    %7066 = vmatprep.subr.mxu0 0.0
    %7067 = vmatpush1.msra.mxu0 0.0
    %7068 = vmatprep.subr.mxu0 0.0
    %7069 = vmatpush1.msra.mxu0 0.0
    %7070 = vmatprep.subr.mxu0 0.0
    %7071 = vmatpush1.msra.mxu0 0.0
    %7072 = vmatprep.subr.mxu0 0.0
    %7073 = vmatpush1.msra.mxu0 0.0
    %7074 = vmatprep.subr.mxu0 0.0
    %7075 = vmatpush1.msra.mxu0 0.0
    %7076 = vmatprep.subr.mxu0 0.0
    %7077 = vmatpush1.msra.mxu0 0.0
    %7078 = vmatprep.subr.mxu0 0.0
    %7079 = vmatpush1.msra.mxu0 0.0
    %7080 = vmatprep.subr.mxu0 0.0
    %7081 = vmatpush1.msra.mxu0 0.0
    %7082 = vmatprep.subr.mxu0 0.0
    %7083 = vmatpush1.msra.mxu0 0.0
    %7084 = vmatprep.subr.mxu0 0.0
    %7085 = vmatpush1.msra.mxu0 0.0
    %7086 = vmatprep.subr.mxu0 0.0
    %7087 = vmatpush1.msra.mxu0 0.0
    %7088 = vmatprep.subr.mxu0 0.0
    %7089 = vmatpush1.msra.mxu0 0.0
    %7090 = vmatprep.subr.mxu0 0.0
    %7091 = vmatpush1.msra.mxu0 0.0
    %7092 = vmatprep.subr.mxu0 0.0
    %7093 = vmatpush1.msra.mxu0 0.0
    %7094 = vmatprep.subr.mxu0 0.0
    %7095 = vmatpush1.msra.mxu0 0.0
    %7096 = vmatprep.subr.mxu0 0.0
    %7097 = vmatpush1.msra.mxu0 0.0
    %7098 = vmatprep.subr.mxu0 0.0
    %7099 = vmatpush1.msra.mxu0 0.0
    %7100 = vmatprep.subr.mxu0 0.0
    %7101 = vmatpush1.msra.mxu0 0.0
    %7102 = vmatprep.subr.mxu0 0.0
    %7103 = vmatpush1.msra.mxu0 0.0
    %7104 = vmatprep.subr.mxu0 0.0
    %7105 = vmatpush1.msra.mxu0 0.0
    %7106 = vmatprep.subr.mxu0 0.0
    %7107 = vmatpush1.msra.mxu0 0.0
    %7108 = vmatprep.subr.mxu0 0.0
    %7109 = vmatpush1.msra.mxu0 0.0
    %7110 = vmatprep.mubr.f32.mxu0 0.0
    %7111 = vmatmul.mubr.f32.gmra.mrb[0].mxu0 %v7041
    %v7112 = vpop.f32.mrb[0].mxu0
    %v7113 = vadd.f32 %v3651, %v7112
    %v7114 = vpop.f32.mrb[0].mxu0
    %7115 = vmatprep.mubr.f32.mxu0 0.0
    %7116 = vmatmul.mubr.f32.gmra.mrb[0].mxu0 %v7044
    %v7117 = vpop.f32.mrb[0].mxu0
    %v7118 = vadd.f32 %v3651, %v7117
    %v7119 = vpop.f32.mrb[0].mxu0
    %7120 = vdwg.mxu0
    %v7121 = vmax.f32 %v7113, 0.0
    %v7122 = vmax.f32 %v7118, 0.0
    %v7124 = vsel %vm3742, %v7121, 0
    %v7127 = vsel %vm3742, %v7122, 0
    %7129 = vmatprep.subr.mxu0 0.0
    %7130 = vmatpush1.msra.mxu0 %v105
    %7131 = vmatprep.subr.mxu0 0.0
    %7132 = vmatpush1.msra.mxu0 %v106
    %7133 = vmatprep.subr.mxu0 0.0
    %7134 = vmatpush1.msra.mxu0 %v107
    %7135 = vmatprep.subr.mxu0 0.0
    %7136 = vmatpush1.msra.mxu0 %v108
    %7137 = vmatprep.subr.mxu0 0.0
    %7138 = vmatpush1.msra.mxu0 %v109
    %7139 = vmatprep.subr.mxu0 0.0
    %7140 = vmatpush1.msra.mxu0 %v110
    %7141 = vmatprep.subr.mxu0 0.0
    %7142 = vmatpush1.msra.mxu0 %v111
    %7143 = vmatprep.subr.mxu0 0.0
    %7144 = vmatpush1.msra.mxu0 %v112
    %7145 = vmatprep.subr.mxu0 0.0
    %7146 = vmatpush1.msra.mxu0 0.0
    %7147 = vmatprep.subr.mxu0 0.0
    %7148 = vmatpush1.msra.mxu0 0.0
    %7149 = vmatprep.subr.mxu0 0.0
    %7150 = vmatpush1.msra.mxu0 0.0
    %7151 = vmatprep.subr.mxu0 0.0
    %7152 = vmatpush1.msra.mxu0 0.0
    %7153 = vmatprep.subr.mxu0 0.0
    %7154 = vmatpush1.msra.mxu0 0.0
    %7155 = vmatprep.subr.mxu0 0.0
    %7156 = vmatpush1.msra.mxu0 0.0
    %7157 = vmatprep.subr.mxu0 0.0
    %7158 = vmatpush1.msra.mxu0 0.0
    %7159 = vmatprep.subr.mxu0 0.0
    %7160 = vmatpush1.msra.mxu0 0.0
    %7161 = vmatprep.subr.mxu0 0.0
    %7162 = vmatpush1.msra.mxu0 0.0
    %7163 = vmatprep.subr.mxu0 0.0
    %7164 = vmatpush1.msra.mxu0 0.0
    %7165 = vmatprep.subr.mxu0 0.0
    %7166 = vmatpush1.msra.mxu0 0.0
    %7167 = vmatprep.subr.mxu0 0.0
    %7168 = vmatpush1.msra.mxu0 0.0
    %7169 = vmatprep.subr.mxu0 0.0
    %7170 = vmatpush1.msra.mxu0 0.0
    %7171 = vmatprep.subr.mxu0 0.0
    %7172 = vmatpush1.msra.mxu0 0.0
    %7173 = vmatprep.subr.mxu0 0.0
    %7174 = vmatpush1.msra.mxu0 0.0
    %7175 = vmatprep.subr.mxu0 0.0
    %7176 = vmatpush1.msra.mxu0 0.0
    %7177 = vmatprep.subr.mxu0 0.0
    %7178 = vmatpush1.msra.mxu0 0.0
    %7179 = vmatprep.subr.mxu0 0.0
    %7180 = vmatpush1.msra.mxu0 0.0
    %7181 = vmatprep.subr.mxu0 0.0
    %7182 = vmatpush1.msra.mxu0 0.0
    %7183 = vmatprep.subr.mxu0 0.0
    %7184 = vmatpush1.msra.mxu0 0.0
    %7185 = vmatprep.subr.mxu0 0.0
    %7186 = vmatpush1.msra.mxu0 0.0
    %7187 = vmatprep.subr.mxu0 0.0
    %7188 = vmatpush1.msra.mxu0 0.0
    %7189 = vmatprep.subr.mxu0 0.0
    %7190 = vmatpush1.msra.mxu0 0.0
    %7191 = vmatprep.subr.mxu0 0.0
    %7192 = vmatpush1.msra.mxu0 0.0
    %7193 = vmatprep.mubr.f32.mxu0 0.0
    %7194 = vmatmul.mubr.f32.gmra.mrb[0].mxu0 %v7124
    %v7195 = vpop.f32.mrb[0].mxu0
    %v7196 = vadd.f32 %v3740, %v7195
    %v7197 = vpop.f32.mrb[0].mxu0
    %7198 = vmatprep.mubr.f32.mxu0 0.0
    %7199 = vmatmul.mubr.f32.gmra.mrb[0].mxu0 %v7127
    %v7200 = vpop.f32.mrb[0].mxu0
    %v7201 = vadd.f32 %v3740, %v7200
    %v7202 = vpop.f32.mrb[0].mxu0
    %7203 = vdwg.mxu0
    %v7204 = vadd.f32 %v7038, %v7196
    %v7205 = vadd.f32 %v7039, %v7201
    %v7206 = vsel %vm130, %v7204, 0.0
    %7207 = vadd.xlane.f32.xlu0 %v7206
    %v7208 = vpop.xlane.xlu0 %7207
    %v7209 = vsel %vm130, %v7205, 0.0
    %7210 = vadd.xlane.f32.xlu0 %v7209
    %v7211 = vpop.xlane.xlu0 %7210
    %v7212 = vmul.f32 %v7208, %v1762
    %v7213 = vmul.f32 %v7211, %v1762
    %v7214 = vsub.f32 %v7204, %v7212
    %v7215 = vsub.f32 %v7205, %v7213
    %v7216 = vmul.f32 %v7214, %v7214
    %v7217 = vmul.f32 %v7215, %v7215
    %v7218 = vsel %vm130, %v7216, 0.0
    %7219 = vadd.xlane.f32.xlu0 %v7218
    %v7220 = vpop.xlane.xlu0 %7219
    %v7221 = vsel %vm130, %v7217, 0.0
    %7222 = vadd.xlane.f32.xlu0 %v7221
    %v7223 = vpop.xlane.xlu0 %7222
    %v7224 = vmul.f32 %v7220, %v1762
    %v7225 = vmul.f32 %v7223, %v1762
    %v7226 = vadd.f32 %v7224, 1e-05
    %v7227 = vadd.f32 %v7225, 1e-05
    %v7228 = vrsqrt.pop %v7226
    %v7229 = vrsqrt.pop %v7227
    %v7230 = vmul.f32 %v7214, %v7228
    %v7231 = vmul.f32 %v7215, %v7229
    %v7232 = vmul.f32 %v7230, %v3855
    %v7233 = vmul.f32 %v7231, %v3855
    %v7234 = vadd.f32 %v7232, %v3861
    %v7235 = vadd.f32 %v7233, %v3861
    %v7236 = vsel %vm130, %v7234, 0.0
    %7237 = vadd.xlane.f32.xlu0 %v7236
    %v7238 = vpop.xlane.xlu0 %7237
    %v7239 = vsel %vm130, %v7235, 0.0
    %7240 = vadd.xlane.f32.xlu0 %v7239
    %v7241 = vpop.xlane.xlu0 %7240
    %v7242 = vmul.f32 %v7238, %v1762
    %v7243 = vmul.f32 %v7241, %v1762
    %v7244 = vsub.f32 %v7234, %v7242
    %v7245 = vsub.f32 %v7235, %v7243
    %v7246 = vmul.f32 %v7244, %v7244
    %v7247 = vmul.f32 %v7245, %v7245
    %v7248 = vsel %vm130, %v7246, 0.0
    %7249 = vadd.xlane.f32.xlu0 %v7248
    %v7250 = vpop.xlane.xlu0 %7249
    %v7251 = vsel %vm130, %v7247, 0.0
    %7252 = vadd.xlane.f32.xlu0 %v7251
    %v7253 = vpop.xlane.xlu0 %7252
    %v7254 = vmul.f32 %v7250, %v1762
    %v7255 = vmul.f32 %v7253, %v1762
    %v7256 = vadd.f32 %v7254, 1e-05
    %v7257 = vadd.f32 %v7255, 1e-05
    %v7258 = vrsqrt.pop %v7256
    %v7259 = vrsqrt.pop %v7257
    %v7260 = vmul.f32 %v7244, %v7258
    %v7261 = vmul.f32 %v7245, %v7259
    %v7262 = vmul.f32 %v7260, %v3893
    %v7263 = vmul.f32 %v7261, %v3893
    %v7264 = vadd.f32 %v7262, %v3899
    %v7265 = vadd.f32 %v7263, %v3899
    %s7266 = scalar_lea.vmem [#allocation2], 16
    %7267 = vst.msk [vmem:[%s7266] sm:$0xff] %vm130, %v7264
    %7268 = vst.msk [vmem:[%s7266 + $0x8] sm:$0xff] %vm130, %v7265
    %s7269 = scalar_lea.vmem [#allocation4], 16
    %7270 = vst.msk [vmem:[%s7269] sm:$0xff] %vm987, %v6272
    %s7271 = scalar_lea.vmem [#allocation4], 24
    %7272 = vst.msk [vmem:[%s7271] sm:$0xff] %vm987, %v6926
    // Predicated region
    $region78: #{time_decoder_forward.1} parent=1 // pred_check
      _
    $region79: #{time_decoder_forward.1} parent=1 // pred_check_branch
      %7274 = sbr.rel (0) target = $region81
    $region80: #{time_decoder_forward.1} parent=1 // pred_region
      %s7276 = ssub.s32 512, 512
      %7277 = vsyncadd [#allocation3], %s7276
      %s7278 = sshll.u32 [#allocation2], 4
      %s7279 = int_to_ptr.vmem [resolvable:$true] %s7278
      %7284 = dma.vmem_to_hbm [thread:$0]  %s7279, 512, %s19, [#allocation3], 128, 128, 8
    $region81: #{time_decoder_forward.1} parent=1 // pred_fallthru
      _
    // Predicated region
    $region82: #{time_decoder_forward.1} parent=1 // pred_check
      _
    $region83: #{time_decoder_forward.1} parent=1 // pred_check_branch
      %7286 = sbr.rel (0) target = $region85
    $region84: #{time_decoder_forward.1} parent=1 // pred_region
      %s7288 = ssub.s32 512, 512
      %7289 = vsyncadd [#allocation5], %s7288
      %s7290 = sshll.u32 [#allocation4], 4
      %s7291 = int_to_ptr.vmem [resolvable:$true] %s7290
      %7296 = dma.vmem_to_hbm [thread:$0]  %s7291, 512, %s20, [#allocation5], 128, 128, 8
    $region85: #{time_decoder_forward.1} parent=1 // pred_fallthru
      _
    // Predicated region
    $region86: #{time_decoder_forward.1} parent=1 // pred_check
      _
    $region87: #{time_decoder_forward.1} parent=1 // pred_check_branch
      %7298 = sbr.rel (0) target = $region89
    $region88: #{time_decoder_forward.1} parent=1 // pred_region
      %7299 = dma.done [#allocation3], 512
    $region89: #{time_decoder_forward.1} parent=1 // pred_fallthru
      _
    // Predicated region
    $region90: #{time_decoder_forward.1} parent=1 // pred_check
      _
    $region91: #{time_decoder_forward.1} parent=1 // pred_check_branch
      %7301 = sbr.rel (0) target = $region93
    $region92: #{time_decoder_forward.1} parent=1 // pred_region
      %7302 = dma.done [#allocation5], 512
    $region93: #{time_decoder_forward.1} parent=1 // pred_fallthru
      _
    %7303 = vsyncpa [#allocation3], 1
    %7304 = vsyncpa [#allocation5], 1

</llo_original>
